<compile_context>
chip_gen: v7x
topology: tpu7x:2x2x1
jax: 0.10.0
libtpu: 0.0.40
codegen_flags: <defaults>
</compile_context>

<pallas_src>
import math

import numpy as np
import jax
import jax.numpy as jnp
from jax import lax
from jax.experimental import pallas as pl
from jax.experimental.pallas import tpu as pltpu

EPS = 1e-5
COUT = 64
CIN0 = 3

# (padding, maxpool) per layer, mirroring the PyTorch module (used by the ref).
LAYER_CFG = [(0, True), (0, True), (1, False), (1, False)]


def _geometry(hw):
    """Static spatial geometry for a square hw x hw input."""
    assert hw % 2 == 0 and hw >= 12, hw
    c1 = hw - 2                 # conv1 output (valid)
    p1 = c1 // 2                # after pool1 -> layer-2 input grid width
    c2 = p1 - 2                 # conv2 output
    p2 = c2 // 2                # after pool2 (floor, like PyTorch MaxPool2d)
    g3 = p2 + 2                 # zero-padded grid width for layers 3/4 (pad=1)
    return dict(
        c1=c1, p1=p1, c2=c2, p2=p2, g3=g3,
        n1=p1 * p1,             # rows of the pooled layer-1 activation
        a2_rows=p1 * p1 + 8,    # + slack so shifted tap windows stay in bounds
        y2_rows=c2 * p1,        # "wide" conv2 output rows (valid cols w < c2)
        a3_rows=g3 * g3 + 8,
        y3_rows=p2 * g3,        # "wide" conv3/4 output rows (valid cols w < p2)
    )


def _make_fused_kernel(g):
    taps = [(dy, dx) for dy in range(3) for dx in range(3)]
    n1, p1, p2, g3 = g["n1"], g["p1"], g["p2"], g["g3"]
    y2_rows, y3_rows, a2_rows = g["y2_rows"], g["y3_rows"], g["a2_rows"]

    def kernel(xcol_ref, w1_ref, b1_ref, w2_ref, b2_ref, w3_ref, b3_ref,
               w4_ref, b4_ref, o_ref, a2_ref, y2_ref, a3_ref, a4_ref):
        f32 = jnp.float32

        # ---- layer 1 + pool1: K=27 im2col, one matmul per pool quadrant -----
        # xcol_ref[0, q] row r = hp*p1 + wp holds the 27-wide patch for conv1
        # output pixel (2*hp + q//2, 2*wp + q%2); 2x2 max-pool == max over q.
        w1 = w1_ref[...]
        z = jnp.dot(xcol_ref[0, 0], w1, preferred_element_type=f32)
        for q in range(1, 4):
            z = jnp.maximum(
                z, jnp.dot(xcol_ref[0, q], w1, preferred_element_type=f32))
        a2_ref[pl.ds(0, n1), :] = jnp.maximum(z + b1_ref[...], 0.0)
        # zero the slack rows so the shifted tap windows below read zeros
        a2_ref[pl.ds(n1, a2_rows - n1), :] = jnp.zeros(
            (a2_rows - n1, COUT), f32)

        # ---- layer 2: 9 per-tap whole-image matmuls on the flat p1 x p1 grid -
        for t, (dy, dx) in enumerate(taps):
            off = dy * p1 + dx
            contrib = jnp.dot(a2_ref[pl.ds(off, y2_rows), :], w2_ref[t],
                              preferred_element_type=f32)
            if t == 0:
                y2_ref[...] = contrib
            else:
                y2_ref[...] = y2_ref[...] + contrib

        # ---- pool2 (floor) + bias/ReLU, scattered into zero-padded g3 grid --
        a3_ref[...] = jnp.zeros_like(a3_ref)
        b2 = b2_ref[...]
        for hp in range(p2):
            r0 = 2 * hp * p1            # conv2 row 2*hp,   col 0 (flat index)
            r1 = r0 + p1                # conv2 row 2*hp+1, col 0
            m = jnp.maximum(
                jnp.maximum(y2_ref[pl.ds(r0, p2, 2), :],
                            y2_ref[pl.ds(r0 + 1, p2, 2), :]),
                jnp.maximum(y2_ref[pl.ds(r1, p2, 2), :],
                            y2_ref[pl.ds(r1 + 1, p2, 2), :]))
            a3_ref[pl.ds((hp + 1) * g3 + 1, p2), :] = jnp.maximum(m + b2, 0.0)

        # ---- layers 3 & 4: padding=1 handled by the zero-padded flat grid ---
        def conv3x3_wide(a_ref, w_ref):
            acc = jnp.dot(a_ref[pl.ds(0, y3_rows), :], w_ref[0],
                          preferred_element_type=f32)
            for t in range(1, 9):
                dy, dx = taps[t]
                acc = acc + jnp.dot(
                    a_ref[pl.ds(dy * g3 + dx, y3_rows), :], w_ref[t],
                    preferred_element_type=f32)
            return acc                                  # (p2*g3, 64) "wide"

        h3 = jnp.maximum(conv3x3_wide(a3_ref, w3_ref) + b3_ref[...], 0.0)
        a4_ref[...] = jnp.zeros_like(a4_ref)
        for h in range(p2):
            a4_ref[pl.ds((h + 1) * g3 + 1, p2), :] = h3[h * g3:h * g3 + p2, :]

        # ---- layer 4 + single lane-dense slab store --------------------------
        o_ref[0] = jnp.maximum(conv3x3_wide(a4_ref, w4_ref) + b4_ref[...], 0.0)

    return kernel


def _im2col_pool_quadrants(x_nhwc):
    """(N, H, W, 3) -> (N, 4, Hp*Wp, 27) im2col, grouped so quadrant q = 2*i+j
    holds the patch of conv1-output pixel (2*hp+i, 2*wp+j) at row hp*Wp + wp."""
    n, h, w, c = x_nhwc.shape
    ho, wo = h - 2, w - 2
    hp, wp = ho // 2, wo // 2
    cols = [x_nhwc[:, dy:dy + ho, dx:dx + wo, :]
            for dy in range(3) for dx in range(3)]
    patches = jnp.concatenate(cols, axis=-1)             # (N, Ho, Wo, 27)
    patches = patches.reshape(n, hp, 2, wp, 2, 9 * c)
    patches = patches.transpose(0, 2, 4, 1, 3, 5)        # (N, 2, 2, Hp, Wp, 27)
    return patches.reshape(n, 4, hp * wp, 9 * c)


@jax.jit
def cnn_encoder(x_nchw, params):
    """Fused Pallas forward. Input/output are NCHW like the PyTorch module."""
    x = jnp.transpose(x_nchw, (0, 2, 3, 1)).astype(jnp.float32)   # -> NHWC
    n, h, w, _ = x.shape
    assert h == w, "square inputs only"
    g = _geometry(h)
    xcol = _im2col_pool_quadrants(x)                              # (N,4,n1,27)

    w1 = params[0]["w9f"].reshape(9 * CIN0, COUT)
    biases = [p["bias"].reshape(1, COUT).astype(jnp.float32) for p in params]
    kernel = _make_fused_kernel(g)

    out_wide = pl.pallas_call(
        kernel,
        out_shape=jax.ShapeDtypeStruct((n, g["y3_rows"], COUT), jnp.float32),
        grid_spec=pltpu.PrefetchScalarGridSpec(
            num_scalar_prefetch=0,
            grid=(n,),
            in_specs=[
                pl.BlockSpec((1, 4, g["n1"], 9 * CIN0), lambda i: (i, 0, 0, 0)),
                pl.BlockSpec((9 * CIN0, COUT), lambda i: (0, 0)),
                pl.BlockSpec((1, COUT), lambda i: (0, 0)),
                pl.BlockSpec((9, COUT, COUT), lambda i: (0, 0, 0)),
                pl.BlockSpec((1, COUT), lambda i: (0, 0)),
                pl.BlockSpec((9, COUT, COUT), lambda i: (0, 0, 0)),
                pl.BlockSpec((1, COUT), lambda i: (0, 0)),
                pl.BlockSpec((9, COUT, COUT), lambda i: (0, 0, 0)),
                pl.BlockSpec((1, COUT), lambda i: (0, 0)),
            ],
            out_specs=pl.BlockSpec((1, g["y3_rows"], COUT),
                                   lambda i: (i, 0, 0)),
            scratch_shapes=[
                pltpu.VMEM((g["a2_rows"], COUT), jnp.float32),   # pooled1 grid
                pltpu.VMEM((g["y2_rows"], COUT), jnp.float32),   # wide conv2
                pltpu.VMEM((g["a3_rows"], COUT), jnp.float32),   # padded l3 in
                pltpu.VMEM((g["a3_rows"], COUT), jnp.float32),   # padded l4 in
            ],
        ),
        compiler_params=pltpu.CompilerParams(
            dimension_semantics=("parallel",)),                  # v7x megacore
    )(xcol, w1, biases[0],
      params[1]["w9f"], biases[1],
      params[2]["w9f"], biases[2],
      params[3]["w9f"], biases[3])

    # (N, p2*g3, 64) wide rows -> (N, p2, p2, 64) -> NCHW
    out = out_wide.reshape(n, g["p2"], g["g3"], COUT)[:, :, :g["p2"], :]
    return jnp.transpose(out, (0, 3, 1, 2))


def init_params(key):
    """Deterministic parameters (conv w/b + BN gamma/beta/mean/var), plus the
    BN-folded forms consumed by the kernel."""
    layers = []
    cins = [CIN0, COUT, COUT, COUT]
    for i, cin in enumerate(cins):
        k = jax.random.fold_in(key, i)
        k1, k2, k3, k4, k5, k6 = jax.random.split(k, 6)
        w = jax.random.normal(k1, (COUT, cin, 3, 3), jnp.float32) / math.sqrt(cin * 9)
        b = 0.05 * jax.random.normal(k2, (COUT,), jnp.float32)
        gamma = 1.0 + 0.1 * jax.random.normal(k3, (COUT,), jnp.float32)
        beta = 0.1 * jax.random.normal(k4, (COUT,), jnp.float32)
        mean = 0.1 * jax.random.normal(k5, (COUT,), jnp.float32)
        var = 1.0 + 0.1 * jax.random.uniform(k6, (COUT,), jnp.float32)
        scale = gamma / jnp.sqrt(var + EPS)            # folded BN scale
        bias = beta + (b - mean) * scale               # folded conv-bias + shift
        # OIHW -> (ky, kx, Cin, Cout) -> (9, Cin, Cout), BN scale folded in.
        w9 = jnp.transpose(w, (2, 3, 1, 0)).reshape(9, cin, COUT)
        w9f = w9 * scale[None, None, :]
        layers.append(dict(w9f=w9f, bias=bias,
                           w=w, b=b, gamma=gamma, beta=beta, mean=mean, var=var))
    return layers


def cnn_encoder_ref(x_nchw, params):
    """Pure-JAX reference (XLA conv / reduce_window) for correctness check."""
    y = x_nchw.astype(jnp.float32)
    for lp, (pad, pool) in zip(params, LAYER_CFG):
        y = lax.conv_general_dilated(
            y, lp["w"], (1, 1), [(pad, pad), (pad, pad)],
            dimension_numbers=("NCHW", "OIHW", "NCHW"),
            precision=lax.Precision.HIGHEST)
        scale = lp["gamma"] / jnp.sqrt(lp["var"] + EPS)
        bias = lp["beta"] + (lp["b"] - lp["mean"]) * scale
        y = jnp.maximum(y * scale[None, :, None, None] + bias[None, :, None, None], 0.0)
        if pool:
            y = lax.reduce_window(y, -jnp.inf, lax.max,
                                  (1, 1, 2, 2), (1, 1, 2, 2), "VALID")
    return y


if __name__ == "__main__":
    key = jax.random.PRNGKey(0)
    kx, kp = jax.random.split(key)

    N, C, H, W = 2, 3, 32, 32          # small miniImagenet-style input (NCHW)
    x = jax.random.normal(kx, (N, C, H, W), jnp.float32)
    params = init_params(kp)

    out = jax.block_until_ready(cnn_encoder(x, params))
    # Shape trace: 32 ->(conv) 30 ->(pool) 15 ->(conv) 13 ->(pool) 6 -> 6 -> 6
    assert out.shape == (N, COUT, 6, 6), out.shape

    ref = jax.block_until_ready(cnn_encoder_ref(x, params))
    np.testing.assert_allclose(np.asarray(out), np.asarray(ref),
                               atol=5e-2, rtol=5e-2)

    print("KERNEL_OK")
</pallas_src>

<mosaic_0001>
module attributes {stable_mosaic.version = 11 : i64} {
  func.func @kernel(%arg0: i32, %arg1: memref<1x4x225x27xf32, #tpu.memory_space<vmem>>, %arg2: memref<27x64xf32, #tpu.memory_space<vmem>>, %arg3: memref<1x64xf32, #tpu.memory_space<vmem>>, %arg4: memref<9x64x64xf32, #tpu.memory_space<vmem>>, %arg5: memref<1x64xf32, #tpu.memory_space<vmem>>, %arg6: memref<9x64x64xf32, #tpu.memory_space<vmem>>, %arg7: memref<1x64xf32, #tpu.memory_space<vmem>>, %arg8: memref<9x64x64xf32, #tpu.memory_space<vmem>>, %arg9: memref<1x64xf32, #tpu.memory_space<vmem>>, %arg10: memref<1x48x64xf32, #tpu.memory_space<vmem>>, %arg11: memref<233x64xf32, #tpu.memory_space<vmem>>, %arg12: memref<195x64xf32, #tpu.memory_space<vmem>>, %arg13: memref<72x64xf32, #tpu.memory_space<vmem>>, %arg14: memref<72x64xf32, #tpu.memory_space<vmem>>) attributes {dimension_semantics = [#tpu.dimension_semantics<parallel>], iteration_bounds = array<i64: 2>, scalar_prefetch = 0 : i64, scratch_operands = 4 : i64, tpu.core_type = #tpu.core_type<tc>, window_params = [{transform_indices = @transform_0, window_bounds = array<i64: 1, 4, 225, 27>}, {pipeline_mode = #tpu.pipeline_mode<synchronous>, transform_indices = @transform_1, window_bounds = array<i64: 27, 64>}, {pipeline_mode = #tpu.pipeline_mode<synchronous>, transform_indices = @transform_2, window_bounds = array<i64: 1, 64>}, {pipeline_mode = #tpu.pipeline_mode<synchronous>, transform_indices = @transform_3, window_bounds = array<i64: 9, 64, 64>}, {pipeline_mode = #tpu.pipeline_mode<synchronous>, transform_indices = @transform_4, window_bounds = array<i64: 1, 64>}, {pipeline_mode = #tpu.pipeline_mode<synchronous>, transform_indices = @transform_5, window_bounds = array<i64: 9, 64, 64>}, {pipeline_mode = #tpu.pipeline_mode<synchronous>, transform_indices = @transform_6, window_bounds = array<i64: 1, 64>}, {pipeline_mode = #tpu.pipeline_mode<synchronous>, transform_indices = @transform_7, window_bounds = array<i64: 9, 64, 64>}, {pipeline_mode = #tpu.pipeline_mode<synchronous>, transform_indices = @transform_8, window_bounds = array<i64: 1, 64>}, {transform_indices = @transform_9, window_bounds = array<i64: 1, 48, 64>}]} {
    %c0 = arith.constant 0 : index
    %c0_0 = arith.constant 0 : index
    %0 = vector.load %arg2[%c0, %c0_0] : memref<27x64xf32, #tpu.memory_space<vmem>>, vector<27x64xf32>
    %c0_1 = arith.constant 0 : index
    %c0_2 = arith.constant 0 : index
    %c0_3 = arith.constant 0 : index
    %c0_4 = arith.constant 0 : index
    %1 = vector.load %arg1[%c0_1, %c0_2, %c0_3, %c0_4] : memref<1x4x225x27xf32, #tpu.memory_space<vmem>>, vector<1x1x225x27xf32>
    %2 = vector.shape_cast %1 : vector<1x1x225x27xf32> to vector<225x27xf32>
    %cst = arith.constant dense<0.000000e+00> : vector<225x64xf32>
    %3 = tpu.matmul %2, %0, %cst {dimension_numbers = #tpu.dot_dimension_numbers<[1], [0], [0], [1], [0, 0, 1, 1], [], []>} : vector<225x27xf32>, vector<27x64xf32>, vector<225x64xf32> -> vector<225x64xf32>
    %c0_5 = arith.constant 0 : index
    %c1 = arith.constant 1 : index
    %c0_6 = arith.constant 0 : index
    %c0_7 = arith.constant 0 : index
    %4 = vector.load %arg1[%c0_5, %c1, %c0_6, %c0_7] : memref<1x4x225x27xf32, #tpu.memory_space<vmem>>, vector<1x1x225x27xf32>
    %5 = vector.shape_cast %4 : vector<1x1x225x27xf32> to vector<225x27xf32>
    %cst_8 = arith.constant dense<0.000000e+00> : vector<225x64xf32>
    %6 = tpu.matmul %5, %0, %cst_8 {dimension_numbers = #tpu.dot_dimension_numbers<[1], [0], [0], [1], [0, 0, 1, 1], [], []>} : vector<225x27xf32>, vector<27x64xf32>, vector<225x64xf32> -> vector<225x64xf32>
    %7 = arith.maximumf %3, %6 : vector<225x64xf32>
    %c0_9 = arith.constant 0 : index
    %c2 = arith.constant 2 : index
    %c0_10 = arith.constant 0 : index
    %c0_11 = arith.constant 0 : index
    %8 = vector.load %arg1[%c0_9, %c2, %c0_10, %c0_11] : memref<1x4x225x27xf32, #tpu.memory_space<vmem>>, vector<1x1x225x27xf32>
    %9 = vector.shape_cast %8 : vector<1x1x225x27xf32> to vector<225x27xf32>
    %cst_12 = arith.constant dense<0.000000e+00> : vector<225x64xf32>
    %10 = tpu.matmul %9, %0, %cst_12 {dimension_numbers = #tpu.dot_dimension_numbers<[1], [0], [0], [1], [0, 0, 1, 1], [], []>} : vector<225x27xf32>, vector<27x64xf32>, vector<225x64xf32> -> vector<225x64xf32>
    %11 = arith.maximumf %7, %10 : vector<225x64xf32>
    %c0_13 = arith.constant 0 : index
    %c3 = arith.constant 3 : index
    %c0_14 = arith.constant 0 : index
    %c0_15 = arith.constant 0 : index
    %12 = vector.load %arg1[%c0_13, %c3, %c0_14, %c0_15] : memref<1x4x225x27xf32, #tpu.memory_space<vmem>>, vector<1x1x225x27xf32>
    %13 = vector.shape_cast %12 : vector<1x1x225x27xf32> to vector<225x27xf32>
    %cst_16 = arith.constant dense<0.000000e+00> : vector<225x64xf32>
    %14 = tpu.matmul %13, %0, %cst_16 {dimension_numbers = #tpu.dot_dimension_numbers<[1], [0], [0], [1], [0, 0, 1, 1], [], []>} : vector<225x27xf32>, vector<27x64xf32>, vector<225x64xf32> -> vector<225x64xf32>
    %15 = arith.maximumf %11, %14 : vector<225x64xf32>
    %c0_17 = arith.constant 0 : index
    %c0_18 = arith.constant 0 : index
    %16 = vector.load %arg3[%c0_17, %c0_18] : memref<1x64xf32, #tpu.memory_space<vmem>>, vector<1x64xf32>
    %17 = vector.broadcast %16 : vector<1x64xf32> to vector<225x64xf32>
    %18 = arith.addf %15, %17 : vector<225x64xf32>
    %cst_19 = arith.constant 0.000000e+00 : f32
    %19 = vector.broadcast %cst_19 : f32 to vector<225x64xf32>
    %20 = arith.maximumf %18, %19 : vector<225x64xf32>
    %c0_20 = arith.constant 0 : index
    %c0_21 = arith.constant 0 : index
    %21 = vector.load %arg11[%c0_20, %c0_21] : memref<233x64xf32, #tpu.memory_space<vmem>>, vector<225x64xf32>
    tpu.vector_store %arg11[%c0_20, %c0_21], %20 {strides = array<i32>} : memref<233x64xf32, #tpu.memory_space<vmem>>, vector<225x64xf32>,
    %cst_22 = arith.constant 0.000000e+00 : f32
    %22 = vector.broadcast %cst_22 : f32 to vector<8x64xf32>
    %c225 = arith.constant 225 : index
    %c0_23 = arith.constant 0 : index
    %23 = vector.load %arg11[%c225, %c0_23] : memref<233x64xf32, #tpu.memory_space<vmem>>, vector<8x64xf32>
    tpu.vector_store %arg11[%c225, %c0_23], %22 {strides = array<i32>} : memref<233x64xf32, #tpu.memory_space<vmem>>, vector<8x64xf32>,
    %c0_24 = arith.constant 0 : index
    %c0_25 = arith.constant 0 : index
    %24 = vector.load %arg11[%c0_24, %c0_25] : memref<233x64xf32, #tpu.memory_space<vmem>>, vector<195x64xf32>
    %c0_26 = arith.constant 0 : index
    %c0_27 = arith.constant 0 : index
    %c0_28 = arith.constant 0 : index
    %25 = vector.load %arg4[%c0_26, %c0_27, %c0_28] : memref<9x64x64xf32, #tpu.memory_space<vmem>>, vector<1x64x64xf32>
    %26 = vector.shape_cast %25 : vector<1x64x64xf32> to vector<64x64xf32>
    %cst_29 = arith.constant dense<0.000000e+00> : vector<195x64xf32>
    %27 = tpu.matmul %24, %26, %cst_29 {dimension_numbers = #tpu.dot_dimension_numbers<[1], [0], [0], [1], [0, 0, 1, 1], [], []>} : vector<195x64xf32>, vector<64x64xf32>, vector<195x64xf32> -> vector<195x64xf32>
    %c0_30 = arith.constant 0 : index
    %c0_31 = arith.constant 0 : index
    %28 = vector.load %arg12[%c0_30, %c0_31] : memref<195x64xf32, #tpu.memory_space<vmem>>, vector<195x64xf32>
    tpu.vector_store %arg12[%c0_30, %c0_31], %27 {strides = array<i32>} : memref<195x64xf32, #tpu.memory_space<vmem>>, vector<195x64xf32>,
    %c1_32 = arith.constant 1 : index
    %c0_33 = arith.constant 0 : index
    %29 = vector.load %arg11[%c1_32, %c0_33] : memref<233x64xf32, #tpu.memory_space<vmem>>, vector<195x64xf32>
    %c1_34 = arith.constant 1 : index
    %c0_35 = arith.constant 0 : index
    %c0_36 = arith.constant 0 : index
    %30 = vector.load %arg4[%c1_34, %c0_35, %c0_36] : memref<9x64x64xf32, #tpu.memory_space<vmem>>, vector<1x64x64xf32>
    %31 = vector.shape_cast %30 : vector<1x64x64xf32> to vector<64x64xf32>
    %cst_37 = arith.constant dense<0.000000e+00> : vector<195x64xf32>
    %32 = tpu.matmul %29, %31, %cst_37 {dimension_numbers = #tpu.dot_dimension_numbers<[1], [0], [0], [1], [0, 0, 1, 1], [], []>} : vector<195x64xf32>, vector<64x64xf32>, vector<195x64xf32> -> vector<195x64xf32>
    %c0_38 = arith.constant 0 : index
    %c0_39 = arith.constant 0 : index
    %33 = vector.load %arg12[%c0_38, %c0_39] : memref<195x64xf32, #tpu.memory_space<vmem>>, vector<195x64xf32>
    %34 = arith.addf %33, %32 : vector<195x64xf32>
    %c0_40 = arith.constant 0 : index
    %c0_41 = arith.constant 0 : index
    %35 = vector.load %arg12[%c0_40, %c0_41] : memref<195x64xf32, #tpu.memory_space<vmem>>, vector<195x64xf32>
    tpu.vector_store %arg12[%c0_40, %c0_41], %34 {strides = array<i32>} : memref<195x64xf32, #tpu.memory_space<vmem>>, vector<195x64xf32>,
    %c2_42 = arith.constant 2 : index
    %c0_43 = arith.constant 0 : index
    %36 = vector.load %arg11[%c2_42, %c0_43] : memref<233x64xf32, #tpu.memory_space<vmem>>, vector<195x64xf32>
    %c2_44 = arith.constant 2 : index
    %c0_45 = arith.constant 0 : index
    %c0_46 = arith.constant 0 : index
    %37 = vector.load %arg4[%c2_44, %c0_45, %c0_46] : memref<9x64x64xf32, #tpu.memory_space<vmem>>, vector<1x64x64xf32>
    %38 = vector.shape_cast %37 : vector<1x64x64xf32> to vector<64x64xf32>
    %cst_47 = arith.constant dense<0.000000e+00> : vector<195x64xf32>
    %39 = tpu.matmul %36, %38, %cst_47 {dimension_numbers = #tpu.dot_dimension_numbers<[1], [0], [0], [1], [0, 0, 1, 1], [], []>} : vector<195x64xf32>, vector<64x64xf32>, vector<195x64xf32> -> vector<195x64xf32>
    %c0_48 = arith.constant 0 : index
    %c0_49 = arith.constant 0 : index
    %40 = vector.load %arg12[%c0_48, %c0_49] : memref<195x64xf32, #tpu.memory_space<vmem>>, vector<195x64xf32>
    %41 = arith.addf %40, %39 : vector<195x64xf32>
    %c0_50 = arith.constant 0 : index
    %c0_51 = arith.constant 0 : index
    %42 = vector.load %arg12[%c0_50, %c0_51] : memref<195x64xf32, #tpu.memory_space<vmem>>, vector<195x64xf32>
    tpu.vector_store %arg12[%c0_50, %c0_51], %41 {strides = array<i32>} : memref<195x64xf32, #tpu.memory_space<vmem>>, vector<195x64xf32>,
    %c15 = arith.constant 15 : index
    %c0_52 = arith.constant 0 : index
    %43 = vector.load %arg11[%c15, %c0_52] : memref<233x64xf32, #tpu.memory_space<vmem>>, vector<195x64xf32>
    %c3_53 = arith.constant 3 : index
    %c0_54 = arith.constant 0 : index
    %c0_55 = arith.constant 0 : index
    %44 = vector.load %arg4[%c3_53, %c0_54, %c0_55] : memref<9x64x64xf32, #tpu.memory_space<vmem>>, vector<1x64x64xf32>
    %45 = vector.shape_cast %44 : vector<1x64x64xf32> to vector<64x64xf32>
    %cst_56 = arith.constant dense<0.000000e+00> : vector<195x64xf32>
    %46 = tpu.matmul %43, %45, %cst_56 {dimension_numbers = #tpu.dot_dimension_numbers<[1], [0], [0], [1], [0, 0, 1, 1], [], []>} : vector<195x64xf32>, vector<64x64xf32>, vector<195x64xf32> -> vector<195x64xf32>
    %c0_57 = arith.constant 0 : index
    %c0_58 = arith.constant 0 : index
    %47 = vector.load %arg12[%c0_57, %c0_58] : memref<195x64xf32, #tpu.memory_space<vmem>>, vector<195x64xf32>
    %48 = arith.addf %47, %46 : vector<195x64xf32>
    %c0_59 = arith.constant 0 : index
    %c0_60 = arith.constant 0 : index
    %49 = vector.load %arg12[%c0_59, %c0_60] : memref<195x64xf32, #tpu.memory_space<vmem>>, vector<195x64xf32>
    tpu.vector_store %arg12[%c0_59, %c0_60], %48 {strides = array<i32>} : memref<195x64xf32, #tpu.memory_space<vmem>>, vector<195x64xf32>,
    %c16 = arith.constant 16 : index
    %c0_61 = arith.constant 0 : index
    %50 = vector.load %arg11[%c16, %c0_61] : memref<233x64xf32, #tpu.memory_space<vmem>>, vector<195x64xf32>
    %c4 = arith.constant 4 : index
    %c0_62 = arith.constant 0 : index
    %c0_63 = arith.constant 0 : index
    %51 = vector.load %arg4[%c4, %c0_62, %c0_63] : memref<9x64x64xf32, #tpu.memory_space<vmem>>, vector<1x64x64xf32>
    %52 = vector.shape_cast %51 : vector<1x64x64xf32> to vector<64x64xf32>
    %cst_64 = arith.constant dense<0.000000e+00> : vector<195x64xf32>
    %53 = tpu.matmul %50, %52, %cst_64 {dimension_numbers = #tpu.dot_dimension_numbers<[1], [0], [0], [1], [0, 0, 1, 1], [], []>} : vector<195x64xf32>, vector<64x64xf32>, vector<195x64xf32> -> vector<195x64xf32>
    %c0_65 = arith.constant 0 : index
    %c0_66 = arith.constant 0 : index
    %54 = vector.load %arg12[%c0_65, %c0_66] : memref<195x64xf32, #tpu.memory_space<vmem>>, vector<195x64xf32>
    %55 = arith.addf %54, %53 : vector<195x64xf32>
    %c0_67 = arith.constant 0 : index
    %c0_68 = arith.constant 0 : index
    %56 = vector.load %arg12[%c0_67, %c0_68] : memref<195x64xf32, #tpu.memory_space<vmem>>, vector<195x64xf32>
    tpu.vector_store %arg12[%c0_67, %c0_68], %55 {strides = array<i32>} : memref<195x64xf32, #tpu.memory_space<vmem>>, vector<195x64xf32>,
    %c17 = arith.constant 17 : index
    %c0_69 = arith.constant 0 : index
    %57 = vector.load %arg11[%c17, %c0_69] : memref<233x64xf32, #tpu.memory_space<vmem>>, vector<195x64xf32>
    %c5 = arith.constant 5 : index
    %c0_70 = arith.constant 0 : index
    %c0_71 = arith.constant 0 : index
    %58 = vector.load %arg4[%c5, %c0_70, %c0_71] : memref<9x64x64xf32, #tpu.memory_space<vmem>>, vector<1x64x64xf32>
    %59 = vector.shape_cast %58 : vector<1x64x64xf32> to vector<64x64xf32>
    %cst_72 = arith.constant dense<0.000000e+00> : vector<195x64xf32>
    %60 = tpu.matmul %57, %59, %cst_72 {dimension_numbers = #tpu.dot_dimension_numbers<[1], [0], [0], [1], [0, 0, 1, 1], [], []>} : vector<195x64xf32>, vector<64x64xf32>, vector<195x64xf32> -> vector<195x64xf32>
    %c0_73 = arith.constant 0 : index
    %c0_74 = arith.constant 0 : index
    %61 = vector.load %arg12[%c0_73, %c0_74] : memref<195x64xf32, #tpu.memory_space<vmem>>, vector<195x64xf32>
    %62 = arith.addf %61, %60 : vector<195x64xf32>
    %c0_75 = arith.constant 0 : index
    %c0_76 = arith.constant 0 : index
    %63 = vector.load %arg12[%c0_75, %c0_76] : memref<195x64xf32, #tpu.memory_space<vmem>>, vector<195x64xf32>
    tpu.vector_store %arg12[%c0_75, %c0_76], %62 {strides = array<i32>} : memref<195x64xf32, #tpu.memory_space<vmem>>, vector<195x64xf32>,
    %c30 = arith.constant 30 : index
    %c0_77 = arith.constant 0 : index
    %64 = vector.load %arg11[%c30, %c0_77] : memref<233x64xf32, #tpu.memory_space<vmem>>, vector<195x64xf32>
    %c6 = arith.constant 6 : index
    %c0_78 = arith.constant 0 : index
    %c0_79 = arith.constant 0 : index
    %65 = vector.load %arg4[%c6, %c0_78, %c0_79] : memref<9x64x64xf32, #tpu.memory_space<vmem>>, vector<1x64x64xf32>
    %66 = vector.shape_cast %65 : vector<1x64x64xf32> to vector<64x64xf32>
    %cst_80 = arith.constant dense<0.000000e+00> : vector<195x64xf32>
    %67 = tpu.matmul %64, %66, %cst_80 {dimension_numbers = #tpu.dot_dimension_numbers<[1], [0], [0], [1], [0, 0, 1, 1], [], []>} : vector<195x64xf32>, vector<64x64xf32>, vector<195x64xf32> -> vector<195x64xf32>
    %c0_81 = arith.constant 0 : index
    %c0_82 = arith.constant 0 : index
    %68 = vector.load %arg12[%c0_81, %c0_82] : memref<195x64xf32, #tpu.memory_space<vmem>>, vector<195x64xf32>
    %69 = arith.addf %68, %67 : vector<195x64xf32>
    %c0_83 = arith.constant 0 : index
    %c0_84 = arith.constant 0 : index
    %70 = vector.load %arg12[%c0_83, %c0_84] : memref<195x64xf32, #tpu.memory_space<vmem>>, vector<195x64xf32>
    tpu.vector_store %arg12[%c0_83, %c0_84], %69 {strides = array<i32>} : memref<195x64xf32, #tpu.memory_space<vmem>>, vector<195x64xf32>,
    %c31 = arith.constant 31 : index
    %c0_85 = arith.constant 0 : index
    %71 = vector.load %arg11[%c31, %c0_85] : memref<233x64xf32, #tpu.memory_space<vmem>>, vector<195x64xf32>
    %c7 = arith.constant 7 : index
    %c0_86 = arith.constant 0 : index
    %c0_87 = arith.constant 0 : index
    %72 = vector.load %arg4[%c7, %c0_86, %c0_87] : memref<9x64x64xf32, #tpu.memory_space<vmem>>, vector<1x64x64xf32>
    %73 = vector.shape_cast %72 : vector<1x64x64xf32> to vector<64x64xf32>
    %cst_88 = arith.constant dense<0.000000e+00> : vector<195x64xf32>
    %74 = tpu.matmul %71, %73, %cst_88 {dimension_numbers = #tpu.dot_dimension_numbers<[1], [0], [0], [1], [0, 0, 1, 1], [], []>} : vector<195x64xf32>, vector<64x64xf32>, vector<195x64xf32> -> vector<195x64xf32>
    %c0_89 = arith.constant 0 : index
    %c0_90 = arith.constant 0 : index
    %75 = vector.load %arg12[%c0_89, %c0_90] : memref<195x64xf32, #tpu.memory_space<vmem>>, vector<195x64xf32>
    %76 = arith.addf %75, %74 : vector<195x64xf32>
    %c0_91 = arith.constant 0 : index
    %c0_92 = arith.constant 0 : index
    %77 = vector.load %arg12[%c0_91, %c0_92] : memref<195x64xf32, #tpu.memory_space<vmem>>, vector<195x64xf32>
    tpu.vector_store %arg12[%c0_91, %c0_92], %76 {strides = array<i32>} : memref<195x64xf32, #tpu.memory_space<vmem>>, vector<195x64xf32>,
    %c32 = arith.constant 32 : index
    %c0_93 = arith.constant 0 : index
    %78 = vector.load %arg11[%c32, %c0_93] : memref<233x64xf32, #tpu.memory_space<vmem>>, vector<195x64xf32>
    %c8 = arith.constant 8 : index
    %c0_94 = arith.constant 0 : index
    %c0_95 = arith.constant 0 : index
    %79 = vector.load %arg4[%c8, %c0_94, %c0_95] : memref<9x64x64xf32, #tpu.memory_space<vmem>>, vector<1x64x64xf32>
    %80 = vector.shape_cast %79 : vector<1x64x64xf32> to vector<64x64xf32>
    %cst_96 = arith.constant dense<0.000000e+00> : vector<195x64xf32>
    %81 = tpu.matmul %78, %80, %cst_96 {dimension_numbers = #tpu.dot_dimension_numbers<[1], [0], [0], [1], [0, 0, 1, 1], [], []>} : vector<195x64xf32>, vector<64x64xf32>, vector<195x64xf32> -> vector<195x64xf32>
    %c0_97 = arith.constant 0 : index
    %c0_98 = arith.constant 0 : index
    %82 = vector.load %arg12[%c0_97, %c0_98] : memref<195x64xf32, #tpu.memory_space<vmem>>, vector<195x64xf32>
    %83 = arith.addf %82, %81 : vector<195x64xf32>
    %c0_99 = arith.constant 0 : index
    %c0_100 = arith.constant 0 : index
    %84 = vector.load %arg12[%c0_99, %c0_100] : memref<195x64xf32, #tpu.memory_space<vmem>>, vector<195x64xf32>
    tpu.vector_store %arg12[%c0_99, %c0_100], %83 {strides = array<i32>} : memref<195x64xf32, #tpu.memory_space<vmem>>, vector<195x64xf32>,
    %cst_101 = arith.constant 0.000000e+00 : f32
    %85 = vector.broadcast %cst_101 : f32 to vector<72x64xf32>
    %c0_102 = arith.constant 0 : index
    %c0_103 = arith.constant 0 : index
    %86 = vector.load %arg13[%c0_102, %c0_103] : memref<72x64xf32, #tpu.memory_space<vmem>>, vector<72x64xf32>
    tpu.vector_store %arg13[%c0_102, %c0_103], %85 {strides = array<i32>} : memref<72x64xf32, #tpu.memory_space<vmem>>, vector<72x64xf32>,
    %c0_104 = arith.constant 0 : index
    %c0_105 = arith.constant 0 : index
    %87 = vector.load %arg5[%c0_104, %c0_105] : memref<1x64xf32, #tpu.memory_space<vmem>>, vector<1x64xf32>
    %c0_106 = arith.constant 0 : index
    %c0_107 = arith.constant 0 : index
    %88 = tpu.strided_load %arg12[%c0_106, %c0_107] {strides = array<i32: 2, 1>} : memref<195x64xf32, #tpu.memory_space<vmem>>, vector<6x64xf32>
    %c1_108 = arith.constant 1 : index
    %c0_109 = arith.constant 0 : index
    %89 = tpu.strided_load %arg12[%c1_108, %c0_109] {strides = array<i32: 2, 1>} : memref<195x64xf32, #tpu.memory_space<vmem>>, vector<6x64xf32>
    %90 = arith.maximumf %88, %89 : vector<6x64xf32>
    %c15_110 = arith.constant 15 : index
    %c0_111 = arith.constant 0 : index
    %91 = tpu.strided_load %arg12[%c15_110, %c0_111] {strides = array<i32: 2, 1>} : memref<195x64xf32, #tpu.memory_space<vmem>>, vector<6x64xf32>
    %c16_112 = arith.constant 16 : index
    %c0_113 = arith.constant 0 : index
    %92 = tpu.strided_load %arg12[%c16_112, %c0_113] {strides = array<i32: 2, 1>} : memref<195x64xf32, #tpu.memory_space<vmem>>, vector<6x64xf32>
    %93 = arith.maximumf %91, %92 : vector<6x64xf32>
    %94 = arith.maximumf %90, %93 : vector<6x64xf32>
    %95 = vector.broadcast %87 : vector<1x64xf32> to vector<6x64xf32>
    %96 = arith.addf %94, %95 : vector<6x64xf32>
    %cst_114 = arith.constant 0.000000e+00 : f32
    %97 = vector.broadcast %cst_114 : f32 to vector<6x64xf32>
    %98 = arith.maximumf %96, %97 : vector<6x64xf32>
    %c9 = arith.constant 9 : index
    %c0_115 = arith.constant 0 : index
    %99 = vector.load %arg13[%c9, %c0_115] : memref<72x64xf32, #tpu.memory_space<vmem>>, vector<6x64xf32>
    tpu.vector_store %arg13[%c9, %c0_115], %98 {strides = array<i32>} : memref<72x64xf32, #tpu.memory_space<vmem>>, vector<6x64xf32>,
    %c30_116 = arith.constant 30 : index
    %c0_117 = arith.constant 0 : index
    %100 = tpu.strided_load %arg12[%c30_116, %c0_117] {strides = array<i32: 2, 1>} : memref<195x64xf32, #tpu.memory_space<vmem>>, vector<6x64xf32>
    %c31_118 = arith.constant 31 : index
    %c0_119 = arith.constant 0 : index
    %101 = tpu.strided_load %arg12[%c31_118, %c0_119] {strides = array<i32: 2, 1>} : memref<195x64xf32, #tpu.memory_space<vmem>>, vector<6x64xf32>
    %102 = arith.maximumf %100, %101 : vector<6x64xf32>
    %c45 = arith.constant 45 : index
    %c0_120 = arith.constant 0 : index
    %103 = tpu.strided_load %arg12[%c45, %c0_120] {strides = array<i32: 2, 1>} : memref<195x64xf32, #tpu.memory_space<vmem>>, vector<6x64xf32>
    %c46 = arith.constant 46 : index
    %c0_121 = arith.constant 0 : index
    %104 = tpu.strided_load %arg12[%c46, %c0_121] {strides = array<i32: 2, 1>} : memref<195x64xf32, #tpu.memory_space<vmem>>, vector<6x64xf32>
    %105 = arith.maximumf %103, %104 : vector<6x64xf32>
    %106 = arith.maximumf %102, %105 : vector<6x64xf32>
    %107 = vector.broadcast %87 : vector<1x64xf32> to vector<6x64xf32>
    %108 = arith.addf %106, %107 : vector<6x64xf32>
    %cst_122 = arith.constant 0.000000e+00 : f32
    %109 = vector.broadcast %cst_122 : f32 to vector<6x64xf32>
    %110 = arith.maximumf %108, %109 : vector<6x64xf32>
    %c17_123 = arith.constant 17 : index
    %c0_124 = arith.constant 0 : index
    %111 = vector.load %arg13[%c17_123, %c0_124] : memref<72x64xf32, #tpu.memory_space<vmem>>, vector<6x64xf32>
    tpu.vector_store %arg13[%c17_123, %c0_124], %110 {strides = array<i32>} : memref<72x64xf32, #tpu.memory_space<vmem>>, vector<6x64xf32>,
    %c60 = arith.constant 60 : index
    %c0_125 = arith.constant 0 : index
    %112 = tpu.strided_load %arg12[%c60, %c0_125] {strides = array<i32: 2, 1>} : memref<195x64xf32, #tpu.memory_space<vmem>>, vector<6x64xf32>
    %c61 = arith.constant 61 : index
    %c0_126 = arith.constant 0 : index
    %113 = tpu.strided_load %arg12[%c61, %c0_126] {strides = array<i32: 2, 1>} : memref<195x64xf32, #tpu.memory_space<vmem>>, vector<6x64xf32>
    %114 = arith.maximumf %112, %113 : vector<6x64xf32>
    %c75 = arith.constant 75 : index
    %c0_127 = arith.constant 0 : index
    %115 = tpu.strided_load %arg12[%c75, %c0_127] {strides = array<i32: 2, 1>} : memref<195x64xf32, #tpu.memory_space<vmem>>, vector<6x64xf32>
    %c76 = arith.constant 76 : index
    %c0_128 = arith.constant 0 : index
    %116 = tpu.strided_load %arg12[%c76, %c0_128] {strides = array<i32: 2, 1>} : memref<195x64xf32, #tpu.memory_space<vmem>>, vector<6x64xf32>
    %117 = arith.maximumf %115, %116 : vector<6x64xf32>
    %118 = arith.maximumf %114, %117 : vector<6x64xf32>
    %119 = vector.broadcast %87 : vector<1x64xf32> to vector<6x64xf32>
    %120 = arith.addf %118, %119 : vector<6x64xf32>
    %cst_129 = arith.constant 0.000000e+00 : f32
    %121 = vector.broadcast %cst_129 : f32 to vector<6x64xf32>
    %122 = arith.maximumf %120, %121 : vector<6x64xf32>
    %c25 = arith.constant 25 : index
    %c0_130 = arith.constant 0 : index
    %123 = vector.load %arg13[%c25, %c0_130] : memref<72x64xf32, #tpu.memory_space<vmem>>, vector<6x64xf32>
    tpu.vector_store %arg13[%c25, %c0_130], %122 {strides = array<i32>} : memref<72x64xf32, #tpu.memory_space<vmem>>, vector<6x64xf32>,
    %c90 = arith.constant 90 : index
    %c0_131 = arith.constant 0 : index
    %124 = tpu.strided_load %arg12[%c90, %c0_131] {strides = array<i32: 2, 1>} : memref<195x64xf32, #tpu.memory_space<vmem>>, vector<6x64xf32>
    %c91 = arith.constant 91 : index
    %c0_132 = arith.constant 0 : index
    %125 = tpu.strided_load %arg12[%c91, %c0_132] {strides = array<i32: 2, 1>} : memref<195x64xf32, #tpu.memory_space<vmem>>, vector<6x64xf32>
    %126 = arith.maximumf %124, %125 : vector<6x64xf32>
    %c105 = arith.constant 105 : index
    %c0_133 = arith.constant 0 : index
    %127 = tpu.strided_load %arg12[%c105, %c0_133] {strides = array<i32: 2, 1>} : memref<195x64xf32, #tpu.memory_space<vmem>>, vector<6x64xf32>
    %c106 = arith.constant 106 : index
    %c0_134 = arith.constant 0 : index
    %128 = tpu.strided_load %arg12[%c106, %c0_134] {strides = array<i32: 2, 1>} : memref<195x64xf32, #tpu.memory_space<vmem>>, vector<6x64xf32>
    %129 = arith.maximumf %127, %128 : vector<6x64xf32>
    %130 = arith.maximumf %126, %129 : vector<6x64xf32>
    %131 = vector.broadcast %87 : vector<1x64xf32> to vector<6x64xf32>
    %132 = arith.addf %130, %131 : vector<6x64xf32>
    %cst_135 = arith.constant 0.000000e+00 : f32
    %133 = vector.broadcast %cst_135 : f32 to vector<6x64xf32>
    %134 = arith.maximumf %132, %133 : vector<6x64xf32>
    %c33 = arith.constant 33 : index
    %c0_136 = arith.constant 0 : index
    %135 = vector.load %arg13[%c33, %c0_136] : memref<72x64xf32, #tpu.memory_space<vmem>>, vector<6x64xf32>
    tpu.vector_store %arg13[%c33, %c0_136], %134 {strides = array<i32>} : memref<72x64xf32, #tpu.memory_space<vmem>>, vector<6x64xf32>,
    %c120 = arith.constant 120 : index
    %c0_137 = arith.constant 0 : index
    %136 = tpu.strided_load %arg12[%c120, %c0_137] {strides = array<i32: 2, 1>} : memref<195x64xf32, #tpu.memory_space<vmem>>, vector<6x64xf32>
    %c121 = arith.constant 121 : index
    %c0_138 = arith.constant 0 : index
    %137 = tpu.strided_load %arg12[%c121, %c0_138] {strides = array<i32: 2, 1>} : memref<195x64xf32, #tpu.memory_space<vmem>>, vector<6x64xf32>
    %138 = arith.maximumf %136, %137 : vector<6x64xf32>
    %c135 = arith.constant 135 : index
    %c0_139 = arith.constant 0 : index
    %139 = tpu.strided_load %arg12[%c135, %c0_139] {strides = array<i32: 2, 1>} : memref<195x64xf32, #tpu.memory_space<vmem>>, vector<6x64xf32>
    %c136 = arith.constant 136 : index
    %c0_140 = arith.constant 0 : index
    %140 = tpu.strided_load %arg12[%c136, %c0_140] {strides = array<i32: 2, 1>} : memref<195x64xf32, #tpu.memory_space<vmem>>, vector<6x64xf32>
    %141 = arith.maximumf %139, %140 : vector<6x64xf32>
    %142 = arith.maximumf %138, %141 : vector<6x64xf32>
    %143 = vector.broadcast %87 : vector<1x64xf32> to vector<6x64xf32>
    %144 = arith.addf %142, %143 : vector<6x64xf32>
    %cst_141 = arith.constant 0.000000e+00 : f32
    %145 = vector.broadcast %cst_141 : f32 to vector<6x64xf32>
    %146 = arith.maximumf %144, %145 : vector<6x64xf32>
    %c41 = arith.constant 41 : index
    %c0_142 = arith.constant 0 : index
    %147 = vector.load %arg13[%c41, %c0_142] : memref<72x64xf32, #tpu.memory_space<vmem>>, vector<6x64xf32>
    tpu.vector_store %arg13[%c41, %c0_142], %146 {strides = array<i32>} : memref<72x64xf32, #tpu.memory_space<vmem>>, vector<6x64xf32>,
    %c150 = arith.constant 150 : index
    %c0_143 = arith.constant 0 : index
    %148 = tpu.strided_load %arg12[%c150, %c0_143] {strides = array<i32: 2, 1>} : memref<195x64xf32, #tpu.memory_space<vmem>>, vector<6x64xf32>
    %c151 = arith.constant 151 : index
    %c0_144 = arith.constant 0 : index
    %149 = tpu.strided_load %arg12[%c151, %c0_144] {strides = array<i32: 2, 1>} : memref<195x64xf32, #tpu.memory_space<vmem>>, vector<6x64xf32>
    %150 = arith.maximumf %148, %149 : vector<6x64xf32>
    %c165 = arith.constant 165 : index
    %c0_145 = arith.constant 0 : index
    %151 = tpu.strided_load %arg12[%c165, %c0_145] {strides = array<i32: 2, 1>} : memref<195x64xf32, #tpu.memory_space<vmem>>, vector<6x64xf32>
    %c166 = arith.constant 166 : index
    %c0_146 = arith.constant 0 : index
    %152 = tpu.strided_load %arg12[%c166, %c0_146] {strides = array<i32: 2, 1>} : memref<195x64xf32, #tpu.memory_space<vmem>>, vector<6x64xf32>
    %153 = arith.maximumf %151, %152 : vector<6x64xf32>
    %154 = arith.maximumf %150, %153 : vector<6x64xf32>
    %155 = vector.broadcast %87 : vector<1x64xf32> to vector<6x64xf32>
    %156 = arith.addf %154, %155 : vector<6x64xf32>
    %cst_147 = arith.constant 0.000000e+00 : f32
    %157 = vector.broadcast %cst_147 : f32 to vector<6x64xf32>
    %158 = arith.maximumf %156, %157 : vector<6x64xf32>
    %c49 = arith.constant 49 : index
    %c0_148 = arith.constant 0 : index
    %159 = vector.load %arg13[%c49, %c0_148] : memref<72x64xf32, #tpu.memory_space<vmem>>, vector<6x64xf32>
    tpu.vector_store %arg13[%c49, %c0_148], %158 {strides = array<i32>} : memref<72x64xf32, #tpu.memory_space<vmem>>, vector<6x64xf32>,
    %c0_149 = arith.constant 0 : index
    %c0_150 = arith.constant 0 : index
    %160 = vector.load %arg13[%c0_149, %c0_150] : memref<72x64xf32, #tpu.memory_space<vmem>>, vector<48x64xf32>
    %c0_151 = arith.constant 0 : index
    %c0_152 = arith.constant 0 : index
    %c0_153 = arith.constant 0 : index
    %161 = vector.load %arg6[%c0_151, %c0_152, %c0_153] : memref<9x64x64xf32, #tpu.memory_space<vmem>>, vector<1x64x64xf32>
    %162 = vector.shape_cast %161 : vector<1x64x64xf32> to vector<64x64xf32>
    %cst_154 = arith.constant dense<0.000000e+00> : vector<48x64xf32>
    %163 = tpu.matmul %160, %162, %cst_154 {dimension_numbers = #tpu.dot_dimension_numbers<[1], [0], [0], [1], [0, 0, 1, 1], [], []>} : vector<48x64xf32>, vector<64x64xf32>, vector<48x64xf32> -> vector<48x64xf32>
    %c1_155 = arith.constant 1 : index
    %c0_156 = arith.constant 0 : index
    %164 = vector.load %arg13[%c1_155, %c0_156] : memref<72x64xf32, #tpu.memory_space<vmem>>, vector<48x64xf32>
    %c1_157 = arith.constant 1 : index
    %c0_158 = arith.constant 0 : index
    %c0_159 = arith.constant 0 : index
    %165 = vector.load %arg6[%c1_157, %c0_158, %c0_159] : memref<9x64x64xf32, #tpu.memory_space<vmem>>, vector<1x64x64xf32>
    %166 = vector.shape_cast %165 : vector<1x64x64xf32> to vector<64x64xf32>
    %cst_160 = arith.constant dense<0.000000e+00> : vector<48x64xf32>
    %167 = tpu.matmul %164, %166, %cst_160 {dimension_numbers = #tpu.dot_dimension_numbers<[1], [0], [0], [1], [0, 0, 1, 1], [], []>} : vector<48x64xf32>, vector<64x64xf32>, vector<48x64xf32> -> vector<48x64xf32>
    %168 = arith.addf %163, %167 : vector<48x64xf32>
    %c2_161 = arith.constant 2 : index
    %c0_162 = arith.constant 0 : index
    %169 = vector.load %arg13[%c2_161, %c0_162] : memref<72x64xf32, #tpu.memory_space<vmem>>, vector<48x64xf32>
    %c2_163 = arith.constant 2 : index
    %c0_164 = arith.constant 0 : index
    %c0_165 = arith.constant 0 : index
    %170 = vector.load %arg6[%c2_163, %c0_164, %c0_165] : memref<9x64x64xf32, #tpu.memory_space<vmem>>, vector<1x64x64xf32>
    %171 = vector.shape_cast %170 : vector<1x64x64xf32> to vector<64x64xf32>
    %cst_166 = arith.constant dense<0.000000e+00> : vector<48x64xf32>
    %172 = tpu.matmul %169, %171, %cst_166 {dimension_numbers = #tpu.dot_dimension_numbers<[1], [0], [0], [1], [0, 0, 1, 1], [], []>} : vector<48x64xf32>, vector<64x64xf32>, vector<48x64xf32> -> vector<48x64xf32>
    %173 = arith.addf %168, %172 : vector<48x64xf32>
    %c8_167 = arith.constant 8 : index
    %c0_168 = arith.constant 0 : index
    %174 = vector.load %arg13[%c8_167, %c0_168] : memref<72x64xf32, #tpu.memory_space<vmem>>, vector<48x64xf32>
    %c3_169 = arith.constant 3 : index
    %c0_170 = arith.constant 0 : index
    %c0_171 = arith.constant 0 : index
    %175 = vector.load %arg6[%c3_169, %c0_170, %c0_171] : memref<9x64x64xf32, #tpu.memory_space<vmem>>, vector<1x64x64xf32>
    %176 = vector.shape_cast %175 : vector<1x64x64xf32> to vector<64x64xf32>
    %cst_172 = arith.constant dense<0.000000e+00> : vector<48x64xf32>
    %177 = tpu.matmul %174, %176, %cst_172 {dimension_numbers = #tpu.dot_dimension_numbers<[1], [0], [0], [1], [0, 0, 1, 1], [], []>} : vector<48x64xf32>, vector<64x64xf32>, vector<48x64xf32> -> vector<48x64xf32>
    %178 = arith.addf %173, %177 : vector<48x64xf32>
    %c9_173 = arith.constant 9 : index
    %c0_174 = arith.constant 0 : index
    %179 = vector.load %arg13[%c9_173, %c0_174] : memref<72x64xf32, #tpu.memory_space<vmem>>, vector<48x64xf32>
    %c4_175 = arith.constant 4 : index
    %c0_176 = arith.constant 0 : index
    %c0_177 = arith.constant 0 : index
    %180 = vector.load %arg6[%c4_175, %c0_176, %c0_177] : memref<9x64x64xf32, #tpu.memory_space<vmem>>, vector<1x64x64xf32>
    %181 = vector.shape_cast %180 : vector<1x64x64xf32> to vector<64x64xf32>
    %cst_178 = arith.constant dense<0.000000e+00> : vector<48x64xf32>
    %182 = tpu.matmul %179, %181, %cst_178 {dimension_numbers = #tpu.dot_dimension_numbers<[1], [0], [0], [1], [0, 0, 1, 1], [], []>} : vector<48x64xf32>, vector<64x64xf32>, vector<48x64xf32> -> vector<48x64xf32>
    %183 = arith.addf %178, %182 : vector<48x64xf32>
    %c10 = arith.constant 10 : index
    %c0_179 = arith.constant 0 : index
    %184 = vector.load %arg13[%c10, %c0_179] : memref<72x64xf32, #tpu.memory_space<vmem>>, vector<48x64xf32>
    %c5_180 = arith.constant 5 : index
    %c0_181 = arith.constant 0 : index
    %c0_182 = arith.constant 0 : index
    %185 = vector.load %arg6[%c5_180, %c0_181, %c0_182] : memref<9x64x64xf32, #tpu.memory_space<vmem>>, vector<1x64x64xf32>
    %186 = vector.shape_cast %185 : vector<1x64x64xf32> to vector<64x64xf32>
    %cst_183 = arith.constant dense<0.000000e+00> : vector<48x64xf32>
    %187 = tpu.matmul %184, %186, %cst_183 {dimension_numbers = #tpu.dot_dimension_numbers<[1], [0], [0], [1], [0, 0, 1, 1], [], []>} : vector<48x64xf32>, vector<64x64xf32>, vector<48x64xf32> -> vector<48x64xf32>
    %188 = arith.addf %183, %187 : vector<48x64xf32>
    %c16_184 = arith.constant 16 : index
    %c0_185 = arith.constant 0 : index
    %189 = vector.load %arg13[%c16_184, %c0_185] : memref<72x64xf32, #tpu.memory_space<vmem>>, vector<48x64xf32>
    %c6_186 = arith.constant 6 : index
    %c0_187 = arith.constant 0 : index
    %c0_188 = arith.constant 0 : index
    %190 = vector.load %arg6[%c6_186, %c0_187, %c0_188] : memref<9x64x64xf32, #tpu.memory_space<vmem>>, vector<1x64x64xf32>
    %191 = vector.shape_cast %190 : vector<1x64x64xf32> to vector<64x64xf32>
    %cst_189 = arith.constant dense<0.000000e+00> : vector<48x64xf32>
    %192 = tpu.matmul %189, %191, %cst_189 {dimension_numbers = #tpu.dot_dimension_numbers<[1], [0], [0], [1], [0, 0, 1, 1], [], []>} : vector<48x64xf32>, vector<64x64xf32>, vector<48x64xf32> -> vector<48x64xf32>
    %193 = arith.addf %188, %192 : vector<48x64xf32>
    %c17_190 = arith.constant 17 : index
    %c0_191 = arith.constant 0 : index
    %194 = vector.load %arg13[%c17_190, %c0_191] : memref<72x64xf32, #tpu.memory_space<vmem>>, vector<48x64xf32>
    %c7_192 = arith.constant 7 : index
    %c0_193 = arith.constant 0 : index
    %c0_194 = arith.constant 0 : index
    %195 = vector.load %arg6[%c7_192, %c0_193, %c0_194] : memref<9x64x64xf32, #tpu.memory_space<vmem>>, vector<1x64x64xf32>
    %196 = vector.shape_cast %195 : vector<1x64x64xf32> to vector<64x64xf32>
    %cst_195 = arith.constant dense<0.000000e+00> : vector<48x64xf32>
    %197 = tpu.matmul %194, %196, %cst_195 {dimension_numbers = #tpu.dot_dimension_numbers<[1], [0], [0], [1], [0, 0, 1, 1], [], []>} : vector<48x64xf32>, vector<64x64xf32>, vector<48x64xf32> -> vector<48x64xf32>
    %198 = arith.addf %193, %197 : vector<48x64xf32>
    %c18 = arith.constant 18 : index
    %c0_196 = arith.constant 0 : index
    %199 = vector.load %arg13[%c18, %c0_196] : memref<72x64xf32, #tpu.memory_space<vmem>>, vector<48x64xf32>
    %c8_197 = arith.constant 8 : index
    %c0_198 = arith.constant 0 : index
    %c0_199 = arith.constant 0 : index
    %200 = vector.load %arg6[%c8_197, %c0_198, %c0_199] : memref<9x64x64xf32, #tpu.memory_space<vmem>>, vector<1x64x64xf32>
    %201 = vector.shape_cast %200 : vector<1x64x64xf32> to vector<64x64xf32>
    %cst_200 = arith.constant dense<0.000000e+00> : vector<48x64xf32>
    %202 = tpu.matmul %199, %201, %cst_200 {dimension_numbers = #tpu.dot_dimension_numbers<[1], [0], [0], [1], [0, 0, 1, 1], [], []>} : vector<48x64xf32>, vector<64x64xf32>, vector<48x64xf32> -> vector<48x64xf32>
    %203 = arith.addf %198, %202 : vector<48x64xf32>
    %c0_201 = arith.constant 0 : index
    %c0_202 = arith.constant 0 : index
    %204 = vector.load %arg7[%c0_201, %c0_202] : memref<1x64xf32, #tpu.memory_space<vmem>>, vector<1x64xf32>
    %205 = vector.broadcast %204 : vector<1x64xf32> to vector<48x64xf32>
    %206 = arith.addf %203, %205 : vector<48x64xf32>
    %cst_203 = arith.constant 0.000000e+00 : f32
    %207 = vector.broadcast %cst_203 : f32 to vector<48x64xf32>
    %208 = arith.maximumf %206, %207 : vector<48x64xf32>
    %cst_204 = arith.constant 0.000000e+00 : f32
    %209 = vector.broadcast %cst_204 : f32 to vector<72x64xf32>
    %c0_205 = arith.constant 0 : index
    %c0_206 = arith.constant 0 : index
    %210 = vector.load %arg14[%c0_205, %c0_206] : memref<72x64xf32, #tpu.memory_space<vmem>>, vector<72x64xf32>
    tpu.vector_store %arg14[%c0_205, %c0_206], %209 {strides = array<i32>} : memref<72x64xf32, #tpu.memory_space<vmem>>, vector<72x64xf32>,
    %211 = vector.extract_strided_slice %208 {offsets = [0, 0], sizes = [6, 64], strides = [1, 1]} : vector<48x64xf32> to vector<6x64xf32>
    %c9_207 = arith.constant 9 : index
    %c0_208 = arith.constant 0 : index
    %212 = vector.load %arg14[%c9_207, %c0_208] : memref<72x64xf32, #tpu.memory_space<vmem>>, vector<6x64xf32>
    tpu.vector_store %arg14[%c9_207, %c0_208], %211 {strides = array<i32>} : memref<72x64xf32, #tpu.memory_space<vmem>>, vector<6x64xf32>,
    %213 = vector.extract_strided_slice %208 {offsets = [8, 0], sizes = [6, 64], strides = [1, 1]} : vector<48x64xf32> to vector<6x64xf32>
    %c17_209 = arith.constant 17 : index
    %c0_210 = arith.constant 0 : index
    %214 = vector.load %arg14[%c17_209, %c0_210] : memref<72x64xf32, #tpu.memory_space<vmem>>, vector<6x64xf32>
    tpu.vector_store %arg14[%c17_209, %c0_210], %213 {strides = array<i32>} : memref<72x64xf32, #tpu.memory_space<vmem>>, vector<6x64xf32>,
    %215 = vector.extract_strided_slice %208 {offsets = [16, 0], sizes = [6, 64], strides = [1, 1]} : vector<48x64xf32> to vector<6x64xf32>
    %c25_211 = arith.constant 25 : index
    %c0_212 = arith.constant 0 : index
    %216 = vector.load %arg14[%c25_211, %c0_212] : memref<72x64xf32, #tpu.memory_space<vmem>>, vector<6x64xf32>
    tpu.vector_store %arg14[%c25_211, %c0_212], %215 {strides = array<i32>} : memref<72x64xf32, #tpu.memory_space<vmem>>, vector<6x64xf32>,
    %217 = vector.extract_strided_slice %208 {offsets = [24, 0], sizes = [6, 64], strides = [1, 1]} : vector<48x64xf32> to vector<6x64xf32>
    %c33_213 = arith.constant 33 : index
    %c0_214 = arith.constant 0 : index
    %218 = vector.load %arg14[%c33_213, %c0_214] : memref<72x64xf32, #tpu.memory_space<vmem>>, vector<6x64xf32>
    tpu.vector_store %arg14[%c33_213, %c0_214], %217 {strides = array<i32>} : memref<72x64xf32, #tpu.memory_space<vmem>>, vector<6x64xf32>,
    %219 = vector.extract_strided_slice %208 {offsets = [32, 0], sizes = [6, 64], strides = [1, 1]} : vector<48x64xf32> to vector<6x64xf32>
    %c41_215 = arith.constant 41 : index
    %c0_216 = arith.constant 0 : index
    %220 = vector.load %arg14[%c41_215, %c0_216] : memref<72x64xf32, #tpu.memory_space<vmem>>, vector<6x64xf32>
    tpu.vector_store %arg14[%c41_215, %c0_216], %219 {strides = array<i32>} : memref<72x64xf32, #tpu.memory_space<vmem>>, vector<6x64xf32>,
    %221 = vector.extract_strided_slice %208 {offsets = [40, 0], sizes = [6, 64], strides = [1, 1]} : vector<48x64xf32> to vector<6x64xf32>
    %c49_217 = arith.constant 49 : index
    %c0_218 = arith.constant 0 : index
    %222 = vector.load %arg14[%c49_217, %c0_218] : memref<72x64xf32, #tpu.memory_space<vmem>>, vector<6x64xf32>
    tpu.vector_store %arg14[%c49_217, %c0_218], %221 {strides = array<i32>} : memref<72x64xf32, #tpu.memory_space<vmem>>, vector<6x64xf32>,
    %c0_219 = arith.constant 0 : index
    %c0_220 = arith.constant 0 : index
    %223 = vector.load %arg14[%c0_219, %c0_220] : memref<72x64xf32, #tpu.memory_space<vmem>>, vector<48x64xf32>
    %c0_221 = arith.constant 0 : index
    %c0_222 = arith.constant 0 : index
    %c0_223 = arith.constant 0 : index
    %224 = vector.load %arg8[%c0_221, %c0_222, %c0_223] : memref<9x64x64xf32, #tpu.memory_space<vmem>>, vector<1x64x64xf32>
    %225 = vector.shape_cast %224 : vector<1x64x64xf32> to vector<64x64xf32>
    %cst_224 = arith.constant dense<0.000000e+00> : vector<48x64xf32>
    %226 = tpu.matmul %223, %225, %cst_224 {dimension_numbers = #tpu.dot_dimension_numbers<[1], [0], [0], [1], [0, 0, 1, 1], [], []>} : vector<48x64xf32>, vector<64x64xf32>, vector<48x64xf32> -> vector<48x64xf32>
    %c1_225 = arith.constant 1 : index
    %c0_226 = arith.constant 0 : index
    %227 = vector.load %arg14[%c1_225, %c0_226] : memref<72x64xf32, #tpu.memory_space<vmem>>, vector<48x64xf32>
    %c1_227 = arith.constant 1 : index
    %c0_228 = arith.constant 0 : index
    %c0_229 = arith.constant 0 : index
    %228 = vector.load %arg8[%c1_227, %c0_228, %c0_229] : memref<9x64x64xf32, #tpu.memory_space<vmem>>, vector<1x64x64xf32>
    %229 = vector.shape_cast %228 : vector<1x64x64xf32> to vector<64x64xf32>
    %cst_230 = arith.constant dense<0.000000e+00> : vector<48x64xf32>
    %230 = tpu.matmul %227, %229, %cst_230 {dimension_numbers = #tpu.dot_dimension_numbers<[1], [0], [0], [1], [0, 0, 1, 1], [], []>} : vector<48x64xf32>, vector<64x64xf32>, vector<48x64xf32> -> vector<48x64xf32>
    %231 = arith.addf %226, %230 : vector<48x64xf32>
    %c2_231 = arith.constant 2 : index
    %c0_232 = arith.constant 0 : index
    %232 = vector.load %arg14[%c2_231, %c0_232] : memref<72x64xf32, #tpu.memory_space<vmem>>, vector<48x64xf32>
    %c2_233 = arith.constant 2 : index
    %c0_234 = arith.constant 0 : index
    %c0_235 = arith.constant 0 : index
    %233 = vector.load %arg8[%c2_233, %c0_234, %c0_235] : memref<9x64x64xf32, #tpu.memory_space<vmem>>, vector<1x64x64xf32>
    %234 = vector.shape_cast %233 : vector<1x64x64xf32> to vector<64x64xf32>
    %cst_236 = arith.constant dense<0.000000e+00> : vector<48x64xf32>
    %235 = tpu.matmul %232, %234, %cst_236 {dimension_numbers = #tpu.dot_dimension_numbers<[1], [0], [0], [1], [0, 0, 1, 1], [], []>} : vector<48x64xf32>, vector<64x64xf32>, vector<48x64xf32> -> vector<48x64xf32>
    %236 = arith.addf %231, %235 : vector<48x64xf32>
    %c8_237 = arith.constant 8 : index
    %c0_238 = arith.constant 0 : index
    %237 = vector.load %arg14[%c8_237, %c0_238] : memref<72x64xf32, #tpu.memory_space<vmem>>, vector<48x64xf32>
    %c3_239 = arith.constant 3 : index
    %c0_240 = arith.constant 0 : index
    %c0_241 = arith.constant 0 : index
    %238 = vector.load %arg8[%c3_239, %c0_240, %c0_241] : memref<9x64x64xf32, #tpu.memory_space<vmem>>, vector<1x64x64xf32>
    %239 = vector.shape_cast %238 : vector<1x64x64xf32> to vector<64x64xf32>
    %cst_242 = arith.constant dense<0.000000e+00> : vector<48x64xf32>
    %240 = tpu.matmul %237, %239, %cst_242 {dimension_numbers = #tpu.dot_dimension_numbers<[1], [0], [0], [1], [0, 0, 1, 1], [], []>} : vector<48x64xf32>, vector<64x64xf32>, vector<48x64xf32> -> vector<48x64xf32>
    %241 = arith.addf %236, %240 : vector<48x64xf32>
    %c9_243 = arith.constant 9 : index
    %c0_244 = arith.constant 0 : index
    %242 = vector.load %arg14[%c9_243, %c0_244] : memref<72x64xf32, #tpu.memory_space<vmem>>, vector<48x64xf32>
    %c4_245 = arith.constant 4 : index
    %c0_246 = arith.constant 0 : index
    %c0_247 = arith.constant 0 : index
    %243 = vector.load %arg8[%c4_245, %c0_246, %c0_247] : memref<9x64x64xf32, #tpu.memory_space<vmem>>, vector<1x64x64xf32>
    %244 = vector.shape_cast %243 : vector<1x64x64xf32> to vector<64x64xf32>
    %cst_248 = arith.constant dense<0.000000e+00> : vector<48x64xf32>
    %245 = tpu.matmul %242, %244, %cst_248 {dimension_numbers = #tpu.dot_dimension_numbers<[1], [0], [0], [1], [0, 0, 1, 1], [], []>} : vector<48x64xf32>, vector<64x64xf32>, vector<48x64xf32> -> vector<48x64xf32>
    %246 = arith.addf %241, %245 : vector<48x64xf32>
    %c10_249 = arith.constant 10 : index
    %c0_250 = arith.constant 0 : index
    %247 = vector.load %arg14[%c10_249, %c0_250] : memref<72x64xf32, #tpu.memory_space<vmem>>, vector<48x64xf32>
    %c5_251 = arith.constant 5 : index
    %c0_252 = arith.constant 0 : index
    %c0_253 = arith.constant 0 : index
    %248 = vector.load %arg8[%c5_251, %c0_252, %c0_253] : memref<9x64x64xf32, #tpu.memory_space<vmem>>, vector<1x64x64xf32>
    %249 = vector.shape_cast %248 : vector<1x64x64xf32> to vector<64x64xf32>
    %cst_254 = arith.constant dense<0.000000e+00> : vector<48x64xf32>
    %250 = tpu.matmul %247, %249, %cst_254 {dimension_numbers = #tpu.dot_dimension_numbers<[1], [0], [0], [1], [0, 0, 1, 1], [], []>} : vector<48x64xf32>, vector<64x64xf32>, vector<48x64xf32> -> vector<48x64xf32>
    %251 = arith.addf %246, %250 : vector<48x64xf32>
    %c16_255 = arith.constant 16 : index
    %c0_256 = arith.constant 0 : index
    %252 = vector.load %arg14[%c16_255, %c0_256] : memref<72x64xf32, #tpu.memory_space<vmem>>, vector<48x64xf32>
    %c6_257 = arith.constant 6 : index
    %c0_258 = arith.constant 0 : index
    %c0_259 = arith.constant 0 : index
    %253 = vector.load %arg8[%c6_257, %c0_258, %c0_259] : memref<9x64x64xf32, #tpu.memory_space<vmem>>, vector<1x64x64xf32>
    %254 = vector.shape_cast %253 : vector<1x64x64xf32> to vector<64x64xf32>
    %cst_260 = arith.constant dense<0.000000e+00> : vector<48x64xf32>
    %255 = tpu.matmul %252, %254, %cst_260 {dimension_numbers = #tpu.dot_dimension_numbers<[1], [0], [0], [1], [0, 0, 1, 1], [], []>} : vector<48x64xf32>, vector<64x64xf32>, vector<48x64xf32> -> vector<48x64xf32>
    %256 = arith.addf %251, %255 : vector<48x64xf32>
    %c17_261 = arith.constant 17 : index
    %c0_262 = arith.constant 0 : index
    %257 = vector.load %arg14[%c17_261, %c0_262] : memref<72x64xf32, #tpu.memory_space<vmem>>, vector<48x64xf32>
    %c7_263 = arith.constant 7 : index
    %c0_264 = arith.constant 0 : index
    %c0_265 = arith.constant 0 : index
    %258 = vector.load %arg8[%c7_263, %c0_264, %c0_265] : memref<9x64x64xf32, #tpu.memory_space<vmem>>, vector<1x64x64xf32>
    %259 = vector.shape_cast %258 : vector<1x64x64xf32> to vector<64x64xf32>
    %cst_266 = arith.constant dense<0.000000e+00> : vector<48x64xf32>
    %260 = tpu.matmul %257, %259, %cst_266 {dimension_numbers = #tpu.dot_dimension_numbers<[1], [0], [0], [1], [0, 0, 1, 1], [], []>} : vector<48x64xf32>, vector<64x64xf32>, vector<48x64xf32> -> vector<48x64xf32>
    %261 = arith.addf %256, %260 : vector<48x64xf32>
    %c18_267 = arith.constant 18 : index
    %c0_268 = arith.constant 0 : index
    %262 = vector.load %arg14[%c18_267, %c0_268] : memref<72x64xf32, #tpu.memory_space<vmem>>, vector<48x64xf32>
    %c8_269 = arith.constant 8 : index
    %c0_270 = arith.constant 0 : index
    %c0_271 = arith.constant 0 : index
    %263 = vector.load %arg8[%c8_269, %c0_270, %c0_271] : memref<9x64x64xf32, #tpu.memory_space<vmem>>, vector<1x64x64xf32>
    %264 = vector.shape_cast %263 : vector<1x64x64xf32> to vector<64x64xf32>
    %cst_272 = arith.constant dense<0.000000e+00> : vector<48x64xf32>
    %265 = tpu.matmul %262, %264, %cst_272 {dimension_numbers = #tpu.dot_dimension_numbers<[1], [0], [0], [1], [0, 0, 1, 1], [], []>} : vector<48x64xf32>, vector<64x64xf32>, vector<48x64xf32> -> vector<48x64xf32>
    %266 = arith.addf %261, %265 : vector<48x64xf32>
    %c0_273 = arith.constant 0 : index
    %c0_274 = arith.constant 0 : index
    %267 = vector.load %arg9[%c0_273, %c0_274] : memref<1x64xf32, #tpu.memory_space<vmem>>, vector<1x64xf32>
    %268 = vector.broadcast %267 : vector<1x64xf32> to vector<48x64xf32>
    %269 = arith.addf %266, %268 : vector<48x64xf32>
    %cst_275 = arith.constant 0.000000e+00 : f32
    %270 = vector.broadcast %cst_275 : f32 to vector<48x64xf32>
    %271 = arith.maximumf %269, %270 : vector<48x64xf32>
    %c0_276 = arith.constant 0 : index
    %c0_277 = arith.constant 0 : index
    %c0_278 = arith.constant 0 : index
    %272 = vector.load %arg10[%c0_276, %c0_277, %c0_278] : memref<1x48x64xf32, #tpu.memory_space<vmem>>, vector<1x48x64xf32>
    %273 = vector.shape_cast %272 : vector<1x48x64xf32> to vector<48x64xf32>
    %274 = vector.shape_cast %271 : vector<48x64xf32> to vector<1x48x64xf32>
    tpu.vector_store %arg10[%c0_276, %c0_277, %c0_278], %274 {strides = array<i32>} : memref<1x48x64xf32, #tpu.memory_space<vmem>>, vector<1x48x64xf32>,
    return
  }
  func.func @transform_0(%arg0: i32) -> (i32, i32, i32, i32) {
    %c0_i32 = arith.constant 0 : i32
    %c0_i32_0 = arith.constant 0 : i32
    %c0_i32_1 = arith.constant 0 : i32
    %c0_i32_2 = arith.constant 0 : i32
    return %arg0, %c0_i32, %c0_i32_0, %c0_i32_1 : i32, i32, i32, i32
  }
  func.func @transform_1(%arg0: i32) -> (i32, i32) {
    %c0_i32 = arith.constant 0 : i32
    %c0_i32_0 = arith.constant 0 : i32
    %c0_i32_1 = arith.constant 0 : i32
    return %c0_i32, %c0_i32_0 : i32, i32
  }
  func.func @transform_2(%arg0: i32) -> (i32, i32) {
    %c0_i32 = arith.constant 0 : i32
    %c0_i32_0 = arith.constant 0 : i32
    %c0_i32_1 = arith.constant 0 : i32
    return %c0_i32, %c0_i32_0 : i32, i32
  }
  func.func @transform_3(%arg0: i32) -> (i32, i32, i32) {
    %c0_i32 = arith.constant 0 : i32
    %c0_i32_0 = arith.constant 0 : i32
    %c0_i32_1 = arith.constant 0 : i32
    %c0_i32_2 = arith.constant 0 : i32
    return %c0_i32, %c0_i32_0, %c0_i32_1 : i32, i32, i32
  }
  func.func @transform_4(%arg0: i32) -> (i32, i32) {
    %c0_i32 = arith.constant 0 : i32
    %c0_i32_0 = arith.constant 0 : i32
    %c0_i32_1 = arith.constant 0 : i32
    return %c0_i32, %c0_i32_0 : i32, i32
  }
  func.func @transform_5(%arg0: i32) -> (i32, i32, i32) {
    %c0_i32 = arith.constant 0 : i32
    %c0_i32_0 = arith.constant 0 : i32
    %c0_i32_1 = arith.constant 0 : i32
    %c0_i32_2 = arith.constant 0 : i32
    return %c0_i32, %c0_i32_0, %c0_i32_1 : i32, i32, i32
  }
  func.func @transform_6(%arg0: i32) -> (i32, i32) {
    %c0_i32 = arith.constant 0 : i32
    %c0_i32_0 = arith.constant 0 : i32
    %c0_i32_1 = arith.constant 0 : i32
    return %c0_i32, %c0_i32_0 : i32, i32
  }
  func.func @transform_7(%arg0: i32) -> (i32, i32, i32) {
    %c0_i32 = arith.constant 0 : i32
    %c0_i32_0 = arith.constant 0 : i32
    %c0_i32_1 = arith.constant 0 : i32
    %c0_i32_2 = arith.constant 0 : i32
    return %c0_i32, %c0_i32_0, %c0_i32_1 : i32, i32, i32
  }
  func.func @transform_8(%arg0: i32) -> (i32, i32) {
    %c0_i32 = arith.constant 0 : i32
    %c0_i32_0 = arith.constant 0 : i32
    %c0_i32_1 = arith.constant 0 : i32
    return %c0_i32, %c0_i32_0 : i32, i32
  }
  func.func @transform_9(%arg0: i32) -> (i32, i32, i32) {
    %c0_i32 = arith.constant 0 : i32
    %c0_i32_0 = arith.constant 0 : i32
    %c0_i32_1 = arith.constant 0 : i32
    return %arg0, %c0_i32, %c0_i32_0 : i32, i32, i32
  }
}

</mosaic_0001>

<llo_original>
// kernel: cnn_encoder.1
$region0: #{cnn_encoder.1}
  #allocation0 [shape = 'u32[]', space=smem, size = 0x4, offset = 0x4, fixed_abs, tag = 'smem constant byte address 0x4 - core index']
  #allocation1 [shape = 'u32[144,128]{1,0:T(1,128)}', space=vmem, size = 0x12000, scoped, tag = 'internal scratch']
  #allocation2 [shape = 'f32[233,64]{1,0:T(8,128)}', space=vmem, size = 0x1e000, scoped, tag = 'scratch operand']
  #allocation3 [shape = 'f32[195,64]{1,0:T(8,128)}', space=vmem, size = 0x19000, scoped, tag = 'scratch operand']
  #allocation4 [shape = 'f32[72,64]{1,0:T(8,128)}', space=vmem, size = 0x9000, scoped, tag = 'scratch operand']
  #allocation5 [shape = 'f32[72,64]{1,0:T(8,128)}', space=vmem, size = 0x9000, scoped, tag = 'scratch operand']
  %s0 = inlined_call_operand.vmem [shape: f32[2,4,225,27], index: 0, kind: input, shape index: {}]
  %s1 = inlined_call_operand.vmem [shape: f32[27,64], index: 1, kind: input, shape index: {}]
  %s2 = inlined_call_operand.vmem [shape: f32[1,64], index: 2, kind: input, shape index: {}]
  %s3 = inlined_call_operand.vmem [shape: f32[9,64,64], index: 3, kind: input, shape index: {}]
  %s4 = inlined_call_operand.vmem [shape: f32[1,64], index: 4, kind: input, shape index: {}]
  %s5 = inlined_call_operand.vmem [shape: f32[9,64,64], index: 5, kind: input, shape index: {}]
  %s6 = inlined_call_operand.vmem [shape: f32[1,64], index: 6, kind: input, shape index: {}]
  %s7 = inlined_call_operand.vmem [shape: f32[9,64,64], index: 7, kind: input, shape index: {}]
  %s8 = inlined_call_operand.vmem [shape: f32[1,64], index: 8, kind: input, shape index: {}]
  %s9 = inlined_call_operand.vmem [shape: f32[2,48,64], index: 9, kind: output, shape index: {}]
  %s10 = sld [smem:[#allocation0]]
  $region69: #{cnn_encoder.1} parent=0
    _
  %s12 = ssub.s32 1, %s10
  %s13 = scalar_select 0, %s12, %s10
  loop: start=0, step=1, limit=4
  $region2: #{cnn_encoder.1} parent=0 // loop_pre_header
    _
  $region3: #{cnn_encoder.1} parent=0 // loop_header
    %s15 = sphi 0, %s19
    %p16 = scmp.ge.s32.totalorder %s15, 4
    %s25 = sphi 0, %s27
    %s28 = sphi 0, %s25
    %s29 = sphi 0, %s28
    %s45 = sphi 0, %s29
    %s49 = sphi 0, %s49
    %s51 = sphi 0, %s49
    %s52 = sphi 0, %s51
    %s66 = sphi 0, %s52
    %s70 = sphi 0, %s70
    %s72 = sphi 0, %s70
    %s73 = sphi 0, %s72
    %s87 = sphi 0, %s73
    %s91 = sphi 0, %s91
    %s93 = sphi 0, %s91
    %s94 = sphi 0, %s93
    %s108 = sphi 0, %s94
    %s112 = sphi 0, %s112
    %s114 = sphi 0, %s112
    %s115 = sphi 0, %s114
    %s129 = sphi 0, %s115
    %s133 = sphi 0, %s133
    %s135 = sphi 0, %s133
    %s136 = sphi 0, %s135
    %s150 = sphi 0, %s136
    %s154 = sphi 0, %s154
    %s156 = sphi 0, %s154
    %s157 = sphi 0, %s156
    %s171 = sphi 0, %s157
    %s175 = sphi 0, %s175
    %s177 = sphi 0, %s175
    %s178 = sphi 0, %s177
    %s192 = sphi 0, %s178
    %s196 = sphi 0, %s196
    %s198 = sphi 0, %s196
    %s199 = sphi 0, %s198
    %s213 = sphi 0, %s199
    %s219 = sphi 0, %s221
    %s222 = sphi 0, %s219
    %s223 = sphi 0, %s222
    %s239 = sphi 0, %s223
  $region4: #{cnn_encoder.1} parent=0 // loop_header_branch
    %18 = sbr.rel (%p16) target = $region8
  $region5: #{cnn_encoder.1} parent=0 // loop_body
    %s20 = ssub.s32 %s15, 1
    %s21 = ssub.s32 %s15, 2
    %s22 = sadd.s32 %s15, 1
    %s23 = ssub.s32 %s15, %s22
    %p24 = scmp.eq.s32.totalorder %s23, 0
    %s26 = sadd.s32 %s25, 1
    %s27 = scalar_select %p24, %s25, %s26
    %p30 = pneg %p24
    %p31 = scmp.eq.s32.totalorder %s15, 1
    %p32 = por %p30, %p31
    %p33 = scmp.ne.s32.totalorder %s25, %s28
    %p34 = scmp.eq.s32.totalorder %s15, 0
    %p35 = por %p33, %p34
    %p36 = scmp.ne.s32.totalorder %s25, %s28
    %p37 = scmp.eq.s32.totalorder %s20, 1
    %p38 = por %p36, %p37
    %p39 = scmp.ne.s32.totalorder %s28, %s29
    %p40 = scmp.eq.s32.totalorder %s20, 0
    %p41 = por %p39, %p40
    %p42 = scmp.ne.s32.totalorder %s28, %s29
    %p43 = scmp.eq.s32.totalorder %s21, 1
    %p44 = por %p42, %p43
    %p46 = scmp.ne.s32.totalorder %s29, %s45
    %p47 = scmp.eq.s32.totalorder %s21, 0
    %p48 = por %p46, %p47
    %s50 = sadd.s32 %s49, 1
    %p53 = scmp.eq.s32.totalorder %s15, 1
    %p54 = scmp.ne.s32.totalorder %s49, %s51
    %p55 = scmp.eq.s32.totalorder %s15, 0
    %p56 = por %p54, %p55
    %p57 = scmp.ne.s32.totalorder %s49, %s51
    %p58 = scmp.eq.s32.totalorder %s20, 1
    %p59 = por %p57, %p58
    %p60 = scmp.ne.s32.totalorder %s51, %s52
    %p61 = scmp.eq.s32.totalorder %s20, 0
    %p62 = por %p60, %p61
    %p63 = scmp.ne.s32.totalorder %s51, %s52
    %p64 = scmp.eq.s32.totalorder %s21, 1
    %p65 = por %p63, %p64
    %p67 = scmp.ne.s32.totalorder %s52, %s66
    %p68 = scmp.eq.s32.totalorder %s21, 0
    %p69 = por %p67, %p68
    %s71 = sadd.s32 %s70, 1
    %p74 = scmp.eq.s32.totalorder %s15, 1
    %p75 = scmp.ne.s32.totalorder %s70, %s72
    %p76 = scmp.eq.s32.totalorder %s15, 0
    %p77 = por %p75, %p76
    %p78 = scmp.ne.s32.totalorder %s70, %s72
    %p79 = scmp.eq.s32.totalorder %s20, 1
    %p80 = por %p78, %p79
    %p81 = scmp.ne.s32.totalorder %s72, %s73
    %p82 = scmp.eq.s32.totalorder %s20, 0
    %p83 = por %p81, %p82
    %p84 = scmp.ne.s32.totalorder %s72, %s73
    %p85 = scmp.eq.s32.totalorder %s21, 1
    %p86 = por %p84, %p85
    %p88 = scmp.ne.s32.totalorder %s73, %s87
    %p89 = scmp.eq.s32.totalorder %s21, 0
    %p90 = por %p88, %p89
    %s92 = sadd.s32 %s91, 1
    %p95 = scmp.eq.s32.totalorder %s15, 1
    %p96 = scmp.ne.s32.totalorder %s91, %s93
    %p97 = scmp.eq.s32.totalorder %s15, 0
    %p98 = por %p96, %p97
    %p99 = scmp.ne.s32.totalorder %s91, %s93
    %p100 = scmp.eq.s32.totalorder %s20, 1
    %p101 = por %p99, %p100
    %p102 = scmp.ne.s32.totalorder %s93, %s94
    %p103 = scmp.eq.s32.totalorder %s20, 0
    %p104 = por %p102, %p103
    %p105 = scmp.ne.s32.totalorder %s93, %s94
    %p106 = scmp.eq.s32.totalorder %s21, 1
    %p107 = por %p105, %p106
    %p109 = scmp.ne.s32.totalorder %s94, %s108
    %p110 = scmp.eq.s32.totalorder %s21, 0
    %p111 = por %p109, %p110
    %s113 = sadd.s32 %s112, 1
    %p116 = scmp.eq.s32.totalorder %s15, 1
    %p117 = scmp.ne.s32.totalorder %s112, %s114
    %p118 = scmp.eq.s32.totalorder %s15, 0
    %p119 = por %p117, %p118
    %p120 = scmp.ne.s32.totalorder %s112, %s114
    %p121 = scmp.eq.s32.totalorder %s20, 1
    %p122 = por %p120, %p121
    %p123 = scmp.ne.s32.totalorder %s114, %s115
    %p124 = scmp.eq.s32.totalorder %s20, 0
    %p125 = por %p123, %p124
    %p126 = scmp.ne.s32.totalorder %s114, %s115
    %p127 = scmp.eq.s32.totalorder %s21, 1
    %p128 = por %p126, %p127
    %p130 = scmp.ne.s32.totalorder %s115, %s129
    %p131 = scmp.eq.s32.totalorder %s21, 0
    %p132 = por %p130, %p131
    %s134 = sadd.s32 %s133, 1
    %p137 = scmp.eq.s32.totalorder %s15, 1
    %p138 = scmp.ne.s32.totalorder %s133, %s135
    %p139 = scmp.eq.s32.totalorder %s15, 0
    %p140 = por %p138, %p139
    %p141 = scmp.ne.s32.totalorder %s133, %s135
    %p142 = scmp.eq.s32.totalorder %s20, 1
    %p143 = por %p141, %p142
    %p144 = scmp.ne.s32.totalorder %s135, %s136
    %p145 = scmp.eq.s32.totalorder %s20, 0
    %p146 = por %p144, %p145
    %p147 = scmp.ne.s32.totalorder %s135, %s136
    %p148 = scmp.eq.s32.totalorder %s21, 1
    %p149 = por %p147, %p148
    %p151 = scmp.ne.s32.totalorder %s136, %s150
    %p152 = scmp.eq.s32.totalorder %s21, 0
    %p153 = por %p151, %p152
    %s155 = sadd.s32 %s154, 1
    %p158 = scmp.eq.s32.totalorder %s15, 1
    %p159 = scmp.ne.s32.totalorder %s154, %s156
    %p160 = scmp.eq.s32.totalorder %s15, 0
    %p161 = por %p159, %p160
    %p162 = scmp.ne.s32.totalorder %s154, %s156
    %p163 = scmp.eq.s32.totalorder %s20, 1
    %p164 = por %p162, %p163
    %p165 = scmp.ne.s32.totalorder %s156, %s157
    %p166 = scmp.eq.s32.totalorder %s20, 0
    %p167 = por %p165, %p166
    %p168 = scmp.ne.s32.totalorder %s156, %s157
    %p169 = scmp.eq.s32.totalorder %s21, 1
    %p170 = por %p168, %p169
    %p172 = scmp.ne.s32.totalorder %s157, %s171
    %p173 = scmp.eq.s32.totalorder %s21, 0
    %p174 = por %p172, %p173
    %s176 = sadd.s32 %s175, 1
    %p179 = scmp.eq.s32.totalorder %s15, 1
    %p180 = scmp.ne.s32.totalorder %s175, %s177
    %p181 = scmp.eq.s32.totalorder %s15, 0
    %p182 = por %p180, %p181
    %p183 = scmp.ne.s32.totalorder %s175, %s177
    %p184 = scmp.eq.s32.totalorder %s20, 1
    %p185 = por %p183, %p184
    %p186 = scmp.ne.s32.totalorder %s177, %s178
    %p187 = scmp.eq.s32.totalorder %s20, 0
    %p188 = por %p186, %p187
    %p189 = scmp.ne.s32.totalorder %s177, %s178
    %p190 = scmp.eq.s32.totalorder %s21, 1
    %p191 = por %p189, %p190
    %p193 = scmp.ne.s32.totalorder %s178, %s192
    %p194 = scmp.eq.s32.totalorder %s21, 0
    %p195 = por %p193, %p194
    %s197 = sadd.s32 %s196, 1
    %p200 = scmp.eq.s32.totalorder %s15, 1
    %p201 = scmp.ne.s32.totalorder %s196, %s198
    %p202 = scmp.eq.s32.totalorder %s15, 0
    %p203 = por %p201, %p202
    %p204 = scmp.ne.s32.totalorder %s196, %s198
    %p205 = scmp.eq.s32.totalorder %s20, 1
    %p206 = por %p204, %p205
    %p207 = scmp.ne.s32.totalorder %s198, %s199
    %p208 = scmp.eq.s32.totalorder %s20, 0
    %p209 = por %p207, %p208
    %p210 = scmp.ne.s32.totalorder %s198, %s199
    %p211 = scmp.eq.s32.totalorder %s21, 1
    %p212 = por %p210, %p211
    %p214 = scmp.ne.s32.totalorder %s199, %s213
    %p215 = scmp.eq.s32.totalorder %s21, 0
    %p216 = por %p214, %p215
    %s217 = ssub.s32 %s15, %s22
    %p218 = scmp.eq.s32.totalorder %s217, 0
    %s220 = sadd.s32 %s219, 1
    %s221 = scalar_select %p218, %s219, %s220
    %p224 = pneg %p218
    %p225 = scmp.eq.s32.totalorder %s15, 1
    %p226 = por %p224, %p225
    %p227 = scmp.ne.s32.totalorder %s219, %s222
    %p228 = scmp.eq.s32.totalorder %s15, 0
    %p229 = por %p227, %p228
    %p230 = scmp.ne.s32.totalorder %s219, %s222
    %p231 = scmp.eq.s32.totalorder %s20, 1
    %p232 = por %p230, %p231
    %p233 = scmp.ne.s32.totalorder %s222, %s223
    %p234 = scmp.eq.s32.totalorder %s20, 0
    %p235 = por %p233, %p234
    %p236 = scmp.ne.s32.totalorder %s222, %s223
    %p237 = scmp.eq.s32.totalorder %s21, 1
    %p238 = por %p236, %p237
    %p240 = scmp.ne.s32.totalorder %s223, %s239
    %p241 = scmp.eq.s32.totalorder %s21, 0
    %p242 = por %p240, %p241
    %p243 = scmp.le.s32.totalorder 1, %s15
    %p244 = scmp.lt.s32.totalorder %s15, 3
    %p245 = pnand %p243, %p244
    %p246 = pneg %p245
    // Predicated region
    $region9: #{cnn_encoder.1} parent=5 // pred_check
      _
    $region10: #{cnn_encoder.1} parent=5 // pred_check_branch
      %248 = sbr.rel (%p245) target = $region12
    $region11: #{cnn_encoder.1} parent=5 // pred_region
      %s249 = ssub.s32 %s15, 1
      // Predicated region
      $region13: #{cnn_encoder.1} parent=11 // pred_check
        %p250 = pneg %p62
      $region14: #{cnn_encoder.1} parent=11 // pred_check_branch
        %252 = sbr.rel (%p250) target = $region16
      $region15: #{cnn_encoder.1} parent=11 // pred_region
        _
      $region16: #{cnn_encoder.1} parent=11 // pred_fallthru
        _
      // Predicated region
      $region17: #{cnn_encoder.1} parent=11 // pred_check
        %p253 = pneg %p83
      $region18: #{cnn_encoder.1} parent=11 // pred_check_branch
        %255 = sbr.rel (%p253) target = $region20
      $region19: #{cnn_encoder.1} parent=11 // pred_region
        _
      $region20: #{cnn_encoder.1} parent=11 // pred_fallthru
        _
      // Predicated region
      $region21: #{cnn_encoder.1} parent=11 // pred_check
        %p256 = pneg %p104
      $region22: #{cnn_encoder.1} parent=11 // pred_check_branch
        %258 = sbr.rel (%p256) target = $region24
      $region23: #{cnn_encoder.1} parent=11 // pred_region
        _
      $region24: #{cnn_encoder.1} parent=11 // pred_fallthru
        _
      // Predicated region
      $region25: #{cnn_encoder.1} parent=11 // pred_check
        %p259 = pneg %p125
      $region26: #{cnn_encoder.1} parent=11 // pred_check_branch
        %261 = sbr.rel (%p259) target = $region28
      $region27: #{cnn_encoder.1} parent=11 // pred_region
        _
      $region28: #{cnn_encoder.1} parent=11 // pred_fallthru
        _
      // Predicated region
      $region29: #{cnn_encoder.1} parent=11 // pred_check
        %p262 = pneg %p146
      $region30: #{cnn_encoder.1} parent=11 // pred_check_branch
        %264 = sbr.rel (%p262) target = $region32
      $region31: #{cnn_encoder.1} parent=11 // pred_region
        _
      $region32: #{cnn_encoder.1} parent=11 // pred_fallthru
        _
      // Predicated region
      $region33: #{cnn_encoder.1} parent=11 // pred_check
        %p265 = pneg %p167
      $region34: #{cnn_encoder.1} parent=11 // pred_check_branch
        %267 = sbr.rel (%p265) target = $region36
      $region35: #{cnn_encoder.1} parent=11 // pred_region
        _
      $region36: #{cnn_encoder.1} parent=11 // pred_fallthru
        _
      // Predicated region
      $region37: #{cnn_encoder.1} parent=11 // pred_check
        %p268 = pneg %p188
      $region38: #{cnn_encoder.1} parent=11 // pred_check_branch
        %270 = sbr.rel (%p268) target = $region40
      $region39: #{cnn_encoder.1} parent=11 // pred_region
        _
      $region40: #{cnn_encoder.1} parent=11 // pred_fallthru
        _
      // Predicated region
      $region41: #{cnn_encoder.1} parent=11 // pred_check
        %p271 = pneg %p209
      $region42: #{cnn_encoder.1} parent=11 // pred_check_branch
        %273 = sbr.rel (%p271) target = $region44
      $region43: #{cnn_encoder.1} parent=11 // pred_region
        _
      $region44: #{cnn_encoder.1} parent=11 // pred_fallthru
        _
    $region12: #{cnn_encoder.1} parent=5 // pred_fallthru
      _
    %p274 = scmp.lt.s32.totalorder %s15, 2
    // Predicated region
    $region45: #{cnn_encoder.1} parent=5 // pred_check
      %p275 = pneg %p274
    $region46: #{cnn_encoder.1} parent=5 // pred_check_branch
      %277 = sbr.rel (%p275) target = $region48
    $region47: #{cnn_encoder.1} parent=5 // pred_region
      // Predicated region
      $region49: #{cnn_encoder.1} parent=47 // pred_check
        %p278 = pneg %p35
      $region50: #{cnn_encoder.1} parent=47 // pred_check_branch
        %280 = sbr.rel (%p278) target = $region52
      $region51: #{cnn_encoder.1} parent=47 // pred_region
        %p281 = scmp.lt.s32.totalorder %s15, 1
        %s282 = scalar_select %p281, %s15, 1
        %s283 = smul.addr %s282, 116
        %s284 = smul.addr %s283, 8
        %s285 = scalar_lea.vmem %s0, %s284
      $region52: #{cnn_encoder.1} parent=47 // pred_fallthru
        _
    $region48: #{cnn_encoder.1} parent=5 // pred_fallthru
      _
    %p286 = scmp.le.s32.totalorder 1, %s15
    %p287 = scmp.lt.s32.totalorder %s15, 3
    %p288 = pnand %p286, %p287
    %p289 = pneg %p288
    // Predicated region
    $region53: #{cnn_encoder.1} parent=5 // pred_check
      _
    $region54: #{cnn_encoder.1} parent=5 // pred_check_branch
      %291 = sbr.rel (%p288) target = $region56
    $region55: #{cnn_encoder.1} parent=5 // pred_region
      %s292 = ssub.s32 %s15, 1
      %p293 = scmp.lt.s32.totalorder %s20, 1
      %s294 = scalar_select %p293, %s20, 1
      %s295 = smul.addr %s294, 116
      %s296 = smul.addr %s295, 8
      %s297 = scalar_lea.vmem %s0, %s296
      %p298 = pneg %p41
      %p299 = pneg %p38
      %p300 = pneg %p62
      %p301 = pneg %p59
      %p302 = pneg %p83
      %p303 = pneg %p80
      %p304 = pneg %p104
      %p305 = pneg %p101
      %p306 = pneg %p125
      %p307 = pneg %p122
      %p308 = pneg %p146
      %p309 = pneg %p143
      %p310 = pneg %p167
      %p311 = pneg %p164
      %p312 = pneg %p188
      %p313 = pneg %p185
      %p314 = pneg %p209
      %p315 = pneg %p206
      %p316 = pneg %p235
      %p317 = pneg %p232
      %p318 = scmp.lt.s32.totalorder %s20, 1
      %s319 = scalar_select %p318, %s20, 1
      %s320 = smul.addr %s319, 6
      %s321 = smul.addr %s320, 8
      %s322 = scalar_lea.vmem %s9, %s321
      %p323 = scmp.lt.s32.totalorder %s20, 1
      %s324 = scalar_select %p323, %s20, 1
      %s325 = smul.addr %s324, 116
      %s326 = smul.addr %s325, 8
      %s327 = scalar_lea.vmem %s0, %s326
      %p328 = scmp.lt.s32.totalorder %s20, 1
      %s329 = scalar_select %p328, %s20, 1
      %s330 = smul.addr %s329, 6
      %s331 = smul.addr %s330, 8
      %s332 = scalar_lea.vmem %s9, %s331
      %v333 = vld [vmem:[%s1] sm:$0xff]
      %v334 = vld [vmem:[%s1 + $0x8] sm:$0xff]
      %v335 = vld [vmem:[%s1 + $0x10] sm:$0xff]
      %v336 = vld [vmem:[%s1 + $0x18] sm:$0x7]
      %v337 = vld [vmem:[%s327] sm:$0xff]
      %v338 = vld [vmem:[%s327 + $0x8] sm:$0xff]
      %v339 = vld [vmem:[%s327 + $0x10] sm:$0xff]
      %v340 = vld [vmem:[%s327 + $0x18] sm:$0xff]
      %v341 = vld [vmem:[%s327 + $0x20] sm:$0xff]
      %v342 = vld [vmem:[%s327 + $0x28] sm:$0xff]
      %v343 = vld [vmem:[%s327 + $0x30] sm:$0xff]
      %v344 = vld [vmem:[%s327 + $0x38] sm:$0xff]
      %v345 = vld [vmem:[%s327 + $0x40] sm:$0xff]
      %v346 = vld [vmem:[%s327 + $0x48] sm:$0xff]
      %v347 = vld [vmem:[%s327 + $0x50] sm:$0xff]
      %v348 = vld [vmem:[%s327 + $0x58] sm:$0xff]
      %v349 = vld [vmem:[%s327 + $0x60] sm:$0xff]
      %v350 = vld [vmem:[%s327 + $0x68] sm:$0xff]
      %v351 = vld [vmem:[%s327 + $0x70] sm:$0xff]
      %v352 = vld [vmem:[%s327 + $0x78] sm:$0xff]
      %v353 = vld [vmem:[%s327 + $0x80] sm:$0xff]
      %v354 = vld [vmem:[%s327 + $0x88] sm:$0xff]
      %v355 = vld [vmem:[%s327 + $0x90] sm:$0xff]
      %v356 = vld [vmem:[%s327 + $0x98] sm:$0xff]
      %v357 = vld [vmem:[%s327 + $0xa0] sm:$0xff]
      %v358 = vld [vmem:[%s327 + $0xa8] sm:$0xff]
      %v359 = vld [vmem:[%s327 + $0xb0] sm:$0xff]
      %v360 = vld [vmem:[%s327 + $0xb8] sm:$0xff]
      %v361 = vld [vmem:[%s327 + $0xc0] sm:$0xff]
      %v362 = vld [vmem:[%s327 + $0xc8] sm:$0xff]
      %v363 = vld [vmem:[%s327 + $0xd0] sm:$0xff]
      %v364 = vld [vmem:[%s327 + $0xd8] sm:$0xff]
      %v365 = vld [vmem:[%s327 + $0xe0] sm:$0x1]
      %vm366 = vcmask 220160
      %v368 = vsel %vm366, %v337, 0
      %v371 = vsel %vm366, %v338, 0
      %v374 = vsel %vm366, %v339, 0
      %v377 = vsel %vm366, %v340, 0
      %v380 = vsel %vm366, %v341, 0
      %v383 = vsel %vm366, %v342, 0
      %v386 = vsel %vm366, %v343, 0
      %v389 = vsel %vm366, %v344, 0
      %v392 = vsel %vm366, %v345, 0
      %v395 = vsel %vm366, %v346, 0
      %v398 = vsel %vm366, %v347, 0
      %v401 = vsel %vm366, %v348, 0
      %v404 = vsel %vm366, %v349, 0
      %v407 = vsel %vm366, %v350, 0
      %v410 = vsel %vm366, %v351, 0
      %v413 = vsel %vm366, %v352, 0
      %v416 = vsel %vm366, %v353, 0
      %v419 = vsel %vm366, %v354, 0
      %v422 = vsel %vm366, %v355, 0
      %v425 = vsel %vm366, %v356, 0
      %v428 = vsel %vm366, %v357, 0
      %v431 = vsel %vm366, %v358, 0
      %v434 = vsel %vm366, %v359, 0
      %v437 = vsel %vm366, %v360, 0
      %v440 = vsel %vm366, %v361, 0
      %v443 = vsel %vm366, %v362, 0
      %v446 = vsel %vm366, %v363, 0
      %v449 = vsel %vm366, %v364, 0
      %v452 = vsel %vm366, %v365, 0
      %vm454 = vcmask 1042432
      %v456 = vsel %vm454, %v336, 0
      %458 = vmatprep.subr.mxu0 0.0
      %459 = vmatpush1.msra.mxu0 %v333
      %460 = vmatprep.subr.mxu0 0.0
      %461 = vmatpush1.msra.mxu0 %v334
      %462 = vmatprep.subr.mxu0 0.0
      %463 = vmatpush1.msra.mxu0 %v335
      %464 = vmatprep.subr.mxu0 0.0
      %465 = vmatpush1.msra.mxu0 %v456
      %466 = vmatprep.subr.mxu0 0.0
      %467 = vmatpush1.msra.mxu0 0.0
      %468 = vmatprep.subr.mxu0 0.0
      %469 = vmatpush1.msra.mxu0 0.0
      %470 = vmatprep.subr.mxu0 0.0
      %471 = vmatpush1.msra.mxu0 0.0
      %472 = vmatprep.subr.mxu0 0.0
      %473 = vmatpush1.msra.mxu0 0.0
      %474 = vmatprep.subr.mxu0 0.0
      %475 = vmatpush1.msra.mxu0 0.0
      %476 = vmatprep.subr.mxu0 0.0
      %477 = vmatpush1.msra.mxu0 0.0
      %478 = vmatprep.subr.mxu0 0.0
      %479 = vmatpush1.msra.mxu0 0.0
      %480 = vmatprep.subr.mxu0 0.0
      %481 = vmatpush1.msra.mxu0 0.0
      %482 = vmatprep.subr.mxu0 0.0
      %483 = vmatpush1.msra.mxu0 0.0
      %484 = vmatprep.subr.mxu0 0.0
      %485 = vmatpush1.msra.mxu0 0.0
      %486 = vmatprep.subr.mxu0 0.0
      %487 = vmatpush1.msra.mxu0 0.0
      %488 = vmatprep.subr.mxu0 0.0
      %489 = vmatpush1.msra.mxu0 0.0
      %490 = vmatprep.subr.mxu0 0.0
      %491 = vmatpush1.msra.mxu0 0.0
      %492 = vmatprep.subr.mxu0 0.0
      %493 = vmatpush1.msra.mxu0 0.0
      %494 = vmatprep.subr.mxu0 0.0
      %495 = vmatpush1.msra.mxu0 0.0
      %496 = vmatprep.subr.mxu0 0.0
      %497 = vmatpush1.msra.mxu0 0.0
      %498 = vmatprep.subr.mxu0 0.0
      %499 = vmatpush1.msra.mxu0 0.0
      %500 = vmatprep.subr.mxu0 0.0
      %501 = vmatpush1.msra.mxu0 0.0
      %502 = vmatprep.subr.mxu0 0.0
      %503 = vmatpush1.msra.mxu0 0.0
      %504 = vmatprep.subr.mxu0 0.0
      %505 = vmatpush1.msra.mxu0 0.0
      %506 = vmatprep.subr.mxu0 0.0
      %507 = vmatpush1.msra.mxu0 0.0
      %508 = vmatprep.subr.mxu0 0.0
      %509 = vmatpush1.msra.mxu0 0.0
      %510 = vmatprep.subr.mxu0 0.0
      %511 = vmatpush1.msra.mxu0 0.0
      %512 = vmatprep.subr.mxu0 0.0
      %513 = vmatpush1.msra.mxu0 0.0
      %514 = vmatprep.subr.mxu0 0.0
      %515 = vmatpush1.msra.mxu0 0.0
      %516 = vmatprep.subr.mxu0 0.0
      %517 = vmatpush1.msra.mxu0 0.0
      %518 = vmatprep.subr.mxu0 0.0
      %519 = vmatpush1.msra.mxu0 0.0
      %520 = vmatprep.subr.mxu0 0.0
      %521 = vmatpush1.msra.mxu0 0.0
      %522 = vmatprep.mubr.f32.mxu0 0.0
      %523 = vmatmul.mubr.f32.gmra.mrb[0].mxu0 %v368
      %v524 = vpop.f32.mrb[0].mxu0
      %v525 = vadd.f32 0.0, %v524
      %v526 = vpop.f32.mrb[0].mxu0
      %527 = vmatprep.mubr.f32.mxu0 0.0
      %528 = vmatmul.mubr.f32.gmra.mrb[0].mxu0 %v371
      %v529 = vpop.f32.mrb[0].mxu0
      %v530 = vadd.f32 0.0, %v529
      %v531 = vpop.f32.mrb[0].mxu0
      %532 = vmatprep.mubr.f32.mxu0 0.0
      %533 = vmatmul.mubr.f32.gmra.mrb[0].mxu0 %v374
      %v534 = vpop.f32.mrb[0].mxu0
      %v535 = vadd.f32 0.0, %v534
      %v536 = vpop.f32.mrb[0].mxu0
      %537 = vmatprep.mubr.f32.mxu0 0.0
      %538 = vmatmul.mubr.f32.gmra.mrb[0].mxu0 %v377
      %v539 = vpop.f32.mrb[0].mxu0
      %v540 = vadd.f32 0.0, %v539
      %v541 = vpop.f32.mrb[0].mxu0
      %542 = vmatprep.mubr.f32.mxu0 0.0
      %543 = vmatmul.mubr.f32.gmra.mrb[0].mxu0 %v380
      %v544 = vpop.f32.mrb[0].mxu0
      %v545 = vadd.f32 0.0, %v544
      %v546 = vpop.f32.mrb[0].mxu0
      %547 = vmatprep.mubr.f32.mxu0 0.0
      %548 = vmatmul.mubr.f32.gmra.mrb[0].mxu0 %v383
      %v549 = vpop.f32.mrb[0].mxu0
      %v550 = vadd.f32 0.0, %v549
      %v551 = vpop.f32.mrb[0].mxu0
      %552 = vmatprep.mubr.f32.mxu0 0.0
      %553 = vmatmul.mubr.f32.gmra.mrb[0].mxu0 %v386
      %v554 = vpop.f32.mrb[0].mxu0
      %v555 = vadd.f32 0.0, %v554
      %v556 = vpop.f32.mrb[0].mxu0
      %557 = vmatprep.mubr.f32.mxu0 0.0
      %558 = vmatmul.mubr.f32.gmra.mrb[0].mxu0 %v389
      %v559 = vpop.f32.mrb[0].mxu0
      %v560 = vadd.f32 0.0, %v559
      %v561 = vpop.f32.mrb[0].mxu0
      %562 = vmatprep.mubr.f32.mxu0 0.0
      %563 = vmatmul.mubr.f32.gmra.mrb[0].mxu0 %v392
      %v564 = vpop.f32.mrb[0].mxu0
      %v565 = vadd.f32 0.0, %v564
      %v566 = vpop.f32.mrb[0].mxu0
      %567 = vmatprep.mubr.f32.mxu0 0.0
      %568 = vmatmul.mubr.f32.gmra.mrb[0].mxu0 %v395
      %v569 = vpop.f32.mrb[0].mxu0
      %v570 = vadd.f32 0.0, %v569
      %v571 = vpop.f32.mrb[0].mxu0
      %572 = vmatprep.mubr.f32.mxu0 0.0
      %573 = vmatmul.mubr.f32.gmra.mrb[0].mxu0 %v398
      %v574 = vpop.f32.mrb[0].mxu0
      %v575 = vadd.f32 0.0, %v574
      %v576 = vpop.f32.mrb[0].mxu0
      %577 = vmatprep.mubr.f32.mxu0 0.0
      %578 = vmatmul.mubr.f32.gmra.mrb[0].mxu0 %v401
      %v579 = vpop.f32.mrb[0].mxu0
      %v580 = vadd.f32 0.0, %v579
      %v581 = vpop.f32.mrb[0].mxu0
      %582 = vmatprep.mubr.f32.mxu0 0.0
      %583 = vmatmul.mubr.f32.gmra.mrb[0].mxu0 %v404
      %v584 = vpop.f32.mrb[0].mxu0
      %v585 = vadd.f32 0.0, %v584
      %v586 = vpop.f32.mrb[0].mxu0
      %587 = vmatprep.mubr.f32.mxu0 0.0
      %588 = vmatmul.mubr.f32.gmra.mrb[0].mxu0 %v407
      %v589 = vpop.f32.mrb[0].mxu0
      %v590 = vadd.f32 0.0, %v589
      %v591 = vpop.f32.mrb[0].mxu0
      %592 = vmatprep.mubr.f32.mxu0 0.0
      %593 = vmatmul.mubr.f32.gmra.mrb[0].mxu0 %v410
      %v594 = vpop.f32.mrb[0].mxu0
      %v595 = vadd.f32 0.0, %v594
      %v596 = vpop.f32.mrb[0].mxu0
      %597 = vmatprep.mubr.f32.mxu0 0.0
      %598 = vmatmul.mubr.f32.gmra.mrb[0].mxu0 %v413
      %v599 = vpop.f32.mrb[0].mxu0
      %v600 = vadd.f32 0.0, %v599
      %v601 = vpop.f32.mrb[0].mxu0
      %602 = vmatprep.mubr.f32.mxu0 0.0
      %603 = vmatmul.mubr.f32.gmra.mrb[0].mxu0 %v416
      %v604 = vpop.f32.mrb[0].mxu0
      %v605 = vadd.f32 0.0, %v604
      %v606 = vpop.f32.mrb[0].mxu0
      %607 = vmatprep.mubr.f32.mxu0 0.0
      %608 = vmatmul.mubr.f32.gmra.mrb[0].mxu0 %v419
      %v609 = vpop.f32.mrb[0].mxu0
      %v610 = vadd.f32 0.0, %v609
      %v611 = vpop.f32.mrb[0].mxu0
      %612 = vmatprep.mubr.f32.mxu0 0.0
      %613 = vmatmul.mubr.f32.gmra.mrb[0].mxu0 %v422
      %v614 = vpop.f32.mrb[0].mxu0
      %v615 = vadd.f32 0.0, %v614
      %v616 = vpop.f32.mrb[0].mxu0
      %617 = vmatprep.mubr.f32.mxu0 0.0
      %618 = vmatmul.mubr.f32.gmra.mrb[0].mxu0 %v425
      %v619 = vpop.f32.mrb[0].mxu0
      %v620 = vadd.f32 0.0, %v619
      %v621 = vpop.f32.mrb[0].mxu0
      %622 = vmatprep.mubr.f32.mxu0 0.0
      %623 = vmatmul.mubr.f32.gmra.mrb[0].mxu0 %v428
      %v624 = vpop.f32.mrb[0].mxu0
      %v625 = vadd.f32 0.0, %v624
      %v626 = vpop.f32.mrb[0].mxu0
      %627 = vmatprep.mubr.f32.mxu0 0.0
      %628 = vmatmul.mubr.f32.gmra.mrb[0].mxu0 %v431
      %v629 = vpop.f32.mrb[0].mxu0
      %v630 = vadd.f32 0.0, %v629
      %v631 = vpop.f32.mrb[0].mxu0
      %632 = vmatprep.mubr.f32.mxu0 0.0
      %633 = vmatmul.mubr.f32.gmra.mrb[0].mxu0 %v434
      %v634 = vpop.f32.mrb[0].mxu0
      %v635 = vadd.f32 0.0, %v634
      %v636 = vpop.f32.mrb[0].mxu0
      %637 = vmatprep.mubr.f32.mxu0 0.0
      %638 = vmatmul.mubr.f32.gmra.mrb[0].mxu0 %v437
      %v639 = vpop.f32.mrb[0].mxu0
      %v640 = vadd.f32 0.0, %v639
      %v641 = vpop.f32.mrb[0].mxu0
      %642 = vmatprep.mubr.f32.mxu0 0.0
      %643 = vmatmul.mubr.f32.gmra.mrb[0].mxu0 %v440
      %v644 = vpop.f32.mrb[0].mxu0
      %v645 = vadd.f32 0.0, %v644
      %v646 = vpop.f32.mrb[0].mxu0
      %647 = vmatprep.mubr.f32.mxu0 0.0
      %648 = vmatmul.mubr.f32.gmra.mrb[0].mxu0 %v443
      %v649 = vpop.f32.mrb[0].mxu0
      %v650 = vadd.f32 0.0, %v649
      %v651 = vpop.f32.mrb[0].mxu0
      %652 = vmatprep.mubr.f32.mxu0 0.0
      %653 = vmatmul.mubr.f32.gmra.mrb[0].mxu0 %v446
      %v654 = vpop.f32.mrb[0].mxu0
      %v655 = vadd.f32 0.0, %v654
      %v656 = vpop.f32.mrb[0].mxu0
      %657 = vmatprep.mubr.f32.mxu0 0.0
      %658 = vmatmul.mubr.f32.gmra.mrb[0].mxu0 %v449
      %v659 = vpop.f32.mrb[0].mxu0
      %v660 = vadd.f32 0.0, %v659
      %v661 = vpop.f32.mrb[0].mxu0
      %662 = vmatprep.mubr.f32.mxu0 0.0
      %663 = vmatmul.mubr.f32.gmra.mrb[0].mxu0 %v452
      %v664 = vpop.f32.mrb[0].mxu0
      %v665 = vadd.f32 0.0, %v664
      %v666 = vpop.f32.mrb[0].mxu0
      %667 = vdwg.mxu0
      %s668 = scalar_lea.vmem %s327, 232
      %v669 = vld [vmem:[%s668] sm:$0xff]
      %v670 = vld [vmem:[%s668 + $0x8] sm:$0xff]
      %v671 = vld [vmem:[%s668 + $0x10] sm:$0xff]
      %v672 = vld [vmem:[%s668 + $0x18] sm:$0xff]
      %v673 = vld [vmem:[%s668 + $0x20] sm:$0xff]
      %v674 = vld [vmem:[%s668 + $0x28] sm:$0xff]
      %v675 = vld [vmem:[%s668 + $0x30] sm:$0xff]
      %v676 = vld [vmem:[%s668 + $0x38] sm:$0xff]
      %v677 = vld [vmem:[%s668 + $0x40] sm:$0xff]
      %v678 = vld [vmem:[%s668 + $0x48] sm:$0xff]
      %v679 = vld [vmem:[%s668 + $0x50] sm:$0xff]
      %v680 = vld [vmem:[%s668 + $0x58] sm:$0xff]
      %v681 = vld [vmem:[%s668 + $0x60] sm:$0xff]
      %v682 = vld [vmem:[%s668 + $0x68] sm:$0xff]
      %v683 = vld [vmem:[%s668 + $0x70] sm:$0xff]
      %v684 = vld [vmem:[%s668 + $0x78] sm:$0xff]
      %v685 = vld [vmem:[%s668 + $0x80] sm:$0xff]
      %v686 = vld [vmem:[%s668 + $0x88] sm:$0xff]
      %v687 = vld [vmem:[%s668 + $0x90] sm:$0xff]
      %v688 = vld [vmem:[%s668 + $0x98] sm:$0xff]
      %v689 = vld [vmem:[%s668 + $0xa0] sm:$0xff]
      %v690 = vld [vmem:[%s668 + $0xa8] sm:$0xff]
      %v691 = vld [vmem:[%s668 + $0xb0] sm:$0xff]
      %v692 = vld [vmem:[%s668 + $0xb8] sm:$0xff]
      %v693 = vld [vmem:[%s668 + $0xc0] sm:$0xff]
      %v694 = vld [vmem:[%s668 + $0xc8] sm:$0xff]
      %v695 = vld [vmem:[%s668 + $0xd0] sm:$0xff]
      %v696 = vld [vmem:[%s668 + $0xd8] sm:$0xff]
      %v697 = vld [vmem:[%s668 + $0xe0] sm:$0x1]
      %v699 = vsel %vm366, %v669, 0
      %v702 = vsel %vm366, %v670, 0
      %v705 = vsel %vm366, %v671, 0
      %v708 = vsel %vm366, %v672, 0
      %v711 = vsel %vm366, %v673, 0
      %v714 = vsel %vm366, %v674, 0
      %v717 = vsel %vm366, %v675, 0
      %v720 = vsel %vm366, %v676, 0
      %v723 = vsel %vm366, %v677, 0
      %v726 = vsel %vm366, %v678, 0
      %v729 = vsel %vm366, %v679, 0
      %v732 = vsel %vm366, %v680, 0
      %v735 = vsel %vm366, %v681, 0
      %v738 = vsel %vm366, %v682, 0
      %v741 = vsel %vm366, %v683, 0
      %v744 = vsel %vm366, %v684, 0
      %v747 = vsel %vm366, %v685, 0
      %v750 = vsel %vm366, %v686, 0
      %v753 = vsel %vm366, %v687, 0
      %v756 = vsel %vm366, %v688, 0
      %v759 = vsel %vm366, %v689, 0
      %v762 = vsel %vm366, %v690, 0
      %v765 = vsel %vm366, %v691, 0
      %v768 = vsel %vm366, %v692, 0
      %v771 = vsel %vm366, %v693, 0
      %v774 = vsel %vm366, %v694, 0
      %v777 = vsel %vm366, %v695, 0
      %v780 = vsel %vm366, %v696, 0
      %v783 = vsel %vm366, %v697, 0
      %785 = vmatprep.subr.mxu0 0.0
      %786 = vmatpush1.msra.mxu0 %v333
      %787 = vmatprep.subr.mxu0 0.0
      %788 = vmatpush1.msra.mxu0 %v334
      %789 = vmatprep.subr.mxu0 0.0
      %790 = vmatpush1.msra.mxu0 %v335
      %791 = vmatprep.subr.mxu0 0.0
      %792 = vmatpush1.msra.mxu0 %v456
      %793 = vmatprep.subr.mxu0 0.0
      %794 = vmatpush1.msra.mxu0 0.0
      %795 = vmatprep.subr.mxu0 0.0
      %796 = vmatpush1.msra.mxu0 0.0
      %797 = vmatprep.subr.mxu0 0.0
      %798 = vmatpush1.msra.mxu0 0.0
      %799 = vmatprep.subr.mxu0 0.0
      %800 = vmatpush1.msra.mxu0 0.0
      %801 = vmatprep.subr.mxu0 0.0
      %802 = vmatpush1.msra.mxu0 0.0
      %803 = vmatprep.subr.mxu0 0.0
      %804 = vmatpush1.msra.mxu0 0.0
      %805 = vmatprep.subr.mxu0 0.0
      %806 = vmatpush1.msra.mxu0 0.0
      %807 = vmatprep.subr.mxu0 0.0
      %808 = vmatpush1.msra.mxu0 0.0
      %809 = vmatprep.subr.mxu0 0.0
      %810 = vmatpush1.msra.mxu0 0.0
      %811 = vmatprep.subr.mxu0 0.0
      %812 = vmatpush1.msra.mxu0 0.0
      %813 = vmatprep.subr.mxu0 0.0
      %814 = vmatpush1.msra.mxu0 0.0
      %815 = vmatprep.subr.mxu0 0.0
      %816 = vmatpush1.msra.mxu0 0.0
      %817 = vmatprep.subr.mxu0 0.0
      %818 = vmatpush1.msra.mxu0 0.0
      %819 = vmatprep.subr.mxu0 0.0
      %820 = vmatpush1.msra.mxu0 0.0
      %821 = vmatprep.subr.mxu0 0.0
      %822 = vmatpush1.msra.mxu0 0.0
      %823 = vmatprep.subr.mxu0 0.0
      %824 = vmatpush1.msra.mxu0 0.0
      %825 = vmatprep.subr.mxu0 0.0
      %826 = vmatpush1.msra.mxu0 0.0
      %827 = vmatprep.subr.mxu0 0.0
      %828 = vmatpush1.msra.mxu0 0.0
      %829 = vmatprep.subr.mxu0 0.0
      %830 = vmatpush1.msra.mxu0 0.0
      %831 = vmatprep.subr.mxu0 0.0
      %832 = vmatpush1.msra.mxu0 0.0
      %833 = vmatprep.subr.mxu0 0.0
      %834 = vmatpush1.msra.mxu0 0.0
      %835 = vmatprep.subr.mxu0 0.0
      %836 = vmatpush1.msra.mxu0 0.0
      %837 = vmatprep.subr.mxu0 0.0
      %838 = vmatpush1.msra.mxu0 0.0
      %839 = vmatprep.subr.mxu0 0.0
      %840 = vmatpush1.msra.mxu0 0.0
      %841 = vmatprep.subr.mxu0 0.0
      %842 = vmatpush1.msra.mxu0 0.0
      %843 = vmatprep.subr.mxu0 0.0
      %844 = vmatpush1.msra.mxu0 0.0
      %845 = vmatprep.subr.mxu0 0.0
      %846 = vmatpush1.msra.mxu0 0.0
      %847 = vmatprep.subr.mxu0 0.0
      %848 = vmatpush1.msra.mxu0 0.0
      %849 = vmatprep.mubr.f32.mxu0 0.0
      %850 = vmatmul.mubr.f32.gmra.mrb[0].mxu0 %v699
      %v851 = vpop.f32.mrb[0].mxu0
      %v852 = vadd.f32 0.0, %v851
      %v853 = vpop.f32.mrb[0].mxu0
      %854 = vmatprep.mubr.f32.mxu0 0.0
      %855 = vmatmul.mubr.f32.gmra.mrb[0].mxu0 %v702
      %v856 = vpop.f32.mrb[0].mxu0
      %v857 = vadd.f32 0.0, %v856
      %v858 = vpop.f32.mrb[0].mxu0
      %859 = vmatprep.mubr.f32.mxu0 0.0
      %860 = vmatmul.mubr.f32.gmra.mrb[0].mxu0 %v705
      %v861 = vpop.f32.mrb[0].mxu0
      %v862 = vadd.f32 0.0, %v861
      %v863 = vpop.f32.mrb[0].mxu0
      %864 = vmatprep.mubr.f32.mxu0 0.0
      %865 = vmatmul.mubr.f32.gmra.mrb[0].mxu0 %v708
      %v866 = vpop.f32.mrb[0].mxu0
      %v867 = vadd.f32 0.0, %v866
      %v868 = vpop.f32.mrb[0].mxu0
      %869 = vmatprep.mubr.f32.mxu0 0.0
      %870 = vmatmul.mubr.f32.gmra.mrb[0].mxu0 %v711
      %v871 = vpop.f32.mrb[0].mxu0
      %v872 = vadd.f32 0.0, %v871
      %v873 = vpop.f32.mrb[0].mxu0
      %874 = vmatprep.mubr.f32.mxu0 0.0
      %875 = vmatmul.mubr.f32.gmra.mrb[0].mxu0 %v714
      %v876 = vpop.f32.mrb[0].mxu0
      %v877 = vadd.f32 0.0, %v876
      %v878 = vpop.f32.mrb[0].mxu0
      %879 = vmatprep.mubr.f32.mxu0 0.0
      %880 = vmatmul.mubr.f32.gmra.mrb[0].mxu0 %v717
      %v881 = vpop.f32.mrb[0].mxu0
      %v882 = vadd.f32 0.0, %v881
      %v883 = vpop.f32.mrb[0].mxu0
      %884 = vmatprep.mubr.f32.mxu0 0.0
      %885 = vmatmul.mubr.f32.gmra.mrb[0].mxu0 %v720
      %v886 = vpop.f32.mrb[0].mxu0
      %v887 = vadd.f32 0.0, %v886
      %v888 = vpop.f32.mrb[0].mxu0
      %889 = vmatprep.mubr.f32.mxu0 0.0
      %890 = vmatmul.mubr.f32.gmra.mrb[0].mxu0 %v723
      %v891 = vpop.f32.mrb[0].mxu0
      %v892 = vadd.f32 0.0, %v891
      %v893 = vpop.f32.mrb[0].mxu0
      %894 = vmatprep.mubr.f32.mxu0 0.0
      %895 = vmatmul.mubr.f32.gmra.mrb[0].mxu0 %v726
      %v896 = vpop.f32.mrb[0].mxu0
      %v897 = vadd.f32 0.0, %v896
      %v898 = vpop.f32.mrb[0].mxu0
      %899 = vmatprep.mubr.f32.mxu0 0.0
      %900 = vmatmul.mubr.f32.gmra.mrb[0].mxu0 %v729
      %v901 = vpop.f32.mrb[0].mxu0
      %v902 = vadd.f32 0.0, %v901
      %v903 = vpop.f32.mrb[0].mxu0
      %904 = vmatprep.mubr.f32.mxu0 0.0
      %905 = vmatmul.mubr.f32.gmra.mrb[0].mxu0 %v732
      %v906 = vpop.f32.mrb[0].mxu0
      %v907 = vadd.f32 0.0, %v906
      %v908 = vpop.f32.mrb[0].mxu0
      %909 = vmatprep.mubr.f32.mxu0 0.0
      %910 = vmatmul.mubr.f32.gmra.mrb[0].mxu0 %v735
      %v911 = vpop.f32.mrb[0].mxu0
      %v912 = vadd.f32 0.0, %v911
      %v913 = vpop.f32.mrb[0].mxu0
      %914 = vmatprep.mubr.f32.mxu0 0.0
      %915 = vmatmul.mubr.f32.gmra.mrb[0].mxu0 %v738
      %v916 = vpop.f32.mrb[0].mxu0
      %v917 = vadd.f32 0.0, %v916
      %v918 = vpop.f32.mrb[0].mxu0
      %919 = vmatprep.mubr.f32.mxu0 0.0
      %920 = vmatmul.mubr.f32.gmra.mrb[0].mxu0 %v741
      %v921 = vpop.f32.mrb[0].mxu0
      %v922 = vadd.f32 0.0, %v921
      %v923 = vpop.f32.mrb[0].mxu0
      %924 = vmatprep.mubr.f32.mxu0 0.0
      %925 = vmatmul.mubr.f32.gmra.mrb[0].mxu0 %v744
      %v926 = vpop.f32.mrb[0].mxu0
      %v927 = vadd.f32 0.0, %v926
      %v928 = vpop.f32.mrb[0].mxu0
      %929 = vmatprep.mubr.f32.mxu0 0.0
      %930 = vmatmul.mubr.f32.gmra.mrb[0].mxu0 %v747
      %v931 = vpop.f32.mrb[0].mxu0
      %v932 = vadd.f32 0.0, %v931
      %v933 = vpop.f32.mrb[0].mxu0
      %934 = vmatprep.mubr.f32.mxu0 0.0
      %935 = vmatmul.mubr.f32.gmra.mrb[0].mxu0 %v750
      %v936 = vpop.f32.mrb[0].mxu0
      %v937 = vadd.f32 0.0, %v936
      %v938 = vpop.f32.mrb[0].mxu0
      %939 = vmatprep.mubr.f32.mxu0 0.0
      %940 = vmatmul.mubr.f32.gmra.mrb[0].mxu0 %v753
      %v941 = vpop.f32.mrb[0].mxu0
      %v942 = vadd.f32 0.0, %v941
      %v943 = vpop.f32.mrb[0].mxu0
      %944 = vmatprep.mubr.f32.mxu0 0.0
      %945 = vmatmul.mubr.f32.gmra.mrb[0].mxu0 %v756
      %v946 = vpop.f32.mrb[0].mxu0
      %v947 = vadd.f32 0.0, %v946
      %v948 = vpop.f32.mrb[0].mxu0
      %949 = vmatprep.mubr.f32.mxu0 0.0
      %950 = vmatmul.mubr.f32.gmra.mrb[0].mxu0 %v759
      %v951 = vpop.f32.mrb[0].mxu0
      %v952 = vadd.f32 0.0, %v951
      %v953 = vpop.f32.mrb[0].mxu0
      %954 = vmatprep.mubr.f32.mxu0 0.0
      %955 = vmatmul.mubr.f32.gmra.mrb[0].mxu0 %v762
      %v956 = vpop.f32.mrb[0].mxu0
      %v957 = vadd.f32 0.0, %v956
      %v958 = vpop.f32.mrb[0].mxu0
      %959 = vmatprep.mubr.f32.mxu0 0.0
      %960 = vmatmul.mubr.f32.gmra.mrb[0].mxu0 %v765
      %v961 = vpop.f32.mrb[0].mxu0
      %v962 = vadd.f32 0.0, %v961
      %v963 = vpop.f32.mrb[0].mxu0
      %964 = vmatprep.mubr.f32.mxu0 0.0
      %965 = vmatmul.mubr.f32.gmra.mrb[0].mxu0 %v768
      %v966 = vpop.f32.mrb[0].mxu0
      %v967 = vadd.f32 0.0, %v966
      %v968 = vpop.f32.mrb[0].mxu0
      %969 = vmatprep.mubr.f32.mxu0 0.0
      %970 = vmatmul.mubr.f32.gmra.mrb[0].mxu0 %v771
      %v971 = vpop.f32.mrb[0].mxu0
      %v972 = vadd.f32 0.0, %v971
      %v973 = vpop.f32.mrb[0].mxu0
      %974 = vmatprep.mubr.f32.mxu0 0.0
      %975 = vmatmul.mubr.f32.gmra.mrb[0].mxu0 %v774
      %v976 = vpop.f32.mrb[0].mxu0
      %v977 = vadd.f32 0.0, %v976
      %v978 = vpop.f32.mrb[0].mxu0
      %979 = vmatprep.mubr.f32.mxu0 0.0
      %980 = vmatmul.mubr.f32.gmra.mrb[0].mxu0 %v777
      %v981 = vpop.f32.mrb[0].mxu0
      %v982 = vadd.f32 0.0, %v981
      %v983 = vpop.f32.mrb[0].mxu0
      %984 = vmatprep.mubr.f32.mxu0 0.0
      %985 = vmatmul.mubr.f32.gmra.mrb[0].mxu0 %v780
      %v986 = vpop.f32.mrb[0].mxu0
      %v987 = vadd.f32 0.0, %v986
      %v988 = vpop.f32.mrb[0].mxu0
      %989 = vmatprep.mubr.f32.mxu0 0.0
      %990 = vmatmul.mubr.f32.gmra.mrb[0].mxu0 %v783
      %v991 = vpop.f32.mrb[0].mxu0
      %v992 = vadd.f32 0.0, %v991
      %v993 = vpop.f32.mrb[0].mxu0
      %994 = vdwg.mxu0
      %v995 = vmax.f32 %v525, %v852
      %v996 = vmax.f32 %v530, %v857
      %v997 = vmax.f32 %v535, %v862
      %v998 = vmax.f32 %v540, %v867
      %v999 = vmax.f32 %v545, %v872
      %v1000 = vmax.f32 %v550, %v877
      %v1001 = vmax.f32 %v555, %v882
      %v1002 = vmax.f32 %v560, %v887
      %v1003 = vmax.f32 %v565, %v892
      %v1004 = vmax.f32 %v570, %v897
      %v1005 = vmax.f32 %v575, %v902
      %v1006 = vmax.f32 %v580, %v907
      %v1007 = vmax.f32 %v585, %v912
      %v1008 = vmax.f32 %v590, %v917
      %v1009 = vmax.f32 %v595, %v922
      %v1010 = vmax.f32 %v600, %v927
      %v1011 = vmax.f32 %v605, %v932
      %v1012 = vmax.f32 %v610, %v937
      %v1013 = vmax.f32 %v615, %v942
      %v1014 = vmax.f32 %v620, %v947
      %v1015 = vmax.f32 %v625, %v952
      %v1016 = vmax.f32 %v630, %v957
      %v1017 = vmax.f32 %v635, %v962
      %v1018 = vmax.f32 %v640, %v967
      %v1019 = vmax.f32 %v645, %v972
      %v1020 = vmax.f32 %v650, %v977
      %v1021 = vmax.f32 %v655, %v982
      %v1022 = vmax.f32 %v660, %v987
      %v1023 = vmax.f32 %v665, %v992
      %s1024 = scalar_lea.vmem %s327, 464
      %v1025 = vld [vmem:[%s1024] sm:$0xff]
      %v1026 = vld [vmem:[%s1024 + $0x8] sm:$0xff]
      %v1027 = vld [vmem:[%s1024 + $0x10] sm:$0xff]
      %v1028 = vld [vmem:[%s1024 + $0x18] sm:$0xff]
      %v1029 = vld [vmem:[%s1024 + $0x20] sm:$0xff]
      %v1030 = vld [vmem:[%s1024 + $0x28] sm:$0xff]
      %v1031 = vld [vmem:[%s1024 + $0x30] sm:$0xff]
      %v1032 = vld [vmem:[%s1024 + $0x38] sm:$0xff]
      %v1033 = vld [vmem:[%s1024 + $0x40] sm:$0xff]
      %v1034 = vld [vmem:[%s1024 + $0x48] sm:$0xff]
      %v1035 = vld [vmem:[%s1024 + $0x50] sm:$0xff]
      %v1036 = vld [vmem:[%s1024 + $0x58] sm:$0xff]
      %v1037 = vld [vmem:[%s1024 + $0x60] sm:$0xff]
      %v1038 = vld [vmem:[%s1024 + $0x68] sm:$0xff]
      %v1039 = vld [vmem:[%s1024 + $0x70] sm:$0xff]
      %v1040 = vld [vmem:[%s1024 + $0x78] sm:$0xff]
      %v1041 = vld [vmem:[%s1024 + $0x80] sm:$0xff]
      %v1042 = vld [vmem:[%s1024 + $0x88] sm:$0xff]
      %v1043 = vld [vmem:[%s1024 + $0x90] sm:$0xff]
      %v1044 = vld [vmem:[%s1024 + $0x98] sm:$0xff]
      %v1045 = vld [vmem:[%s1024 + $0xa0] sm:$0xff]
      %v1046 = vld [vmem:[%s1024 + $0xa8] sm:$0xff]
      %v1047 = vld [vmem:[%s1024 + $0xb0] sm:$0xff]
      %v1048 = vld [vmem:[%s1024 + $0xb8] sm:$0xff]
      %v1049 = vld [vmem:[%s1024 + $0xc0] sm:$0xff]
      %v1050 = vld [vmem:[%s1024 + $0xc8] sm:$0xff]
      %v1051 = vld [vmem:[%s1024 + $0xd0] sm:$0xff]
      %v1052 = vld [vmem:[%s1024 + $0xd8] sm:$0xff]
      %v1053 = vld [vmem:[%s1024 + $0xe0] sm:$0x1]
      %v1055 = vsel %vm366, %v1025, 0
      %v1058 = vsel %vm366, %v1026, 0
      %v1061 = vsel %vm366, %v1027, 0
      %v1064 = vsel %vm366, %v1028, 0
      %v1067 = vsel %vm366, %v1029, 0
      %v1070 = vsel %vm366, %v1030, 0
      %v1073 = vsel %vm366, %v1031, 0
      %v1076 = vsel %vm366, %v1032, 0
      %v1079 = vsel %vm366, %v1033, 0
      %v1082 = vsel %vm366, %v1034, 0
      %v1085 = vsel %vm366, %v1035, 0
      %v1088 = vsel %vm366, %v1036, 0
      %v1091 = vsel %vm366, %v1037, 0
      %v1094 = vsel %vm366, %v1038, 0
      %v1097 = vsel %vm366, %v1039, 0
      %v1100 = vsel %vm366, %v1040, 0
      %v1103 = vsel %vm366, %v1041, 0
      %v1106 = vsel %vm366, %v1042, 0
      %v1109 = vsel %vm366, %v1043, 0
      %v1112 = vsel %vm366, %v1044, 0
      %v1115 = vsel %vm366, %v1045, 0
      %v1118 = vsel %vm366, %v1046, 0
      %v1121 = vsel %vm366, %v1047, 0
      %v1124 = vsel %vm366, %v1048, 0
      %v1127 = vsel %vm366, %v1049, 0
      %v1130 = vsel %vm366, %v1050, 0
      %v1133 = vsel %vm366, %v1051, 0
      %v1136 = vsel %vm366, %v1052, 0
      %v1139 = vsel %vm366, %v1053, 0
      %1141 = vmatprep.subr.mxu0 0.0
      %1142 = vmatpush1.msra.mxu0 %v333
      %1143 = vmatprep.subr.mxu0 0.0
      %1144 = vmatpush1.msra.mxu0 %v334
      %1145 = vmatprep.subr.mxu0 0.0
      %1146 = vmatpush1.msra.mxu0 %v335
      %1147 = vmatprep.subr.mxu0 0.0
      %1148 = vmatpush1.msra.mxu0 %v456
      %1149 = vmatprep.subr.mxu0 0.0
      %1150 = vmatpush1.msra.mxu0 0.0
      %1151 = vmatprep.subr.mxu0 0.0
      %1152 = vmatpush1.msra.mxu0 0.0
      %1153 = vmatprep.subr.mxu0 0.0
      %1154 = vmatpush1.msra.mxu0 0.0
      %1155 = vmatprep.subr.mxu0 0.0
      %1156 = vmatpush1.msra.mxu0 0.0
      %1157 = vmatprep.subr.mxu0 0.0
      %1158 = vmatpush1.msra.mxu0 0.0
      %1159 = vmatprep.subr.mxu0 0.0
      %1160 = vmatpush1.msra.mxu0 0.0
      %1161 = vmatprep.subr.mxu0 0.0
      %1162 = vmatpush1.msra.mxu0 0.0
      %1163 = vmatprep.subr.mxu0 0.0
      %1164 = vmatpush1.msra.mxu0 0.0
      %1165 = vmatprep.subr.mxu0 0.0
      %1166 = vmatpush1.msra.mxu0 0.0
      %1167 = vmatprep.subr.mxu0 0.0
      %1168 = vmatpush1.msra.mxu0 0.0
      %1169 = vmatprep.subr.mxu0 0.0
      %1170 = vmatpush1.msra.mxu0 0.0
      %1171 = vmatprep.subr.mxu0 0.0
      %1172 = vmatpush1.msra.mxu0 0.0
      %1173 = vmatprep.subr.mxu0 0.0
      %1174 = vmatpush1.msra.mxu0 0.0
      %1175 = vmatprep.subr.mxu0 0.0
      %1176 = vmatpush1.msra.mxu0 0.0
      %1177 = vmatprep.subr.mxu0 0.0
      %1178 = vmatpush1.msra.mxu0 0.0
      %1179 = vmatprep.subr.mxu0 0.0
      %1180 = vmatpush1.msra.mxu0 0.0
      %1181 = vmatprep.subr.mxu0 0.0
      %1182 = vmatpush1.msra.mxu0 0.0
      %1183 = vmatprep.subr.mxu0 0.0
      %1184 = vmatpush1.msra.mxu0 0.0
      %1185 = vmatprep.subr.mxu0 0.0
      %1186 = vmatpush1.msra.mxu0 0.0
      %1187 = vmatprep.subr.mxu0 0.0
      %1188 = vmatpush1.msra.mxu0 0.0
      %1189 = vmatprep.subr.mxu0 0.0
      %1190 = vmatpush1.msra.mxu0 0.0
      %1191 = vmatprep.subr.mxu0 0.0
      %1192 = vmatpush1.msra.mxu0 0.0
      %1193 = vmatprep.subr.mxu0 0.0
      %1194 = vmatpush1.msra.mxu0 0.0
      %1195 = vmatprep.subr.mxu0 0.0
      %1196 = vmatpush1.msra.mxu0 0.0
      %1197 = vmatprep.subr.mxu0 0.0
      %1198 = vmatpush1.msra.mxu0 0.0
      %1199 = vmatprep.subr.mxu0 0.0
      %1200 = vmatpush1.msra.mxu0 0.0
      %1201 = vmatprep.subr.mxu0 0.0
      %1202 = vmatpush1.msra.mxu0 0.0
      %1203 = vmatprep.subr.mxu0 0.0
      %1204 = vmatpush1.msra.mxu0 0.0
      %1205 = vmatprep.mubr.f32.mxu0 0.0
      %1206 = vmatmul.mubr.f32.gmra.mrb[0].mxu0 %v1055
      %v1207 = vpop.f32.mrb[0].mxu0
      %v1208 = vadd.f32 0.0, %v1207
      %v1209 = vpop.f32.mrb[0].mxu0
      %1210 = vmatprep.mubr.f32.mxu0 0.0
      %1211 = vmatmul.mubr.f32.gmra.mrb[0].mxu0 %v1058
      %v1212 = vpop.f32.mrb[0].mxu0
      %v1213 = vadd.f32 0.0, %v1212
      %v1214 = vpop.f32.mrb[0].mxu0
      %1215 = vmatprep.mubr.f32.mxu0 0.0
      %1216 = vmatmul.mubr.f32.gmra.mrb[0].mxu0 %v1061
      %v1217 = vpop.f32.mrb[0].mxu0
      %v1218 = vadd.f32 0.0, %v1217
      %v1219 = vpop.f32.mrb[0].mxu0
      %1220 = vmatprep.mubr.f32.mxu0 0.0
      %1221 = vmatmul.mubr.f32.gmra.mrb[0].mxu0 %v1064
      %v1222 = vpop.f32.mrb[0].mxu0
      %v1223 = vadd.f32 0.0, %v1222
      %v1224 = vpop.f32.mrb[0].mxu0
      %1225 = vmatprep.mubr.f32.mxu0 0.0
      %1226 = vmatmul.mubr.f32.gmra.mrb[0].mxu0 %v1067
      %v1227 = vpop.f32.mrb[0].mxu0
      %v1228 = vadd.f32 0.0, %v1227
      %v1229 = vpop.f32.mrb[0].mxu0
      %1230 = vmatprep.mubr.f32.mxu0 0.0
      %1231 = vmatmul.mubr.f32.gmra.mrb[0].mxu0 %v1070
      %v1232 = vpop.f32.mrb[0].mxu0
      %v1233 = vadd.f32 0.0, %v1232
      %v1234 = vpop.f32.mrb[0].mxu0
      %1235 = vmatprep.mubr.f32.mxu0 0.0
      %1236 = vmatmul.mubr.f32.gmra.mrb[0].mxu0 %v1073
      %v1237 = vpop.f32.mrb[0].mxu0
      %v1238 = vadd.f32 0.0, %v1237
      %v1239 = vpop.f32.mrb[0].mxu0
      %1240 = vmatprep.mubr.f32.mxu0 0.0
      %1241 = vmatmul.mubr.f32.gmra.mrb[0].mxu0 %v1076
      %v1242 = vpop.f32.mrb[0].mxu0
      %v1243 = vadd.f32 0.0, %v1242
      %v1244 = vpop.f32.mrb[0].mxu0
      %1245 = vmatprep.mubr.f32.mxu0 0.0
      %1246 = vmatmul.mubr.f32.gmra.mrb[0].mxu0 %v1079
      %v1247 = vpop.f32.mrb[0].mxu0
      %v1248 = vadd.f32 0.0, %v1247
      %v1249 = vpop.f32.mrb[0].mxu0
      %1250 = vmatprep.mubr.f32.mxu0 0.0
      %1251 = vmatmul.mubr.f32.gmra.mrb[0].mxu0 %v1082
      %v1252 = vpop.f32.mrb[0].mxu0
      %v1253 = vadd.f32 0.0, %v1252
      %v1254 = vpop.f32.mrb[0].mxu0
      %1255 = vmatprep.mubr.f32.mxu0 0.0
      %1256 = vmatmul.mubr.f32.gmra.mrb[0].mxu0 %v1085
      %v1257 = vpop.f32.mrb[0].mxu0
      %v1258 = vadd.f32 0.0, %v1257
      %v1259 = vpop.f32.mrb[0].mxu0
      %1260 = vmatprep.mubr.f32.mxu0 0.0
      %1261 = vmatmul.mubr.f32.gmra.mrb[0].mxu0 %v1088
      %v1262 = vpop.f32.mrb[0].mxu0
      %v1263 = vadd.f32 0.0, %v1262
      %v1264 = vpop.f32.mrb[0].mxu0
      %1265 = vmatprep.mubr.f32.mxu0 0.0
      %1266 = vmatmul.mubr.f32.gmra.mrb[0].mxu0 %v1091
      %v1267 = vpop.f32.mrb[0].mxu0
      %v1268 = vadd.f32 0.0, %v1267
      %v1269 = vpop.f32.mrb[0].mxu0
      %1270 = vmatprep.mubr.f32.mxu0 0.0
      %1271 = vmatmul.mubr.f32.gmra.mrb[0].mxu0 %v1094
      %v1272 = vpop.f32.mrb[0].mxu0
      %v1273 = vadd.f32 0.0, %v1272
      %v1274 = vpop.f32.mrb[0].mxu0
      %1275 = vmatprep.mubr.f32.mxu0 0.0
      %1276 = vmatmul.mubr.f32.gmra.mrb[0].mxu0 %v1097
      %v1277 = vpop.f32.mrb[0].mxu0
      %v1278 = vadd.f32 0.0, %v1277
      %v1279 = vpop.f32.mrb[0].mxu0
      %1280 = vmatprep.mubr.f32.mxu0 0.0
      %1281 = vmatmul.mubr.f32.gmra.mrb[0].mxu0 %v1100
      %v1282 = vpop.f32.mrb[0].mxu0
      %v1283 = vadd.f32 0.0, %v1282
      %v1284 = vpop.f32.mrb[0].mxu0
      %1285 = vmatprep.mubr.f32.mxu0 0.0
      %1286 = vmatmul.mubr.f32.gmra.mrb[0].mxu0 %v1103
      %v1287 = vpop.f32.mrb[0].mxu0
      %v1288 = vadd.f32 0.0, %v1287
      %v1289 = vpop.f32.mrb[0].mxu0
      %1290 = vmatprep.mubr.f32.mxu0 0.0
      %1291 = vmatmul.mubr.f32.gmra.mrb[0].mxu0 %v1106
      %v1292 = vpop.f32.mrb[0].mxu0
      %v1293 = vadd.f32 0.0, %v1292
      %v1294 = vpop.f32.mrb[0].mxu0
      %1295 = vmatprep.mubr.f32.mxu0 0.0
      %1296 = vmatmul.mubr.f32.gmra.mrb[0].mxu0 %v1109
      %v1297 = vpop.f32.mrb[0].mxu0
      %v1298 = vadd.f32 0.0, %v1297
      %v1299 = vpop.f32.mrb[0].mxu0
      %1300 = vmatprep.mubr.f32.mxu0 0.0
      %1301 = vmatmul.mubr.f32.gmra.mrb[0].mxu0 %v1112
      %v1302 = vpop.f32.mrb[0].mxu0
      %v1303 = vadd.f32 0.0, %v1302
      %v1304 = vpop.f32.mrb[0].mxu0
      %1305 = vmatprep.mubr.f32.mxu0 0.0
      %1306 = vmatmul.mubr.f32.gmra.mrb[0].mxu0 %v1115
      %v1307 = vpop.f32.mrb[0].mxu0
      %v1308 = vadd.f32 0.0, %v1307
      %v1309 = vpop.f32.mrb[0].mxu0
      %1310 = vmatprep.mubr.f32.mxu0 0.0
      %1311 = vmatmul.mubr.f32.gmra.mrb[0].mxu0 %v1118
      %v1312 = vpop.f32.mrb[0].mxu0
      %v1313 = vadd.f32 0.0, %v1312
      %v1314 = vpop.f32.mrb[0].mxu0
      %1315 = vmatprep.mubr.f32.mxu0 0.0
      %1316 = vmatmul.mubr.f32.gmra.mrb[0].mxu0 %v1121
      %v1317 = vpop.f32.mrb[0].mxu0
      %v1318 = vadd.f32 0.0, %v1317
      %v1319 = vpop.f32.mrb[0].mxu0
      %1320 = vmatprep.mubr.f32.mxu0 0.0
      %1321 = vmatmul.mubr.f32.gmra.mrb[0].mxu0 %v1124
      %v1322 = vpop.f32.mrb[0].mxu0
      %v1323 = vadd.f32 0.0, %v1322
      %v1324 = vpop.f32.mrb[0].mxu0
      %1325 = vmatprep.mubr.f32.mxu0 0.0
      %1326 = vmatmul.mubr.f32.gmra.mrb[0].mxu0 %v1127
      %v1327 = vpop.f32.mrb[0].mxu0
      %v1328 = vadd.f32 0.0, %v1327
      %v1329 = vpop.f32.mrb[0].mxu0
      %1330 = vmatprep.mubr.f32.mxu0 0.0
      %1331 = vmatmul.mubr.f32.gmra.mrb[0].mxu0 %v1130
      %v1332 = vpop.f32.mrb[0].mxu0
      %v1333 = vadd.f32 0.0, %v1332
      %v1334 = vpop.f32.mrb[0].mxu0
      %1335 = vmatprep.mubr.f32.mxu0 0.0
      %1336 = vmatmul.mubr.f32.gmra.mrb[0].mxu0 %v1133
      %v1337 = vpop.f32.mrb[0].mxu0
      %v1338 = vadd.f32 0.0, %v1337
      %v1339 = vpop.f32.mrb[0].mxu0
      %1340 = vmatprep.mubr.f32.mxu0 0.0
      %1341 = vmatmul.mubr.f32.gmra.mrb[0].mxu0 %v1136
      %v1342 = vpop.f32.mrb[0].mxu0
      %v1343 = vadd.f32 0.0, %v1342
      %v1344 = vpop.f32.mrb[0].mxu0
      %1345 = vmatprep.mubr.f32.mxu0 0.0
      %1346 = vmatmul.mubr.f32.gmra.mrb[0].mxu0 %v1139
      %v1347 = vpop.f32.mrb[0].mxu0
      %v1348 = vadd.f32 0.0, %v1347
      %v1349 = vpop.f32.mrb[0].mxu0
      %1350 = vdwg.mxu0
      %v1351 = vmax.f32 %v995, %v1208
      %v1352 = vmax.f32 %v996, %v1213
      %v1353 = vmax.f32 %v997, %v1218
      %v1354 = vmax.f32 %v998, %v1223
      %v1355 = vmax.f32 %v999, %v1228
      %v1356 = vmax.f32 %v1000, %v1233
      %v1357 = vmax.f32 %v1001, %v1238
      %v1358 = vmax.f32 %v1002, %v1243
      %v1359 = vmax.f32 %v1003, %v1248
      %v1360 = vmax.f32 %v1004, %v1253
      %v1361 = vmax.f32 %v1005, %v1258
      %v1362 = vmax.f32 %v1006, %v1263
      %v1363 = vmax.f32 %v1007, %v1268
      %v1364 = vmax.f32 %v1008, %v1273
      %v1365 = vmax.f32 %v1009, %v1278
      %v1366 = vmax.f32 %v1010, %v1283
      %v1367 = vmax.f32 %v1011, %v1288
      %v1368 = vmax.f32 %v1012, %v1293
      %v1369 = vmax.f32 %v1013, %v1298
      %v1370 = vmax.f32 %v1014, %v1303
      %v1371 = vmax.f32 %v1015, %v1308
      %v1372 = vmax.f32 %v1016, %v1313
      %v1373 = vmax.f32 %v1017, %v1318
      %v1374 = vmax.f32 %v1018, %v1323
      %v1375 = vmax.f32 %v1019, %v1328
      %v1376 = vmax.f32 %v1020, %v1333
      %v1377 = vmax.f32 %v1021, %v1338
      %v1378 = vmax.f32 %v1022, %v1343
      %v1379 = vmax.f32 %v1023, %v1348
      %s1380 = scalar_lea.vmem %s327, 696
      %v1381 = vld [vmem:[%s1380] sm:$0xff]
      %v1382 = vld [vmem:[%s1380 + $0x8] sm:$0xff]
      %v1383 = vld [vmem:[%s1380 + $0x10] sm:$0xff]
      %v1384 = vld [vmem:[%s1380 + $0x18] sm:$0xff]
      %v1385 = vld [vmem:[%s1380 + $0x20] sm:$0xff]
      %v1386 = vld [vmem:[%s1380 + $0x28] sm:$0xff]
      %v1387 = vld [vmem:[%s1380 + $0x30] sm:$0xff]
      %v1388 = vld [vmem:[%s1380 + $0x38] sm:$0xff]
      %v1389 = vld [vmem:[%s1380 + $0x40] sm:$0xff]
      %v1390 = vld [vmem:[%s1380 + $0x48] sm:$0xff]
      %v1391 = vld [vmem:[%s1380 + $0x50] sm:$0xff]
      %v1392 = vld [vmem:[%s1380 + $0x58] sm:$0xff]
      %v1393 = vld [vmem:[%s1380 + $0x60] sm:$0xff]
      %v1394 = vld [vmem:[%s1380 + $0x68] sm:$0xff]
      %v1395 = vld [vmem:[%s1380 + $0x70] sm:$0xff]
      %v1396 = vld [vmem:[%s1380 + $0x78] sm:$0xff]
      %v1397 = vld [vmem:[%s1380 + $0x80] sm:$0xff]
      %v1398 = vld [vmem:[%s1380 + $0x88] sm:$0xff]
      %v1399 = vld [vmem:[%s1380 + $0x90] sm:$0xff]
      %v1400 = vld [vmem:[%s1380 + $0x98] sm:$0xff]
      %v1401 = vld [vmem:[%s1380 + $0xa0] sm:$0xff]
      %v1402 = vld [vmem:[%s1380 + $0xa8] sm:$0xff]
      %v1403 = vld [vmem:[%s1380 + $0xb0] sm:$0xff]
      %v1404 = vld [vmem:[%s1380 + $0xb8] sm:$0xff]
      %v1405 = vld [vmem:[%s1380 + $0xc0] sm:$0xff]
      %v1406 = vld [vmem:[%s1380 + $0xc8] sm:$0xff]
      %v1407 = vld [vmem:[%s1380 + $0xd0] sm:$0xff]
      %v1408 = vld [vmem:[%s1380 + $0xd8] sm:$0xff]
      %v1409 = vld [vmem:[%s1380 + $0xe0] sm:$0x1]
      %v1411 = vsel %vm366, %v1381, 0
      %v1414 = vsel %vm366, %v1382, 0
      %v1417 = vsel %vm366, %v1383, 0
      %v1420 = vsel %vm366, %v1384, 0
      %v1423 = vsel %vm366, %v1385, 0
      %v1426 = vsel %vm366, %v1386, 0
      %v1429 = vsel %vm366, %v1387, 0
      %v1432 = vsel %vm366, %v1388, 0
      %v1435 = vsel %vm366, %v1389, 0
      %v1438 = vsel %vm366, %v1390, 0
      %v1441 = vsel %vm366, %v1391, 0
      %v1444 = vsel %vm366, %v1392, 0
      %v1447 = vsel %vm366, %v1393, 0
      %v1450 = vsel %vm366, %v1394, 0
      %v1453 = vsel %vm366, %v1395, 0
      %v1456 = vsel %vm366, %v1396, 0
      %v1459 = vsel %vm366, %v1397, 0
      %v1462 = vsel %vm366, %v1398, 0
      %v1465 = vsel %vm366, %v1399, 0
      %v1468 = vsel %vm366, %v1400, 0
      %v1471 = vsel %vm366, %v1401, 0
      %v1474 = vsel %vm366, %v1402, 0
      %v1477 = vsel %vm366, %v1403, 0
      %v1480 = vsel %vm366, %v1404, 0
      %v1483 = vsel %vm366, %v1405, 0
      %v1486 = vsel %vm366, %v1406, 0
      %v1489 = vsel %vm366, %v1407, 0
      %v1492 = vsel %vm366, %v1408, 0
      %v1495 = vsel %vm366, %v1409, 0
      %1497 = vmatprep.subr.mxu0 0.0
      %1498 = vmatpush1.msra.mxu0 %v333
      %1499 = vmatprep.subr.mxu0 0.0
      %1500 = vmatpush1.msra.mxu0 %v334
      %1501 = vmatprep.subr.mxu0 0.0
      %1502 = vmatpush1.msra.mxu0 %v335
      %1503 = vmatprep.subr.mxu0 0.0
      %1504 = vmatpush1.msra.mxu0 %v456
      %1505 = vmatprep.subr.mxu0 0.0
      %1506 = vmatpush1.msra.mxu0 0.0
      %1507 = vmatprep.subr.mxu0 0.0
      %1508 = vmatpush1.msra.mxu0 0.0
      %1509 = vmatprep.subr.mxu0 0.0
      %1510 = vmatpush1.msra.mxu0 0.0
      %1511 = vmatprep.subr.mxu0 0.0
      %1512 = vmatpush1.msra.mxu0 0.0
      %1513 = vmatprep.subr.mxu0 0.0
      %1514 = vmatpush1.msra.mxu0 0.0
      %1515 = vmatprep.subr.mxu0 0.0
      %1516 = vmatpush1.msra.mxu0 0.0
      %1517 = vmatprep.subr.mxu0 0.0
      %1518 = vmatpush1.msra.mxu0 0.0
      %1519 = vmatprep.subr.mxu0 0.0
      %1520 = vmatpush1.msra.mxu0 0.0
      %1521 = vmatprep.subr.mxu0 0.0
      %1522 = vmatpush1.msra.mxu0 0.0
      %1523 = vmatprep.subr.mxu0 0.0
      %1524 = vmatpush1.msra.mxu0 0.0
      %1525 = vmatprep.subr.mxu0 0.0
      %1526 = vmatpush1.msra.mxu0 0.0
      %1527 = vmatprep.subr.mxu0 0.0
      %1528 = vmatpush1.msra.mxu0 0.0
      %1529 = vmatprep.subr.mxu0 0.0
      %1530 = vmatpush1.msra.mxu0 0.0
      %1531 = vmatprep.subr.mxu0 0.0
      %1532 = vmatpush1.msra.mxu0 0.0
      %1533 = vmatprep.subr.mxu0 0.0
      %1534 = vmatpush1.msra.mxu0 0.0
      %1535 = vmatprep.subr.mxu0 0.0
      %1536 = vmatpush1.msra.mxu0 0.0
      %1537 = vmatprep.subr.mxu0 0.0
      %1538 = vmatpush1.msra.mxu0 0.0
      %1539 = vmatprep.subr.mxu0 0.0
      %1540 = vmatpush1.msra.mxu0 0.0
      %1541 = vmatprep.subr.mxu0 0.0
      %1542 = vmatpush1.msra.mxu0 0.0
      %1543 = vmatprep.subr.mxu0 0.0
      %1544 = vmatpush1.msra.mxu0 0.0
      %1545 = vmatprep.subr.mxu0 0.0
      %1546 = vmatpush1.msra.mxu0 0.0
      %1547 = vmatprep.subr.mxu0 0.0
      %1548 = vmatpush1.msra.mxu0 0.0
      %1549 = vmatprep.subr.mxu0 0.0
      %1550 = vmatpush1.msra.mxu0 0.0
      %1551 = vmatprep.subr.mxu0 0.0
      %1552 = vmatpush1.msra.mxu0 0.0
      %1553 = vmatprep.subr.mxu0 0.0
      %1554 = vmatpush1.msra.mxu0 0.0
      %1555 = vmatprep.subr.mxu0 0.0
      %1556 = vmatpush1.msra.mxu0 0.0
      %1557 = vmatprep.subr.mxu0 0.0
      %1558 = vmatpush1.msra.mxu0 0.0
      %1559 = vmatprep.subr.mxu0 0.0
      %1560 = vmatpush1.msra.mxu0 0.0
      %1561 = vmatprep.mubr.f32.mxu0 0.0
      %1562 = vmatmul.mubr.f32.gmra.mrb[0].mxu0 %v1411
      %v1563 = vpop.f32.mrb[0].mxu0
      %v1564 = vadd.f32 0.0, %v1563
      %v1565 = vpop.f32.mrb[0].mxu0
      %1566 = vmatprep.mubr.f32.mxu0 0.0
      %1567 = vmatmul.mubr.f32.gmra.mrb[0].mxu0 %v1414
      %v1568 = vpop.f32.mrb[0].mxu0
      %v1569 = vadd.f32 0.0, %v1568
      %v1570 = vpop.f32.mrb[0].mxu0
      %1571 = vmatprep.mubr.f32.mxu0 0.0
      %1572 = vmatmul.mubr.f32.gmra.mrb[0].mxu0 %v1417
      %v1573 = vpop.f32.mrb[0].mxu0
      %v1574 = vadd.f32 0.0, %v1573
      %v1575 = vpop.f32.mrb[0].mxu0
      %1576 = vmatprep.mubr.f32.mxu0 0.0
      %1577 = vmatmul.mubr.f32.gmra.mrb[0].mxu0 %v1420
      %v1578 = vpop.f32.mrb[0].mxu0
      %v1579 = vadd.f32 0.0, %v1578
      %v1580 = vpop.f32.mrb[0].mxu0
      %1581 = vmatprep.mubr.f32.mxu0 0.0
      %1582 = vmatmul.mubr.f32.gmra.mrb[0].mxu0 %v1423
      %v1583 = vpop.f32.mrb[0].mxu0
      %v1584 = vadd.f32 0.0, %v1583
      %v1585 = vpop.f32.mrb[0].mxu0
      %1586 = vmatprep.mubr.f32.mxu0 0.0
      %1587 = vmatmul.mubr.f32.gmra.mrb[0].mxu0 %v1426
      %v1588 = vpop.f32.mrb[0].mxu0
      %v1589 = vadd.f32 0.0, %v1588
      %v1590 = vpop.f32.mrb[0].mxu0
      %1591 = vmatprep.mubr.f32.mxu0 0.0
      %1592 = vmatmul.mubr.f32.gmra.mrb[0].mxu0 %v1429
      %v1593 = vpop.f32.mrb[0].mxu0
      %v1594 = vadd.f32 0.0, %v1593
      %v1595 = vpop.f32.mrb[0].mxu0
      %1596 = vmatprep.mubr.f32.mxu0 0.0
      %1597 = vmatmul.mubr.f32.gmra.mrb[0].mxu0 %v1432
      %v1598 = vpop.f32.mrb[0].mxu0
      %v1599 = vadd.f32 0.0, %v1598
      %v1600 = vpop.f32.mrb[0].mxu0
      %1601 = vmatprep.mubr.f32.mxu0 0.0
      %1602 = vmatmul.mubr.f32.gmra.mrb[0].mxu0 %v1435
      %v1603 = vpop.f32.mrb[0].mxu0
      %v1604 = vadd.f32 0.0, %v1603
      %v1605 = vpop.f32.mrb[0].mxu0
      %1606 = vmatprep.mubr.f32.mxu0 0.0
      %1607 = vmatmul.mubr.f32.gmra.mrb[0].mxu0 %v1438
      %v1608 = vpop.f32.mrb[0].mxu0
      %v1609 = vadd.f32 0.0, %v1608
      %v1610 = vpop.f32.mrb[0].mxu0
      %1611 = vmatprep.mubr.f32.mxu0 0.0
      %1612 = vmatmul.mubr.f32.gmra.mrb[0].mxu0 %v1441
      %v1613 = vpop.f32.mrb[0].mxu0
      %v1614 = vadd.f32 0.0, %v1613
      %v1615 = vpop.f32.mrb[0].mxu0
      %1616 = vmatprep.mubr.f32.mxu0 0.0
      %1617 = vmatmul.mubr.f32.gmra.mrb[0].mxu0 %v1444
      %v1618 = vpop.f32.mrb[0].mxu0
      %v1619 = vadd.f32 0.0, %v1618
      %v1620 = vpop.f32.mrb[0].mxu0
      %1621 = vmatprep.mubr.f32.mxu0 0.0
      %1622 = vmatmul.mubr.f32.gmra.mrb[0].mxu0 %v1447
      %v1623 = vpop.f32.mrb[0].mxu0
      %v1624 = vadd.f32 0.0, %v1623
      %v1625 = vpop.f32.mrb[0].mxu0
      %1626 = vmatprep.mubr.f32.mxu0 0.0
      %1627 = vmatmul.mubr.f32.gmra.mrb[0].mxu0 %v1450
      %v1628 = vpop.f32.mrb[0].mxu0
      %v1629 = vadd.f32 0.0, %v1628
      %v1630 = vpop.f32.mrb[0].mxu0
      %1631 = vmatprep.mubr.f32.mxu0 0.0
      %1632 = vmatmul.mubr.f32.gmra.mrb[0].mxu0 %v1453
      %v1633 = vpop.f32.mrb[0].mxu0
      %v1634 = vadd.f32 0.0, %v1633
      %v1635 = vpop.f32.mrb[0].mxu0
      %1636 = vmatprep.mubr.f32.mxu0 0.0
      %1637 = vmatmul.mubr.f32.gmra.mrb[0].mxu0 %v1456
      %v1638 = vpop.f32.mrb[0].mxu0
      %v1639 = vadd.f32 0.0, %v1638
      %v1640 = vpop.f32.mrb[0].mxu0
      %1641 = vmatprep.mubr.f32.mxu0 0.0
      %1642 = vmatmul.mubr.f32.gmra.mrb[0].mxu0 %v1459
      %v1643 = vpop.f32.mrb[0].mxu0
      %v1644 = vadd.f32 0.0, %v1643
      %v1645 = vpop.f32.mrb[0].mxu0
      %1646 = vmatprep.mubr.f32.mxu0 0.0
      %1647 = vmatmul.mubr.f32.gmra.mrb[0].mxu0 %v1462
      %v1648 = vpop.f32.mrb[0].mxu0
      %v1649 = vadd.f32 0.0, %v1648
      %v1650 = vpop.f32.mrb[0].mxu0
      %1651 = vmatprep.mubr.f32.mxu0 0.0
      %1652 = vmatmul.mubr.f32.gmra.mrb[0].mxu0 %v1465
      %v1653 = vpop.f32.mrb[0].mxu0
      %v1654 = vadd.f32 0.0, %v1653
      %v1655 = vpop.f32.mrb[0].mxu0
      %1656 = vmatprep.mubr.f32.mxu0 0.0
      %1657 = vmatmul.mubr.f32.gmra.mrb[0].mxu0 %v1468
      %v1658 = vpop.f32.mrb[0].mxu0
      %v1659 = vadd.f32 0.0, %v1658
      %v1660 = vpop.f32.mrb[0].mxu0
      %1661 = vmatprep.mubr.f32.mxu0 0.0
      %1662 = vmatmul.mubr.f32.gmra.mrb[0].mxu0 %v1471
      %v1663 = vpop.f32.mrb[0].mxu0
      %v1664 = vadd.f32 0.0, %v1663
      %v1665 = vpop.f32.mrb[0].mxu0
      %1666 = vmatprep.mubr.f32.mxu0 0.0
      %1667 = vmatmul.mubr.f32.gmra.mrb[0].mxu0 %v1474
      %v1668 = vpop.f32.mrb[0].mxu0
      %v1669 = vadd.f32 0.0, %v1668
      %v1670 = vpop.f32.mrb[0].mxu0
      %1671 = vmatprep.mubr.f32.mxu0 0.0
      %1672 = vmatmul.mubr.f32.gmra.mrb[0].mxu0 %v1477
      %v1673 = vpop.f32.mrb[0].mxu0
      %v1674 = vadd.f32 0.0, %v1673
      %v1675 = vpop.f32.mrb[0].mxu0
      %1676 = vmatprep.mubr.f32.mxu0 0.0
      %1677 = vmatmul.mubr.f32.gmra.mrb[0].mxu0 %v1480
      %v1678 = vpop.f32.mrb[0].mxu0
      %v1679 = vadd.f32 0.0, %v1678
      %v1680 = vpop.f32.mrb[0].mxu0
      %1681 = vmatprep.mubr.f32.mxu0 0.0
      %1682 = vmatmul.mubr.f32.gmra.mrb[0].mxu0 %v1483
      %v1683 = vpop.f32.mrb[0].mxu0
      %v1684 = vadd.f32 0.0, %v1683
      %v1685 = vpop.f32.mrb[0].mxu0
      %1686 = vmatprep.mubr.f32.mxu0 0.0
      %1687 = vmatmul.mubr.f32.gmra.mrb[0].mxu0 %v1486
      %v1688 = vpop.f32.mrb[0].mxu0
      %v1689 = vadd.f32 0.0, %v1688
      %v1690 = vpop.f32.mrb[0].mxu0
      %1691 = vmatprep.mubr.f32.mxu0 0.0
      %1692 = vmatmul.mubr.f32.gmra.mrb[0].mxu0 %v1489
      %v1693 = vpop.f32.mrb[0].mxu0
      %v1694 = vadd.f32 0.0, %v1693
      %v1695 = vpop.f32.mrb[0].mxu0
      %1696 = vmatprep.mubr.f32.mxu0 0.0
      %1697 = vmatmul.mubr.f32.gmra.mrb[0].mxu0 %v1492
      %v1698 = vpop.f32.mrb[0].mxu0
      %v1699 = vadd.f32 0.0, %v1698
      %v1700 = vpop.f32.mrb[0].mxu0
      %1701 = vmatprep.mubr.f32.mxu0 0.0
      %1702 = vmatmul.mubr.f32.gmra.mrb[0].mxu0 %v1495
      %v1703 = vpop.f32.mrb[0].mxu0
      %v1704 = vadd.f32 0.0, %v1703
      %v1705 = vpop.f32.mrb[0].mxu0
      %1706 = vdwg.mxu0
      %v1707 = vmax.f32 %v1351, %v1564
      %v1708 = vmax.f32 %v1352, %v1569
      %v1709 = vmax.f32 %v1353, %v1574
      %v1710 = vmax.f32 %v1354, %v1579
      %v1711 = vmax.f32 %v1355, %v1584
      %v1712 = vmax.f32 %v1356, %v1589
      %v1713 = vmax.f32 %v1357, %v1594
      %v1714 = vmax.f32 %v1358, %v1599
      %v1715 = vmax.f32 %v1359, %v1604
      %v1716 = vmax.f32 %v1360, %v1609
      %v1717 = vmax.f32 %v1361, %v1614
      %v1718 = vmax.f32 %v1362, %v1619
      %v1719 = vmax.f32 %v1363, %v1624
      %v1720 = vmax.f32 %v1364, %v1629
      %v1721 = vmax.f32 %v1365, %v1634
      %v1722 = vmax.f32 %v1366, %v1639
      %v1723 = vmax.f32 %v1367, %v1644
      %v1724 = vmax.f32 %v1368, %v1649
      %v1725 = vmax.f32 %v1369, %v1654
      %v1726 = vmax.f32 %v1370, %v1659
      %v1727 = vmax.f32 %v1371, %v1664
      %v1728 = vmax.f32 %v1372, %v1669
      %v1729 = vmax.f32 %v1373, %v1674
      %v1730 = vmax.f32 %v1374, %v1679
      %v1731 = vmax.f32 %v1375, %v1684
      %v1732 = vmax.f32 %v1376, %v1689
      %v1733 = vmax.f32 %v1377, %v1694
      %v1734 = vmax.f32 %v1378, %v1699
      %v1735 = vmax.f32 %v1379, %v1704
      %v1736 = vld [vmem:[%s2] sm:$0x1]
      %v1738 = vlaneseq
      %v1739 = vshrl.u32 %v1738, 7
      %v1740 = vsub.s32 0, %v1739
      %v1741 = vrot.slane %v1736, %v1740
      %v1743 = vadd.f32 %v1707, %v1741
      %v1744 = vadd.f32 %v1708, %v1741
      %v1745 = vadd.f32 %v1709, %v1741
      %v1746 = vadd.f32 %v1710, %v1741
      %v1747 = vadd.f32 %v1711, %v1741
      %v1748 = vadd.f32 %v1712, %v1741
      %v1749 = vadd.f32 %v1713, %v1741
      %v1750 = vadd.f32 %v1714, %v1741
      %v1751 = vadd.f32 %v1715, %v1741
      %v1752 = vadd.f32 %v1716, %v1741
      %v1753 = vadd.f32 %v1717, %v1741
      %v1754 = vadd.f32 %v1718, %v1741
      %v1755 = vadd.f32 %v1719, %v1741
      %v1756 = vadd.f32 %v1720, %v1741
      %v1757 = vadd.f32 %v1721, %v1741
      %v1758 = vadd.f32 %v1722, %v1741
      %v1759 = vadd.f32 %v1723, %v1741
      %v1760 = vadd.f32 %v1724, %v1741
      %v1761 = vadd.f32 %v1725, %v1741
      %v1762 = vadd.f32 %v1726, %v1741
      %v1763 = vadd.f32 %v1727, %v1741
      %v1764 = vadd.f32 %v1728, %v1741
      %v1765 = vadd.f32 %v1729, %v1741
      %v1766 = vadd.f32 %v1730, %v1741
      %v1767 = vadd.f32 %v1731, %v1741
      %v1768 = vadd.f32 %v1732, %v1741
      %v1769 = vadd.f32 %v1733, %v1741
      %v1770 = vadd.f32 %v1734, %v1741
      %v1771 = vadd.f32 %v1735, %v1741
      %v1772 = vmax.f32 %v1743, 0.0
      %v1773 = vmax.f32 %v1744, 0.0
      %v1774 = vmax.f32 %v1745, 0.0
      %v1775 = vmax.f32 %v1746, 0.0
      %v1776 = vmax.f32 %v1747, 0.0
      %v1777 = vmax.f32 %v1748, 0.0
      %v1778 = vmax.f32 %v1749, 0.0
      %v1779 = vmax.f32 %v1750, 0.0
      %v1780 = vmax.f32 %v1751, 0.0
      %v1781 = vmax.f32 %v1752, 0.0
      %v1782 = vmax.f32 %v1753, 0.0
      %v1783 = vmax.f32 %v1754, 0.0
      %v1784 = vmax.f32 %v1755, 0.0
      %v1785 = vmax.f32 %v1756, 0.0
      %v1786 = vmax.f32 %v1757, 0.0
      %v1787 = vmax.f32 %v1758, 0.0
      %v1788 = vmax.f32 %v1759, 0.0
      %v1789 = vmax.f32 %v1760, 0.0
      %v1790 = vmax.f32 %v1761, 0.0
      %v1791 = vmax.f32 %v1762, 0.0
      %v1792 = vmax.f32 %v1763, 0.0
      %v1793 = vmax.f32 %v1764, 0.0
      %v1794 = vmax.f32 %v1765, 0.0
      %v1795 = vmax.f32 %v1766, 0.0
      %v1796 = vmax.f32 %v1767, 0.0
      %v1797 = vmax.f32 %v1768, 0.0
      %v1798 = vmax.f32 %v1769, 0.0
      %v1799 = vmax.f32 %v1770, 0.0
      %v1800 = vmax.f32 %v1771, 0.0
      %vm1801 = vcmask 523264
      %1802 = vst.msk [vmem:[#allocation2] sm:$0xff] %vm1801, %v1772
      %1803 = vst.msk [vmem:[#allocation2 + $0x8] sm:$0xff] %vm1801, %v1773
      %1804 = vst.msk [vmem:[#allocation2 + $0x10] sm:$0xff] %vm1801, %v1774
      %1805 = vst.msk [vmem:[#allocation2 + $0x18] sm:$0xff] %vm1801, %v1775
      %1806 = vst.msk [vmem:[#allocation2 + $0x20] sm:$0xff] %vm1801, %v1776
      %1807 = vst.msk [vmem:[#allocation2 + $0x28] sm:$0xff] %vm1801, %v1777
      %1808 = vst.msk [vmem:[#allocation2 + $0x30] sm:$0xff] %vm1801, %v1778
      %1809 = vst.msk [vmem:[#allocation2 + $0x38] sm:$0xff] %vm1801, %v1779
      %1810 = vst.msk [vmem:[#allocation2 + $0x40] sm:$0xff] %vm1801, %v1780
      %1811 = vst.msk [vmem:[#allocation2 + $0x48] sm:$0xff] %vm1801, %v1781
      %1812 = vst.msk [vmem:[#allocation2 + $0x50] sm:$0xff] %vm1801, %v1782
      %1813 = vst.msk [vmem:[#allocation2 + $0x58] sm:$0xff] %vm1801, %v1783
      %1814 = vst.msk [vmem:[#allocation2 + $0x60] sm:$0xff] %vm1801, %v1784
      %1815 = vst.msk [vmem:[#allocation2 + $0x68] sm:$0xff] %vm1801, %v1785
      %1816 = vst.msk [vmem:[#allocation2 + $0x70] sm:$0xff] %vm1801, %v1786
      %1817 = vst.msk [vmem:[#allocation2 + $0x78] sm:$0xff] %vm1801, %v1787
      %1818 = vst.msk [vmem:[#allocation2 + $0x80] sm:$0xff] %vm1801, %v1788
      %1819 = vst.msk [vmem:[#allocation2 + $0x88] sm:$0xff] %vm1801, %v1789
      %1820 = vst.msk [vmem:[#allocation2 + $0x90] sm:$0xff] %vm1801, %v1790
      %1821 = vst.msk [vmem:[#allocation2 + $0x98] sm:$0xff] %vm1801, %v1791
      %1822 = vst.msk [vmem:[#allocation2 + $0xa0] sm:$0xff] %vm1801, %v1792
      %1823 = vst.msk [vmem:[#allocation2 + $0xa8] sm:$0xff] %vm1801, %v1793
      %1824 = vst.msk [vmem:[#allocation2 + $0xb0] sm:$0xff] %vm1801, %v1794
      %1825 = vst.msk [vmem:[#allocation2 + $0xb8] sm:$0xff] %vm1801, %v1795
      %1826 = vst.msk [vmem:[#allocation2 + $0xc0] sm:$0xff] %vm1801, %v1796
      %1827 = vst.msk [vmem:[#allocation2 + $0xc8] sm:$0xff] %vm1801, %v1797
      %1828 = vst.msk [vmem:[#allocation2 + $0xd0] sm:$0xff] %vm1801, %v1798
      %1829 = vst.msk [vmem:[#allocation2 + $0xd8] sm:$0xff] %vm1801, %v1799
      %vm1830 = vcmask 516096
      %1831 = vst.msk [vmem:[#allocation2 + $0xe0] sm:$0x1] %vm1830, %v1800
      %1832 = vst.msk [vmem:[#allocation2 + $0xe1] sm:$0xff] %vm1801, 0.0
      %v1833 = vld [vmem:[#allocation2] sm:$0xff]
      %v1834 = vld [vmem:[#allocation2 + $0x8] sm:$0xff]
      %v1835 = vld [vmem:[#allocation2 + $0x10] sm:$0xff]
      %v1836 = vld [vmem:[#allocation2 + $0x18] sm:$0xff]
      %v1837 = vld [vmem:[#allocation2 + $0x20] sm:$0xff]
      %v1838 = vld [vmem:[#allocation2 + $0x28] sm:$0xff]
      %v1839 = vld [vmem:[#allocation2 + $0x30] sm:$0xff]
      %v1840 = vld [vmem:[#allocation2 + $0x38] sm:$0xff]
      %v1841 = vld [vmem:[#allocation2 + $0x40] sm:$0xff]
      %v1842 = vld [vmem:[#allocation2 + $0x48] sm:$0xff]
      %v1843 = vld [vmem:[#allocation2 + $0x50] sm:$0xff]
      %v1844 = vld [vmem:[#allocation2 + $0x58] sm:$0xff]
      %v1845 = vld [vmem:[#allocation2 + $0x60] sm:$0xff]
      %v1846 = vld [vmem:[#allocation2 + $0x68] sm:$0xff]
      %v1847 = vld [vmem:[#allocation2 + $0x70] sm:$0xff]
      %v1848 = vld [vmem:[#allocation2 + $0x78] sm:$0xff]
      %v1849 = vld [vmem:[#allocation2 + $0x80] sm:$0xff]
      %v1850 = vld [vmem:[#allocation2 + $0x88] sm:$0xff]
      %v1851 = vld [vmem:[#allocation2 + $0x90] sm:$0xff]
      %v1852 = vld [vmem:[#allocation2 + $0x98] sm:$0xff]
      %v1853 = vld [vmem:[#allocation2 + $0xa0] sm:$0xff]
      %v1854 = vld [vmem:[#allocation2 + $0xa8] sm:$0xff]
      %v1855 = vld [vmem:[#allocation2 + $0xb0] sm:$0xff]
      %v1856 = vld [vmem:[#allocation2 + $0xb8] sm:$0xff]
      %v1857 = vld [vmem:[#allocation2 + $0xc0] sm:$0x7]
      %v1858 = vld [vmem:[%s3] sm:$0xff]
      %v1859 = vld [vmem:[%s3 + $0x8] sm:$0xff]
      %v1860 = vld [vmem:[%s3 + $0x10] sm:$0xff]
      %v1861 = vld [vmem:[%s3 + $0x18] sm:$0xff]
      %v1862 = vld [vmem:[%s3 + $0x20] sm:$0xff]
      %v1863 = vld [vmem:[%s3 + $0x28] sm:$0xff]
      %v1864 = vld [vmem:[%s3 + $0x30] sm:$0xff]
      %v1865 = vld [vmem:[%s3 + $0x38] sm:$0xff]
      %v1867 = vsel %vm1801, %v1833, 0
      %v1870 = vsel %vm1801, %v1834, 0
      %v1873 = vsel %vm1801, %v1835, 0
      %v1876 = vsel %vm1801, %v1836, 0
      %v1879 = vsel %vm1801, %v1837, 0
      %v1882 = vsel %vm1801, %v1838, 0
      %v1885 = vsel %vm1801, %v1839, 0
      %v1888 = vsel %vm1801, %v1840, 0
      %v1891 = vsel %vm1801, %v1841, 0
      %v1894 = vsel %vm1801, %v1842, 0
      %v1897 = vsel %vm1801, %v1843, 0
      %v1900 = vsel %vm1801, %v1844, 0
      %v1903 = vsel %vm1801, %v1845, 0
      %v1906 = vsel %vm1801, %v1846, 0
      %v1909 = vsel %vm1801, %v1847, 0
      %v1912 = vsel %vm1801, %v1848, 0
      %v1915 = vsel %vm1801, %v1849, 0
      %v1918 = vsel %vm1801, %v1850, 0
      %v1921 = vsel %vm1801, %v1851, 0
      %v1924 = vsel %vm1801, %v1852, 0
      %v1927 = vsel %vm1801, %v1853, 0
      %v1930 = vsel %vm1801, %v1854, 0
      %v1933 = vsel %vm1801, %v1855, 0
      %v1936 = vsel %vm1801, %v1856, 0
      %v1939 = vsel %vm1801, %v1857, 0
      %1941 = vmatprep.subr.mxu0 0.0
      %1942 = vmatpush1.msra.mxu0 %v1858
      %1943 = vmatprep.subr.mxu0 0.0
      %1944 = vmatpush1.msra.mxu0 %v1859
      %1945 = vmatprep.subr.mxu0 0.0
      %1946 = vmatpush1.msra.mxu0 %v1860
      %1947 = vmatprep.subr.mxu0 0.0
      %1948 = vmatpush1.msra.mxu0 %v1861
      %1949 = vmatprep.subr.mxu0 0.0
      %1950 = vmatpush1.msra.mxu0 %v1862
      %1951 = vmatprep.subr.mxu0 0.0
      %1952 = vmatpush1.msra.mxu0 %v1863
      %1953 = vmatprep.subr.mxu0 0.0
      %1954 = vmatpush1.msra.mxu0 %v1864
      %1955 = vmatprep.subr.mxu0 0.0
      %1956 = vmatpush1.msra.mxu0 %v1865
      %1957 = vmatprep.subr.mxu0 0.0
      %1958 = vmatpush1.msra.mxu0 0.0
      %1959 = vmatprep.subr.mxu0 0.0
      %1960 = vmatpush1.msra.mxu0 0.0
      %1961 = vmatprep.subr.mxu0 0.0
      %1962 = vmatpush1.msra.mxu0 0.0
      %1963 = vmatprep.subr.mxu0 0.0
      %1964 = vmatpush1.msra.mxu0 0.0
      %1965 = vmatprep.subr.mxu0 0.0
      %1966 = vmatpush1.msra.mxu0 0.0
      %1967 = vmatprep.subr.mxu0 0.0
      %1968 = vmatpush1.msra.mxu0 0.0
      %1969 = vmatprep.subr.mxu0 0.0
      %1970 = vmatpush1.msra.mxu0 0.0
      %1971 = vmatprep.subr.mxu0 0.0
      %1972 = vmatpush1.msra.mxu0 0.0
      %1973 = vmatprep.subr.mxu0 0.0
      %1974 = vmatpush1.msra.mxu0 0.0
      %1975 = vmatprep.subr.mxu0 0.0
      %1976 = vmatpush1.msra.mxu0 0.0
      %1977 = vmatprep.subr.mxu0 0.0
      %1978 = vmatpush1.msra.mxu0 0.0
      %1979 = vmatprep.subr.mxu0 0.0
      %1980 = vmatpush1.msra.mxu0 0.0
      %1981 = vmatprep.subr.mxu0 0.0
      %1982 = vmatpush1.msra.mxu0 0.0
      %1983 = vmatprep.subr.mxu0 0.0
      %1984 = vmatpush1.msra.mxu0 0.0
      %1985 = vmatprep.subr.mxu0 0.0
      %1986 = vmatpush1.msra.mxu0 0.0
      %1987 = vmatprep.subr.mxu0 0.0
      %1988 = vmatpush1.msra.mxu0 0.0
      %1989 = vmatprep.subr.mxu0 0.0
      %1990 = vmatpush1.msra.mxu0 0.0
      %1991 = vmatprep.subr.mxu0 0.0
      %1992 = vmatpush1.msra.mxu0 0.0
      %1993 = vmatprep.subr.mxu0 0.0
      %1994 = vmatpush1.msra.mxu0 0.0
      %1995 = vmatprep.subr.mxu0 0.0
      %1996 = vmatpush1.msra.mxu0 0.0
      %1997 = vmatprep.subr.mxu0 0.0
      %1998 = vmatpush1.msra.mxu0 0.0
      %1999 = vmatprep.subr.mxu0 0.0
      %2000 = vmatpush1.msra.mxu0 0.0
      %2001 = vmatprep.subr.mxu0 0.0
      %2002 = vmatpush1.msra.mxu0 0.0
      %2003 = vmatprep.subr.mxu0 0.0
      %2004 = vmatpush1.msra.mxu0 0.0
      %2005 = vmatprep.mubr.f32.mxu0 0.0
      %2006 = vmatmul.mubr.f32.gmra.mrb[0].mxu0 %v1867
      %v2007 = vpop.f32.mrb[0].mxu0
      %v2008 = vadd.f32 0.0, %v2007
      %v2009 = vpop.f32.mrb[0].mxu0
      %2010 = vmatprep.mubr.f32.mxu0 0.0
      %2011 = vmatmul.mubr.f32.gmra.mrb[0].mxu0 %v1870
      %v2012 = vpop.f32.mrb[0].mxu0
      %v2013 = vadd.f32 0.0, %v2012
      %v2014 = vpop.f32.mrb[0].mxu0
      %2015 = vmatprep.mubr.f32.mxu0 0.0
      %2016 = vmatmul.mubr.f32.gmra.mrb[0].mxu0 %v1873
      %v2017 = vpop.f32.mrb[0].mxu0
      %v2018 = vadd.f32 0.0, %v2017
      %v2019 = vpop.f32.mrb[0].mxu0
      %2020 = vmatprep.mubr.f32.mxu0 0.0
      %2021 = vmatmul.mubr.f32.gmra.mrb[0].mxu0 %v1876
      %v2022 = vpop.f32.mrb[0].mxu0
      %v2023 = vadd.f32 0.0, %v2022
      %v2024 = vpop.f32.mrb[0].mxu0
      %2025 = vmatprep.mubr.f32.mxu0 0.0
      %2026 = vmatmul.mubr.f32.gmra.mrb[0].mxu0 %v1879
      %v2027 = vpop.f32.mrb[0].mxu0
      %v2028 = vadd.f32 0.0, %v2027
      %v2029 = vpop.f32.mrb[0].mxu0
      %2030 = vmatprep.mubr.f32.mxu0 0.0
      %2031 = vmatmul.mubr.f32.gmra.mrb[0].mxu0 %v1882
      %v2032 = vpop.f32.mrb[0].mxu0
      %v2033 = vadd.f32 0.0, %v2032
      %v2034 = vpop.f32.mrb[0].mxu0
      %2035 = vmatprep.mubr.f32.mxu0 0.0
      %2036 = vmatmul.mubr.f32.gmra.mrb[0].mxu0 %v1885
      %v2037 = vpop.f32.mrb[0].mxu0
      %v2038 = vadd.f32 0.0, %v2037
      %v2039 = vpop.f32.mrb[0].mxu0
      %2040 = vmatprep.mubr.f32.mxu0 0.0
      %2041 = vmatmul.mubr.f32.gmra.mrb[0].mxu0 %v1888
      %v2042 = vpop.f32.mrb[0].mxu0
      %v2043 = vadd.f32 0.0, %v2042
      %v2044 = vpop.f32.mrb[0].mxu0
      %2045 = vmatprep.mubr.f32.mxu0 0.0
      %2046 = vmatmul.mubr.f32.gmra.mrb[0].mxu0 %v1891
      %v2047 = vpop.f32.mrb[0].mxu0
      %v2048 = vadd.f32 0.0, %v2047
      %v2049 = vpop.f32.mrb[0].mxu0
      %2050 = vmatprep.mubr.f32.mxu0 0.0
      %2051 = vmatmul.mubr.f32.gmra.mrb[0].mxu0 %v1894
      %v2052 = vpop.f32.mrb[0].mxu0
      %v2053 = vadd.f32 0.0, %v2052
      %v2054 = vpop.f32.mrb[0].mxu0
      %2055 = vmatprep.mubr.f32.mxu0 0.0
      %2056 = vmatmul.mubr.f32.gmra.mrb[0].mxu0 %v1897
      %v2057 = vpop.f32.mrb[0].mxu0
      %v2058 = vadd.f32 0.0, %v2057
      %v2059 = vpop.f32.mrb[0].mxu0
      %2060 = vmatprep.mubr.f32.mxu0 0.0
      %2061 = vmatmul.mubr.f32.gmra.mrb[0].mxu0 %v1900
      %v2062 = vpop.f32.mrb[0].mxu0
      %v2063 = vadd.f32 0.0, %v2062
      %v2064 = vpop.f32.mrb[0].mxu0
      %2065 = vmatprep.mubr.f32.mxu0 0.0
      %2066 = vmatmul.mubr.f32.gmra.mrb[0].mxu0 %v1903
      %v2067 = vpop.f32.mrb[0].mxu0
      %v2068 = vadd.f32 0.0, %v2067
      %v2069 = vpop.f32.mrb[0].mxu0
      %2070 = vmatprep.mubr.f32.mxu0 0.0
      %2071 = vmatmul.mubr.f32.gmra.mrb[0].mxu0 %v1906
      %v2072 = vpop.f32.mrb[0].mxu0
      %v2073 = vadd.f32 0.0, %v2072
      %v2074 = vpop.f32.mrb[0].mxu0
      %2075 = vmatprep.mubr.f32.mxu0 0.0
      %2076 = vmatmul.mubr.f32.gmra.mrb[0].mxu0 %v1909
      %v2077 = vpop.f32.mrb[0].mxu0
      %v2078 = vadd.f32 0.0, %v2077
      %v2079 = vpop.f32.mrb[0].mxu0
      %2080 = vmatprep.mubr.f32.mxu0 0.0
      %2081 = vmatmul.mubr.f32.gmra.mrb[0].mxu0 %v1912
      %v2082 = vpop.f32.mrb[0].mxu0
      %v2083 = vadd.f32 0.0, %v2082
      %v2084 = vpop.f32.mrb[0].mxu0
      %2085 = vmatprep.mubr.f32.mxu0 0.0
      %2086 = vmatmul.mubr.f32.gmra.mrb[0].mxu0 %v1915
      %v2087 = vpop.f32.mrb[0].mxu0
      %v2088 = vadd.f32 0.0, %v2087
      %v2089 = vpop.f32.mrb[0].mxu0
      %2090 = vmatprep.mubr.f32.mxu0 0.0
      %2091 = vmatmul.mubr.f32.gmra.mrb[0].mxu0 %v1918
      %v2092 = vpop.f32.mrb[0].mxu0
      %v2093 = vadd.f32 0.0, %v2092
      %v2094 = vpop.f32.mrb[0].mxu0
      %2095 = vmatprep.mubr.f32.mxu0 0.0
      %2096 = vmatmul.mubr.f32.gmra.mrb[0].mxu0 %v1921
      %v2097 = vpop.f32.mrb[0].mxu0
      %v2098 = vadd.f32 0.0, %v2097
      %v2099 = vpop.f32.mrb[0].mxu0
      %2100 = vmatprep.mubr.f32.mxu0 0.0
      %2101 = vmatmul.mubr.f32.gmra.mrb[0].mxu0 %v1924
      %v2102 = vpop.f32.mrb[0].mxu0
      %v2103 = vadd.f32 0.0, %v2102
      %v2104 = vpop.f32.mrb[0].mxu0
      %2105 = vmatprep.mubr.f32.mxu0 0.0
      %2106 = vmatmul.mubr.f32.gmra.mrb[0].mxu0 %v1927
      %v2107 = vpop.f32.mrb[0].mxu0
      %v2108 = vadd.f32 0.0, %v2107
      %v2109 = vpop.f32.mrb[0].mxu0
      %2110 = vmatprep.mubr.f32.mxu0 0.0
      %2111 = vmatmul.mubr.f32.gmra.mrb[0].mxu0 %v1930
      %v2112 = vpop.f32.mrb[0].mxu0
      %v2113 = vadd.f32 0.0, %v2112
      %v2114 = vpop.f32.mrb[0].mxu0
      %2115 = vmatprep.mubr.f32.mxu0 0.0
      %2116 = vmatmul.mubr.f32.gmra.mrb[0].mxu0 %v1933
      %v2117 = vpop.f32.mrb[0].mxu0
      %v2118 = vadd.f32 0.0, %v2117
      %v2119 = vpop.f32.mrb[0].mxu0
      %2120 = vmatprep.mubr.f32.mxu0 0.0
      %2121 = vmatmul.mubr.f32.gmra.mrb[0].mxu0 %v1936
      %v2122 = vpop.f32.mrb[0].mxu0
      %v2123 = vadd.f32 0.0, %v2122
      %v2124 = vpop.f32.mrb[0].mxu0
      %2125 = vmatprep.mubr.f32.mxu0 0.0
      %2126 = vmatmul.mubr.f32.gmra.mrb[0].mxu0 %v1939
      %v2127 = vpop.f32.mrb[0].mxu0
      %v2128 = vadd.f32 0.0, %v2127
      %v2129 = vpop.f32.mrb[0].mxu0
      %2130 = vdwg.mxu0
      %2131 = vst.msk [vmem:[#allocation3] sm:$0xff] %vm1801, %v2008
      %2132 = vst.msk [vmem:[#allocation3 + $0x8] sm:$0xff] %vm1801, %v2013
      %2133 = vst.msk [vmem:[#allocation3 + $0x10] sm:$0xff] %vm1801, %v2018
      %2134 = vst.msk [vmem:[#allocation3 + $0x18] sm:$0xff] %vm1801, %v2023
      %2135 = vst.msk [vmem:[#allocation3 + $0x20] sm:$0xff] %vm1801, %v2028
      %2136 = vst.msk [vmem:[#allocation3 + $0x28] sm:$0xff] %vm1801, %v2033
      %2137 = vst.msk [vmem:[#allocation3 + $0x30] sm:$0xff] %vm1801, %v2038
      %2138 = vst.msk [vmem:[#allocation3 + $0x38] sm:$0xff] %vm1801, %v2043
      %2139 = vst.msk [vmem:[#allocation3 + $0x40] sm:$0xff] %vm1801, %v2048
      %2140 = vst.msk [vmem:[#allocation3 + $0x48] sm:$0xff] %vm1801, %v2053
      %2141 = vst.msk [vmem:[#allocation3 + $0x50] sm:$0xff] %vm1801, %v2058
      %2142 = vst.msk [vmem:[#allocation3 + $0x58] sm:$0xff] %vm1801, %v2063
      %2143 = vst.msk [vmem:[#allocation3 + $0x60] sm:$0xff] %vm1801, %v2068
      %2144 = vst.msk [vmem:[#allocation3 + $0x68] sm:$0xff] %vm1801, %v2073
      %2145 = vst.msk [vmem:[#allocation3 + $0x70] sm:$0xff] %vm1801, %v2078
      %2146 = vst.msk [vmem:[#allocation3 + $0x78] sm:$0xff] %vm1801, %v2083
      %2147 = vst.msk [vmem:[#allocation3 + $0x80] sm:$0xff] %vm1801, %v2088
      %2148 = vst.msk [vmem:[#allocation3 + $0x88] sm:$0xff] %vm1801, %v2093
      %2149 = vst.msk [vmem:[#allocation3 + $0x90] sm:$0xff] %vm1801, %v2098
      %2150 = vst.msk [vmem:[#allocation3 + $0x98] sm:$0xff] %vm1801, %v2103
      %2151 = vst.msk [vmem:[#allocation3 + $0xa0] sm:$0xff] %vm1801, %v2108
      %2152 = vst.msk [vmem:[#allocation3 + $0xa8] sm:$0xff] %vm1801, %v2113
      %2153 = vst.msk [vmem:[#allocation3 + $0xb0] sm:$0xff] %vm1801, %v2118
      %2154 = vst.msk [vmem:[#allocation3 + $0xb8] sm:$0xff] %vm1801, %v2123
      %vm2155 = vcmask 518144
      %2156 = vst.msk [vmem:[#allocation3 + $0xc0] sm:$0x7] %vm2155, %v2128
      %v2157 = vld [vmem:[#allocation2 + $0x1] sm:$0xff]
      %v2158 = vld [vmem:[#allocation2 + $0x9] sm:$0xff]
      %v2159 = vld [vmem:[#allocation2 + $0x11] sm:$0xff]
      %v2160 = vld [vmem:[#allocation2 + $0x19] sm:$0xff]
      %v2161 = vld [vmem:[#allocation2 + $0x21] sm:$0xff]
      %v2162 = vld [vmem:[#allocation2 + $0x29] sm:$0xff]
      %v2163 = vld [vmem:[#allocation2 + $0x31] sm:$0xff]
      %v2164 = vld [vmem:[#allocation2 + $0x39] sm:$0xff]
      %v2165 = vld [vmem:[#allocation2 + $0x41] sm:$0xff]
      %v2166 = vld [vmem:[#allocation2 + $0x49] sm:$0xff]
      %v2167 = vld [vmem:[#allocation2 + $0x51] sm:$0xff]
      %v2168 = vld [vmem:[#allocation2 + $0x59] sm:$0xff]
      %v2169 = vld [vmem:[#allocation2 + $0x61] sm:$0xff]
      %v2170 = vld [vmem:[#allocation2 + $0x69] sm:$0xff]
      %v2171 = vld [vmem:[#allocation2 + $0x71] sm:$0xff]
      %v2172 = vld [vmem:[#allocation2 + $0x79] sm:$0xff]
      %v2173 = vld [vmem:[#allocation2 + $0x81] sm:$0xff]
      %v2174 = vld [vmem:[#allocation2 + $0x89] sm:$0xff]
      %v2175 = vld [vmem:[#allocation2 + $0x91] sm:$0xff]
      %v2176 = vld [vmem:[#allocation2 + $0x99] sm:$0xff]
      %v2177 = vld [vmem:[#allocation2 + $0xa1] sm:$0xff]
      %v2178 = vld [vmem:[#allocation2 + $0xa9] sm:$0xff]
      %v2179 = vld [vmem:[#allocation2 + $0xb1] sm:$0xff]
      %v2180 = vld [vmem:[#allocation2 + $0xb9] sm:$0xff]
      %v2181 = vld [vmem:[#allocation2 + $0xc1] sm:$0x7]
      %s2182 = scalar_lea.vmem %s3, 64
      %v2183 = vld [vmem:[%s2182] sm:$0xff]
      %v2184 = vld [vmem:[%s2182 + $0x8] sm:$0xff]
      %v2185 = vld [vmem:[%s2182 + $0x10] sm:$0xff]
      %v2186 = vld [vmem:[%s2182 + $0x18] sm:$0xff]
      %v2187 = vld [vmem:[%s2182 + $0x20] sm:$0xff]
      %v2188 = vld [vmem:[%s2182 + $0x28] sm:$0xff]
      %v2189 = vld [vmem:[%s2182 + $0x30] sm:$0xff]
      %v2190 = vld [vmem:[%s2182 + $0x38] sm:$0xff]
      %v2192 = vsel %vm1801, %v2157, 0
      %v2195 = vsel %vm1801, %v2158, 0
      %v2198 = vsel %vm1801, %v2159, 0
      %v2201 = vsel %vm1801, %v2160, 0
      %v2204 = vsel %vm1801, %v2161, 0
      %v2207 = vsel %vm1801, %v2162, 0
      %v2210 = vsel %vm1801, %v2163, 0
      %v2213 = vsel %vm1801, %v2164, 0
      %v2216 = vsel %vm1801, %v2165, 0
      %v2219 = vsel %vm1801, %v2166, 0
      %v2222 = vsel %vm1801, %v2167, 0
      %v2225 = vsel %vm1801, %v2168, 0
      %v2228 = vsel %vm1801, %v2169, 0
      %v2231 = vsel %vm1801, %v2170, 0
      %v2234 = vsel %vm1801, %v2171, 0
      %v2237 = vsel %vm1801, %v2172, 0
      %v2240 = vsel %vm1801, %v2173, 0
      %v2243 = vsel %vm1801, %v2174, 0
      %v2246 = vsel %vm1801, %v2175, 0
      %v2249 = vsel %vm1801, %v2176, 0
      %v2252 = vsel %vm1801, %v2177, 0
      %v2255 = vsel %vm1801, %v2178, 0
      %v2258 = vsel %vm1801, %v2179, 0
      %v2261 = vsel %vm1801, %v2180, 0
      %v2264 = vsel %vm1801, %v2181, 0
      %2266 = vmatprep.subr.mxu0 0.0
      %2267 = vmatpush1.msra.mxu0 %v2183
      %2268 = vmatprep.subr.mxu0 0.0
      %2269 = vmatpush1.msra.mxu0 %v2184
      %2270 = vmatprep.subr.mxu0 0.0
      %2271 = vmatpush1.msra.mxu0 %v2185
      %2272 = vmatprep.subr.mxu0 0.0
      %2273 = vmatpush1.msra.mxu0 %v2186
      %2274 = vmatprep.subr.mxu0 0.0
      %2275 = vmatpush1.msra.mxu0 %v2187
      %2276 = vmatprep.subr.mxu0 0.0
      %2277 = vmatpush1.msra.mxu0 %v2188
      %2278 = vmatprep.subr.mxu0 0.0
      %2279 = vmatpush1.msra.mxu0 %v2189
      %2280 = vmatprep.subr.mxu0 0.0
      %2281 = vmatpush1.msra.mxu0 %v2190
      %2282 = vmatprep.subr.mxu0 0.0
      %2283 = vmatpush1.msra.mxu0 0.0
      %2284 = vmatprep.subr.mxu0 0.0
      %2285 = vmatpush1.msra.mxu0 0.0
      %2286 = vmatprep.subr.mxu0 0.0
      %2287 = vmatpush1.msra.mxu0 0.0
      %2288 = vmatprep.subr.mxu0 0.0
      %2289 = vmatpush1.msra.mxu0 0.0
      %2290 = vmatprep.subr.mxu0 0.0
      %2291 = vmatpush1.msra.mxu0 0.0
      %2292 = vmatprep.subr.mxu0 0.0
      %2293 = vmatpush1.msra.mxu0 0.0
      %2294 = vmatprep.subr.mxu0 0.0
      %2295 = vmatpush1.msra.mxu0 0.0
      %2296 = vmatprep.subr.mxu0 0.0
      %2297 = vmatpush1.msra.mxu0 0.0
      %2298 = vmatprep.subr.mxu0 0.0
      %2299 = vmatpush1.msra.mxu0 0.0
      %2300 = vmatprep.subr.mxu0 0.0
      %2301 = vmatpush1.msra.mxu0 0.0
      %2302 = vmatprep.subr.mxu0 0.0
      %2303 = vmatpush1.msra.mxu0 0.0
      %2304 = vmatprep.subr.mxu0 0.0
      %2305 = vmatpush1.msra.mxu0 0.0
      %2306 = vmatprep.subr.mxu0 0.0
      %2307 = vmatpush1.msra.mxu0 0.0
      %2308 = vmatprep.subr.mxu0 0.0
      %2309 = vmatpush1.msra.mxu0 0.0
      %2310 = vmatprep.subr.mxu0 0.0
      %2311 = vmatpush1.msra.mxu0 0.0
      %2312 = vmatprep.subr.mxu0 0.0
      %2313 = vmatpush1.msra.mxu0 0.0
      %2314 = vmatprep.subr.mxu0 0.0
      %2315 = vmatpush1.msra.mxu0 0.0
      %2316 = vmatprep.subr.mxu0 0.0
      %2317 = vmatpush1.msra.mxu0 0.0
      %2318 = vmatprep.subr.mxu0 0.0
      %2319 = vmatpush1.msra.mxu0 0.0
      %2320 = vmatprep.subr.mxu0 0.0
      %2321 = vmatpush1.msra.mxu0 0.0
      %2322 = vmatprep.subr.mxu0 0.0
      %2323 = vmatpush1.msra.mxu0 0.0
      %2324 = vmatprep.subr.mxu0 0.0
      %2325 = vmatpush1.msra.mxu0 0.0
      %2326 = vmatprep.subr.mxu0 0.0
      %2327 = vmatpush1.msra.mxu0 0.0
      %2328 = vmatprep.subr.mxu0 0.0
      %2329 = vmatpush1.msra.mxu0 0.0
      %2330 = vmatprep.mubr.f32.mxu0 0.0
      %2331 = vmatmul.mubr.f32.gmra.mrb[0].mxu0 %v2192
      %v2332 = vpop.f32.mrb[0].mxu0
      %v2333 = vadd.f32 0.0, %v2332
      %v2334 = vpop.f32.mrb[0].mxu0
      %2335 = vmatprep.mubr.f32.mxu0 0.0
      %2336 = vmatmul.mubr.f32.gmra.mrb[0].mxu0 %v2195
      %v2337 = vpop.f32.mrb[0].mxu0
      %v2338 = vadd.f32 0.0, %v2337
      %v2339 = vpop.f32.mrb[0].mxu0
      %2340 = vmatprep.mubr.f32.mxu0 0.0
      %2341 = vmatmul.mubr.f32.gmra.mrb[0].mxu0 %v2198
      %v2342 = vpop.f32.mrb[0].mxu0
      %v2343 = vadd.f32 0.0, %v2342
      %v2344 = vpop.f32.mrb[0].mxu0
      %2345 = vmatprep.mubr.f32.mxu0 0.0
      %2346 = vmatmul.mubr.f32.gmra.mrb[0].mxu0 %v2201
      %v2347 = vpop.f32.mrb[0].mxu0
      %v2348 = vadd.f32 0.0, %v2347
      %v2349 = vpop.f32.mrb[0].mxu0
      %2350 = vmatprep.mubr.f32.mxu0 0.0
      %2351 = vmatmul.mubr.f32.gmra.mrb[0].mxu0 %v2204
      %v2352 = vpop.f32.mrb[0].mxu0
      %v2353 = vadd.f32 0.0, %v2352
      %v2354 = vpop.f32.mrb[0].mxu0
      %2355 = vmatprep.mubr.f32.mxu0 0.0
      %2356 = vmatmul.mubr.f32.gmra.mrb[0].mxu0 %v2207
      %v2357 = vpop.f32.mrb[0].mxu0
      %v2358 = vadd.f32 0.0, %v2357
      %v2359 = vpop.f32.mrb[0].mxu0
      %2360 = vmatprep.mubr.f32.mxu0 0.0
      %2361 = vmatmul.mubr.f32.gmra.mrb[0].mxu0 %v2210
      %v2362 = vpop.f32.mrb[0].mxu0
      %v2363 = vadd.f32 0.0, %v2362
      %v2364 = vpop.f32.mrb[0].mxu0
      %2365 = vmatprep.mubr.f32.mxu0 0.0
      %2366 = vmatmul.mubr.f32.gmra.mrb[0].mxu0 %v2213
      %v2367 = vpop.f32.mrb[0].mxu0
      %v2368 = vadd.f32 0.0, %v2367
      %v2369 = vpop.f32.mrb[0].mxu0
      %2370 = vmatprep.mubr.f32.mxu0 0.0
      %2371 = vmatmul.mubr.f32.gmra.mrb[0].mxu0 %v2216
      %v2372 = vpop.f32.mrb[0].mxu0
      %v2373 = vadd.f32 0.0, %v2372
      %v2374 = vpop.f32.mrb[0].mxu0
      %2375 = vmatprep.mubr.f32.mxu0 0.0
      %2376 = vmatmul.mubr.f32.gmra.mrb[0].mxu0 %v2219
      %v2377 = vpop.f32.mrb[0].mxu0
      %v2378 = vadd.f32 0.0, %v2377
      %v2379 = vpop.f32.mrb[0].mxu0
      %2380 = vmatprep.mubr.f32.mxu0 0.0
      %2381 = vmatmul.mubr.f32.gmra.mrb[0].mxu0 %v2222
      %v2382 = vpop.f32.mrb[0].mxu0
      %v2383 = vadd.f32 0.0, %v2382
      %v2384 = vpop.f32.mrb[0].mxu0
      %2385 = vmatprep.mubr.f32.mxu0 0.0
      %2386 = vmatmul.mubr.f32.gmra.mrb[0].mxu0 %v2225
      %v2387 = vpop.f32.mrb[0].mxu0
      %v2388 = vadd.f32 0.0, %v2387
      %v2389 = vpop.f32.mrb[0].mxu0
      %2390 = vmatprep.mubr.f32.mxu0 0.0
      %2391 = vmatmul.mubr.f32.gmra.mrb[0].mxu0 %v2228
      %v2392 = vpop.f32.mrb[0].mxu0
      %v2393 = vadd.f32 0.0, %v2392
      %v2394 = vpop.f32.mrb[0].mxu0
      %2395 = vmatprep.mubr.f32.mxu0 0.0
      %2396 = vmatmul.mubr.f32.gmra.mrb[0].mxu0 %v2231
      %v2397 = vpop.f32.mrb[0].mxu0
      %v2398 = vadd.f32 0.0, %v2397
      %v2399 = vpop.f32.mrb[0].mxu0
      %2400 = vmatprep.mubr.f32.mxu0 0.0
      %2401 = vmatmul.mubr.f32.gmra.mrb[0].mxu0 %v2234
      %v2402 = vpop.f32.mrb[0].mxu0
      %v2403 = vadd.f32 0.0, %v2402
      %v2404 = vpop.f32.mrb[0].mxu0
      %2405 = vmatprep.mubr.f32.mxu0 0.0
      %2406 = vmatmul.mubr.f32.gmra.mrb[0].mxu0 %v2237
      %v2407 = vpop.f32.mrb[0].mxu0
      %v2408 = vadd.f32 0.0, %v2407
      %v2409 = vpop.f32.mrb[0].mxu0
      %2410 = vmatprep.mubr.f32.mxu0 0.0
      %2411 = vmatmul.mubr.f32.gmra.mrb[0].mxu0 %v2240
      %v2412 = vpop.f32.mrb[0].mxu0
      %v2413 = vadd.f32 0.0, %v2412
      %v2414 = vpop.f32.mrb[0].mxu0
      %2415 = vmatprep.mubr.f32.mxu0 0.0
      %2416 = vmatmul.mubr.f32.gmra.mrb[0].mxu0 %v2243
      %v2417 = vpop.f32.mrb[0].mxu0
      %v2418 = vadd.f32 0.0, %v2417
      %v2419 = vpop.f32.mrb[0].mxu0
      %2420 = vmatprep.mubr.f32.mxu0 0.0
      %2421 = vmatmul.mubr.f32.gmra.mrb[0].mxu0 %v2246
      %v2422 = vpop.f32.mrb[0].mxu0
      %v2423 = vadd.f32 0.0, %v2422
      %v2424 = vpop.f32.mrb[0].mxu0
      %2425 = vmatprep.mubr.f32.mxu0 0.0
      %2426 = vmatmul.mubr.f32.gmra.mrb[0].mxu0 %v2249
      %v2427 = vpop.f32.mrb[0].mxu0
      %v2428 = vadd.f32 0.0, %v2427
      %v2429 = vpop.f32.mrb[0].mxu0
      %2430 = vmatprep.mubr.f32.mxu0 0.0
      %2431 = vmatmul.mubr.f32.gmra.mrb[0].mxu0 %v2252
      %v2432 = vpop.f32.mrb[0].mxu0
      %v2433 = vadd.f32 0.0, %v2432
      %v2434 = vpop.f32.mrb[0].mxu0
      %2435 = vmatprep.mubr.f32.mxu0 0.0
      %2436 = vmatmul.mubr.f32.gmra.mrb[0].mxu0 %v2255
      %v2437 = vpop.f32.mrb[0].mxu0
      %v2438 = vadd.f32 0.0, %v2437
      %v2439 = vpop.f32.mrb[0].mxu0
      %2440 = vmatprep.mubr.f32.mxu0 0.0
      %2441 = vmatmul.mubr.f32.gmra.mrb[0].mxu0 %v2258
      %v2442 = vpop.f32.mrb[0].mxu0
      %v2443 = vadd.f32 0.0, %v2442
      %v2444 = vpop.f32.mrb[0].mxu0
      %2445 = vmatprep.mubr.f32.mxu0 0.0
      %2446 = vmatmul.mubr.f32.gmra.mrb[0].mxu0 %v2261
      %v2447 = vpop.f32.mrb[0].mxu0
      %v2448 = vadd.f32 0.0, %v2447
      %v2449 = vpop.f32.mrb[0].mxu0
      %2450 = vmatprep.mubr.f32.mxu0 0.0
      %2451 = vmatmul.mubr.f32.gmra.mrb[0].mxu0 %v2264
      %v2452 = vpop.f32.mrb[0].mxu0
      %v2453 = vadd.f32 0.0, %v2452
      %v2454 = vpop.f32.mrb[0].mxu0
      %2455 = vdwg.mxu0
      %v2456 = vld [vmem:[#allocation3] sm:$0xff]
      %v2457 = vld [vmem:[#allocation3 + $0x8] sm:$0xff]
      %v2458 = vld [vmem:[#allocation3 + $0x10] sm:$0xff]
      %v2459 = vld [vmem:[#allocation3 + $0x18] sm:$0xff]
      %v2460 = vld [vmem:[#allocation3 + $0x20] sm:$0xff]
      %v2461 = vld [vmem:[#allocation3 + $0x28] sm:$0xff]
      %v2462 = vld [vmem:[#allocation3 + $0x30] sm:$0xff]
      %v2463 = vld [vmem:[#allocation3 + $0x38] sm:$0xff]
      %v2464 = vld [vmem:[#allocation3 + $0x40] sm:$0xff]
      %v2465 = vld [vmem:[#allocation3 + $0x48] sm:$0xff]
      %v2466 = vld [vmem:[#allocation3 + $0x50] sm:$0xff]
      %v2467 = vld [vmem:[#allocation3 + $0x58] sm:$0xff]
      %v2468 = vld [vmem:[#allocation3 + $0x60] sm:$0xff]
      %v2469 = vld [vmem:[#allocation3 + $0x68] sm:$0xff]
      %v2470 = vld [vmem:[#allocation3 + $0x70] sm:$0xff]
      %v2471 = vld [vmem:[#allocation3 + $0x78] sm:$0xff]
      %v2472 = vld [vmem:[#allocation3 + $0x80] sm:$0xff]
      %v2473 = vld [vmem:[#allocation3 + $0x88] sm:$0xff]
      %v2474 = vld [vmem:[#allocation3 + $0x90] sm:$0xff]
      %v2475 = vld [vmem:[#allocation3 + $0x98] sm:$0xff]
      %v2476 = vld [vmem:[#allocation3 + $0xa0] sm:$0xff]
      %v2477 = vld [vmem:[#allocation3 + $0xa8] sm:$0xff]
      %v2478 = vld [vmem:[#allocation3 + $0xb0] sm:$0xff]
      %v2479 = vld [vmem:[#allocation3 + $0xb8] sm:$0xff]
      %v2480 = vld [vmem:[#allocation3 + $0xc0] sm:$0x7]
      %v2481 = vadd.f32 %v2456, %v2333
      %v2482 = vadd.f32 %v2457, %v2338
      %v2483 = vadd.f32 %v2458, %v2343
      %v2484 = vadd.f32 %v2459, %v2348
      %v2485 = vadd.f32 %v2460, %v2353
      %v2486 = vadd.f32 %v2461, %v2358
      %v2487 = vadd.f32 %v2462, %v2363
      %v2488 = vadd.f32 %v2463, %v2368
      %v2489 = vadd.f32 %v2464, %v2373
      %v2490 = vadd.f32 %v2465, %v2378
      %v2491 = vadd.f32 %v2466, %v2383
      %v2492 = vadd.f32 %v2467, %v2388
      %v2493 = vadd.f32 %v2468, %v2393
      %v2494 = vadd.f32 %v2469, %v2398
      %v2495 = vadd.f32 %v2470, %v2403
      %v2496 = vadd.f32 %v2471, %v2408
      %v2497 = vadd.f32 %v2472, %v2413
      %v2498 = vadd.f32 %v2473, %v2418
      %v2499 = vadd.f32 %v2474, %v2423
      %v2500 = vadd.f32 %v2475, %v2428
      %v2501 = vadd.f32 %v2476, %v2433
      %v2502 = vadd.f32 %v2477, %v2438
      %v2503 = vadd.f32 %v2478, %v2443
      %v2504 = vadd.f32 %v2479, %v2448
      %v2505 = vadd.f32 %v2480, %v2453
      %2506 = vst.msk [vmem:[#allocation3] sm:$0xff] %vm1801, %v2481
      %2507 = vst.msk [vmem:[#allocation3 + $0x8] sm:$0xff] %vm1801, %v2482
      %2508 = vst.msk [vmem:[#allocation3 + $0x10] sm:$0xff] %vm1801, %v2483
      %2509 = vst.msk [vmem:[#allocation3 + $0x18] sm:$0xff] %vm1801, %v2484
      %2510 = vst.msk [vmem:[#allocation3 + $0x20] sm:$0xff] %vm1801, %v2485
      %2511 = vst.msk [vmem:[#allocation3 + $0x28] sm:$0xff] %vm1801, %v2486
      %2512 = vst.msk [vmem:[#allocation3 + $0x30] sm:$0xff] %vm1801, %v2487
      %2513 = vst.msk [vmem:[#allocation3 + $0x38] sm:$0xff] %vm1801, %v2488
      %2514 = vst.msk [vmem:[#allocation3 + $0x40] sm:$0xff] %vm1801, %v2489
      %2515 = vst.msk [vmem:[#allocation3 + $0x48] sm:$0xff] %vm1801, %v2490
      %2516 = vst.msk [vmem:[#allocation3 + $0x50] sm:$0xff] %vm1801, %v2491
      %2517 = vst.msk [vmem:[#allocation3 + $0x58] sm:$0xff] %vm1801, %v2492
      %2518 = vst.msk [vmem:[#allocation3 + $0x60] sm:$0xff] %vm1801, %v2493
      %2519 = vst.msk [vmem:[#allocation3 + $0x68] sm:$0xff] %vm1801, %v2494
      %2520 = vst.msk [vmem:[#allocation3 + $0x70] sm:$0xff] %vm1801, %v2495
      %2521 = vst.msk [vmem:[#allocation3 + $0x78] sm:$0xff] %vm1801, %v2496
      %2522 = vst.msk [vmem:[#allocation3 + $0x80] sm:$0xff] %vm1801, %v2497
      %2523 = vst.msk [vmem:[#allocation3 + $0x88] sm:$0xff] %vm1801, %v2498
      %2524 = vst.msk [vmem:[#allocation3 + $0x90] sm:$0xff] %vm1801, %v2499
      %2525 = vst.msk [vmem:[#allocation3 + $0x98] sm:$0xff] %vm1801, %v2500
      %2526 = vst.msk [vmem:[#allocation3 + $0xa0] sm:$0xff] %vm1801, %v2501
      %2527 = vst.msk [vmem:[#allocation3 + $0xa8] sm:$0xff] %vm1801, %v2502
      %2528 = vst.msk [vmem:[#allocation3 + $0xb0] sm:$0xff] %vm1801, %v2503
      %2529 = vst.msk [vmem:[#allocation3 + $0xb8] sm:$0xff] %vm1801, %v2504
      %2530 = vst.msk [vmem:[#allocation3 + $0xc0] sm:$0x7] %vm2155, %v2505
      %v2531 = vld [vmem:[#allocation2 + $0x2] sm:$0xff]
      %v2532 = vld [vmem:[#allocation2 + $0xa] sm:$0xff]
      %v2533 = vld [vmem:[#allocation2 + $0x12] sm:$0xff]
      %v2534 = vld [vmem:[#allocation2 + $0x1a] sm:$0xff]
      %v2535 = vld [vmem:[#allocation2 + $0x22] sm:$0xff]
      %v2536 = vld [vmem:[#allocation2 + $0x2a] sm:$0xff]
      %v2537 = vld [vmem:[#allocation2 + $0x32] sm:$0xff]
      %v2538 = vld [vmem:[#allocation2 + $0x3a] sm:$0xff]
      %v2539 = vld [vmem:[#allocation2 + $0x42] sm:$0xff]
      %v2540 = vld [vmem:[#allocation2 + $0x4a] sm:$0xff]
      %v2541 = vld [vmem:[#allocation2 + $0x52] sm:$0xff]
      %v2542 = vld [vmem:[#allocation2 + $0x5a] sm:$0xff]
      %v2543 = vld [vmem:[#allocation2 + $0x62] sm:$0xff]
      %v2544 = vld [vmem:[#allocation2 + $0x6a] sm:$0xff]
      %v2545 = vld [vmem:[#allocation2 + $0x72] sm:$0xff]
      %v2546 = vld [vmem:[#allocation2 + $0x7a] sm:$0xff]
      %v2547 = vld [vmem:[#allocation2 + $0x82] sm:$0xff]
      %v2548 = vld [vmem:[#allocation2 + $0x8a] sm:$0xff]
      %v2549 = vld [vmem:[#allocation2 + $0x92] sm:$0xff]
      %v2550 = vld [vmem:[#allocation2 + $0x9a] sm:$0xff]
      %v2551 = vld [vmem:[#allocation2 + $0xa2] sm:$0xff]
      %v2552 = vld [vmem:[#allocation2 + $0xaa] sm:$0xff]
      %v2553 = vld [vmem:[#allocation2 + $0xb2] sm:$0xff]
      %v2554 = vld [vmem:[#allocation2 + $0xba] sm:$0xff]
      %v2555 = vld [vmem:[#allocation2 + $0xc2] sm:$0x7]
      %s2556 = scalar_lea.vmem %s3, 128
      %v2557 = vld [vmem:[%s2556] sm:$0xff]
      %v2558 = vld [vmem:[%s2556 + $0x8] sm:$0xff]
      %v2559 = vld [vmem:[%s2556 + $0x10] sm:$0xff]
      %v2560 = vld [vmem:[%s2556 + $0x18] sm:$0xff]
      %v2561 = vld [vmem:[%s2556 + $0x20] sm:$0xff]
      %v2562 = vld [vmem:[%s2556 + $0x28] sm:$0xff]
      %v2563 = vld [vmem:[%s2556 + $0x30] sm:$0xff]
      %v2564 = vld [vmem:[%s2556 + $0x38] sm:$0xff]
      %v2566 = vsel %vm1801, %v2531, 0
      %v2569 = vsel %vm1801, %v2532, 0
      %v2572 = vsel %vm1801, %v2533, 0
      %v2575 = vsel %vm1801, %v2534, 0
      %v2578 = vsel %vm1801, %v2535, 0
      %v2581 = vsel %vm1801, %v2536, 0
      %v2584 = vsel %vm1801, %v2537, 0
      %v2587 = vsel %vm1801, %v2538, 0
      %v2590 = vsel %vm1801, %v2539, 0
      %v2593 = vsel %vm1801, %v2540, 0
      %v2596 = vsel %vm1801, %v2541, 0
      %v2599 = vsel %vm1801, %v2542, 0
      %v2602 = vsel %vm1801, %v2543, 0
      %v2605 = vsel %vm1801, %v2544, 0
      %v2608 = vsel %vm1801, %v2545, 0
      %v2611 = vsel %vm1801, %v2546, 0
      %v2614 = vsel %vm1801, %v2547, 0
      %v2617 = vsel %vm1801, %v2548, 0
      %v2620 = vsel %vm1801, %v2549, 0
      %v2623 = vsel %vm1801, %v2550, 0
      %v2626 = vsel %vm1801, %v2551, 0
      %v2629 = vsel %vm1801, %v2552, 0
      %v2632 = vsel %vm1801, %v2553, 0
      %v2635 = vsel %vm1801, %v2554, 0
      %v2638 = vsel %vm1801, %v2555, 0
      %2640 = vmatprep.subr.mxu0 0.0
      %2641 = vmatpush1.msra.mxu0 %v2557
      %2642 = vmatprep.subr.mxu0 0.0
      %2643 = vmatpush1.msra.mxu0 %v2558
      %2644 = vmatprep.subr.mxu0 0.0
      %2645 = vmatpush1.msra.mxu0 %v2559
      %2646 = vmatprep.subr.mxu0 0.0
      %2647 = vmatpush1.msra.mxu0 %v2560
      %2648 = vmatprep.subr.mxu0 0.0
      %2649 = vmatpush1.msra.mxu0 %v2561
      %2650 = vmatprep.subr.mxu0 0.0
      %2651 = vmatpush1.msra.mxu0 %v2562
      %2652 = vmatprep.subr.mxu0 0.0
      %2653 = vmatpush1.msra.mxu0 %v2563
      %2654 = vmatprep.subr.mxu0 0.0
      %2655 = vmatpush1.msra.mxu0 %v2564
      %2656 = vmatprep.subr.mxu0 0.0
      %2657 = vmatpush1.msra.mxu0 0.0
      %2658 = vmatprep.subr.mxu0 0.0
      %2659 = vmatpush1.msra.mxu0 0.0
      %2660 = vmatprep.subr.mxu0 0.0
      %2661 = vmatpush1.msra.mxu0 0.0
      %2662 = vmatprep.subr.mxu0 0.0
      %2663 = vmatpush1.msra.mxu0 0.0
      %2664 = vmatprep.subr.mxu0 0.0
      %2665 = vmatpush1.msra.mxu0 0.0
      %2666 = vmatprep.subr.mxu0 0.0
      %2667 = vmatpush1.msra.mxu0 0.0
      %2668 = vmatprep.subr.mxu0 0.0
      %2669 = vmatpush1.msra.mxu0 0.0
      %2670 = vmatprep.subr.mxu0 0.0
      %2671 = vmatpush1.msra.mxu0 0.0
      %2672 = vmatprep.subr.mxu0 0.0
      %2673 = vmatpush1.msra.mxu0 0.0
      %2674 = vmatprep.subr.mxu0 0.0
      %2675 = vmatpush1.msra.mxu0 0.0
      %2676 = vmatprep.subr.mxu0 0.0
      %2677 = vmatpush1.msra.mxu0 0.0
      %2678 = vmatprep.subr.mxu0 0.0
      %2679 = vmatpush1.msra.mxu0 0.0
      %2680 = vmatprep.subr.mxu0 0.0
      %2681 = vmatpush1.msra.mxu0 0.0
      %2682 = vmatprep.subr.mxu0 0.0
      %2683 = vmatpush1.msra.mxu0 0.0
      %2684 = vmatprep.subr.mxu0 0.0
      %2685 = vmatpush1.msra.mxu0 0.0
      %2686 = vmatprep.subr.mxu0 0.0
      %2687 = vmatpush1.msra.mxu0 0.0
      %2688 = vmatprep.subr.mxu0 0.0
      %2689 = vmatpush1.msra.mxu0 0.0
      %2690 = vmatprep.subr.mxu0 0.0
      %2691 = vmatpush1.msra.mxu0 0.0
      %2692 = vmatprep.subr.mxu0 0.0
      %2693 = vmatpush1.msra.mxu0 0.0
      %2694 = vmatprep.subr.mxu0 0.0
      %2695 = vmatpush1.msra.mxu0 0.0
      %2696 = vmatprep.subr.mxu0 0.0
      %2697 = vmatpush1.msra.mxu0 0.0
      %2698 = vmatprep.subr.mxu0 0.0
      %2699 = vmatpush1.msra.mxu0 0.0
      %2700 = vmatprep.subr.mxu0 0.0
      %2701 = vmatpush1.msra.mxu0 0.0
      %2702 = vmatprep.subr.mxu0 0.0
      %2703 = vmatpush1.msra.mxu0 0.0
      %2704 = vmatprep.mubr.f32.mxu0 0.0
      %2705 = vmatmul.mubr.f32.gmra.mrb[0].mxu0 %v2566
      %v2706 = vpop.f32.mrb[0].mxu0
      %v2707 = vadd.f32 0.0, %v2706
      %v2708 = vpop.f32.mrb[0].mxu0
      %2709 = vmatprep.mubr.f32.mxu0 0.0
      %2710 = vmatmul.mubr.f32.gmra.mrb[0].mxu0 %v2569
      %v2711 = vpop.f32.mrb[0].mxu0
      %v2712 = vadd.f32 0.0, %v2711
      %v2713 = vpop.f32.mrb[0].mxu0
      %2714 = vmatprep.mubr.f32.mxu0 0.0
      %2715 = vmatmul.mubr.f32.gmra.mrb[0].mxu0 %v2572
      %v2716 = vpop.f32.mrb[0].mxu0
      %v2717 = vadd.f32 0.0, %v2716
      %v2718 = vpop.f32.mrb[0].mxu0
      %2719 = vmatprep.mubr.f32.mxu0 0.0
      %2720 = vmatmul.mubr.f32.gmra.mrb[0].mxu0 %v2575
      %v2721 = vpop.f32.mrb[0].mxu0
      %v2722 = vadd.f32 0.0, %v2721
      %v2723 = vpop.f32.mrb[0].mxu0
      %2724 = vmatprep.mubr.f32.mxu0 0.0
      %2725 = vmatmul.mubr.f32.gmra.mrb[0].mxu0 %v2578
      %v2726 = vpop.f32.mrb[0].mxu0
      %v2727 = vadd.f32 0.0, %v2726
      %v2728 = vpop.f32.mrb[0].mxu0
      %2729 = vmatprep.mubr.f32.mxu0 0.0
      %2730 = vmatmul.mubr.f32.gmra.mrb[0].mxu0 %v2581
      %v2731 = vpop.f32.mrb[0].mxu0
      %v2732 = vadd.f32 0.0, %v2731
      %v2733 = vpop.f32.mrb[0].mxu0
      %2734 = vmatprep.mubr.f32.mxu0 0.0
      %2735 = vmatmul.mubr.f32.gmra.mrb[0].mxu0 %v2584
      %v2736 = vpop.f32.mrb[0].mxu0
      %v2737 = vadd.f32 0.0, %v2736
      %v2738 = vpop.f32.mrb[0].mxu0
      %2739 = vmatprep.mubr.f32.mxu0 0.0
      %2740 = vmatmul.mubr.f32.gmra.mrb[0].mxu0 %v2587
      %v2741 = vpop.f32.mrb[0].mxu0
      %v2742 = vadd.f32 0.0, %v2741
      %v2743 = vpop.f32.mrb[0].mxu0
      %2744 = vmatprep.mubr.f32.mxu0 0.0
      %2745 = vmatmul.mubr.f32.gmra.mrb[0].mxu0 %v2590
      %v2746 = vpop.f32.mrb[0].mxu0
      %v2747 = vadd.f32 0.0, %v2746
      %v2748 = vpop.f32.mrb[0].mxu0
      %2749 = vmatprep.mubr.f32.mxu0 0.0
      %2750 = vmatmul.mubr.f32.gmra.mrb[0].mxu0 %v2593
      %v2751 = vpop.f32.mrb[0].mxu0
      %v2752 = vadd.f32 0.0, %v2751
      %v2753 = vpop.f32.mrb[0].mxu0
      %2754 = vmatprep.mubr.f32.mxu0 0.0
      %2755 = vmatmul.mubr.f32.gmra.mrb[0].mxu0 %v2596
      %v2756 = vpop.f32.mrb[0].mxu0
      %v2757 = vadd.f32 0.0, %v2756
      %v2758 = vpop.f32.mrb[0].mxu0
      %2759 = vmatprep.mubr.f32.mxu0 0.0
      %2760 = vmatmul.mubr.f32.gmra.mrb[0].mxu0 %v2599
      %v2761 = vpop.f32.mrb[0].mxu0
      %v2762 = vadd.f32 0.0, %v2761
      %v2763 = vpop.f32.mrb[0].mxu0
      %2764 = vmatprep.mubr.f32.mxu0 0.0
      %2765 = vmatmul.mubr.f32.gmra.mrb[0].mxu0 %v2602
      %v2766 = vpop.f32.mrb[0].mxu0
      %v2767 = vadd.f32 0.0, %v2766
      %v2768 = vpop.f32.mrb[0].mxu0
      %2769 = vmatprep.mubr.f32.mxu0 0.0
      %2770 = vmatmul.mubr.f32.gmra.mrb[0].mxu0 %v2605
      %v2771 = vpop.f32.mrb[0].mxu0
      %v2772 = vadd.f32 0.0, %v2771
      %v2773 = vpop.f32.mrb[0].mxu0
      %2774 = vmatprep.mubr.f32.mxu0 0.0
      %2775 = vmatmul.mubr.f32.gmra.mrb[0].mxu0 %v2608
      %v2776 = vpop.f32.mrb[0].mxu0
      %v2777 = vadd.f32 0.0, %v2776
      %v2778 = vpop.f32.mrb[0].mxu0
      %2779 = vmatprep.mubr.f32.mxu0 0.0
      %2780 = vmatmul.mubr.f32.gmra.mrb[0].mxu0 %v2611
      %v2781 = vpop.f32.mrb[0].mxu0
      %v2782 = vadd.f32 0.0, %v2781
      %v2783 = vpop.f32.mrb[0].mxu0
      %2784 = vmatprep.mubr.f32.mxu0 0.0
      %2785 = vmatmul.mubr.f32.gmra.mrb[0].mxu0 %v2614
      %v2786 = vpop.f32.mrb[0].mxu0
      %v2787 = vadd.f32 0.0, %v2786
      %v2788 = vpop.f32.mrb[0].mxu0
      %2789 = vmatprep.mubr.f32.mxu0 0.0
      %2790 = vmatmul.mubr.f32.gmra.mrb[0].mxu0 %v2617
      %v2791 = vpop.f32.mrb[0].mxu0
      %v2792 = vadd.f32 0.0, %v2791
      %v2793 = vpop.f32.mrb[0].mxu0
      %2794 = vmatprep.mubr.f32.mxu0 0.0
      %2795 = vmatmul.mubr.f32.gmra.mrb[0].mxu0 %v2620
      %v2796 = vpop.f32.mrb[0].mxu0
      %v2797 = vadd.f32 0.0, %v2796
      %v2798 = vpop.f32.mrb[0].mxu0
      %2799 = vmatprep.mubr.f32.mxu0 0.0
      %2800 = vmatmul.mubr.f32.gmra.mrb[0].mxu0 %v2623
      %v2801 = vpop.f32.mrb[0].mxu0
      %v2802 = vadd.f32 0.0, %v2801
      %v2803 = vpop.f32.mrb[0].mxu0
      %2804 = vmatprep.mubr.f32.mxu0 0.0
      %2805 = vmatmul.mubr.f32.gmra.mrb[0].mxu0 %v2626
      %v2806 = vpop.f32.mrb[0].mxu0
      %v2807 = vadd.f32 0.0, %v2806
      %v2808 = vpop.f32.mrb[0].mxu0
      %2809 = vmatprep.mubr.f32.mxu0 0.0
      %2810 = vmatmul.mubr.f32.gmra.mrb[0].mxu0 %v2629
      %v2811 = vpop.f32.mrb[0].mxu0
      %v2812 = vadd.f32 0.0, %v2811
      %v2813 = vpop.f32.mrb[0].mxu0
      %2814 = vmatprep.mubr.f32.mxu0 0.0
      %2815 = vmatmul.mubr.f32.gmra.mrb[0].mxu0 %v2632
      %v2816 = vpop.f32.mrb[0].mxu0
      %v2817 = vadd.f32 0.0, %v2816
      %v2818 = vpop.f32.mrb[0].mxu0
      %2819 = vmatprep.mubr.f32.mxu0 0.0
      %2820 = vmatmul.mubr.f32.gmra.mrb[0].mxu0 %v2635
      %v2821 = vpop.f32.mrb[0].mxu0
      %v2822 = vadd.f32 0.0, %v2821
      %v2823 = vpop.f32.mrb[0].mxu0
      %2824 = vmatprep.mubr.f32.mxu0 0.0
      %2825 = vmatmul.mubr.f32.gmra.mrb[0].mxu0 %v2638
      %v2826 = vpop.f32.mrb[0].mxu0
      %v2827 = vadd.f32 0.0, %v2826
      %v2828 = vpop.f32.mrb[0].mxu0
      %2829 = vdwg.mxu0
      %v2830 = vld [vmem:[#allocation3] sm:$0xff]
      %v2831 = vld [vmem:[#allocation3 + $0x8] sm:$0xff]
      %v2832 = vld [vmem:[#allocation3 + $0x10] sm:$0xff]
      %v2833 = vld [vmem:[#allocation3 + $0x18] sm:$0xff]
      %v2834 = vld [vmem:[#allocation3 + $0x20] sm:$0xff]
      %v2835 = vld [vmem:[#allocation3 + $0x28] sm:$0xff]
      %v2836 = vld [vmem:[#allocation3 + $0x30] sm:$0xff]
      %v2837 = vld [vmem:[#allocation3 + $0x38] sm:$0xff]
      %v2838 = vld [vmem:[#allocation3 + $0x40] sm:$0xff]
      %v2839 = vld [vmem:[#allocation3 + $0x48] sm:$0xff]
      %v2840 = vld [vmem:[#allocation3 + $0x50] sm:$0xff]
      %v2841 = vld [vmem:[#allocation3 + $0x58] sm:$0xff]
      %v2842 = vld [vmem:[#allocation3 + $0x60] sm:$0xff]
      %v2843 = vld [vmem:[#allocation3 + $0x68] sm:$0xff]
      %v2844 = vld [vmem:[#allocation3 + $0x70] sm:$0xff]
      %v2845 = vld [vmem:[#allocation3 + $0x78] sm:$0xff]
      %v2846 = vld [vmem:[#allocation3 + $0x80] sm:$0xff]
      %v2847 = vld [vmem:[#allocation3 + $0x88] sm:$0xff]
      %v2848 = vld [vmem:[#allocation3 + $0x90] sm:$0xff]
      %v2849 = vld [vmem:[#allocation3 + $0x98] sm:$0xff]
      %v2850 = vld [vmem:[#allocation3 + $0xa0] sm:$0xff]
      %v2851 = vld [vmem:[#allocation3 + $0xa8] sm:$0xff]
      %v2852 = vld [vmem:[#allocation3 + $0xb0] sm:$0xff]
      %v2853 = vld [vmem:[#allocation3 + $0xb8] sm:$0xff]
      %v2854 = vld [vmem:[#allocation3 + $0xc0] sm:$0x7]
      %v2855 = vadd.f32 %v2830, %v2707
      %v2856 = vadd.f32 %v2831, %v2712
      %v2857 = vadd.f32 %v2832, %v2717
      %v2858 = vadd.f32 %v2833, %v2722
      %v2859 = vadd.f32 %v2834, %v2727
      %v2860 = vadd.f32 %v2835, %v2732
      %v2861 = vadd.f32 %v2836, %v2737
      %v2862 = vadd.f32 %v2837, %v2742
      %v2863 = vadd.f32 %v2838, %v2747
      %v2864 = vadd.f32 %v2839, %v2752
      %v2865 = vadd.f32 %v2840, %v2757
      %v2866 = vadd.f32 %v2841, %v2762
      %v2867 = vadd.f32 %v2842, %v2767
      %v2868 = vadd.f32 %v2843, %v2772
      %v2869 = vadd.f32 %v2844, %v2777
      %v2870 = vadd.f32 %v2845, %v2782
      %v2871 = vadd.f32 %v2846, %v2787
      %v2872 = vadd.f32 %v2847, %v2792
      %v2873 = vadd.f32 %v2848, %v2797
      %v2874 = vadd.f32 %v2849, %v2802
      %v2875 = vadd.f32 %v2850, %v2807
      %v2876 = vadd.f32 %v2851, %v2812
      %v2877 = vadd.f32 %v2852, %v2817
      %v2878 = vadd.f32 %v2853, %v2822
      %v2879 = vadd.f32 %v2854, %v2827
      %2880 = vst.msk [vmem:[#allocation3] sm:$0xff] %vm1801, %v2855
      %2881 = vst.msk [vmem:[#allocation3 + $0x8] sm:$0xff] %vm1801, %v2856
      %2882 = vst.msk [vmem:[#allocation3 + $0x10] sm:$0xff] %vm1801, %v2857
      %2883 = vst.msk [vmem:[#allocation3 + $0x18] sm:$0xff] %vm1801, %v2858
      %2884 = vst.msk [vmem:[#allocation3 + $0x20] sm:$0xff] %vm1801, %v2859
      %2885 = vst.msk [vmem:[#allocation3 + $0x28] sm:$0xff] %vm1801, %v2860
      %2886 = vst.msk [vmem:[#allocation3 + $0x30] sm:$0xff] %vm1801, %v2861
      %2887 = vst.msk [vmem:[#allocation3 + $0x38] sm:$0xff] %vm1801, %v2862
      %2888 = vst.msk [vmem:[#allocation3 + $0x40] sm:$0xff] %vm1801, %v2863
      %2889 = vst.msk [vmem:[#allocation3 + $0x48] sm:$0xff] %vm1801, %v2864
      %2890 = vst.msk [vmem:[#allocation3 + $0x50] sm:$0xff] %vm1801, %v2865
      %2891 = vst.msk [vmem:[#allocation3 + $0x58] sm:$0xff] %vm1801, %v2866
      %2892 = vst.msk [vmem:[#allocation3 + $0x60] sm:$0xff] %vm1801, %v2867
      %2893 = vst.msk [vmem:[#allocation3 + $0x68] sm:$0xff] %vm1801, %v2868
      %2894 = vst.msk [vmem:[#allocation3 + $0x70] sm:$0xff] %vm1801, %v2869
      %2895 = vst.msk [vmem:[#allocation3 + $0x78] sm:$0xff] %vm1801, %v2870
      %2896 = vst.msk [vmem:[#allocation3 + $0x80] sm:$0xff] %vm1801, %v2871
      %2897 = vst.msk [vmem:[#allocation3 + $0x88] sm:$0xff] %vm1801, %v2872
      %2898 = vst.msk [vmem:[#allocation3 + $0x90] sm:$0xff] %vm1801, %v2873
      %2899 = vst.msk [vmem:[#allocation3 + $0x98] sm:$0xff] %vm1801, %v2874
      %2900 = vst.msk [vmem:[#allocation3 + $0xa0] sm:$0xff] %vm1801, %v2875
      %2901 = vst.msk [vmem:[#allocation3 + $0xa8] sm:$0xff] %vm1801, %v2876
      %2902 = vst.msk [vmem:[#allocation3 + $0xb0] sm:$0xff] %vm1801, %v2877
      %2903 = vst.msk [vmem:[#allocation3 + $0xb8] sm:$0xff] %vm1801, %v2878
      %2904 = vst.msk [vmem:[#allocation3 + $0xc0] sm:$0x7] %vm2155, %v2879
      %v2905 = vld [vmem:[#allocation2 + $0xf] sm:$0xff]
      %v2906 = vld [vmem:[#allocation2 + $0x17] sm:$0xff]
      %v2907 = vld [vmem:[#allocation2 + $0x1f] sm:$0xff]
      %v2908 = vld [vmem:[#allocation2 + $0x27] sm:$0xff]
      %v2909 = vld [vmem:[#allocation2 + $0x2f] sm:$0xff]
      %v2910 = vld [vmem:[#allocation2 + $0x37] sm:$0xff]
      %v2911 = vld [vmem:[#allocation2 + $0x3f] sm:$0xff]
      %v2912 = vld [vmem:[#allocation2 + $0x47] sm:$0xff]
      %v2913 = vld [vmem:[#allocation2 + $0x4f] sm:$0xff]
      %v2914 = vld [vmem:[#allocation2 + $0x57] sm:$0xff]
      %v2915 = vld [vmem:[#allocation2 + $0x5f] sm:$0xff]
      %v2916 = vld [vmem:[#allocation2 + $0x67] sm:$0xff]
      %v2917 = vld [vmem:[#allocation2 + $0x6f] sm:$0xff]
      %v2918 = vld [vmem:[#allocation2 + $0x77] sm:$0xff]
      %v2919 = vld [vmem:[#allocation2 + $0x7f] sm:$0xff]
      %v2920 = vld [vmem:[#allocation2 + $0x87] sm:$0xff]
      %v2921 = vld [vmem:[#allocation2 + $0x8f] sm:$0xff]
      %v2922 = vld [vmem:[#allocation2 + $0x97] sm:$0xff]
      %v2923 = vld [vmem:[#allocation2 + $0x9f] sm:$0xff]
      %v2924 = vld [vmem:[#allocation2 + $0xa7] sm:$0xff]
      %v2925 = vld [vmem:[#allocation2 + $0xaf] sm:$0xff]
      %v2926 = vld [vmem:[#allocation2 + $0xb7] sm:$0xff]
      %v2927 = vld [vmem:[#allocation2 + $0xbf] sm:$0xff]
      %v2928 = vld [vmem:[#allocation2 + $0xc7] sm:$0xff]
      %v2929 = vld [vmem:[#allocation2 + $0xcf] sm:$0x7]
      %s2930 = scalar_lea.vmem %s3, 192
      %v2931 = vld [vmem:[%s2930] sm:$0xff]
      %v2932 = vld [vmem:[%s2930 + $0x8] sm:$0xff]
      %v2933 = vld [vmem:[%s2930 + $0x10] sm:$0xff]
      %v2934 = vld [vmem:[%s2930 + $0x18] sm:$0xff]
      %v2935 = vld [vmem:[%s2930 + $0x20] sm:$0xff]
      %v2936 = vld [vmem:[%s2930 + $0x28] sm:$0xff]
      %v2937 = vld [vmem:[%s2930 + $0x30] sm:$0xff]
      %v2938 = vld [vmem:[%s2930 + $0x38] sm:$0xff]
      %v2940 = vsel %vm1801, %v2905, 0
      %v2943 = vsel %vm1801, %v2906, 0
      %v2946 = vsel %vm1801, %v2907, 0
      %v2949 = vsel %vm1801, %v2908, 0
      %v2952 = vsel %vm1801, %v2909, 0
      %v2955 = vsel %vm1801, %v2910, 0
      %v2958 = vsel %vm1801, %v2911, 0
      %v2961 = vsel %vm1801, %v2912, 0
      %v2964 = vsel %vm1801, %v2913, 0
      %v2967 = vsel %vm1801, %v2914, 0
      %v2970 = vsel %vm1801, %v2915, 0
      %v2973 = vsel %vm1801, %v2916, 0
      %v2976 = vsel %vm1801, %v2917, 0
      %v2979 = vsel %vm1801, %v2918, 0
      %v2982 = vsel %vm1801, %v2919, 0
      %v2985 = vsel %vm1801, %v2920, 0
      %v2988 = vsel %vm1801, %v2921, 0
      %v2991 = vsel %vm1801, %v2922, 0
      %v2994 = vsel %vm1801, %v2923, 0
      %v2997 = vsel %vm1801, %v2924, 0
      %v3000 = vsel %vm1801, %v2925, 0
      %v3003 = vsel %vm1801, %v2926, 0
      %v3006 = vsel %vm1801, %v2927, 0
      %v3009 = vsel %vm1801, %v2928, 0
      %v3012 = vsel %vm1801, %v2929, 0
      %3014 = vmatprep.subr.mxu0 0.0
      %3015 = vmatpush1.msra.mxu0 %v2931
      %3016 = vmatprep.subr.mxu0 0.0
      %3017 = vmatpush1.msra.mxu0 %v2932
      %3018 = vmatprep.subr.mxu0 0.0
      %3019 = vmatpush1.msra.mxu0 %v2933
      %3020 = vmatprep.subr.mxu0 0.0
      %3021 = vmatpush1.msra.mxu0 %v2934
      %3022 = vmatprep.subr.mxu0 0.0
      %3023 = vmatpush1.msra.mxu0 %v2935
      %3024 = vmatprep.subr.mxu0 0.0
      %3025 = vmatpush1.msra.mxu0 %v2936
      %3026 = vmatprep.subr.mxu0 0.0
      %3027 = vmatpush1.msra.mxu0 %v2937
      %3028 = vmatprep.subr.mxu0 0.0
      %3029 = vmatpush1.msra.mxu0 %v2938
      %3030 = vmatprep.subr.mxu0 0.0
      %3031 = vmatpush1.msra.mxu0 0.0
      %3032 = vmatprep.subr.mxu0 0.0
      %3033 = vmatpush1.msra.mxu0 0.0
      %3034 = vmatprep.subr.mxu0 0.0
      %3035 = vmatpush1.msra.mxu0 0.0
      %3036 = vmatprep.subr.mxu0 0.0
      %3037 = vmatpush1.msra.mxu0 0.0
      %3038 = vmatprep.subr.mxu0 0.0
      %3039 = vmatpush1.msra.mxu0 0.0
      %3040 = vmatprep.subr.mxu0 0.0
      %3041 = vmatpush1.msra.mxu0 0.0
      %3042 = vmatprep.subr.mxu0 0.0
      %3043 = vmatpush1.msra.mxu0 0.0
      %3044 = vmatprep.subr.mxu0 0.0
      %3045 = vmatpush1.msra.mxu0 0.0
      %3046 = vmatprep.subr.mxu0 0.0
      %3047 = vmatpush1.msra.mxu0 0.0
      %3048 = vmatprep.subr.mxu0 0.0
      %3049 = vmatpush1.msra.mxu0 0.0
      %3050 = vmatprep.subr.mxu0 0.0
      %3051 = vmatpush1.msra.mxu0 0.0
      %3052 = vmatprep.subr.mxu0 0.0
      %3053 = vmatpush1.msra.mxu0 0.0
      %3054 = vmatprep.subr.mxu0 0.0
      %3055 = vmatpush1.msra.mxu0 0.0
      %3056 = vmatprep.subr.mxu0 0.0
      %3057 = vmatpush1.msra.mxu0 0.0
      %3058 = vmatprep.subr.mxu0 0.0
      %3059 = vmatpush1.msra.mxu0 0.0
      %3060 = vmatprep.subr.mxu0 0.0
      %3061 = vmatpush1.msra.mxu0 0.0
      %3062 = vmatprep.subr.mxu0 0.0
      %3063 = vmatpush1.msra.mxu0 0.0
      %3064 = vmatprep.subr.mxu0 0.0
      %3065 = vmatpush1.msra.mxu0 0.0
      %3066 = vmatprep.subr.mxu0 0.0
      %3067 = vmatpush1.msra.mxu0 0.0
      %3068 = vmatprep.subr.mxu0 0.0
      %3069 = vmatpush1.msra.mxu0 0.0
      %3070 = vmatprep.subr.mxu0 0.0
      %3071 = vmatpush1.msra.mxu0 0.0
      %3072 = vmatprep.subr.mxu0 0.0
      %3073 = vmatpush1.msra.mxu0 0.0
      %3074 = vmatprep.subr.mxu0 0.0
      %3075 = vmatpush1.msra.mxu0 0.0
      %3076 = vmatprep.subr.mxu0 0.0
      %3077 = vmatpush1.msra.mxu0 0.0
      %3078 = vmatprep.mubr.f32.mxu0 0.0
      %3079 = vmatmul.mubr.f32.gmra.mrb[0].mxu0 %v2940
      %v3080 = vpop.f32.mrb[0].mxu0
      %v3081 = vadd.f32 0.0, %v3080
      %v3082 = vpop.f32.mrb[0].mxu0
      %3083 = vmatprep.mubr.f32.mxu0 0.0
      %3084 = vmatmul.mubr.f32.gmra.mrb[0].mxu0 %v2943
      %v3085 = vpop.f32.mrb[0].mxu0
      %v3086 = vadd.f32 0.0, %v3085
      %v3087 = vpop.f32.mrb[0].mxu0
      %3088 = vmatprep.mubr.f32.mxu0 0.0
      %3089 = vmatmul.mubr.f32.gmra.mrb[0].mxu0 %v2946
      %v3090 = vpop.f32.mrb[0].mxu0
      %v3091 = vadd.f32 0.0, %v3090
      %v3092 = vpop.f32.mrb[0].mxu0
      %3093 = vmatprep.mubr.f32.mxu0 0.0
      %3094 = vmatmul.mubr.f32.gmra.mrb[0].mxu0 %v2949
      %v3095 = vpop.f32.mrb[0].mxu0
      %v3096 = vadd.f32 0.0, %v3095
      %v3097 = vpop.f32.mrb[0].mxu0
      %3098 = vmatprep.mubr.f32.mxu0 0.0
      %3099 = vmatmul.mubr.f32.gmra.mrb[0].mxu0 %v2952
      %v3100 = vpop.f32.mrb[0].mxu0
      %v3101 = vadd.f32 0.0, %v3100
      %v3102 = vpop.f32.mrb[0].mxu0
      %3103 = vmatprep.mubr.f32.mxu0 0.0
      %3104 = vmatmul.mubr.f32.gmra.mrb[0].mxu0 %v2955
      %v3105 = vpop.f32.mrb[0].mxu0
      %v3106 = vadd.f32 0.0, %v3105
      %v3107 = vpop.f32.mrb[0].mxu0
      %3108 = vmatprep.mubr.f32.mxu0 0.0
      %3109 = vmatmul.mubr.f32.gmra.mrb[0].mxu0 %v2958
      %v3110 = vpop.f32.mrb[0].mxu0
      %v3111 = vadd.f32 0.0, %v3110
      %v3112 = vpop.f32.mrb[0].mxu0
      %3113 = vmatprep.mubr.f32.mxu0 0.0
      %3114 = vmatmul.mubr.f32.gmra.mrb[0].mxu0 %v2961
      %v3115 = vpop.f32.mrb[0].mxu0
      %v3116 = vadd.f32 0.0, %v3115
      %v3117 = vpop.f32.mrb[0].mxu0
      %3118 = vmatprep.mubr.f32.mxu0 0.0
      %3119 = vmatmul.mubr.f32.gmra.mrb[0].mxu0 %v2964
      %v3120 = vpop.f32.mrb[0].mxu0
      %v3121 = vadd.f32 0.0, %v3120
      %v3122 = vpop.f32.mrb[0].mxu0
      %3123 = vmatprep.mubr.f32.mxu0 0.0
      %3124 = vmatmul.mubr.f32.gmra.mrb[0].mxu0 %v2967
      %v3125 = vpop.f32.mrb[0].mxu0
      %v3126 = vadd.f32 0.0, %v3125
      %v3127 = vpop.f32.mrb[0].mxu0
      %3128 = vmatprep.mubr.f32.mxu0 0.0
      %3129 = vmatmul.mubr.f32.gmra.mrb[0].mxu0 %v2970
      %v3130 = vpop.f32.mrb[0].mxu0
      %v3131 = vadd.f32 0.0, %v3130
      %v3132 = vpop.f32.mrb[0].mxu0
      %3133 = vmatprep.mubr.f32.mxu0 0.0
      %3134 = vmatmul.mubr.f32.gmra.mrb[0].mxu0 %v2973
      %v3135 = vpop.f32.mrb[0].mxu0
      %v3136 = vadd.f32 0.0, %v3135
      %v3137 = vpop.f32.mrb[0].mxu0
      %3138 = vmatprep.mubr.f32.mxu0 0.0
      %3139 = vmatmul.mubr.f32.gmra.mrb[0].mxu0 %v2976
      %v3140 = vpop.f32.mrb[0].mxu0
      %v3141 = vadd.f32 0.0, %v3140
      %v3142 = vpop.f32.mrb[0].mxu0
      %3143 = vmatprep.mubr.f32.mxu0 0.0
      %3144 = vmatmul.mubr.f32.gmra.mrb[0].mxu0 %v2979
      %v3145 = vpop.f32.mrb[0].mxu0
      %v3146 = vadd.f32 0.0, %v3145
      %v3147 = vpop.f32.mrb[0].mxu0
      %3148 = vmatprep.mubr.f32.mxu0 0.0
      %3149 = vmatmul.mubr.f32.gmra.mrb[0].mxu0 %v2982
      %v3150 = vpop.f32.mrb[0].mxu0
      %v3151 = vadd.f32 0.0, %v3150
      %v3152 = vpop.f32.mrb[0].mxu0
      %3153 = vmatprep.mubr.f32.mxu0 0.0
      %3154 = vmatmul.mubr.f32.gmra.mrb[0].mxu0 %v2985
      %v3155 = vpop.f32.mrb[0].mxu0
      %v3156 = vadd.f32 0.0, %v3155
      %v3157 = vpop.f32.mrb[0].mxu0
      %3158 = vmatprep.mubr.f32.mxu0 0.0
      %3159 = vmatmul.mubr.f32.gmra.mrb[0].mxu0 %v2988
      %v3160 = vpop.f32.mrb[0].mxu0
      %v3161 = vadd.f32 0.0, %v3160
      %v3162 = vpop.f32.mrb[0].mxu0
      %3163 = vmatprep.mubr.f32.mxu0 0.0
      %3164 = vmatmul.mubr.f32.gmra.mrb[0].mxu0 %v2991
      %v3165 = vpop.f32.mrb[0].mxu0
      %v3166 = vadd.f32 0.0, %v3165
      %v3167 = vpop.f32.mrb[0].mxu0
      %3168 = vmatprep.mubr.f32.mxu0 0.0
      %3169 = vmatmul.mubr.f32.gmra.mrb[0].mxu0 %v2994
      %v3170 = vpop.f32.mrb[0].mxu0
      %v3171 = vadd.f32 0.0, %v3170
      %v3172 = vpop.f32.mrb[0].mxu0
      %3173 = vmatprep.mubr.f32.mxu0 0.0
      %3174 = vmatmul.mubr.f32.gmra.mrb[0].mxu0 %v2997
      %v3175 = vpop.f32.mrb[0].mxu0
      %v3176 = vadd.f32 0.0, %v3175
      %v3177 = vpop.f32.mrb[0].mxu0
      %3178 = vmatprep.mubr.f32.mxu0 0.0
      %3179 = vmatmul.mubr.f32.gmra.mrb[0].mxu0 %v3000
      %v3180 = vpop.f32.mrb[0].mxu0
      %v3181 = vadd.f32 0.0, %v3180
      %v3182 = vpop.f32.mrb[0].mxu0
      %3183 = vmatprep.mubr.f32.mxu0 0.0
      %3184 = vmatmul.mubr.f32.gmra.mrb[0].mxu0 %v3003
      %v3185 = vpop.f32.mrb[0].mxu0
      %v3186 = vadd.f32 0.0, %v3185
      %v3187 = vpop.f32.mrb[0].mxu0
      %3188 = vmatprep.mubr.f32.mxu0 0.0
      %3189 = vmatmul.mubr.f32.gmra.mrb[0].mxu0 %v3006
      %v3190 = vpop.f32.mrb[0].mxu0
      %v3191 = vadd.f32 0.0, %v3190
      %v3192 = vpop.f32.mrb[0].mxu0
      %3193 = vmatprep.mubr.f32.mxu0 0.0
      %3194 = vmatmul.mubr.f32.gmra.mrb[0].mxu0 %v3009
      %v3195 = vpop.f32.mrb[0].mxu0
      %v3196 = vadd.f32 0.0, %v3195
      %v3197 = vpop.f32.mrb[0].mxu0
      %3198 = vmatprep.mubr.f32.mxu0 0.0
      %3199 = vmatmul.mubr.f32.gmra.mrb[0].mxu0 %v3012
      %v3200 = vpop.f32.mrb[0].mxu0
      %v3201 = vadd.f32 0.0, %v3200
      %v3202 = vpop.f32.mrb[0].mxu0
      %3203 = vdwg.mxu0
      %v3204 = vld [vmem:[#allocation3] sm:$0xff]
      %v3205 = vld [vmem:[#allocation3 + $0x8] sm:$0xff]
      %v3206 = vld [vmem:[#allocation3 + $0x10] sm:$0xff]
      %v3207 = vld [vmem:[#allocation3 + $0x18] sm:$0xff]
      %v3208 = vld [vmem:[#allocation3 + $0x20] sm:$0xff]
      %v3209 = vld [vmem:[#allocation3 + $0x28] sm:$0xff]
      %v3210 = vld [vmem:[#allocation3 + $0x30] sm:$0xff]
      %v3211 = vld [vmem:[#allocation3 + $0x38] sm:$0xff]
      %v3212 = vld [vmem:[#allocation3 + $0x40] sm:$0xff]
      %v3213 = vld [vmem:[#allocation3 + $0x48] sm:$0xff]
      %v3214 = vld [vmem:[#allocation3 + $0x50] sm:$0xff]
      %v3215 = vld [vmem:[#allocation3 + $0x58] sm:$0xff]
      %v3216 = vld [vmem:[#allocation3 + $0x60] sm:$0xff]
      %v3217 = vld [vmem:[#allocation3 + $0x68] sm:$0xff]
      %v3218 = vld [vmem:[#allocation3 + $0x70] sm:$0xff]
      %v3219 = vld [vmem:[#allocation3 + $0x78] sm:$0xff]
      %v3220 = vld [vmem:[#allocation3 + $0x80] sm:$0xff]
      %v3221 = vld [vmem:[#allocation3 + $0x88] sm:$0xff]
      %v3222 = vld [vmem:[#allocation3 + $0x90] sm:$0xff]
      %v3223 = vld [vmem:[#allocation3 + $0x98] sm:$0xff]
      %v3224 = vld [vmem:[#allocation3 + $0xa0] sm:$0xff]
      %v3225 = vld [vmem:[#allocation3 + $0xa8] sm:$0xff]
      %v3226 = vld [vmem:[#allocation3 + $0xb0] sm:$0xff]
      %v3227 = vld [vmem:[#allocation3 + $0xb8] sm:$0xff]
      %v3228 = vld [vmem:[#allocation3 + $0xc0] sm:$0x7]
      %v3229 = vadd.f32 %v3204, %v3081
      %v3230 = vadd.f32 %v3205, %v3086
      %v3231 = vadd.f32 %v3206, %v3091
      %v3232 = vadd.f32 %v3207, %v3096
      %v3233 = vadd.f32 %v3208, %v3101
      %v3234 = vadd.f32 %v3209, %v3106
      %v3235 = vadd.f32 %v3210, %v3111
      %v3236 = vadd.f32 %v3211, %v3116
      %v3237 = vadd.f32 %v3212, %v3121
      %v3238 = vadd.f32 %v3213, %v3126
      %v3239 = vadd.f32 %v3214, %v3131
      %v3240 = vadd.f32 %v3215, %v3136
      %v3241 = vadd.f32 %v3216, %v3141
      %v3242 = vadd.f32 %v3217, %v3146
      %v3243 = vadd.f32 %v3218, %v3151
      %v3244 = vadd.f32 %v3219, %v3156
      %v3245 = vadd.f32 %v3220, %v3161
      %v3246 = vadd.f32 %v3221, %v3166
      %v3247 = vadd.f32 %v3222, %v3171
      %v3248 = vadd.f32 %v3223, %v3176
      %v3249 = vadd.f32 %v3224, %v3181
      %v3250 = vadd.f32 %v3225, %v3186
      %v3251 = vadd.f32 %v3226, %v3191
      %v3252 = vadd.f32 %v3227, %v3196
      %v3253 = vadd.f32 %v3228, %v3201
      %3254 = vst.msk [vmem:[#allocation3] sm:$0xff] %vm1801, %v3229
      %3255 = vst.msk [vmem:[#allocation3 + $0x8] sm:$0xff] %vm1801, %v3230
      %3256 = vst.msk [vmem:[#allocation3 + $0x10] sm:$0xff] %vm1801, %v3231
      %3257 = vst.msk [vmem:[#allocation3 + $0x18] sm:$0xff] %vm1801, %v3232
      %3258 = vst.msk [vmem:[#allocation3 + $0x20] sm:$0xff] %vm1801, %v3233
      %3259 = vst.msk [vmem:[#allocation3 + $0x28] sm:$0xff] %vm1801, %v3234
      %3260 = vst.msk [vmem:[#allocation3 + $0x30] sm:$0xff] %vm1801, %v3235
      %3261 = vst.msk [vmem:[#allocation3 + $0x38] sm:$0xff] %vm1801, %v3236
      %3262 = vst.msk [vmem:[#allocation3 + $0x40] sm:$0xff] %vm1801, %v3237
      %3263 = vst.msk [vmem:[#allocation3 + $0x48] sm:$0xff] %vm1801, %v3238
      %3264 = vst.msk [vmem:[#allocation3 + $0x50] sm:$0xff] %vm1801, %v3239
      %3265 = vst.msk [vmem:[#allocation3 + $0x58] sm:$0xff] %vm1801, %v3240
      %3266 = vst.msk [vmem:[#allocation3 + $0x60] sm:$0xff] %vm1801, %v3241
      %3267 = vst.msk [vmem:[#allocation3 + $0x68] sm:$0xff] %vm1801, %v3242
      %3268 = vst.msk [vmem:[#allocation3 + $0x70] sm:$0xff] %vm1801, %v3243
      %3269 = vst.msk [vmem:[#allocation3 + $0x78] sm:$0xff] %vm1801, %v3244
      %3270 = vst.msk [vmem:[#allocation3 + $0x80] sm:$0xff] %vm1801, %v3245
      %3271 = vst.msk [vmem:[#allocation3 + $0x88] sm:$0xff] %vm1801, %v3246
      %3272 = vst.msk [vmem:[#allocation3 + $0x90] sm:$0xff] %vm1801, %v3247
      %3273 = vst.msk [vmem:[#allocation3 + $0x98] sm:$0xff] %vm1801, %v3248
      %3274 = vst.msk [vmem:[#allocation3 + $0xa0] sm:$0xff] %vm1801, %v3249
      %3275 = vst.msk [vmem:[#allocation3 + $0xa8] sm:$0xff] %vm1801, %v3250
      %3276 = vst.msk [vmem:[#allocation3 + $0xb0] sm:$0xff] %vm1801, %v3251
      %3277 = vst.msk [vmem:[#allocation3 + $0xb8] sm:$0xff] %vm1801, %v3252
      %3278 = vst.msk [vmem:[#allocation3 + $0xc0] sm:$0x7] %vm2155, %v3253
      %v3279 = vld [vmem:[#allocation2 + $0x10] sm:$0xff]
      %v3280 = vld [vmem:[#allocation2 + $0x18] sm:$0xff]
      %v3281 = vld [vmem:[#allocation2 + $0x20] sm:$0xff]
      %v3282 = vld [vmem:[#allocation2 + $0x28] sm:$0xff]
      %v3283 = vld [vmem:[#allocation2 + $0x30] sm:$0xff]
      %v3284 = vld [vmem:[#allocation2 + $0x38] sm:$0xff]
      %v3285 = vld [vmem:[#allocation2 + $0x40] sm:$0xff]
      %v3286 = vld [vmem:[#allocation2 + $0x48] sm:$0xff]
      %v3287 = vld [vmem:[#allocation2 + $0x50] sm:$0xff]
      %v3288 = vld [vmem:[#allocation2 + $0x58] sm:$0xff]
      %v3289 = vld [vmem:[#allocation2 + $0x60] sm:$0xff]
      %v3290 = vld [vmem:[#allocation2 + $0x68] sm:$0xff]
      %v3291 = vld [vmem:[#allocation2 + $0x70] sm:$0xff]
      %v3292 = vld [vmem:[#allocation2 + $0x78] sm:$0xff]
      %v3293 = vld [vmem:[#allocation2 + $0x80] sm:$0xff]
      %v3294 = vld [vmem:[#allocation2 + $0x88] sm:$0xff]
      %v3295 = vld [vmem:[#allocation2 + $0x90] sm:$0xff]
      %v3296 = vld [vmem:[#allocation2 + $0x98] sm:$0xff]
      %v3297 = vld [vmem:[#allocation2 + $0xa0] sm:$0xff]
      %v3298 = vld [vmem:[#allocation2 + $0xa8] sm:$0xff]
      %v3299 = vld [vmem:[#allocation2 + $0xb0] sm:$0xff]
      %v3300 = vld [vmem:[#allocation2 + $0xb8] sm:$0xff]
      %v3301 = vld [vmem:[#allocation2 + $0xc0] sm:$0xff]
      %v3302 = vld [vmem:[#allocation2 + $0xc8] sm:$0xff]
      %v3303 = vld [vmem:[#allocation2 + $0xd0] sm:$0x7]
      %s3304 = scalar_lea.vmem %s3, 256
      %v3305 = vld [vmem:[%s3304] sm:$0xff]
      %v3306 = vld [vmem:[%s3304 + $0x8] sm:$0xff]
      %v3307 = vld [vmem:[%s3304 + $0x10] sm:$0xff]
      %v3308 = vld [vmem:[%s3304 + $0x18] sm:$0xff]
      %v3309 = vld [vmem:[%s3304 + $0x20] sm:$0xff]
      %v3310 = vld [vmem:[%s3304 + $0x28] sm:$0xff]
      %v3311 = vld [vmem:[%s3304 + $0x30] sm:$0xff]
      %v3312 = vld [vmem:[%s3304 + $0x38] sm:$0xff]
      %v3314 = vsel %vm1801, %v3279, 0
      %v3317 = vsel %vm1801, %v3280, 0
      %v3320 = vsel %vm1801, %v3281, 0
      %v3323 = vsel %vm1801, %v3282, 0
      %v3326 = vsel %vm1801, %v3283, 0
      %v3329 = vsel %vm1801, %v3284, 0
      %v3332 = vsel %vm1801, %v3285, 0
      %v3335 = vsel %vm1801, %v3286, 0
      %v3338 = vsel %vm1801, %v3287, 0
      %v3341 = vsel %vm1801, %v3288, 0
      %v3344 = vsel %vm1801, %v3289, 0
      %v3347 = vsel %vm1801, %v3290, 0
      %v3350 = vsel %vm1801, %v3291, 0
      %v3353 = vsel %vm1801, %v3292, 0
      %v3356 = vsel %vm1801, %v3293, 0
      %v3359 = vsel %vm1801, %v3294, 0
      %v3362 = vsel %vm1801, %v3295, 0
      %v3365 = vsel %vm1801, %v3296, 0
      %v3368 = vsel %vm1801, %v3297, 0
      %v3371 = vsel %vm1801, %v3298, 0
      %v3374 = vsel %vm1801, %v3299, 0
      %v3377 = vsel %vm1801, %v3300, 0
      %v3380 = vsel %vm1801, %v3301, 0
      %v3383 = vsel %vm1801, %v3302, 0
      %v3386 = vsel %vm1801, %v3303, 0
      %3388 = vmatprep.subr.mxu0 0.0
      %3389 = vmatpush1.msra.mxu0 %v3305
      %3390 = vmatprep.subr.mxu0 0.0
      %3391 = vmatpush1.msra.mxu0 %v3306
      %3392 = vmatprep.subr.mxu0 0.0
      %3393 = vmatpush1.msra.mxu0 %v3307
      %3394 = vmatprep.subr.mxu0 0.0
      %3395 = vmatpush1.msra.mxu0 %v3308
      %3396 = vmatprep.subr.mxu0 0.0
      %3397 = vmatpush1.msra.mxu0 %v3309
      %3398 = vmatprep.subr.mxu0 0.0
      %3399 = vmatpush1.msra.mxu0 %v3310
      %3400 = vmatprep.subr.mxu0 0.0
      %3401 = vmatpush1.msra.mxu0 %v3311
      %3402 = vmatprep.subr.mxu0 0.0
      %3403 = vmatpush1.msra.mxu0 %v3312
      %3404 = vmatprep.subr.mxu0 0.0
      %3405 = vmatpush1.msra.mxu0 0.0
      %3406 = vmatprep.subr.mxu0 0.0
      %3407 = vmatpush1.msra.mxu0 0.0
      %3408 = vmatprep.subr.mxu0 0.0
      %3409 = vmatpush1.msra.mxu0 0.0
      %3410 = vmatprep.subr.mxu0 0.0
      %3411 = vmatpush1.msra.mxu0 0.0
      %3412 = vmatprep.subr.mxu0 0.0
      %3413 = vmatpush1.msra.mxu0 0.0
      %3414 = vmatprep.subr.mxu0 0.0
      %3415 = vmatpush1.msra.mxu0 0.0
      %3416 = vmatprep.subr.mxu0 0.0
      %3417 = vmatpush1.msra.mxu0 0.0
      %3418 = vmatprep.subr.mxu0 0.0
      %3419 = vmatpush1.msra.mxu0 0.0
      %3420 = vmatprep.subr.mxu0 0.0
      %3421 = vmatpush1.msra.mxu0 0.0
      %3422 = vmatprep.subr.mxu0 0.0
      %3423 = vmatpush1.msra.mxu0 0.0
      %3424 = vmatprep.subr.mxu0 0.0
      %3425 = vmatpush1.msra.mxu0 0.0
      %3426 = vmatprep.subr.mxu0 0.0
      %3427 = vmatpush1.msra.mxu0 0.0
      %3428 = vmatprep.subr.mxu0 0.0
      %3429 = vmatpush1.msra.mxu0 0.0
      %3430 = vmatprep.subr.mxu0 0.0
      %3431 = vmatpush1.msra.mxu0 0.0
      %3432 = vmatprep.subr.mxu0 0.0
      %3433 = vmatpush1.msra.mxu0 0.0
      %3434 = vmatprep.subr.mxu0 0.0
      %3435 = vmatpush1.msra.mxu0 0.0
      %3436 = vmatprep.subr.mxu0 0.0
      %3437 = vmatpush1.msra.mxu0 0.0
      %3438 = vmatprep.subr.mxu0 0.0
      %3439 = vmatpush1.msra.mxu0 0.0
      %3440 = vmatprep.subr.mxu0 0.0
      %3441 = vmatpush1.msra.mxu0 0.0
      %3442 = vmatprep.subr.mxu0 0.0
      %3443 = vmatpush1.msra.mxu0 0.0
      %3444 = vmatprep.subr.mxu0 0.0
      %3445 = vmatpush1.msra.mxu0 0.0
      %3446 = vmatprep.subr.mxu0 0.0
      %3447 = vmatpush1.msra.mxu0 0.0
      %3448 = vmatprep.subr.mxu0 0.0
      %3449 = vmatpush1.msra.mxu0 0.0
      %3450 = vmatprep.subr.mxu0 0.0
      %3451 = vmatpush1.msra.mxu0 0.0
      %3452 = vmatprep.mubr.f32.mxu0 0.0
      %3453 = vmatmul.mubr.f32.gmra.mrb[0].mxu0 %v3314
      %v3454 = vpop.f32.mrb[0].mxu0
      %v3455 = vadd.f32 0.0, %v3454
      %v3456 = vpop.f32.mrb[0].mxu0
      %3457 = vmatprep.mubr.f32.mxu0 0.0
      %3458 = vmatmul.mubr.f32.gmra.mrb[0].mxu0 %v3317
      %v3459 = vpop.f32.mrb[0].mxu0
      %v3460 = vadd.f32 0.0, %v3459
      %v3461 = vpop.f32.mrb[0].mxu0
      %3462 = vmatprep.mubr.f32.mxu0 0.0
      %3463 = vmatmul.mubr.f32.gmra.mrb[0].mxu0 %v3320
      %v3464 = vpop.f32.mrb[0].mxu0
      %v3465 = vadd.f32 0.0, %v3464
      %v3466 = vpop.f32.mrb[0].mxu0
      %3467 = vmatprep.mubr.f32.mxu0 0.0
      %3468 = vmatmul.mubr.f32.gmra.mrb[0].mxu0 %v3323
      %v3469 = vpop.f32.mrb[0].mxu0
      %v3470 = vadd.f32 0.0, %v3469
      %v3471 = vpop.f32.mrb[0].mxu0
      %3472 = vmatprep.mubr.f32.mxu0 0.0
      %3473 = vmatmul.mubr.f32.gmra.mrb[0].mxu0 %v3326
      %v3474 = vpop.f32.mrb[0].mxu0
      %v3475 = vadd.f32 0.0, %v3474
      %v3476 = vpop.f32.mrb[0].mxu0
      %3477 = vmatprep.mubr.f32.mxu0 0.0
      %3478 = vmatmul.mubr.f32.gmra.mrb[0].mxu0 %v3329
      %v3479 = vpop.f32.mrb[0].mxu0
      %v3480 = vadd.f32 0.0, %v3479
      %v3481 = vpop.f32.mrb[0].mxu0
      %3482 = vmatprep.mubr.f32.mxu0 0.0
      %3483 = vmatmul.mubr.f32.gmra.mrb[0].mxu0 %v3332
      %v3484 = vpop.f32.mrb[0].mxu0
      %v3485 = vadd.f32 0.0, %v3484
      %v3486 = vpop.f32.mrb[0].mxu0
      %3487 = vmatprep.mubr.f32.mxu0 0.0
      %3488 = vmatmul.mubr.f32.gmra.mrb[0].mxu0 %v3335
      %v3489 = vpop.f32.mrb[0].mxu0
      %v3490 = vadd.f32 0.0, %v3489
      %v3491 = vpop.f32.mrb[0].mxu0
      %3492 = vmatprep.mubr.f32.mxu0 0.0
      %3493 = vmatmul.mubr.f32.gmra.mrb[0].mxu0 %v3338
      %v3494 = vpop.f32.mrb[0].mxu0
      %v3495 = vadd.f32 0.0, %v3494
      %v3496 = vpop.f32.mrb[0].mxu0
      %3497 = vmatprep.mubr.f32.mxu0 0.0
      %3498 = vmatmul.mubr.f32.gmra.mrb[0].mxu0 %v3341
      %v3499 = vpop.f32.mrb[0].mxu0
      %v3500 = vadd.f32 0.0, %v3499
      %v3501 = vpop.f32.mrb[0].mxu0
      %3502 = vmatprep.mubr.f32.mxu0 0.0
      %3503 = vmatmul.mubr.f32.gmra.mrb[0].mxu0 %v3344
      %v3504 = vpop.f32.mrb[0].mxu0
      %v3505 = vadd.f32 0.0, %v3504
      %v3506 = vpop.f32.mrb[0].mxu0
      %3507 = vmatprep.mubr.f32.mxu0 0.0
      %3508 = vmatmul.mubr.f32.gmra.mrb[0].mxu0 %v3347
      %v3509 = vpop.f32.mrb[0].mxu0
      %v3510 = vadd.f32 0.0, %v3509
      %v3511 = vpop.f32.mrb[0].mxu0
      %3512 = vmatprep.mubr.f32.mxu0 0.0
      %3513 = vmatmul.mubr.f32.gmra.mrb[0].mxu0 %v3350
      %v3514 = vpop.f32.mrb[0].mxu0
      %v3515 = vadd.f32 0.0, %v3514
      %v3516 = vpop.f32.mrb[0].mxu0
      %3517 = vmatprep.mubr.f32.mxu0 0.0
      %3518 = vmatmul.mubr.f32.gmra.mrb[0].mxu0 %v3353
      %v3519 = vpop.f32.mrb[0].mxu0
      %v3520 = vadd.f32 0.0, %v3519
      %v3521 = vpop.f32.mrb[0].mxu0
      %3522 = vmatprep.mubr.f32.mxu0 0.0
      %3523 = vmatmul.mubr.f32.gmra.mrb[0].mxu0 %v3356
      %v3524 = vpop.f32.mrb[0].mxu0
      %v3525 = vadd.f32 0.0, %v3524
      %v3526 = vpop.f32.mrb[0].mxu0
      %3527 = vmatprep.mubr.f32.mxu0 0.0
      %3528 = vmatmul.mubr.f32.gmra.mrb[0].mxu0 %v3359
      %v3529 = vpop.f32.mrb[0].mxu0
      %v3530 = vadd.f32 0.0, %v3529
      %v3531 = vpop.f32.mrb[0].mxu0
      %3532 = vmatprep.mubr.f32.mxu0 0.0
      %3533 = vmatmul.mubr.f32.gmra.mrb[0].mxu0 %v3362
      %v3534 = vpop.f32.mrb[0].mxu0
      %v3535 = vadd.f32 0.0, %v3534
      %v3536 = vpop.f32.mrb[0].mxu0
      %3537 = vmatprep.mubr.f32.mxu0 0.0
      %3538 = vmatmul.mubr.f32.gmra.mrb[0].mxu0 %v3365
      %v3539 = vpop.f32.mrb[0].mxu0
      %v3540 = vadd.f32 0.0, %v3539
      %v3541 = vpop.f32.mrb[0].mxu0
      %3542 = vmatprep.mubr.f32.mxu0 0.0
      %3543 = vmatmul.mubr.f32.gmra.mrb[0].mxu0 %v3368
      %v3544 = vpop.f32.mrb[0].mxu0
      %v3545 = vadd.f32 0.0, %v3544
      %v3546 = vpop.f32.mrb[0].mxu0
      %3547 = vmatprep.mubr.f32.mxu0 0.0
      %3548 = vmatmul.mubr.f32.gmra.mrb[0].mxu0 %v3371
      %v3549 = vpop.f32.mrb[0].mxu0
      %v3550 = vadd.f32 0.0, %v3549
      %v3551 = vpop.f32.mrb[0].mxu0
      %3552 = vmatprep.mubr.f32.mxu0 0.0
      %3553 = vmatmul.mubr.f32.gmra.mrb[0].mxu0 %v3374
      %v3554 = vpop.f32.mrb[0].mxu0
      %v3555 = vadd.f32 0.0, %v3554
      %v3556 = vpop.f32.mrb[0].mxu0
      %3557 = vmatprep.mubr.f32.mxu0 0.0
      %3558 = vmatmul.mubr.f32.gmra.mrb[0].mxu0 %v3377
      %v3559 = vpop.f32.mrb[0].mxu0
      %v3560 = vadd.f32 0.0, %v3559
      %v3561 = vpop.f32.mrb[0].mxu0
      %3562 = vmatprep.mubr.f32.mxu0 0.0
      %3563 = vmatmul.mubr.f32.gmra.mrb[0].mxu0 %v3380
      %v3564 = vpop.f32.mrb[0].mxu0
      %v3565 = vadd.f32 0.0, %v3564
      %v3566 = vpop.f32.mrb[0].mxu0
      %3567 = vmatprep.mubr.f32.mxu0 0.0
      %3568 = vmatmul.mubr.f32.gmra.mrb[0].mxu0 %v3383
      %v3569 = vpop.f32.mrb[0].mxu0
      %v3570 = vadd.f32 0.0, %v3569
      %v3571 = vpop.f32.mrb[0].mxu0
      %3572 = vmatprep.mubr.f32.mxu0 0.0
      %3573 = vmatmul.mubr.f32.gmra.mrb[0].mxu0 %v3386
      %v3574 = vpop.f32.mrb[0].mxu0
      %v3575 = vadd.f32 0.0, %v3574
      %v3576 = vpop.f32.mrb[0].mxu0
      %3577 = vdwg.mxu0
      %v3578 = vld [vmem:[#allocation3] sm:$0xff]
      %v3579 = vld [vmem:[#allocation3 + $0x8] sm:$0xff]
      %v3580 = vld [vmem:[#allocation3 + $0x10] sm:$0xff]
      %v3581 = vld [vmem:[#allocation3 + $0x18] sm:$0xff]
      %v3582 = vld [vmem:[#allocation3 + $0x20] sm:$0xff]
      %v3583 = vld [vmem:[#allocation3 + $0x28] sm:$0xff]
      %v3584 = vld [vmem:[#allocation3 + $0x30] sm:$0xff]
      %v3585 = vld [vmem:[#allocation3 + $0x38] sm:$0xff]
      %v3586 = vld [vmem:[#allocation3 + $0x40] sm:$0xff]
      %v3587 = vld [vmem:[#allocation3 + $0x48] sm:$0xff]
      %v3588 = vld [vmem:[#allocation3 + $0x50] sm:$0xff]
      %v3589 = vld [vmem:[#allocation3 + $0x58] sm:$0xff]
      %v3590 = vld [vmem:[#allocation3 + $0x60] sm:$0xff]
      %v3591 = vld [vmem:[#allocation3 + $0x68] sm:$0xff]
      %v3592 = vld [vmem:[#allocation3 + $0x70] sm:$0xff]
      %v3593 = vld [vmem:[#allocation3 + $0x78] sm:$0xff]
      %v3594 = vld [vmem:[#allocation3 + $0x80] sm:$0xff]
      %v3595 = vld [vmem:[#allocation3 + $0x88] sm:$0xff]
      %v3596 = vld [vmem:[#allocation3 + $0x90] sm:$0xff]
      %v3597 = vld [vmem:[#allocation3 + $0x98] sm:$0xff]
      %v3598 = vld [vmem:[#allocation3 + $0xa0] sm:$0xff]
      %v3599 = vld [vmem:[#allocation3 + $0xa8] sm:$0xff]
      %v3600 = vld [vmem:[#allocation3 + $0xb0] sm:$0xff]
      %v3601 = vld [vmem:[#allocation3 + $0xb8] sm:$0xff]
      %v3602 = vld [vmem:[#allocation3 + $0xc0] sm:$0x7]
      %v3603 = vadd.f32 %v3578, %v3455
      %v3604 = vadd.f32 %v3579, %v3460
      %v3605 = vadd.f32 %v3580, %v3465
      %v3606 = vadd.f32 %v3581, %v3470
      %v3607 = vadd.f32 %v3582, %v3475
      %v3608 = vadd.f32 %v3583, %v3480
      %v3609 = vadd.f32 %v3584, %v3485
      %v3610 = vadd.f32 %v3585, %v3490
      %v3611 = vadd.f32 %v3586, %v3495
      %v3612 = vadd.f32 %v3587, %v3500
      %v3613 = vadd.f32 %v3588, %v3505
      %v3614 = vadd.f32 %v3589, %v3510
      %v3615 = vadd.f32 %v3590, %v3515
      %v3616 = vadd.f32 %v3591, %v3520
      %v3617 = vadd.f32 %v3592, %v3525
      %v3618 = vadd.f32 %v3593, %v3530
      %v3619 = vadd.f32 %v3594, %v3535
      %v3620 = vadd.f32 %v3595, %v3540
      %v3621 = vadd.f32 %v3596, %v3545
      %v3622 = vadd.f32 %v3597, %v3550
      %v3623 = vadd.f32 %v3598, %v3555
      %v3624 = vadd.f32 %v3599, %v3560
      %v3625 = vadd.f32 %v3600, %v3565
      %v3626 = vadd.f32 %v3601, %v3570
      %v3627 = vadd.f32 %v3602, %v3575
      %3628 = vst.msk [vmem:[#allocation3] sm:$0xff] %vm1801, %v3603
      %3629 = vst.msk [vmem:[#allocation3 + $0x8] sm:$0xff] %vm1801, %v3604
      %3630 = vst.msk [vmem:[#allocation3 + $0x10] sm:$0xff] %vm1801, %v3605
      %3631 = vst.msk [vmem:[#allocation3 + $0x18] sm:$0xff] %vm1801, %v3606
      %3632 = vst.msk [vmem:[#allocation3 + $0x20] sm:$0xff] %vm1801, %v3607
      %3633 = vst.msk [vmem:[#allocation3 + $0x28] sm:$0xff] %vm1801, %v3608
      %3634 = vst.msk [vmem:[#allocation3 + $0x30] sm:$0xff] %vm1801, %v3609
      %3635 = vst.msk [vmem:[#allocation3 + $0x38] sm:$0xff] %vm1801, %v3610
      %3636 = vst.msk [vmem:[#allocation3 + $0x40] sm:$0xff] %vm1801, %v3611
      %3637 = vst.msk [vmem:[#allocation3 + $0x48] sm:$0xff] %vm1801, %v3612
      %3638 = vst.msk [vmem:[#allocation3 + $0x50] sm:$0xff] %vm1801, %v3613
      %3639 = vst.msk [vmem:[#allocation3 + $0x58] sm:$0xff] %vm1801, %v3614
      %3640 = vst.msk [vmem:[#allocation3 + $0x60] sm:$0xff] %vm1801, %v3615
      %3641 = vst.msk [vmem:[#allocation3 + $0x68] sm:$0xff] %vm1801, %v3616
      %3642 = vst.msk [vmem:[#allocation3 + $0x70] sm:$0xff] %vm1801, %v3617
      %3643 = vst.msk [vmem:[#allocation3 + $0x78] sm:$0xff] %vm1801, %v3618
      %3644 = vst.msk [vmem:[#allocation3 + $0x80] sm:$0xff] %vm1801, %v3619
      %3645 = vst.msk [vmem:[#allocation3 + $0x88] sm:$0xff] %vm1801, %v3620
      %3646 = vst.msk [vmem:[#allocation3 + $0x90] sm:$0xff] %vm1801, %v3621
      %3647 = vst.msk [vmem:[#allocation3 + $0x98] sm:$0xff] %vm1801, %v3622
      %3648 = vst.msk [vmem:[#allocation3 + $0xa0] sm:$0xff] %vm1801, %v3623
      %3649 = vst.msk [vmem:[#allocation3 + $0xa8] sm:$0xff] %vm1801, %v3624
      %3650 = vst.msk [vmem:[#allocation3 + $0xb0] sm:$0xff] %vm1801, %v3625
      %3651 = vst.msk [vmem:[#allocation3 + $0xb8] sm:$0xff] %vm1801, %v3626
      %3652 = vst.msk [vmem:[#allocation3 + $0xc0] sm:$0x7] %vm2155, %v3627
      %v3653 = vld [vmem:[#allocation2 + $0x11] sm:$0xff]
      %v3654 = vld [vmem:[#allocation2 + $0x19] sm:$0xff]
      %v3655 = vld [vmem:[#allocation2 + $0x21] sm:$0xff]
      %v3656 = vld [vmem:[#allocation2 + $0x29] sm:$0xff]
      %v3657 = vld [vmem:[#allocation2 + $0x31] sm:$0xff]
      %v3658 = vld [vmem:[#allocation2 + $0x39] sm:$0xff]
      %v3659 = vld [vmem:[#allocation2 + $0x41] sm:$0xff]
      %v3660 = vld [vmem:[#allocation2 + $0x49] sm:$0xff]
      %v3661 = vld [vmem:[#allocation2 + $0x51] sm:$0xff]
      %v3662 = vld [vmem:[#allocation2 + $0x59] sm:$0xff]
      %v3663 = vld [vmem:[#allocation2 + $0x61] sm:$0xff]
      %v3664 = vld [vmem:[#allocation2 + $0x69] sm:$0xff]
      %v3665 = vld [vmem:[#allocation2 + $0x71] sm:$0xff]
      %v3666 = vld [vmem:[#allocation2 + $0x79] sm:$0xff]
      %v3667 = vld [vmem:[#allocation2 + $0x81] sm:$0xff]
      %v3668 = vld [vmem:[#allocation2 + $0x89] sm:$0xff]
      %v3669 = vld [vmem:[#allocation2 + $0x91] sm:$0xff]
      %v3670 = vld [vmem:[#allocation2 + $0x99] sm:$0xff]
      %v3671 = vld [vmem:[#allocation2 + $0xa1] sm:$0xff]
      %v3672 = vld [vmem:[#allocation2 + $0xa9] sm:$0xff]
      %v3673 = vld [vmem:[#allocation2 + $0xb1] sm:$0xff]
      %v3674 = vld [vmem:[#allocation2 + $0xb9] sm:$0xff]
      %v3675 = vld [vmem:[#allocation2 + $0xc1] sm:$0xff]
      %v3676 = vld [vmem:[#allocation2 + $0xc9] sm:$0xff]
      %v3677 = vld [vmem:[#allocation2 + $0xd1] sm:$0x7]
      %s3678 = scalar_lea.vmem %s3, 320
      %v3679 = vld [vmem:[%s3678] sm:$0xff]
      %v3680 = vld [vmem:[%s3678 + $0x8] sm:$0xff]
      %v3681 = vld [vmem:[%s3678 + $0x10] sm:$0xff]
      %v3682 = vld [vmem:[%s3678 + $0x18] sm:$0xff]
      %v3683 = vld [vmem:[%s3678 + $0x20] sm:$0xff]
      %v3684 = vld [vmem:[%s3678 + $0x28] sm:$0xff]
      %v3685 = vld [vmem:[%s3678 + $0x30] sm:$0xff]
      %v3686 = vld [vmem:[%s3678 + $0x38] sm:$0xff]
      %v3688 = vsel %vm1801, %v3653, 0
      %v3691 = vsel %vm1801, %v3654, 0
      %v3694 = vsel %vm1801, %v3655, 0
      %v3697 = vsel %vm1801, %v3656, 0
      %v3700 = vsel %vm1801, %v3657, 0
      %v3703 = vsel %vm1801, %v3658, 0
      %v3706 = vsel %vm1801, %v3659, 0
      %v3709 = vsel %vm1801, %v3660, 0
      %v3712 = vsel %vm1801, %v3661, 0
      %v3715 = vsel %vm1801, %v3662, 0
      %v3718 = vsel %vm1801, %v3663, 0
      %v3721 = vsel %vm1801, %v3664, 0
      %v3724 = vsel %vm1801, %v3665, 0
      %v3727 = vsel %vm1801, %v3666, 0
      %v3730 = vsel %vm1801, %v3667, 0
      %v3733 = vsel %vm1801, %v3668, 0
      %v3736 = vsel %vm1801, %v3669, 0
      %v3739 = vsel %vm1801, %v3670, 0
      %v3742 = vsel %vm1801, %v3671, 0
      %v3745 = vsel %vm1801, %v3672, 0
      %v3748 = vsel %vm1801, %v3673, 0
      %v3751 = vsel %vm1801, %v3674, 0
      %v3754 = vsel %vm1801, %v3675, 0
      %v3757 = vsel %vm1801, %v3676, 0
      %v3760 = vsel %vm1801, %v3677, 0
      %3762 = vmatprep.subr.mxu0 0.0
      %3763 = vmatpush1.msra.mxu0 %v3679
      %3764 = vmatprep.subr.mxu0 0.0
      %3765 = vmatpush1.msra.mxu0 %v3680
      %3766 = vmatprep.subr.mxu0 0.0
      %3767 = vmatpush1.msra.mxu0 %v3681
      %3768 = vmatprep.subr.mxu0 0.0
      %3769 = vmatpush1.msra.mxu0 %v3682
      %3770 = vmatprep.subr.mxu0 0.0
      %3771 = vmatpush1.msra.mxu0 %v3683
      %3772 = vmatprep.subr.mxu0 0.0
      %3773 = vmatpush1.msra.mxu0 %v3684
      %3774 = vmatprep.subr.mxu0 0.0
      %3775 = vmatpush1.msra.mxu0 %v3685
      %3776 = vmatprep.subr.mxu0 0.0
      %3777 = vmatpush1.msra.mxu0 %v3686
      %3778 = vmatprep.subr.mxu0 0.0
      %3779 = vmatpush1.msra.mxu0 0.0
      %3780 = vmatprep.subr.mxu0 0.0
      %3781 = vmatpush1.msra.mxu0 0.0
      %3782 = vmatprep.subr.mxu0 0.0
      %3783 = vmatpush1.msra.mxu0 0.0
      %3784 = vmatprep.subr.mxu0 0.0
      %3785 = vmatpush1.msra.mxu0 0.0
      %3786 = vmatprep.subr.mxu0 0.0
      %3787 = vmatpush1.msra.mxu0 0.0
      %3788 = vmatprep.subr.mxu0 0.0
      %3789 = vmatpush1.msra.mxu0 0.0
      %3790 = vmatprep.subr.mxu0 0.0
      %3791 = vmatpush1.msra.mxu0 0.0
      %3792 = vmatprep.subr.mxu0 0.0
      %3793 = vmatpush1.msra.mxu0 0.0
      %3794 = vmatprep.subr.mxu0 0.0
      %3795 = vmatpush1.msra.mxu0 0.0
      %3796 = vmatprep.subr.mxu0 0.0
      %3797 = vmatpush1.msra.mxu0 0.0
      %3798 = vmatprep.subr.mxu0 0.0
      %3799 = vmatpush1.msra.mxu0 0.0
      %3800 = vmatprep.subr.mxu0 0.0
      %3801 = vmatpush1.msra.mxu0 0.0
      %3802 = vmatprep.subr.mxu0 0.0
      %3803 = vmatpush1.msra.mxu0 0.0
      %3804 = vmatprep.subr.mxu0 0.0
      %3805 = vmatpush1.msra.mxu0 0.0
      %3806 = vmatprep.subr.mxu0 0.0
      %3807 = vmatpush1.msra.mxu0 0.0
      %3808 = vmatprep.subr.mxu0 0.0
      %3809 = vmatpush1.msra.mxu0 0.0
      %3810 = vmatprep.subr.mxu0 0.0
      %3811 = vmatpush1.msra.mxu0 0.0
      %3812 = vmatprep.subr.mxu0 0.0
      %3813 = vmatpush1.msra.mxu0 0.0
      %3814 = vmatprep.subr.mxu0 0.0
      %3815 = vmatpush1.msra.mxu0 0.0
      %3816 = vmatprep.subr.mxu0 0.0
      %3817 = vmatpush1.msra.mxu0 0.0
      %3818 = vmatprep.subr.mxu0 0.0
      %3819 = vmatpush1.msra.mxu0 0.0
      %3820 = vmatprep.subr.mxu0 0.0
      %3821 = vmatpush1.msra.mxu0 0.0
      %3822 = vmatprep.subr.mxu0 0.0
      %3823 = vmatpush1.msra.mxu0 0.0
      %3824 = vmatprep.subr.mxu0 0.0
      %3825 = vmatpush1.msra.mxu0 0.0
      %3826 = vmatprep.mubr.f32.mxu0 0.0
      %3827 = vmatmul.mubr.f32.gmra.mrb[0].mxu0 %v3688
      %v3828 = vpop.f32.mrb[0].mxu0
      %v3829 = vadd.f32 0.0, %v3828
      %v3830 = vpop.f32.mrb[0].mxu0
      %3831 = vmatprep.mubr.f32.mxu0 0.0
      %3832 = vmatmul.mubr.f32.gmra.mrb[0].mxu0 %v3691
      %v3833 = vpop.f32.mrb[0].mxu0
      %v3834 = vadd.f32 0.0, %v3833
      %v3835 = vpop.f32.mrb[0].mxu0
      %3836 = vmatprep.mubr.f32.mxu0 0.0
      %3837 = vmatmul.mubr.f32.gmra.mrb[0].mxu0 %v3694
      %v3838 = vpop.f32.mrb[0].mxu0
      %v3839 = vadd.f32 0.0, %v3838
      %v3840 = vpop.f32.mrb[0].mxu0
      %3841 = vmatprep.mubr.f32.mxu0 0.0
      %3842 = vmatmul.mubr.f32.gmra.mrb[0].mxu0 %v3697
      %v3843 = vpop.f32.mrb[0].mxu0
      %v3844 = vadd.f32 0.0, %v3843
      %v3845 = vpop.f32.mrb[0].mxu0
      %3846 = vmatprep.mubr.f32.mxu0 0.0
      %3847 = vmatmul.mubr.f32.gmra.mrb[0].mxu0 %v3700
      %v3848 = vpop.f32.mrb[0].mxu0
      %v3849 = vadd.f32 0.0, %v3848
      %v3850 = vpop.f32.mrb[0].mxu0
      %3851 = vmatprep.mubr.f32.mxu0 0.0
      %3852 = vmatmul.mubr.f32.gmra.mrb[0].mxu0 %v3703
      %v3853 = vpop.f32.mrb[0].mxu0
      %v3854 = vadd.f32 0.0, %v3853
      %v3855 = vpop.f32.mrb[0].mxu0
      %3856 = vmatprep.mubr.f32.mxu0 0.0
      %3857 = vmatmul.mubr.f32.gmra.mrb[0].mxu0 %v3706
      %v3858 = vpop.f32.mrb[0].mxu0
      %v3859 = vadd.f32 0.0, %v3858
      %v3860 = vpop.f32.mrb[0].mxu0
      %3861 = vmatprep.mubr.f32.mxu0 0.0
      %3862 = vmatmul.mubr.f32.gmra.mrb[0].mxu0 %v3709
      %v3863 = vpop.f32.mrb[0].mxu0
      %v3864 = vadd.f32 0.0, %v3863
      %v3865 = vpop.f32.mrb[0].mxu0
      %3866 = vmatprep.mubr.f32.mxu0 0.0
      %3867 = vmatmul.mubr.f32.gmra.mrb[0].mxu0 %v3712
      %v3868 = vpop.f32.mrb[0].mxu0
      %v3869 = vadd.f32 0.0, %v3868
      %v3870 = vpop.f32.mrb[0].mxu0
      %3871 = vmatprep.mubr.f32.mxu0 0.0
      %3872 = vmatmul.mubr.f32.gmra.mrb[0].mxu0 %v3715
      %v3873 = vpop.f32.mrb[0].mxu0
      %v3874 = vadd.f32 0.0, %v3873
      %v3875 = vpop.f32.mrb[0].mxu0
      %3876 = vmatprep.mubr.f32.mxu0 0.0
      %3877 = vmatmul.mubr.f32.gmra.mrb[0].mxu0 %v3718
      %v3878 = vpop.f32.mrb[0].mxu0
      %v3879 = vadd.f32 0.0, %v3878
      %v3880 = vpop.f32.mrb[0].mxu0
      %3881 = vmatprep.mubr.f32.mxu0 0.0
      %3882 = vmatmul.mubr.f32.gmra.mrb[0].mxu0 %v3721
      %v3883 = vpop.f32.mrb[0].mxu0
      %v3884 = vadd.f32 0.0, %v3883
      %v3885 = vpop.f32.mrb[0].mxu0
      %3886 = vmatprep.mubr.f32.mxu0 0.0
      %3887 = vmatmul.mubr.f32.gmra.mrb[0].mxu0 %v3724
      %v3888 = vpop.f32.mrb[0].mxu0
      %v3889 = vadd.f32 0.0, %v3888
      %v3890 = vpop.f32.mrb[0].mxu0
      %3891 = vmatprep.mubr.f32.mxu0 0.0
      %3892 = vmatmul.mubr.f32.gmra.mrb[0].mxu0 %v3727
      %v3893 = vpop.f32.mrb[0].mxu0
      %v3894 = vadd.f32 0.0, %v3893
      %v3895 = vpop.f32.mrb[0].mxu0
      %3896 = vmatprep.mubr.f32.mxu0 0.0
      %3897 = vmatmul.mubr.f32.gmra.mrb[0].mxu0 %v3730
      %v3898 = vpop.f32.mrb[0].mxu0
      %v3899 = vadd.f32 0.0, %v3898
      %v3900 = vpop.f32.mrb[0].mxu0
      %3901 = vmatprep.mubr.f32.mxu0 0.0
      %3902 = vmatmul.mubr.f32.gmra.mrb[0].mxu0 %v3733
      %v3903 = vpop.f32.mrb[0].mxu0
      %v3904 = vadd.f32 0.0, %v3903
      %v3905 = vpop.f32.mrb[0].mxu0
      %3906 = vmatprep.mubr.f32.mxu0 0.0
      %3907 = vmatmul.mubr.f32.gmra.mrb[0].mxu0 %v3736
      %v3908 = vpop.f32.mrb[0].mxu0
      %v3909 = vadd.f32 0.0, %v3908
      %v3910 = vpop.f32.mrb[0].mxu0
      %3911 = vmatprep.mubr.f32.mxu0 0.0
      %3912 = vmatmul.mubr.f32.gmra.mrb[0].mxu0 %v3739
      %v3913 = vpop.f32.mrb[0].mxu0
      %v3914 = vadd.f32 0.0, %v3913
      %v3915 = vpop.f32.mrb[0].mxu0
      %3916 = vmatprep.mubr.f32.mxu0 0.0
      %3917 = vmatmul.mubr.f32.gmra.mrb[0].mxu0 %v3742
      %v3918 = vpop.f32.mrb[0].mxu0
      %v3919 = vadd.f32 0.0, %v3918
      %v3920 = vpop.f32.mrb[0].mxu0
      %3921 = vmatprep.mubr.f32.mxu0 0.0
      %3922 = vmatmul.mubr.f32.gmra.mrb[0].mxu0 %v3745
      %v3923 = vpop.f32.mrb[0].mxu0
      %v3924 = vadd.f32 0.0, %v3923
      %v3925 = vpop.f32.mrb[0].mxu0
      %3926 = vmatprep.mubr.f32.mxu0 0.0
      %3927 = vmatmul.mubr.f32.gmra.mrb[0].mxu0 %v3748
      %v3928 = vpop.f32.mrb[0].mxu0
      %v3929 = vadd.f32 0.0, %v3928
      %v3930 = vpop.f32.mrb[0].mxu0
      %3931 = vmatprep.mubr.f32.mxu0 0.0
      %3932 = vmatmul.mubr.f32.gmra.mrb[0].mxu0 %v3751
      %v3933 = vpop.f32.mrb[0].mxu0
      %v3934 = vadd.f32 0.0, %v3933
      %v3935 = vpop.f32.mrb[0].mxu0
      %3936 = vmatprep.mubr.f32.mxu0 0.0
      %3937 = vmatmul.mubr.f32.gmra.mrb[0].mxu0 %v3754
      %v3938 = vpop.f32.mrb[0].mxu0
      %v3939 = vadd.f32 0.0, %v3938
      %v3940 = vpop.f32.mrb[0].mxu0
      %3941 = vmatprep.mubr.f32.mxu0 0.0
      %3942 = vmatmul.mubr.f32.gmra.mrb[0].mxu0 %v3757
      %v3943 = vpop.f32.mrb[0].mxu0
      %v3944 = vadd.f32 0.0, %v3943
      %v3945 = vpop.f32.mrb[0].mxu0
      %3946 = vmatprep.mubr.f32.mxu0 0.0
      %3947 = vmatmul.mubr.f32.gmra.mrb[0].mxu0 %v3760
      %v3948 = vpop.f32.mrb[0].mxu0
      %v3949 = vadd.f32 0.0, %v3948
      %v3950 = vpop.f32.mrb[0].mxu0
      %3951 = vdwg.mxu0
      %v3952 = vld [vmem:[#allocation3] sm:$0xff]
      %v3953 = vld [vmem:[#allocation3 + $0x8] sm:$0xff]
      %v3954 = vld [vmem:[#allocation3 + $0x10] sm:$0xff]
      %v3955 = vld [vmem:[#allocation3 + $0x18] sm:$0xff]
      %v3956 = vld [vmem:[#allocation3 + $0x20] sm:$0xff]
      %v3957 = vld [vmem:[#allocation3 + $0x28] sm:$0xff]
      %v3958 = vld [vmem:[#allocation3 + $0x30] sm:$0xff]
      %v3959 = vld [vmem:[#allocation3 + $0x38] sm:$0xff]
      %v3960 = vld [vmem:[#allocation3 + $0x40] sm:$0xff]
      %v3961 = vld [vmem:[#allocation3 + $0x48] sm:$0xff]
      %v3962 = vld [vmem:[#allocation3 + $0x50] sm:$0xff]
      %v3963 = vld [vmem:[#allocation3 + $0x58] sm:$0xff]
      %v3964 = vld [vmem:[#allocation3 + $0x60] sm:$0xff]
      %v3965 = vld [vmem:[#allocation3 + $0x68] sm:$0xff]
      %v3966 = vld [vmem:[#allocation3 + $0x70] sm:$0xff]
      %v3967 = vld [vmem:[#allocation3 + $0x78] sm:$0xff]
      %v3968 = vld [vmem:[#allocation3 + $0x80] sm:$0xff]
      %v3969 = vld [vmem:[#allocation3 + $0x88] sm:$0xff]
      %v3970 = vld [vmem:[#allocation3 + $0x90] sm:$0xff]
      %v3971 = vld [vmem:[#allocation3 + $0x98] sm:$0xff]
      %v3972 = vld [vmem:[#allocation3 + $0xa0] sm:$0xff]
      %v3973 = vld [vmem:[#allocation3 + $0xa8] sm:$0xff]
      %v3974 = vld [vmem:[#allocation3 + $0xb0] sm:$0xff]
      %v3975 = vld [vmem:[#allocation3 + $0xb8] sm:$0xff]
      %v3976 = vld [vmem:[#allocation3 + $0xc0] sm:$0x7]
      %v3977 = vadd.f32 %v3952, %v3829
      %v3978 = vadd.f32 %v3953, %v3834
      %v3979 = vadd.f32 %v3954, %v3839
      %v3980 = vadd.f32 %v3955, %v3844
      %v3981 = vadd.f32 %v3956, %v3849
      %v3982 = vadd.f32 %v3957, %v3854
      %v3983 = vadd.f32 %v3958, %v3859
      %v3984 = vadd.f32 %v3959, %v3864
      %v3985 = vadd.f32 %v3960, %v3869
      %v3986 = vadd.f32 %v3961, %v3874
      %v3987 = vadd.f32 %v3962, %v3879
      %v3988 = vadd.f32 %v3963, %v3884
      %v3989 = vadd.f32 %v3964, %v3889
      %v3990 = vadd.f32 %v3965, %v3894
      %v3991 = vadd.f32 %v3966, %v3899
      %v3992 = vadd.f32 %v3967, %v3904
      %v3993 = vadd.f32 %v3968, %v3909
      %v3994 = vadd.f32 %v3969, %v3914
      %v3995 = vadd.f32 %v3970, %v3919
      %v3996 = vadd.f32 %v3971, %v3924
      %v3997 = vadd.f32 %v3972, %v3929
      %v3998 = vadd.f32 %v3973, %v3934
      %v3999 = vadd.f32 %v3974, %v3939
      %v4000 = vadd.f32 %v3975, %v3944
      %v4001 = vadd.f32 %v3976, %v3949
      %4002 = vst.msk [vmem:[#allocation3] sm:$0xff] %vm1801, %v3977
      %4003 = vst.msk [vmem:[#allocation3 + $0x8] sm:$0xff] %vm1801, %v3978
      %4004 = vst.msk [vmem:[#allocation3 + $0x10] sm:$0xff] %vm1801, %v3979
      %4005 = vst.msk [vmem:[#allocation3 + $0x18] sm:$0xff] %vm1801, %v3980
      %4006 = vst.msk [vmem:[#allocation3 + $0x20] sm:$0xff] %vm1801, %v3981
      %4007 = vst.msk [vmem:[#allocation3 + $0x28] sm:$0xff] %vm1801, %v3982
      %4008 = vst.msk [vmem:[#allocation3 + $0x30] sm:$0xff] %vm1801, %v3983
      %4009 = vst.msk [vmem:[#allocation3 + $0x38] sm:$0xff] %vm1801, %v3984
      %4010 = vst.msk [vmem:[#allocation3 + $0x40] sm:$0xff] %vm1801, %v3985
      %4011 = vst.msk [vmem:[#allocation3 + $0x48] sm:$0xff] %vm1801, %v3986
      %4012 = vst.msk [vmem:[#allocation3 + $0x50] sm:$0xff] %vm1801, %v3987
      %4013 = vst.msk [vmem:[#allocation3 + $0x58] sm:$0xff] %vm1801, %v3988
      %4014 = vst.msk [vmem:[#allocation3 + $0x60] sm:$0xff] %vm1801, %v3989
      %4015 = vst.msk [vmem:[#allocation3 + $0x68] sm:$0xff] %vm1801, %v3990
      %4016 = vst.msk [vmem:[#allocation3 + $0x70] sm:$0xff] %vm1801, %v3991
      %4017 = vst.msk [vmem:[#allocation3 + $0x78] sm:$0xff] %vm1801, %v3992
      %4018 = vst.msk [vmem:[#allocation3 + $0x80] sm:$0xff] %vm1801, %v3993
      %4019 = vst.msk [vmem:[#allocation3 + $0x88] sm:$0xff] %vm1801, %v3994
      %4020 = vst.msk [vmem:[#allocation3 + $0x90] sm:$0xff] %vm1801, %v3995
      %4021 = vst.msk [vmem:[#allocation3 + $0x98] sm:$0xff] %vm1801, %v3996
      %4022 = vst.msk [vmem:[#allocation3 + $0xa0] sm:$0xff] %vm1801, %v3997
      %4023 = vst.msk [vmem:[#allocation3 + $0xa8] sm:$0xff] %vm1801, %v3998
      %4024 = vst.msk [vmem:[#allocation3 + $0xb0] sm:$0xff] %vm1801, %v3999
      %4025 = vst.msk [vmem:[#allocation3 + $0xb8] sm:$0xff] %vm1801, %v4000
      %4026 = vst.msk [vmem:[#allocation3 + $0xc0] sm:$0x7] %vm2155, %v4001
      %v4027 = vld [vmem:[#allocation2 + $0x1e] sm:$0xff]
      %v4028 = vld [vmem:[#allocation2 + $0x26] sm:$0xff]
      %v4029 = vld [vmem:[#allocation2 + $0x2e] sm:$0xff]
      %v4030 = vld [vmem:[#allocation2 + $0x36] sm:$0xff]
      %v4031 = vld [vmem:[#allocation2 + $0x3e] sm:$0xff]
      %v4032 = vld [vmem:[#allocation2 + $0x46] sm:$0xff]
      %v4033 = vld [vmem:[#allocation2 + $0x4e] sm:$0xff]
      %v4034 = vld [vmem:[#allocation2 + $0x56] sm:$0xff]
      %v4035 = vld [vmem:[#allocation2 + $0x5e] sm:$0xff]
      %v4036 = vld [vmem:[#allocation2 + $0x66] sm:$0xff]
      %v4037 = vld [vmem:[#allocation2 + $0x6e] sm:$0xff]
      %v4038 = vld [vmem:[#allocation2 + $0x76] sm:$0xff]
      %v4039 = vld [vmem:[#allocation2 + $0x7e] sm:$0xff]
      %v4040 = vld [vmem:[#allocation2 + $0x86] sm:$0xff]
      %v4041 = vld [vmem:[#allocation2 + $0x8e] sm:$0xff]
      %v4042 = vld [vmem:[#allocation2 + $0x96] sm:$0xff]
      %v4043 = vld [vmem:[#allocation2 + $0x9e] sm:$0xff]
      %v4044 = vld [vmem:[#allocation2 + $0xa6] sm:$0xff]
      %v4045 = vld [vmem:[#allocation2 + $0xae] sm:$0xff]
      %v4046 = vld [vmem:[#allocation2 + $0xb6] sm:$0xff]
      %v4047 = vld [vmem:[#allocation2 + $0xbe] sm:$0xff]
      %v4048 = vld [vmem:[#allocation2 + $0xc6] sm:$0xff]
      %v4049 = vld [vmem:[#allocation2 + $0xce] sm:$0xff]
      %v4050 = vld [vmem:[#allocation2 + $0xd6] sm:$0xff]
      %v4051 = vld [vmem:[#allocation2 + $0xde] sm:$0x7]
      %s4052 = scalar_lea.vmem %s3, 384
      %v4053 = vld [vmem:[%s4052] sm:$0xff]
      %v4054 = vld [vmem:[%s4052 + $0x8] sm:$0xff]
      %v4055 = vld [vmem:[%s4052 + $0x10] sm:$0xff]
      %v4056 = vld [vmem:[%s4052 + $0x18] sm:$0xff]
      %v4057 = vld [vmem:[%s4052 + $0x20] sm:$0xff]
      %v4058 = vld [vmem:[%s4052 + $0x28] sm:$0xff]
      %v4059 = vld [vmem:[%s4052 + $0x30] sm:$0xff]
      %v4060 = vld [vmem:[%s4052 + $0x38] sm:$0xff]
      %v4062 = vsel %vm1801, %v4027, 0
      %v4065 = vsel %vm1801, %v4028, 0
      %v4068 = vsel %vm1801, %v4029, 0
      %v4071 = vsel %vm1801, %v4030, 0
      %v4074 = vsel %vm1801, %v4031, 0
      %v4077 = vsel %vm1801, %v4032, 0
      %v4080 = vsel %vm1801, %v4033, 0
      %v4083 = vsel %vm1801, %v4034, 0
      %v4086 = vsel %vm1801, %v4035, 0
      %v4089 = vsel %vm1801, %v4036, 0
      %v4092 = vsel %vm1801, %v4037, 0
      %v4095 = vsel %vm1801, %v4038, 0
      %v4098 = vsel %vm1801, %v4039, 0
      %v4101 = vsel %vm1801, %v4040, 0
      %v4104 = vsel %vm1801, %v4041, 0
      %v4107 = vsel %vm1801, %v4042, 0
      %v4110 = vsel %vm1801, %v4043, 0
      %v4113 = vsel %vm1801, %v4044, 0
      %v4116 = vsel %vm1801, %v4045, 0
      %v4119 = vsel %vm1801, %v4046, 0
      %v4122 = vsel %vm1801, %v4047, 0
      %v4125 = vsel %vm1801, %v4048, 0
      %v4128 = vsel %vm1801, %v4049, 0
      %v4131 = vsel %vm1801, %v4050, 0
      %v4134 = vsel %vm1801, %v4051, 0
      %4136 = vmatprep.subr.mxu0 0.0
      %4137 = vmatpush1.msra.mxu0 %v4053
      %4138 = vmatprep.subr.mxu0 0.0
      %4139 = vmatpush1.msra.mxu0 %v4054
      %4140 = vmatprep.subr.mxu0 0.0
      %4141 = vmatpush1.msra.mxu0 %v4055
      %4142 = vmatprep.subr.mxu0 0.0
      %4143 = vmatpush1.msra.mxu0 %v4056
      %4144 = vmatprep.subr.mxu0 0.0
      %4145 = vmatpush1.msra.mxu0 %v4057
      %4146 = vmatprep.subr.mxu0 0.0
      %4147 = vmatpush1.msra.mxu0 %v4058
      %4148 = vmatprep.subr.mxu0 0.0
      %4149 = vmatpush1.msra.mxu0 %v4059
      %4150 = vmatprep.subr.mxu0 0.0
      %4151 = vmatpush1.msra.mxu0 %v4060
      %4152 = vmatprep.subr.mxu0 0.0
      %4153 = vmatpush1.msra.mxu0 0.0
      %4154 = vmatprep.subr.mxu0 0.0
      %4155 = vmatpush1.msra.mxu0 0.0
      %4156 = vmatprep.subr.mxu0 0.0
      %4157 = vmatpush1.msra.mxu0 0.0
      %4158 = vmatprep.subr.mxu0 0.0
      %4159 = vmatpush1.msra.mxu0 0.0
      %4160 = vmatprep.subr.mxu0 0.0
      %4161 = vmatpush1.msra.mxu0 0.0
      %4162 = vmatprep.subr.mxu0 0.0
      %4163 = vmatpush1.msra.mxu0 0.0
      %4164 = vmatprep.subr.mxu0 0.0
      %4165 = vmatpush1.msra.mxu0 0.0
      %4166 = vmatprep.subr.mxu0 0.0
      %4167 = vmatpush1.msra.mxu0 0.0
      %4168 = vmatprep.subr.mxu0 0.0
      %4169 = vmatpush1.msra.mxu0 0.0
      %4170 = vmatprep.subr.mxu0 0.0
      %4171 = vmatpush1.msra.mxu0 0.0
      %4172 = vmatprep.subr.mxu0 0.0
      %4173 = vmatpush1.msra.mxu0 0.0
      %4174 = vmatprep.subr.mxu0 0.0
      %4175 = vmatpush1.msra.mxu0 0.0
      %4176 = vmatprep.subr.mxu0 0.0
      %4177 = vmatpush1.msra.mxu0 0.0
      %4178 = vmatprep.subr.mxu0 0.0
      %4179 = vmatpush1.msra.mxu0 0.0
      %4180 = vmatprep.subr.mxu0 0.0
      %4181 = vmatpush1.msra.mxu0 0.0
      %4182 = vmatprep.subr.mxu0 0.0
      %4183 = vmatpush1.msra.mxu0 0.0
      %4184 = vmatprep.subr.mxu0 0.0
      %4185 = vmatpush1.msra.mxu0 0.0
      %4186 = vmatprep.subr.mxu0 0.0
      %4187 = vmatpush1.msra.mxu0 0.0
      %4188 = vmatprep.subr.mxu0 0.0
      %4189 = vmatpush1.msra.mxu0 0.0
      %4190 = vmatprep.subr.mxu0 0.0
      %4191 = vmatpush1.msra.mxu0 0.0
      %4192 = vmatprep.subr.mxu0 0.0
      %4193 = vmatpush1.msra.mxu0 0.0
      %4194 = vmatprep.subr.mxu0 0.0
      %4195 = vmatpush1.msra.mxu0 0.0
      %4196 = vmatprep.subr.mxu0 0.0
      %4197 = vmatpush1.msra.mxu0 0.0
      %4198 = vmatprep.subr.mxu0 0.0
      %4199 = vmatpush1.msra.mxu0 0.0
      %4200 = vmatprep.mubr.f32.mxu0 0.0
      %4201 = vmatmul.mubr.f32.gmra.mrb[0].mxu0 %v4062
      %v4202 = vpop.f32.mrb[0].mxu0
      %v4203 = vadd.f32 0.0, %v4202
      %v4204 = vpop.f32.mrb[0].mxu0
      %4205 = vmatprep.mubr.f32.mxu0 0.0
      %4206 = vmatmul.mubr.f32.gmra.mrb[0].mxu0 %v4065
      %v4207 = vpop.f32.mrb[0].mxu0
      %v4208 = vadd.f32 0.0, %v4207
      %v4209 = vpop.f32.mrb[0].mxu0
      %4210 = vmatprep.mubr.f32.mxu0 0.0
      %4211 = vmatmul.mubr.f32.gmra.mrb[0].mxu0 %v4068
      %v4212 = vpop.f32.mrb[0].mxu0
      %v4213 = vadd.f32 0.0, %v4212
      %v4214 = vpop.f32.mrb[0].mxu0
      %4215 = vmatprep.mubr.f32.mxu0 0.0
      %4216 = vmatmul.mubr.f32.gmra.mrb[0].mxu0 %v4071
      %v4217 = vpop.f32.mrb[0].mxu0
      %v4218 = vadd.f32 0.0, %v4217
      %v4219 = vpop.f32.mrb[0].mxu0
      %4220 = vmatprep.mubr.f32.mxu0 0.0
      %4221 = vmatmul.mubr.f32.gmra.mrb[0].mxu0 %v4074
      %v4222 = vpop.f32.mrb[0].mxu0
      %v4223 = vadd.f32 0.0, %v4222
      %v4224 = vpop.f32.mrb[0].mxu0
      %4225 = vmatprep.mubr.f32.mxu0 0.0
      %4226 = vmatmul.mubr.f32.gmra.mrb[0].mxu0 %v4077
      %v4227 = vpop.f32.mrb[0].mxu0
      %v4228 = vadd.f32 0.0, %v4227
      %v4229 = vpop.f32.mrb[0].mxu0
      %4230 = vmatprep.mubr.f32.mxu0 0.0
      %4231 = vmatmul.mubr.f32.gmra.mrb[0].mxu0 %v4080
      %v4232 = vpop.f32.mrb[0].mxu0
      %v4233 = vadd.f32 0.0, %v4232
      %v4234 = vpop.f32.mrb[0].mxu0
      %4235 = vmatprep.mubr.f32.mxu0 0.0
      %4236 = vmatmul.mubr.f32.gmra.mrb[0].mxu0 %v4083
      %v4237 = vpop.f32.mrb[0].mxu0
      %v4238 = vadd.f32 0.0, %v4237
      %v4239 = vpop.f32.mrb[0].mxu0
      %4240 = vmatprep.mubr.f32.mxu0 0.0
      %4241 = vmatmul.mubr.f32.gmra.mrb[0].mxu0 %v4086
      %v4242 = vpop.f32.mrb[0].mxu0
      %v4243 = vadd.f32 0.0, %v4242
      %v4244 = vpop.f32.mrb[0].mxu0
      %4245 = vmatprep.mubr.f32.mxu0 0.0
      %4246 = vmatmul.mubr.f32.gmra.mrb[0].mxu0 %v4089
      %v4247 = vpop.f32.mrb[0].mxu0
      %v4248 = vadd.f32 0.0, %v4247
      %v4249 = vpop.f32.mrb[0].mxu0
      %4250 = vmatprep.mubr.f32.mxu0 0.0
      %4251 = vmatmul.mubr.f32.gmra.mrb[0].mxu0 %v4092
      %v4252 = vpop.f32.mrb[0].mxu0
      %v4253 = vadd.f32 0.0, %v4252
      %v4254 = vpop.f32.mrb[0].mxu0
      %4255 = vmatprep.mubr.f32.mxu0 0.0
      %4256 = vmatmul.mubr.f32.gmra.mrb[0].mxu0 %v4095
      %v4257 = vpop.f32.mrb[0].mxu0
      %v4258 = vadd.f32 0.0, %v4257
      %v4259 = vpop.f32.mrb[0].mxu0
      %4260 = vmatprep.mubr.f32.mxu0 0.0
      %4261 = vmatmul.mubr.f32.gmra.mrb[0].mxu0 %v4098
      %v4262 = vpop.f32.mrb[0].mxu0
      %v4263 = vadd.f32 0.0, %v4262
      %v4264 = vpop.f32.mrb[0].mxu0
      %4265 = vmatprep.mubr.f32.mxu0 0.0
      %4266 = vmatmul.mubr.f32.gmra.mrb[0].mxu0 %v4101
      %v4267 = vpop.f32.mrb[0].mxu0
      %v4268 = vadd.f32 0.0, %v4267
      %v4269 = vpop.f32.mrb[0].mxu0
      %4270 = vmatprep.mubr.f32.mxu0 0.0
      %4271 = vmatmul.mubr.f32.gmra.mrb[0].mxu0 %v4104
      %v4272 = vpop.f32.mrb[0].mxu0
      %v4273 = vadd.f32 0.0, %v4272
      %v4274 = vpop.f32.mrb[0].mxu0
      %4275 = vmatprep.mubr.f32.mxu0 0.0
      %4276 = vmatmul.mubr.f32.gmra.mrb[0].mxu0 %v4107
      %v4277 = vpop.f32.mrb[0].mxu0
      %v4278 = vadd.f32 0.0, %v4277
      %v4279 = vpop.f32.mrb[0].mxu0
      %4280 = vmatprep.mubr.f32.mxu0 0.0
      %4281 = vmatmul.mubr.f32.gmra.mrb[0].mxu0 %v4110
      %v4282 = vpop.f32.mrb[0].mxu0
      %v4283 = vadd.f32 0.0, %v4282
      %v4284 = vpop.f32.mrb[0].mxu0
      %4285 = vmatprep.mubr.f32.mxu0 0.0
      %4286 = vmatmul.mubr.f32.gmra.mrb[0].mxu0 %v4113
      %v4287 = vpop.f32.mrb[0].mxu0
      %v4288 = vadd.f32 0.0, %v4287
      %v4289 = vpop.f32.mrb[0].mxu0
      %4290 = vmatprep.mubr.f32.mxu0 0.0
      %4291 = vmatmul.mubr.f32.gmra.mrb[0].mxu0 %v4116
      %v4292 = vpop.f32.mrb[0].mxu0
      %v4293 = vadd.f32 0.0, %v4292
      %v4294 = vpop.f32.mrb[0].mxu0
      %4295 = vmatprep.mubr.f32.mxu0 0.0
      %4296 = vmatmul.mubr.f32.gmra.mrb[0].mxu0 %v4119
      %v4297 = vpop.f32.mrb[0].mxu0
      %v4298 = vadd.f32 0.0, %v4297
      %v4299 = vpop.f32.mrb[0].mxu0
      %4300 = vmatprep.mubr.f32.mxu0 0.0
      %4301 = vmatmul.mubr.f32.gmra.mrb[0].mxu0 %v4122
      %v4302 = vpop.f32.mrb[0].mxu0
      %v4303 = vadd.f32 0.0, %v4302
      %v4304 = vpop.f32.mrb[0].mxu0
      %4305 = vmatprep.mubr.f32.mxu0 0.0
      %4306 = vmatmul.mubr.f32.gmra.mrb[0].mxu0 %v4125
      %v4307 = vpop.f32.mrb[0].mxu0
      %v4308 = vadd.f32 0.0, %v4307
      %v4309 = vpop.f32.mrb[0].mxu0
      %4310 = vmatprep.mubr.f32.mxu0 0.0
      %4311 = vmatmul.mubr.f32.gmra.mrb[0].mxu0 %v4128
      %v4312 = vpop.f32.mrb[0].mxu0
      %v4313 = vadd.f32 0.0, %v4312
      %v4314 = vpop.f32.mrb[0].mxu0
      %4315 = vmatprep.mubr.f32.mxu0 0.0
      %4316 = vmatmul.mubr.f32.gmra.mrb[0].mxu0 %v4131
      %v4317 = vpop.f32.mrb[0].mxu0
      %v4318 = vadd.f32 0.0, %v4317
      %v4319 = vpop.f32.mrb[0].mxu0
      %4320 = vmatprep.mubr.f32.mxu0 0.0
      %4321 = vmatmul.mubr.f32.gmra.mrb[0].mxu0 %v4134
      %v4322 = vpop.f32.mrb[0].mxu0
      %v4323 = vadd.f32 0.0, %v4322
      %v4324 = vpop.f32.mrb[0].mxu0
      %4325 = vdwg.mxu0
      %v4326 = vld [vmem:[#allocation3] sm:$0xff]
      %v4327 = vld [vmem:[#allocation3 + $0x8] sm:$0xff]
      %v4328 = vld [vmem:[#allocation3 + $0x10] sm:$0xff]
      %v4329 = vld [vmem:[#allocation3 + $0x18] sm:$0xff]
      %v4330 = vld [vmem:[#allocation3 + $0x20] sm:$0xff]
      %v4331 = vld [vmem:[#allocation3 + $0x28] sm:$0xff]
      %v4332 = vld [vmem:[#allocation3 + $0x30] sm:$0xff]
      %v4333 = vld [vmem:[#allocation3 + $0x38] sm:$0xff]
      %v4334 = vld [vmem:[#allocation3 + $0x40] sm:$0xff]
      %v4335 = vld [vmem:[#allocation3 + $0x48] sm:$0xff]
      %v4336 = vld [vmem:[#allocation3 + $0x50] sm:$0xff]
      %v4337 = vld [vmem:[#allocation3 + $0x58] sm:$0xff]
      %v4338 = vld [vmem:[#allocation3 + $0x60] sm:$0xff]
      %v4339 = vld [vmem:[#allocation3 + $0x68] sm:$0xff]
      %v4340 = vld [vmem:[#allocation3 + $0x70] sm:$0xff]
      %v4341 = vld [vmem:[#allocation3 + $0x78] sm:$0xff]
      %v4342 = vld [vmem:[#allocation3 + $0x80] sm:$0xff]
      %v4343 = vld [vmem:[#allocation3 + $0x88] sm:$0xff]
      %v4344 = vld [vmem:[#allocation3 + $0x90] sm:$0xff]
      %v4345 = vld [vmem:[#allocation3 + $0x98] sm:$0xff]
      %v4346 = vld [vmem:[#allocation3 + $0xa0] sm:$0xff]
      %v4347 = vld [vmem:[#allocation3 + $0xa8] sm:$0xff]
      %v4348 = vld [vmem:[#allocation3 + $0xb0] sm:$0xff]
      %v4349 = vld [vmem:[#allocation3 + $0xb8] sm:$0xff]
      %v4350 = vld [vmem:[#allocation3 + $0xc0] sm:$0x7]
      %v4351 = vadd.f32 %v4326, %v4203
      %v4352 = vadd.f32 %v4327, %v4208
      %v4353 = vadd.f32 %v4328, %v4213
      %v4354 = vadd.f32 %v4329, %v4218
      %v4355 = vadd.f32 %v4330, %v4223
      %v4356 = vadd.f32 %v4331, %v4228
      %v4357 = vadd.f32 %v4332, %v4233
      %v4358 = vadd.f32 %v4333, %v4238
      %v4359 = vadd.f32 %v4334, %v4243
      %v4360 = vadd.f32 %v4335, %v4248
      %v4361 = vadd.f32 %v4336, %v4253
      %v4362 = vadd.f32 %v4337, %v4258
      %v4363 = vadd.f32 %v4338, %v4263
      %v4364 = vadd.f32 %v4339, %v4268
      %v4365 = vadd.f32 %v4340, %v4273
      %v4366 = vadd.f32 %v4341, %v4278
      %v4367 = vadd.f32 %v4342, %v4283
      %v4368 = vadd.f32 %v4343, %v4288
      %v4369 = vadd.f32 %v4344, %v4293
      %v4370 = vadd.f32 %v4345, %v4298
      %v4371 = vadd.f32 %v4346, %v4303
      %v4372 = vadd.f32 %v4347, %v4308
      %v4373 = vadd.f32 %v4348, %v4313
      %v4374 = vadd.f32 %v4349, %v4318
      %v4375 = vadd.f32 %v4350, %v4323
      %4376 = vst.msk [vmem:[#allocation3] sm:$0xff] %vm1801, %v4351
      %4377 = vst.msk [vmem:[#allocation3 + $0x8] sm:$0xff] %vm1801, %v4352
      %4378 = vst.msk [vmem:[#allocation3 + $0x10] sm:$0xff] %vm1801, %v4353
      %4379 = vst.msk [vmem:[#allocation3 + $0x18] sm:$0xff] %vm1801, %v4354
      %4380 = vst.msk [vmem:[#allocation3 + $0x20] sm:$0xff] %vm1801, %v4355
      %4381 = vst.msk [vmem:[#allocation3 + $0x28] sm:$0xff] %vm1801, %v4356
      %4382 = vst.msk [vmem:[#allocation3 + $0x30] sm:$0xff] %vm1801, %v4357
      %4383 = vst.msk [vmem:[#allocation3 + $0x38] sm:$0xff] %vm1801, %v4358
      %4384 = vst.msk [vmem:[#allocation3 + $0x40] sm:$0xff] %vm1801, %v4359
      %4385 = vst.msk [vmem:[#allocation3 + $0x48] sm:$0xff] %vm1801, %v4360
      %4386 = vst.msk [vmem:[#allocation3 + $0x50] sm:$0xff] %vm1801, %v4361
      %4387 = vst.msk [vmem:[#allocation3 + $0x58] sm:$0xff] %vm1801, %v4362
      %4388 = vst.msk [vmem:[#allocation3 + $0x60] sm:$0xff] %vm1801, %v4363
      %4389 = vst.msk [vmem:[#allocation3 + $0x68] sm:$0xff] %vm1801, %v4364
      %4390 = vst.msk [vmem:[#allocation3 + $0x70] sm:$0xff] %vm1801, %v4365
      %4391 = vst.msk [vmem:[#allocation3 + $0x78] sm:$0xff] %vm1801, %v4366
      %4392 = vst.msk [vmem:[#allocation3 + $0x80] sm:$0xff] %vm1801, %v4367
      %4393 = vst.msk [vmem:[#allocation3 + $0x88] sm:$0xff] %vm1801, %v4368
      %4394 = vst.msk [vmem:[#allocation3 + $0x90] sm:$0xff] %vm1801, %v4369
      %4395 = vst.msk [vmem:[#allocation3 + $0x98] sm:$0xff] %vm1801, %v4370
      %4396 = vst.msk [vmem:[#allocation3 + $0xa0] sm:$0xff] %vm1801, %v4371
      %4397 = vst.msk [vmem:[#allocation3 + $0xa8] sm:$0xff] %vm1801, %v4372
      %4398 = vst.msk [vmem:[#allocation3 + $0xb0] sm:$0xff] %vm1801, %v4373
      %4399 = vst.msk [vmem:[#allocation3 + $0xb8] sm:$0xff] %vm1801, %v4374
      %4400 = vst.msk [vmem:[#allocation3 + $0xc0] sm:$0x7] %vm2155, %v4375
      %v4401 = vld [vmem:[#allocation2 + $0x1f] sm:$0xff]
      %v4402 = vld [vmem:[#allocation2 + $0x27] sm:$0xff]
      %v4403 = vld [vmem:[#allocation2 + $0x2f] sm:$0xff]
      %v4404 = vld [vmem:[#allocation2 + $0x37] sm:$0xff]
      %v4405 = vld [vmem:[#allocation2 + $0x3f] sm:$0xff]
      %v4406 = vld [vmem:[#allocation2 + $0x47] sm:$0xff]
      %v4407 = vld [vmem:[#allocation2 + $0x4f] sm:$0xff]
      %v4408 = vld [vmem:[#allocation2 + $0x57] sm:$0xff]
      %v4409 = vld [vmem:[#allocation2 + $0x5f] sm:$0xff]
      %v4410 = vld [vmem:[#allocation2 + $0x67] sm:$0xff]
      %v4411 = vld [vmem:[#allocation2 + $0x6f] sm:$0xff]
      %v4412 = vld [vmem:[#allocation2 + $0x77] sm:$0xff]
      %v4413 = vld [vmem:[#allocation2 + $0x7f] sm:$0xff]
      %v4414 = vld [vmem:[#allocation2 + $0x87] sm:$0xff]
      %v4415 = vld [vmem:[#allocation2 + $0x8f] sm:$0xff]
      %v4416 = vld [vmem:[#allocation2 + $0x97] sm:$0xff]
      %v4417 = vld [vmem:[#allocation2 + $0x9f] sm:$0xff]
      %v4418 = vld [vmem:[#allocation2 + $0xa7] sm:$0xff]
      %v4419 = vld [vmem:[#allocation2 + $0xaf] sm:$0xff]
      %v4420 = vld [vmem:[#allocation2 + $0xb7] sm:$0xff]
      %v4421 = vld [vmem:[#allocation2 + $0xbf] sm:$0xff]
      %v4422 = vld [vmem:[#allocation2 + $0xc7] sm:$0xff]
      %v4423 = vld [vmem:[#allocation2 + $0xcf] sm:$0xff]
      %v4424 = vld [vmem:[#allocation2 + $0xd7] sm:$0xff]
      %v4425 = vld [vmem:[#allocation2 + $0xdf] sm:$0x7]
      %s4426 = scalar_lea.vmem %s3, 448
      %v4427 = vld [vmem:[%s4426] sm:$0xff]
      %v4428 = vld [vmem:[%s4426 + $0x8] sm:$0xff]
      %v4429 = vld [vmem:[%s4426 + $0x10] sm:$0xff]
      %v4430 = vld [vmem:[%s4426 + $0x18] sm:$0xff]
      %v4431 = vld [vmem:[%s4426 + $0x20] sm:$0xff]
      %v4432 = vld [vmem:[%s4426 + $0x28] sm:$0xff]
      %v4433 = vld [vmem:[%s4426 + $0x30] sm:$0xff]
      %v4434 = vld [vmem:[%s4426 + $0x38] sm:$0xff]
      %v4436 = vsel %vm1801, %v4401, 0
      %v4439 = vsel %vm1801, %v4402, 0
      %v4442 = vsel %vm1801, %v4403, 0
      %v4445 = vsel %vm1801, %v4404, 0
      %v4448 = vsel %vm1801, %v4405, 0
      %v4451 = vsel %vm1801, %v4406, 0
      %v4454 = vsel %vm1801, %v4407, 0
      %v4457 = vsel %vm1801, %v4408, 0
      %v4460 = vsel %vm1801, %v4409, 0
      %v4463 = vsel %vm1801, %v4410, 0
      %v4466 = vsel %vm1801, %v4411, 0
      %v4469 = vsel %vm1801, %v4412, 0
      %v4472 = vsel %vm1801, %v4413, 0
      %v4475 = vsel %vm1801, %v4414, 0
      %v4478 = vsel %vm1801, %v4415, 0
      %v4481 = vsel %vm1801, %v4416, 0
      %v4484 = vsel %vm1801, %v4417, 0
      %v4487 = vsel %vm1801, %v4418, 0
      %v4490 = vsel %vm1801, %v4419, 0
      %v4493 = vsel %vm1801, %v4420, 0
      %v4496 = vsel %vm1801, %v4421, 0
      %v4499 = vsel %vm1801, %v4422, 0
      %v4502 = vsel %vm1801, %v4423, 0
      %v4505 = vsel %vm1801, %v4424, 0
      %v4508 = vsel %vm1801, %v4425, 0
      %4510 = vmatprep.subr.mxu0 0.0
      %4511 = vmatpush1.msra.mxu0 %v4427
      %4512 = vmatprep.subr.mxu0 0.0
      %4513 = vmatpush1.msra.mxu0 %v4428
      %4514 = vmatprep.subr.mxu0 0.0
      %4515 = vmatpush1.msra.mxu0 %v4429
      %4516 = vmatprep.subr.mxu0 0.0
      %4517 = vmatpush1.msra.mxu0 %v4430
      %4518 = vmatprep.subr.mxu0 0.0
      %4519 = vmatpush1.msra.mxu0 %v4431
      %4520 = vmatprep.subr.mxu0 0.0
      %4521 = vmatpush1.msra.mxu0 %v4432
      %4522 = vmatprep.subr.mxu0 0.0
      %4523 = vmatpush1.msra.mxu0 %v4433
      %4524 = vmatprep.subr.mxu0 0.0
      %4525 = vmatpush1.msra.mxu0 %v4434
      %4526 = vmatprep.subr.mxu0 0.0
      %4527 = vmatpush1.msra.mxu0 0.0
      %4528 = vmatprep.subr.mxu0 0.0
      %4529 = vmatpush1.msra.mxu0 0.0
      %4530 = vmatprep.subr.mxu0 0.0
      %4531 = vmatpush1.msra.mxu0 0.0
      %4532 = vmatprep.subr.mxu0 0.0
      %4533 = vmatpush1.msra.mxu0 0.0
      %4534 = vmatprep.subr.mxu0 0.0
      %4535 = vmatpush1.msra.mxu0 0.0
      %4536 = vmatprep.subr.mxu0 0.0
      %4537 = vmatpush1.msra.mxu0 0.0
      %4538 = vmatprep.subr.mxu0 0.0
      %4539 = vmatpush1.msra.mxu0 0.0
      %4540 = vmatprep.subr.mxu0 0.0
      %4541 = vmatpush1.msra.mxu0 0.0
      %4542 = vmatprep.subr.mxu0 0.0
      %4543 = vmatpush1.msra.mxu0 0.0
      %4544 = vmatprep.subr.mxu0 0.0
      %4545 = vmatpush1.msra.mxu0 0.0
      %4546 = vmatprep.subr.mxu0 0.0
      %4547 = vmatpush1.msra.mxu0 0.0
      %4548 = vmatprep.subr.mxu0 0.0
      %4549 = vmatpush1.msra.mxu0 0.0
      %4550 = vmatprep.subr.mxu0 0.0
      %4551 = vmatpush1.msra.mxu0 0.0
      %4552 = vmatprep.subr.mxu0 0.0
      %4553 = vmatpush1.msra.mxu0 0.0
      %4554 = vmatprep.subr.mxu0 0.0
      %4555 = vmatpush1.msra.mxu0 0.0
      %4556 = vmatprep.subr.mxu0 0.0
      %4557 = vmatpush1.msra.mxu0 0.0
      %4558 = vmatprep.subr.mxu0 0.0
      %4559 = vmatpush1.msra.mxu0 0.0
      %4560 = vmatprep.subr.mxu0 0.0
      %4561 = vmatpush1.msra.mxu0 0.0
      %4562 = vmatprep.subr.mxu0 0.0
      %4563 = vmatpush1.msra.mxu0 0.0
      %4564 = vmatprep.subr.mxu0 0.0
      %4565 = vmatpush1.msra.mxu0 0.0
      %4566 = vmatprep.subr.mxu0 0.0
      %4567 = vmatpush1.msra.mxu0 0.0
      %4568 = vmatprep.subr.mxu0 0.0
      %4569 = vmatpush1.msra.mxu0 0.0
      %4570 = vmatprep.subr.mxu0 0.0
      %4571 = vmatpush1.msra.mxu0 0.0
      %4572 = vmatprep.subr.mxu0 0.0
      %4573 = vmatpush1.msra.mxu0 0.0
      %4574 = vmatprep.mubr.f32.mxu0 0.0
      %4575 = vmatmul.mubr.f32.gmra.mrb[0].mxu0 %v4436
      %v4576 = vpop.f32.mrb[0].mxu0
      %v4577 = vadd.f32 0.0, %v4576
      %v4578 = vpop.f32.mrb[0].mxu0
      %4579 = vmatprep.mubr.f32.mxu0 0.0
      %4580 = vmatmul.mubr.f32.gmra.mrb[0].mxu0 %v4439
      %v4581 = vpop.f32.mrb[0].mxu0
      %v4582 = vadd.f32 0.0, %v4581
      %v4583 = vpop.f32.mrb[0].mxu0
      %4584 = vmatprep.mubr.f32.mxu0 0.0
      %4585 = vmatmul.mubr.f32.gmra.mrb[0].mxu0 %v4442
      %v4586 = vpop.f32.mrb[0].mxu0
      %v4587 = vadd.f32 0.0, %v4586
      %v4588 = vpop.f32.mrb[0].mxu0
      %4589 = vmatprep.mubr.f32.mxu0 0.0
      %4590 = vmatmul.mubr.f32.gmra.mrb[0].mxu0 %v4445
      %v4591 = vpop.f32.mrb[0].mxu0
      %v4592 = vadd.f32 0.0, %v4591
      %v4593 = vpop.f32.mrb[0].mxu0
      %4594 = vmatprep.mubr.f32.mxu0 0.0
      %4595 = vmatmul.mubr.f32.gmra.mrb[0].mxu0 %v4448
      %v4596 = vpop.f32.mrb[0].mxu0
      %v4597 = vadd.f32 0.0, %v4596
      %v4598 = vpop.f32.mrb[0].mxu0
      %4599 = vmatprep.mubr.f32.mxu0 0.0
      %4600 = vmatmul.mubr.f32.gmra.mrb[0].mxu0 %v4451
      %v4601 = vpop.f32.mrb[0].mxu0
      %v4602 = vadd.f32 0.0, %v4601
      %v4603 = vpop.f32.mrb[0].mxu0
      %4604 = vmatprep.mubr.f32.mxu0 0.0
      %4605 = vmatmul.mubr.f32.gmra.mrb[0].mxu0 %v4454
      %v4606 = vpop.f32.mrb[0].mxu0
      %v4607 = vadd.f32 0.0, %v4606
      %v4608 = vpop.f32.mrb[0].mxu0
      %4609 = vmatprep.mubr.f32.mxu0 0.0
      %4610 = vmatmul.mubr.f32.gmra.mrb[0].mxu0 %v4457
      %v4611 = vpop.f32.mrb[0].mxu0
      %v4612 = vadd.f32 0.0, %v4611
      %v4613 = vpop.f32.mrb[0].mxu0
      %4614 = vmatprep.mubr.f32.mxu0 0.0
      %4615 = vmatmul.mubr.f32.gmra.mrb[0].mxu0 %v4460
      %v4616 = vpop.f32.mrb[0].mxu0
      %v4617 = vadd.f32 0.0, %v4616
      %v4618 = vpop.f32.mrb[0].mxu0
      %4619 = vmatprep.mubr.f32.mxu0 0.0
      %4620 = vmatmul.mubr.f32.gmra.mrb[0].mxu0 %v4463
      %v4621 = vpop.f32.mrb[0].mxu0
      %v4622 = vadd.f32 0.0, %v4621
      %v4623 = vpop.f32.mrb[0].mxu0
      %4624 = vmatprep.mubr.f32.mxu0 0.0
      %4625 = vmatmul.mubr.f32.gmra.mrb[0].mxu0 %v4466
      %v4626 = vpop.f32.mrb[0].mxu0
      %v4627 = vadd.f32 0.0, %v4626
      %v4628 = vpop.f32.mrb[0].mxu0
      %4629 = vmatprep.mubr.f32.mxu0 0.0
      %4630 = vmatmul.mubr.f32.gmra.mrb[0].mxu0 %v4469
      %v4631 = vpop.f32.mrb[0].mxu0
      %v4632 = vadd.f32 0.0, %v4631
      %v4633 = vpop.f32.mrb[0].mxu0
      %4634 = vmatprep.mubr.f32.mxu0 0.0
      %4635 = vmatmul.mubr.f32.gmra.mrb[0].mxu0 %v4472
      %v4636 = vpop.f32.mrb[0].mxu0
      %v4637 = vadd.f32 0.0, %v4636
      %v4638 = vpop.f32.mrb[0].mxu0
      %4639 = vmatprep.mubr.f32.mxu0 0.0
      %4640 = vmatmul.mubr.f32.gmra.mrb[0].mxu0 %v4475
      %v4641 = vpop.f32.mrb[0].mxu0
      %v4642 = vadd.f32 0.0, %v4641
      %v4643 = vpop.f32.mrb[0].mxu0
      %4644 = vmatprep.mubr.f32.mxu0 0.0
      %4645 = vmatmul.mubr.f32.gmra.mrb[0].mxu0 %v4478
      %v4646 = vpop.f32.mrb[0].mxu0
      %v4647 = vadd.f32 0.0, %v4646
      %v4648 = vpop.f32.mrb[0].mxu0
      %4649 = vmatprep.mubr.f32.mxu0 0.0
      %4650 = vmatmul.mubr.f32.gmra.mrb[0].mxu0 %v4481
      %v4651 = vpop.f32.mrb[0].mxu0
      %v4652 = vadd.f32 0.0, %v4651
      %v4653 = vpop.f32.mrb[0].mxu0
      %4654 = vmatprep.mubr.f32.mxu0 0.0
      %4655 = vmatmul.mubr.f32.gmra.mrb[0].mxu0 %v4484
      %v4656 = vpop.f32.mrb[0].mxu0
      %v4657 = vadd.f32 0.0, %v4656
      %v4658 = vpop.f32.mrb[0].mxu0
      %4659 = vmatprep.mubr.f32.mxu0 0.0
      %4660 = vmatmul.mubr.f32.gmra.mrb[0].mxu0 %v4487
      %v4661 = vpop.f32.mrb[0].mxu0
      %v4662 = vadd.f32 0.0, %v4661
      %v4663 = vpop.f32.mrb[0].mxu0
      %4664 = vmatprep.mubr.f32.mxu0 0.0
      %4665 = vmatmul.mubr.f32.gmra.mrb[0].mxu0 %v4490
      %v4666 = vpop.f32.mrb[0].mxu0
      %v4667 = vadd.f32 0.0, %v4666
      %v4668 = vpop.f32.mrb[0].mxu0
      %4669 = vmatprep.mubr.f32.mxu0 0.0
      %4670 = vmatmul.mubr.f32.gmra.mrb[0].mxu0 %v4493
      %v4671 = vpop.f32.mrb[0].mxu0
      %v4672 = vadd.f32 0.0, %v4671
      %v4673 = vpop.f32.mrb[0].mxu0
      %4674 = vmatprep.mubr.f32.mxu0 0.0
      %4675 = vmatmul.mubr.f32.gmra.mrb[0].mxu0 %v4496
      %v4676 = vpop.f32.mrb[0].mxu0
      %v4677 = vadd.f32 0.0, %v4676
      %v4678 = vpop.f32.mrb[0].mxu0
      %4679 = vmatprep.mubr.f32.mxu0 0.0
      %4680 = vmatmul.mubr.f32.gmra.mrb[0].mxu0 %v4499
      %v4681 = vpop.f32.mrb[0].mxu0
      %v4682 = vadd.f32 0.0, %v4681
      %v4683 = vpop.f32.mrb[0].mxu0
      %4684 = vmatprep.mubr.f32.mxu0 0.0
      %4685 = vmatmul.mubr.f32.gmra.mrb[0].mxu0 %v4502
      %v4686 = vpop.f32.mrb[0].mxu0
      %v4687 = vadd.f32 0.0, %v4686
      %v4688 = vpop.f32.mrb[0].mxu0
      %4689 = vmatprep.mubr.f32.mxu0 0.0
      %4690 = vmatmul.mubr.f32.gmra.mrb[0].mxu0 %v4505
      %v4691 = vpop.f32.mrb[0].mxu0
      %v4692 = vadd.f32 0.0, %v4691
      %v4693 = vpop.f32.mrb[0].mxu0
      %4694 = vmatprep.mubr.f32.mxu0 0.0
      %4695 = vmatmul.mubr.f32.gmra.mrb[0].mxu0 %v4508
      %v4696 = vpop.f32.mrb[0].mxu0
      %v4697 = vadd.f32 0.0, %v4696
      %v4698 = vpop.f32.mrb[0].mxu0
      %4699 = vdwg.mxu0
      %v4700 = vld [vmem:[#allocation3] sm:$0xff]
      %v4701 = vld [vmem:[#allocation3 + $0x8] sm:$0xff]
      %v4702 = vld [vmem:[#allocation3 + $0x10] sm:$0xff]
      %v4703 = vld [vmem:[#allocation3 + $0x18] sm:$0xff]
      %v4704 = vld [vmem:[#allocation3 + $0x20] sm:$0xff]
      %v4705 = vld [vmem:[#allocation3 + $0x28] sm:$0xff]
      %v4706 = vld [vmem:[#allocation3 + $0x30] sm:$0xff]
      %v4707 = vld [vmem:[#allocation3 + $0x38] sm:$0xff]
      %v4708 = vld [vmem:[#allocation3 + $0x40] sm:$0xff]
      %v4709 = vld [vmem:[#allocation3 + $0x48] sm:$0xff]
      %v4710 = vld [vmem:[#allocation3 + $0x50] sm:$0xff]
      %v4711 = vld [vmem:[#allocation3 + $0x58] sm:$0xff]
      %v4712 = vld [vmem:[#allocation3 + $0x60] sm:$0xff]
      %v4713 = vld [vmem:[#allocation3 + $0x68] sm:$0xff]
      %v4714 = vld [vmem:[#allocation3 + $0x70] sm:$0xff]
      %v4715 = vld [vmem:[#allocation3 + $0x78] sm:$0xff]
      %v4716 = vld [vmem:[#allocation3 + $0x80] sm:$0xff]
      %v4717 = vld [vmem:[#allocation3 + $0x88] sm:$0xff]
      %v4718 = vld [vmem:[#allocation3 + $0x90] sm:$0xff]
      %v4719 = vld [vmem:[#allocation3 + $0x98] sm:$0xff]
      %v4720 = vld [vmem:[#allocation3 + $0xa0] sm:$0xff]
      %v4721 = vld [vmem:[#allocation3 + $0xa8] sm:$0xff]
      %v4722 = vld [vmem:[#allocation3 + $0xb0] sm:$0xff]
      %v4723 = vld [vmem:[#allocation3 + $0xb8] sm:$0xff]
      %v4724 = vld [vmem:[#allocation3 + $0xc0] sm:$0x7]
      %v4725 = vadd.f32 %v4700, %v4577
      %v4726 = vadd.f32 %v4701, %v4582
      %v4727 = vadd.f32 %v4702, %v4587
      %v4728 = vadd.f32 %v4703, %v4592
      %v4729 = vadd.f32 %v4704, %v4597
      %v4730 = vadd.f32 %v4705, %v4602
      %v4731 = vadd.f32 %v4706, %v4607
      %v4732 = vadd.f32 %v4707, %v4612
      %v4733 = vadd.f32 %v4708, %v4617
      %v4734 = vadd.f32 %v4709, %v4622
      %v4735 = vadd.f32 %v4710, %v4627
      %v4736 = vadd.f32 %v4711, %v4632
      %v4737 = vadd.f32 %v4712, %v4637
      %v4738 = vadd.f32 %v4713, %v4642
      %v4739 = vadd.f32 %v4714, %v4647
      %v4740 = vadd.f32 %v4715, %v4652
      %v4741 = vadd.f32 %v4716, %v4657
      %v4742 = vadd.f32 %v4717, %v4662
      %v4743 = vadd.f32 %v4718, %v4667
      %v4744 = vadd.f32 %v4719, %v4672
      %v4745 = vadd.f32 %v4720, %v4677
      %v4746 = vadd.f32 %v4721, %v4682
      %v4747 = vadd.f32 %v4722, %v4687
      %v4748 = vadd.f32 %v4723, %v4692
      %v4749 = vadd.f32 %v4724, %v4697
      %4750 = vst.msk [vmem:[#allocation3] sm:$0xff] %vm1801, %v4725
      %4751 = vst.msk [vmem:[#allocation3 + $0x8] sm:$0xff] %vm1801, %v4726
      %4752 = vst.msk [vmem:[#allocation3 + $0x10] sm:$0xff] %vm1801, %v4727
      %4753 = vst.msk [vmem:[#allocation3 + $0x18] sm:$0xff] %vm1801, %v4728
      %4754 = vst.msk [vmem:[#allocation3 + $0x20] sm:$0xff] %vm1801, %v4729
      %4755 = vst.msk [vmem:[#allocation3 + $0x28] sm:$0xff] %vm1801, %v4730
      %4756 = vst.msk [vmem:[#allocation3 + $0x30] sm:$0xff] %vm1801, %v4731
      %4757 = vst.msk [vmem:[#allocation3 + $0x38] sm:$0xff] %vm1801, %v4732
      %4758 = vst.msk [vmem:[#allocation3 + $0x40] sm:$0xff] %vm1801, %v4733
      %4759 = vst.msk [vmem:[#allocation3 + $0x48] sm:$0xff] %vm1801, %v4734
      %4760 = vst.msk [vmem:[#allocation3 + $0x50] sm:$0xff] %vm1801, %v4735
      %4761 = vst.msk [vmem:[#allocation3 + $0x58] sm:$0xff] %vm1801, %v4736
      %4762 = vst.msk [vmem:[#allocation3 + $0x60] sm:$0xff] %vm1801, %v4737
      %4763 = vst.msk [vmem:[#allocation3 + $0x68] sm:$0xff] %vm1801, %v4738
      %4764 = vst.msk [vmem:[#allocation3 + $0x70] sm:$0xff] %vm1801, %v4739
      %4765 = vst.msk [vmem:[#allocation3 + $0x78] sm:$0xff] %vm1801, %v4740
      %4766 = vst.msk [vmem:[#allocation3 + $0x80] sm:$0xff] %vm1801, %v4741
      %4767 = vst.msk [vmem:[#allocation3 + $0x88] sm:$0xff] %vm1801, %v4742
      %4768 = vst.msk [vmem:[#allocation3 + $0x90] sm:$0xff] %vm1801, %v4743
      %4769 = vst.msk [vmem:[#allocation3 + $0x98] sm:$0xff] %vm1801, %v4744
      %4770 = vst.msk [vmem:[#allocation3 + $0xa0] sm:$0xff] %vm1801, %v4745
      %4771 = vst.msk [vmem:[#allocation3 + $0xa8] sm:$0xff] %vm1801, %v4746
      %4772 = vst.msk [vmem:[#allocation3 + $0xb0] sm:$0xff] %vm1801, %v4747
      %4773 = vst.msk [vmem:[#allocation3 + $0xb8] sm:$0xff] %vm1801, %v4748
      %4774 = vst.msk [vmem:[#allocation3 + $0xc0] sm:$0x7] %vm2155, %v4749
      %v4775 = vld [vmem:[#allocation2 + $0x20] sm:$0xff]
      %v4776 = vld [vmem:[#allocation2 + $0x28] sm:$0xff]
      %v4777 = vld [vmem:[#allocation2 + $0x30] sm:$0xff]
      %v4778 = vld [vmem:[#allocation2 + $0x38] sm:$0xff]
      %v4779 = vld [vmem:[#allocation2 + $0x40] sm:$0xff]
      %v4780 = vld [vmem:[#allocation2 + $0x48] sm:$0xff]
      %v4781 = vld [vmem:[#allocation2 + $0x50] sm:$0xff]
      %v4782 = vld [vmem:[#allocation2 + $0x58] sm:$0xff]
      %v4783 = vld [vmem:[#allocation2 + $0x60] sm:$0xff]
      %v4784 = vld [vmem:[#allocation2 + $0x68] sm:$0xff]
      %v4785 = vld [vmem:[#allocation2 + $0x70] sm:$0xff]
      %v4786 = vld [vmem:[#allocation2 + $0x78] sm:$0xff]
      %v4787 = vld [vmem:[#allocation2 + $0x80] sm:$0xff]
      %v4788 = vld [vmem:[#allocation2 + $0x88] sm:$0xff]
      %v4789 = vld [vmem:[#allocation2 + $0x90] sm:$0xff]
      %v4790 = vld [vmem:[#allocation2 + $0x98] sm:$0xff]
      %v4791 = vld [vmem:[#allocation2 + $0xa0] sm:$0xff]
      %v4792 = vld [vmem:[#allocation2 + $0xa8] sm:$0xff]
      %v4793 = vld [vmem:[#allocation2 + $0xb0] sm:$0xff]
      %v4794 = vld [vmem:[#allocation2 + $0xb8] sm:$0xff]
      %v4795 = vld [vmem:[#allocation2 + $0xc0] sm:$0xff]
      %v4796 = vld [vmem:[#allocation2 + $0xc8] sm:$0xff]
      %v4797 = vld [vmem:[#allocation2 + $0xd0] sm:$0xff]
      %v4798 = vld [vmem:[#allocation2 + $0xd8] sm:$0xff]
      %v4799 = vld [vmem:[#allocation2 + $0xe0] sm:$0x7]
      %s4800 = scalar_lea.vmem %s3, 512
      %v4801 = vld [vmem:[%s4800] sm:$0xff]
      %v4802 = vld [vmem:[%s4800 + $0x8] sm:$0xff]
      %v4803 = vld [vmem:[%s4800 + $0x10] sm:$0xff]
      %v4804 = vld [vmem:[%s4800 + $0x18] sm:$0xff]
      %v4805 = vld [vmem:[%s4800 + $0x20] sm:$0xff]
      %v4806 = vld [vmem:[%s4800 + $0x28] sm:$0xff]
      %v4807 = vld [vmem:[%s4800 + $0x30] sm:$0xff]
      %v4808 = vld [vmem:[%s4800 + $0x38] sm:$0xff]
      %v4810 = vsel %vm1801, %v4775, 0
      %v4813 = vsel %vm1801, %v4776, 0
      %v4816 = vsel %vm1801, %v4777, 0
      %v4819 = vsel %vm1801, %v4778, 0
      %v4822 = vsel %vm1801, %v4779, 0
      %v4825 = vsel %vm1801, %v4780, 0
      %v4828 = vsel %vm1801, %v4781, 0
      %v4831 = vsel %vm1801, %v4782, 0
      %v4834 = vsel %vm1801, %v4783, 0
      %v4837 = vsel %vm1801, %v4784, 0
      %v4840 = vsel %vm1801, %v4785, 0
      %v4843 = vsel %vm1801, %v4786, 0
      %v4846 = vsel %vm1801, %v4787, 0
      %v4849 = vsel %vm1801, %v4788, 0
      %v4852 = vsel %vm1801, %v4789, 0
      %v4855 = vsel %vm1801, %v4790, 0
      %v4858 = vsel %vm1801, %v4791, 0
      %v4861 = vsel %vm1801, %v4792, 0
      %v4864 = vsel %vm1801, %v4793, 0
      %v4867 = vsel %vm1801, %v4794, 0
      %v4870 = vsel %vm1801, %v4795, 0
      %v4873 = vsel %vm1801, %v4796, 0
      %v4876 = vsel %vm1801, %v4797, 0
      %v4879 = vsel %vm1801, %v4798, 0
      %v4882 = vsel %vm1801, %v4799, 0
      %4884 = vmatprep.subr.mxu0 0.0
      %4885 = vmatpush1.msra.mxu0 %v4801
      %4886 = vmatprep.subr.mxu0 0.0
      %4887 = vmatpush1.msra.mxu0 %v4802
      %4888 = vmatprep.subr.mxu0 0.0
      %4889 = vmatpush1.msra.mxu0 %v4803
      %4890 = vmatprep.subr.mxu0 0.0
      %4891 = vmatpush1.msra.mxu0 %v4804
      %4892 = vmatprep.subr.mxu0 0.0
      %4893 = vmatpush1.msra.mxu0 %v4805
      %4894 = vmatprep.subr.mxu0 0.0
      %4895 = vmatpush1.msra.mxu0 %v4806
      %4896 = vmatprep.subr.mxu0 0.0
      %4897 = vmatpush1.msra.mxu0 %v4807
      %4898 = vmatprep.subr.mxu0 0.0
      %4899 = vmatpush1.msra.mxu0 %v4808
      %4900 = vmatprep.subr.mxu0 0.0
      %4901 = vmatpush1.msra.mxu0 0.0
      %4902 = vmatprep.subr.mxu0 0.0
      %4903 = vmatpush1.msra.mxu0 0.0
      %4904 = vmatprep.subr.mxu0 0.0
      %4905 = vmatpush1.msra.mxu0 0.0
      %4906 = vmatprep.subr.mxu0 0.0
      %4907 = vmatpush1.msra.mxu0 0.0
      %4908 = vmatprep.subr.mxu0 0.0
      %4909 = vmatpush1.msra.mxu0 0.0
      %4910 = vmatprep.subr.mxu0 0.0
      %4911 = vmatpush1.msra.mxu0 0.0
      %4912 = vmatprep.subr.mxu0 0.0
      %4913 = vmatpush1.msra.mxu0 0.0
      %4914 = vmatprep.subr.mxu0 0.0
      %4915 = vmatpush1.msra.mxu0 0.0
      %4916 = vmatprep.subr.mxu0 0.0
      %4917 = vmatpush1.msra.mxu0 0.0
      %4918 = vmatprep.subr.mxu0 0.0
      %4919 = vmatpush1.msra.mxu0 0.0
      %4920 = vmatprep.subr.mxu0 0.0
      %4921 = vmatpush1.msra.mxu0 0.0
      %4922 = vmatprep.subr.mxu0 0.0
      %4923 = vmatpush1.msra.mxu0 0.0
      %4924 = vmatprep.subr.mxu0 0.0
      %4925 = vmatpush1.msra.mxu0 0.0
      %4926 = vmatprep.subr.mxu0 0.0
      %4927 = vmatpush1.msra.mxu0 0.0
      %4928 = vmatprep.subr.mxu0 0.0
      %4929 = vmatpush1.msra.mxu0 0.0
      %4930 = vmatprep.subr.mxu0 0.0
      %4931 = vmatpush1.msra.mxu0 0.0
      %4932 = vmatprep.subr.mxu0 0.0
      %4933 = vmatpush1.msra.mxu0 0.0
      %4934 = vmatprep.subr.mxu0 0.0
      %4935 = vmatpush1.msra.mxu0 0.0
      %4936 = vmatprep.subr.mxu0 0.0
      %4937 = vmatpush1.msra.mxu0 0.0
      %4938 = vmatprep.subr.mxu0 0.0
      %4939 = vmatpush1.msra.mxu0 0.0
      %4940 = vmatprep.subr.mxu0 0.0
      %4941 = vmatpush1.msra.mxu0 0.0
      %4942 = vmatprep.subr.mxu0 0.0
      %4943 = vmatpush1.msra.mxu0 0.0
      %4944 = vmatprep.subr.mxu0 0.0
      %4945 = vmatpush1.msra.mxu0 0.0
      %4946 = vmatprep.subr.mxu0 0.0
      %4947 = vmatpush1.msra.mxu0 0.0
      %4948 = vmatprep.mubr.f32.mxu0 0.0
      %4949 = vmatmul.mubr.f32.gmra.mrb[0].mxu0 %v4810
      %v4950 = vpop.f32.mrb[0].mxu0
      %v4951 = vadd.f32 0.0, %v4950
      %v4952 = vpop.f32.mrb[0].mxu0
      %4953 = vmatprep.mubr.f32.mxu0 0.0
      %4954 = vmatmul.mubr.f32.gmra.mrb[0].mxu0 %v4813
      %v4955 = vpop.f32.mrb[0].mxu0
      %v4956 = vadd.f32 0.0, %v4955
      %v4957 = vpop.f32.mrb[0].mxu0
      %4958 = vmatprep.mubr.f32.mxu0 0.0
      %4959 = vmatmul.mubr.f32.gmra.mrb[0].mxu0 %v4816
      %v4960 = vpop.f32.mrb[0].mxu0
      %v4961 = vadd.f32 0.0, %v4960
      %v4962 = vpop.f32.mrb[0].mxu0
      %4963 = vmatprep.mubr.f32.mxu0 0.0
      %4964 = vmatmul.mubr.f32.gmra.mrb[0].mxu0 %v4819
      %v4965 = vpop.f32.mrb[0].mxu0
      %v4966 = vadd.f32 0.0, %v4965
      %v4967 = vpop.f32.mrb[0].mxu0
      %4968 = vmatprep.mubr.f32.mxu0 0.0
      %4969 = vmatmul.mubr.f32.gmra.mrb[0].mxu0 %v4822
      %v4970 = vpop.f32.mrb[0].mxu0
      %v4971 = vadd.f32 0.0, %v4970
      %v4972 = vpop.f32.mrb[0].mxu0
      %4973 = vmatprep.mubr.f32.mxu0 0.0
      %4974 = vmatmul.mubr.f32.gmra.mrb[0].mxu0 %v4825
      %v4975 = vpop.f32.mrb[0].mxu0
      %v4976 = vadd.f32 0.0, %v4975
      %v4977 = vpop.f32.mrb[0].mxu0
      %4978 = vmatprep.mubr.f32.mxu0 0.0
      %4979 = vmatmul.mubr.f32.gmra.mrb[0].mxu0 %v4828
      %v4980 = vpop.f32.mrb[0].mxu0
      %v4981 = vadd.f32 0.0, %v4980
      %v4982 = vpop.f32.mrb[0].mxu0
      %4983 = vmatprep.mubr.f32.mxu0 0.0
      %4984 = vmatmul.mubr.f32.gmra.mrb[0].mxu0 %v4831
      %v4985 = vpop.f32.mrb[0].mxu0
      %v4986 = vadd.f32 0.0, %v4985
      %v4987 = vpop.f32.mrb[0].mxu0
      %4988 = vmatprep.mubr.f32.mxu0 0.0
      %4989 = vmatmul.mubr.f32.gmra.mrb[0].mxu0 %v4834
      %v4990 = vpop.f32.mrb[0].mxu0
      %v4991 = vadd.f32 0.0, %v4990
      %v4992 = vpop.f32.mrb[0].mxu0
      %4993 = vmatprep.mubr.f32.mxu0 0.0
      %4994 = vmatmul.mubr.f32.gmra.mrb[0].mxu0 %v4837
      %v4995 = vpop.f32.mrb[0].mxu0
      %v4996 = vadd.f32 0.0, %v4995
      %v4997 = vpop.f32.mrb[0].mxu0
      %4998 = vmatprep.mubr.f32.mxu0 0.0
      %4999 = vmatmul.mubr.f32.gmra.mrb[0].mxu0 %v4840
      %v5000 = vpop.f32.mrb[0].mxu0
      %v5001 = vadd.f32 0.0, %v5000
      %v5002 = vpop.f32.mrb[0].mxu0
      %5003 = vmatprep.mubr.f32.mxu0 0.0
      %5004 = vmatmul.mubr.f32.gmra.mrb[0].mxu0 %v4843
      %v5005 = vpop.f32.mrb[0].mxu0
      %v5006 = vadd.f32 0.0, %v5005
      %v5007 = vpop.f32.mrb[0].mxu0
      %5008 = vmatprep.mubr.f32.mxu0 0.0
      %5009 = vmatmul.mubr.f32.gmra.mrb[0].mxu0 %v4846
      %v5010 = vpop.f32.mrb[0].mxu0
      %v5011 = vadd.f32 0.0, %v5010
      %v5012 = vpop.f32.mrb[0].mxu0
      %5013 = vmatprep.mubr.f32.mxu0 0.0
      %5014 = vmatmul.mubr.f32.gmra.mrb[0].mxu0 %v4849
      %v5015 = vpop.f32.mrb[0].mxu0
      %v5016 = vadd.f32 0.0, %v5015
      %v5017 = vpop.f32.mrb[0].mxu0
      %5018 = vmatprep.mubr.f32.mxu0 0.0
      %5019 = vmatmul.mubr.f32.gmra.mrb[0].mxu0 %v4852
      %v5020 = vpop.f32.mrb[0].mxu0
      %v5021 = vadd.f32 0.0, %v5020
      %v5022 = vpop.f32.mrb[0].mxu0
      %5023 = vmatprep.mubr.f32.mxu0 0.0
      %5024 = vmatmul.mubr.f32.gmra.mrb[0].mxu0 %v4855
      %v5025 = vpop.f32.mrb[0].mxu0
      %v5026 = vadd.f32 0.0, %v5025
      %v5027 = vpop.f32.mrb[0].mxu0
      %5028 = vmatprep.mubr.f32.mxu0 0.0
      %5029 = vmatmul.mubr.f32.gmra.mrb[0].mxu0 %v4858
      %v5030 = vpop.f32.mrb[0].mxu0
      %v5031 = vadd.f32 0.0, %v5030
      %v5032 = vpop.f32.mrb[0].mxu0
      %5033 = vmatprep.mubr.f32.mxu0 0.0
      %5034 = vmatmul.mubr.f32.gmra.mrb[0].mxu0 %v4861
      %v5035 = vpop.f32.mrb[0].mxu0
      %v5036 = vadd.f32 0.0, %v5035
      %v5037 = vpop.f32.mrb[0].mxu0
      %5038 = vmatprep.mubr.f32.mxu0 0.0
      %5039 = vmatmul.mubr.f32.gmra.mrb[0].mxu0 %v4864
      %v5040 = vpop.f32.mrb[0].mxu0
      %v5041 = vadd.f32 0.0, %v5040
      %v5042 = vpop.f32.mrb[0].mxu0
      %5043 = vmatprep.mubr.f32.mxu0 0.0
      %5044 = vmatmul.mubr.f32.gmra.mrb[0].mxu0 %v4867
      %v5045 = vpop.f32.mrb[0].mxu0
      %v5046 = vadd.f32 0.0, %v5045
      %v5047 = vpop.f32.mrb[0].mxu0
      %5048 = vmatprep.mubr.f32.mxu0 0.0
      %5049 = vmatmul.mubr.f32.gmra.mrb[0].mxu0 %v4870
      %v5050 = vpop.f32.mrb[0].mxu0
      %v5051 = vadd.f32 0.0, %v5050
      %v5052 = vpop.f32.mrb[0].mxu0
      %5053 = vmatprep.mubr.f32.mxu0 0.0
      %5054 = vmatmul.mubr.f32.gmra.mrb[0].mxu0 %v4873
      %v5055 = vpop.f32.mrb[0].mxu0
      %v5056 = vadd.f32 0.0, %v5055
      %v5057 = vpop.f32.mrb[0].mxu0
      %5058 = vmatprep.mubr.f32.mxu0 0.0
      %5059 = vmatmul.mubr.f32.gmra.mrb[0].mxu0 %v4876
      %v5060 = vpop.f32.mrb[0].mxu0
      %v5061 = vadd.f32 0.0, %v5060
      %v5062 = vpop.f32.mrb[0].mxu0
      %5063 = vmatprep.mubr.f32.mxu0 0.0
      %5064 = vmatmul.mubr.f32.gmra.mrb[0].mxu0 %v4879
      %v5065 = vpop.f32.mrb[0].mxu0
      %v5066 = vadd.f32 0.0, %v5065
      %v5067 = vpop.f32.mrb[0].mxu0
      %5068 = vmatprep.mubr.f32.mxu0 0.0
      %5069 = vmatmul.mubr.f32.gmra.mrb[0].mxu0 %v4882
      %v5070 = vpop.f32.mrb[0].mxu0
      %v5071 = vadd.f32 0.0, %v5070
      %v5072 = vpop.f32.mrb[0].mxu0
      %5073 = vdwg.mxu0
      %v5074 = vld [vmem:[#allocation3] sm:$0xff]
      %v5075 = vld [vmem:[#allocation3 + $0x8] sm:$0xff]
      %v5076 = vld [vmem:[#allocation3 + $0x10] sm:$0xff]
      %v5077 = vld [vmem:[#allocation3 + $0x18] sm:$0xff]
      %v5078 = vld [vmem:[#allocation3 + $0x20] sm:$0xff]
      %v5079 = vld [vmem:[#allocation3 + $0x28] sm:$0xff]
      %v5080 = vld [vmem:[#allocation3 + $0x30] sm:$0xff]
      %v5081 = vld [vmem:[#allocation3 + $0x38] sm:$0xff]
      %v5082 = vld [vmem:[#allocation3 + $0x40] sm:$0xff]
      %v5083 = vld [vmem:[#allocation3 + $0x48] sm:$0xff]
      %v5084 = vld [vmem:[#allocation3 + $0x50] sm:$0xff]
      %v5085 = vld [vmem:[#allocation3 + $0x58] sm:$0xff]
      %v5086 = vld [vmem:[#allocation3 + $0x60] sm:$0xff]
      %v5087 = vld [vmem:[#allocation3 + $0x68] sm:$0xff]
      %v5088 = vld [vmem:[#allocation3 + $0x70] sm:$0xff]
      %v5089 = vld [vmem:[#allocation3 + $0x78] sm:$0xff]
      %v5090 = vld [vmem:[#allocation3 + $0x80] sm:$0xff]
      %v5091 = vld [vmem:[#allocation3 + $0x88] sm:$0xff]
      %v5092 = vld [vmem:[#allocation3 + $0x90] sm:$0xff]
      %v5093 = vld [vmem:[#allocation3 + $0x98] sm:$0xff]
      %v5094 = vld [vmem:[#allocation3 + $0xa0] sm:$0xff]
      %v5095 = vld [vmem:[#allocation3 + $0xa8] sm:$0xff]
      %v5096 = vld [vmem:[#allocation3 + $0xb0] sm:$0xff]
      %v5097 = vld [vmem:[#allocation3 + $0xb8] sm:$0xff]
      %v5098 = vld [vmem:[#allocation3 + $0xc0] sm:$0x7]
      %v5099 = vadd.f32 %v5074, %v4951
      %v5100 = vadd.f32 %v5075, %v4956
      %v5101 = vadd.f32 %v5076, %v4961
      %v5102 = vadd.f32 %v5077, %v4966
      %v5103 = vadd.f32 %v5078, %v4971
      %v5104 = vadd.f32 %v5079, %v4976
      %v5105 = vadd.f32 %v5080, %v4981
      %v5106 = vadd.f32 %v5081, %v4986
      %v5107 = vadd.f32 %v5082, %v4991
      %v5108 = vadd.f32 %v5083, %v4996
      %v5109 = vadd.f32 %v5084, %v5001
      %v5110 = vadd.f32 %v5085, %v5006
      %v5111 = vadd.f32 %v5086, %v5011
      %v5112 = vadd.f32 %v5087, %v5016
      %v5113 = vadd.f32 %v5088, %v5021
      %v5114 = vadd.f32 %v5089, %v5026
      %v5115 = vadd.f32 %v5090, %v5031
      %v5116 = vadd.f32 %v5091, %v5036
      %v5117 = vadd.f32 %v5092, %v5041
      %v5118 = vadd.f32 %v5093, %v5046
      %v5119 = vadd.f32 %v5094, %v5051
      %v5120 = vadd.f32 %v5095, %v5056
      %v5121 = vadd.f32 %v5096, %v5061
      %v5122 = vadd.f32 %v5097, %v5066
      %v5123 = vadd.f32 %v5098, %v5071
      %5124 = vst.msk [vmem:[#allocation3] sm:$0xff] %vm1801, %v5099
      %5125 = vst.msk [vmem:[#allocation3 + $0x8] sm:$0xff] %vm1801, %v5100
      %5126 = vst.msk [vmem:[#allocation3 + $0x10] sm:$0xff] %vm1801, %v5101
      %5127 = vst.msk [vmem:[#allocation3 + $0x18] sm:$0xff] %vm1801, %v5102
      %5128 = vst.msk [vmem:[#allocation3 + $0x20] sm:$0xff] %vm1801, %v5103
      %5129 = vst.msk [vmem:[#allocation3 + $0x28] sm:$0xff] %vm1801, %v5104
      %5130 = vst.msk [vmem:[#allocation3 + $0x30] sm:$0xff] %vm1801, %v5105
      %5131 = vst.msk [vmem:[#allocation3 + $0x38] sm:$0xff] %vm1801, %v5106
      %5132 = vst.msk [vmem:[#allocation3 + $0x40] sm:$0xff] %vm1801, %v5107
      %5133 = vst.msk [vmem:[#allocation3 + $0x48] sm:$0xff] %vm1801, %v5108
      %5134 = vst.msk [vmem:[#allocation3 + $0x50] sm:$0xff] %vm1801, %v5109
      %5135 = vst.msk [vmem:[#allocation3 + $0x58] sm:$0xff] %vm1801, %v5110
      %5136 = vst.msk [vmem:[#allocation3 + $0x60] sm:$0xff] %vm1801, %v5111
      %5137 = vst.msk [vmem:[#allocation3 + $0x68] sm:$0xff] %vm1801, %v5112
      %5138 = vst.msk [vmem:[#allocation3 + $0x70] sm:$0xff] %vm1801, %v5113
      %5139 = vst.msk [vmem:[#allocation3 + $0x78] sm:$0xff] %vm1801, %v5114
      %5140 = vst.msk [vmem:[#allocation3 + $0x80] sm:$0xff] %vm1801, %v5115
      %5141 = vst.msk [vmem:[#allocation3 + $0x88] sm:$0xff] %vm1801, %v5116
      %5142 = vst.msk [vmem:[#allocation3 + $0x90] sm:$0xff] %vm1801, %v5117
      %5143 = vst.msk [vmem:[#allocation3 + $0x98] sm:$0xff] %vm1801, %v5118
      %5144 = vst.msk [vmem:[#allocation3 + $0xa0] sm:$0xff] %vm1801, %v5119
      %5145 = vst.msk [vmem:[#allocation3 + $0xa8] sm:$0xff] %vm1801, %v5120
      %5146 = vst.msk [vmem:[#allocation3 + $0xb0] sm:$0xff] %vm1801, %v5121
      %5147 = vst.msk [vmem:[#allocation3 + $0xb8] sm:$0xff] %vm1801, %v5122
      %5148 = vst.msk [vmem:[#allocation3 + $0xc0] sm:$0x7] %vm2155, %v5123
      %5149 = vst.msk [vmem:[#allocation4] sm:$0xff] %vm1801, 0.0
      %5150 = vst.msk [vmem:[#allocation4 + $0x8] sm:$0xff] %vm1801, 0.0
      %5151 = vst.msk [vmem:[#allocation4 + $0x10] sm:$0xff] %vm1801, 0.0
      %5152 = vst.msk [vmem:[#allocation4 + $0x18] sm:$0xff] %vm1801, 0.0
      %5153 = vst.msk [vmem:[#allocation4 + $0x20] sm:$0xff] %vm1801, 0.0
      %5154 = vst.msk [vmem:[#allocation4 + $0x28] sm:$0xff] %vm1801, 0.0
      %5155 = vst.msk [vmem:[#allocation4 + $0x30] sm:$0xff] %vm1801, 0.0
      %5156 = vst.msk [vmem:[#allocation4 + $0x38] sm:$0xff] %vm1801, 0.0
      %5157 = vst.msk [vmem:[#allocation4 + $0x40] sm:$0xff] %vm1801, 0.0
      %v5158 = vld [vmem:[%s4] sm:$0x1]
      %v5159 = vld [vmem:[#allocation3] ss:$2 sm:$0x3f]
      %s5160 = scalar_lea.vmem [#allocation3], 1
      %v5161 = vld [vmem:[%s5160] ss:$2 sm:$0x3f]
      %v5162 = vmax.f32 %v5159, %v5161
      %s5163 = scalar_lea.vmem [#allocation3], 15
      %v5164 = vld [vmem:[%s5163] ss:$2 sm:$0x3f]
      %s5165 = scalar_lea.vmem [#allocation3], 16
      %v5166 = vld [vmem:[%s5165] ss:$2 sm:$0x3f]
      %v5167 = vmax.f32 %v5164, %v5166
      %v5168 = vmax.f32 %v5162, %v5167
      %v5170 = vlaneseq
      %v5171 = vshrl.u32 %v5170, 7
      %v5172 = vsub.s32 0, %v5171
      %v5173 = vrot.slane %v5158, %v5172
      %v5175 = vadd.f32 %v5168, %v5173
      %v5176 = vmax.f32 %v5175, 0.0
      %vm5177 = vcmask 521216
      %5178 = vst.msk [vmem:[#allocation4 + $0x9] sm:$0x3f] %vm5177, %v5176
      %s5179 = scalar_lea.vmem [#allocation3], 30
      %v5180 = vld [vmem:[%s5179] ss:$2 sm:$0x3f]
      %s5181 = scalar_lea.vmem [#allocation3], 31
      %v5182 = vld [vmem:[%s5181] ss:$2 sm:$0x3f]
      %v5183 = vmax.f32 %v5180, %v5182
      %s5184 = scalar_lea.vmem [#allocation3], 45
      %v5185 = vld [vmem:[%s5184] ss:$2 sm:$0x3f]
      %s5186 = scalar_lea.vmem [#allocation3], 46
      %v5187 = vld [vmem:[%s5186] ss:$2 sm:$0x3f]
      %v5188 = vmax.f32 %v5185, %v5187
      %v5189 = vmax.f32 %v5183, %v5188
      %v5190 = vadd.f32 %v5189, %v5173
      %v5191 = vmax.f32 %v5190, 0.0
      %5192 = vst.msk [vmem:[#allocation4 + $0x11] sm:$0x3f] %vm5177, %v5191
      %s5193 = scalar_lea.vmem [#allocation3], 60
      %v5194 = vld [vmem:[%s5193] ss:$2 sm:$0x3f]
      %s5195 = scalar_lea.vmem [#allocation3], 61
      %v5196 = vld [vmem:[%s5195] ss:$2 sm:$0x3f]
      %v5197 = vmax.f32 %v5194, %v5196
      %s5198 = scalar_lea.vmem [#allocation3], 75
      %v5199 = vld [vmem:[%s5198] ss:$2 sm:$0x3f]
      %s5200 = scalar_lea.vmem [#allocation3], 76
      %v5201 = vld [vmem:[%s5200] ss:$2 sm:$0x3f]
      %v5202 = vmax.f32 %v5199, %v5201
      %v5203 = vmax.f32 %v5197, %v5202
      %v5204 = vadd.f32 %v5203, %v5173
      %v5205 = vmax.f32 %v5204, 0.0
      %5206 = vst.msk [vmem:[#allocation4 + $0x19] sm:$0x3f] %vm5177, %v5205
      %s5207 = scalar_lea.vmem [#allocation3], 90
      %v5208 = vld [vmem:[%s5207] ss:$2 sm:$0x3f]
      %s5209 = scalar_lea.vmem [#allocation3], 91
      %v5210 = vld [vmem:[%s5209] ss:$2 sm:$0x3f]
      %v5211 = vmax.f32 %v5208, %v5210
      %s5212 = scalar_lea.vmem [#allocation3], 105
      %v5213 = vld [vmem:[%s5212] ss:$2 sm:$0x3f]
      %s5214 = scalar_lea.vmem [#allocation3], 106
      %v5215 = vld [vmem:[%s5214] ss:$2 sm:$0x3f]
      %v5216 = vmax.f32 %v5213, %v5215
      %v5217 = vmax.f32 %v5211, %v5216
      %v5218 = vadd.f32 %v5217, %v5173
      %v5219 = vmax.f32 %v5218, 0.0
      %5220 = vst.msk [vmem:[#allocation4 + $0x21] sm:$0x3f] %vm5177, %v5219
      %s5221 = scalar_lea.vmem [#allocation3], 120
      %v5222 = vld [vmem:[%s5221] ss:$2 sm:$0x3f]
      %s5223 = scalar_lea.vmem [#allocation3], 121
      %v5224 = vld [vmem:[%s5223] ss:$2 sm:$0x3f]
      %v5225 = vmax.f32 %v5222, %v5224
      %s5226 = scalar_lea.vmem [#allocation3], 135
      %v5227 = vld [vmem:[%s5226] ss:$2 sm:$0x3f]
      %s5228 = scalar_lea.vmem [#allocation3], 136
      %v5229 = vld [vmem:[%s5228] ss:$2 sm:$0x3f]
      %v5230 = vmax.f32 %v5227, %v5229
      %v5231 = vmax.f32 %v5225, %v5230
      %v5232 = vadd.f32 %v5231, %v5173
      %v5233 = vmax.f32 %v5232, 0.0
      %5234 = vst.msk [vmem:[#allocation4 + $0x29] sm:$0x3f] %vm5177, %v5233
      %s5235 = scalar_lea.vmem [#allocation3], 150
      %v5236 = vld [vmem:[%s5235] ss:$2 sm:$0x3f]
      %s5237 = scalar_lea.vmem [#allocation3], 151
      %v5238 = vld [vmem:[%s5237] ss:$2 sm:$0x3f]
      %v5239 = vmax.f32 %v5236, %v5238
      %s5240 = scalar_lea.vmem [#allocation3], 165
      %v5241 = vld [vmem:[%s5240] ss:$2 sm:$0x3f]
      %s5242 = scalar_lea.vmem [#allocation3], 166
      %v5243 = vld [vmem:[%s5242] ss:$2 sm:$0x3f]
      %v5244 = vmax.f32 %v5241, %v5243
      %v5245 = vmax.f32 %v5239, %v5244
      %v5246 = vadd.f32 %v5245, %v5173
      %v5247 = vmax.f32 %v5246, 0.0
      %5248 = vst.msk [vmem:[#allocation4 + $0x31] sm:$0x3f] %vm5177, %v5247
      %v5249 = vld [vmem:[#allocation4] sm:$0xff]
      %v5250 = vld [vmem:[#allocation4 + $0x8] sm:$0xff]
      %v5251 = vld [vmem:[#allocation4 + $0x10] sm:$0xff]
      %v5252 = vld [vmem:[#allocation4 + $0x18] sm:$0xff]
      %v5253 = vld [vmem:[#allocation4 + $0x20] sm:$0xff]
      %v5254 = vld [vmem:[#allocation4 + $0x28] sm:$0xff]
      %v5255 = vld [vmem:[%s5] sm:$0xff]
      %v5256 = vld [vmem:[%s5 + $0x8] sm:$0xff]
      %v5257 = vld [vmem:[%s5 + $0x10] sm:$0xff]
      %v5258 = vld [vmem:[%s5 + $0x18] sm:$0xff]
      %v5259 = vld [vmem:[%s5 + $0x20] sm:$0xff]
      %v5260 = vld [vmem:[%s5 + $0x28] sm:$0xff]
      %v5261 = vld [vmem:[%s5 + $0x30] sm:$0xff]
      %v5262 = vld [vmem:[%s5 + $0x38] sm:$0xff]
      %v5263 = vld [vmem:[#allocation4 + $0x1] sm:$0xff]
      %v5264 = vld [vmem:[#allocation4 + $0x9] sm:$0xff]
      %v5265 = vld [vmem:[#allocation4 + $0x11] sm:$0xff]
      %v5266 = vld [vmem:[#allocation4 + $0x19] sm:$0xff]
      %v5267 = vld [vmem:[#allocation4 + $0x21] sm:$0xff]
      %v5268 = vld [vmem:[#allocation4 + $0x29] sm:$0xff]
      %s5269 = scalar_lea.vmem %s5, 64
      %v5270 = vld [vmem:[%s5269] sm:$0xff]
      %v5271 = vld [vmem:[%s5269 + $0x8] sm:$0xff]
      %v5272 = vld [vmem:[%s5269 + $0x10] sm:$0xff]
      %v5273 = vld [vmem:[%s5269 + $0x18] sm:$0xff]
      %v5274 = vld [vmem:[%s5269 + $0x20] sm:$0xff]
      %v5275 = vld [vmem:[%s5269 + $0x28] sm:$0xff]
      %v5276 = vld [vmem:[%s5269 + $0x30] sm:$0xff]
      %v5277 = vld [vmem:[%s5269 + $0x38] sm:$0xff]
      %v5279 = vsel %vm1801, %v5263, 0
      %v5282 = vsel %vm1801, %v5264, 0
      %v5285 = vsel %vm1801, %v5265, 0
      %v5288 = vsel %vm1801, %v5266, 0
      %v5291 = vsel %vm1801, %v5267, 0
      %v5294 = vsel %vm1801, %v5268, 0
      %5296 = vmatprep.subr.mxu0 0.0
      %5297 = vmatpush1.msra.mxu0 %v5270
      %5298 = vmatprep.subr.mxu0 0.0
      %5299 = vmatpush1.msra.mxu0 %v5271
      %5300 = vmatprep.subr.mxu0 0.0
      %5301 = vmatpush1.msra.mxu0 %v5272
      %5302 = vmatprep.subr.mxu0 0.0
      %5303 = vmatpush1.msra.mxu0 %v5273
      %5304 = vmatprep.subr.mxu0 0.0
      %5305 = vmatpush1.msra.mxu0 %v5274
      %5306 = vmatprep.subr.mxu0 0.0
      %5307 = vmatpush1.msra.mxu0 %v5275
      %5308 = vmatprep.subr.mxu0 0.0
      %5309 = vmatpush1.msra.mxu0 %v5276
      %5310 = vmatprep.subr.mxu0 0.0
      %5311 = vmatpush1.msra.mxu0 %v5277
      %5312 = vmatprep.subr.mxu0 0.0
      %5313 = vmatpush1.msra.mxu0 0.0
      %5314 = vmatprep.subr.mxu0 0.0
      %5315 = vmatpush1.msra.mxu0 0.0
      %5316 = vmatprep.subr.mxu0 0.0
      %5317 = vmatpush1.msra.mxu0 0.0
      %5318 = vmatprep.subr.mxu0 0.0
      %5319 = vmatpush1.msra.mxu0 0.0
      %5320 = vmatprep.subr.mxu0 0.0
      %5321 = vmatpush1.msra.mxu0 0.0
      %5322 = vmatprep.subr.mxu0 0.0
      %5323 = vmatpush1.msra.mxu0 0.0
      %5324 = vmatprep.subr.mxu0 0.0
      %5325 = vmatpush1.msra.mxu0 0.0
      %5326 = vmatprep.subr.mxu0 0.0
      %5327 = vmatpush1.msra.mxu0 0.0
      %5328 = vmatprep.subr.mxu0 0.0
      %5329 = vmatpush1.msra.mxu0 0.0
      %5330 = vmatprep.subr.mxu0 0.0
      %5331 = vmatpush1.msra.mxu0 0.0
      %5332 = vmatprep.subr.mxu0 0.0
      %5333 = vmatpush1.msra.mxu0 0.0
      %5334 = vmatprep.subr.mxu0 0.0
      %5335 = vmatpush1.msra.mxu0 0.0
      %5336 = vmatprep.subr.mxu0 0.0
      %5337 = vmatpush1.msra.mxu0 0.0
      %5338 = vmatprep.subr.mxu0 0.0
      %5339 = vmatpush1.msra.mxu0 0.0
      %5340 = vmatprep.subr.mxu0 0.0
      %5341 = vmatpush1.msra.mxu0 0.0
      %5342 = vmatprep.subr.mxu0 0.0
      %5343 = vmatpush1.msra.mxu0 0.0
      %5344 = vmatprep.subr.mxu0 0.0
      %5345 = vmatpush1.msra.mxu0 0.0
      %5346 = vmatprep.subr.mxu0 0.0
      %5347 = vmatpush1.msra.mxu0 0.0
      %5348 = vmatprep.subr.mxu0 0.0
      %5349 = vmatpush1.msra.mxu0 0.0
      %5350 = vmatprep.subr.mxu0 0.0
      %5351 = vmatpush1.msra.mxu0 0.0
      %5352 = vmatprep.subr.mxu0 0.0
      %5353 = vmatpush1.msra.mxu0 0.0
      %5354 = vmatprep.subr.mxu0 0.0
      %5355 = vmatpush1.msra.mxu0 0.0
      %5356 = vmatprep.subr.mxu0 0.0
      %5357 = vmatpush1.msra.mxu0 0.0
      %5358 = vmatprep.subr.mxu0 0.0
      %5359 = vmatpush1.msra.mxu0 0.0
      %5360 = vmatprep.mubr.f32.mxu0 0.0
      %5361 = vmatmul.mubr.f32.gmra.mrb[0].mxu0 %v5279
      %v5362 = vpop.f32.mrb[0].mxu0
      %v5363 = vadd.f32 0.0, %v5362
      %v5364 = vpop.f32.mrb[0].mxu0
      %5365 = vmatprep.mubr.f32.mxu0 0.0
      %5366 = vmatmul.mubr.f32.gmra.mrb[0].mxu0 %v5282
      %v5367 = vpop.f32.mrb[0].mxu0
      %v5368 = vadd.f32 0.0, %v5367
      %v5369 = vpop.f32.mrb[0].mxu0
      %5370 = vmatprep.mubr.f32.mxu0 0.0
      %5371 = vmatmul.mubr.f32.gmra.mrb[0].mxu0 %v5285
      %v5372 = vpop.f32.mrb[0].mxu0
      %v5373 = vadd.f32 0.0, %v5372
      %v5374 = vpop.f32.mrb[0].mxu0
      %5375 = vmatprep.mubr.f32.mxu0 0.0
      %5376 = vmatmul.mubr.f32.gmra.mrb[0].mxu0 %v5288
      %v5377 = vpop.f32.mrb[0].mxu0
      %v5378 = vadd.f32 0.0, %v5377
      %v5379 = vpop.f32.mrb[0].mxu0
      %5380 = vmatprep.mubr.f32.mxu0 0.0
      %5381 = vmatmul.mubr.f32.gmra.mrb[0].mxu0 %v5291
      %v5382 = vpop.f32.mrb[0].mxu0
      %v5383 = vadd.f32 0.0, %v5382
      %v5384 = vpop.f32.mrb[0].mxu0
      %5385 = vmatprep.mubr.f32.mxu0 0.0
      %5386 = vmatmul.mubr.f32.gmra.mrb[0].mxu0 %v5294
      %v5387 = vpop.f32.mrb[0].mxu0
      %v5388 = vadd.f32 0.0, %v5387
      %v5389 = vpop.f32.mrb[0].mxu0
      %5390 = vdwg.mxu0
      %v5392 = vsel %vm1801, %v5249, 0
      %v5395 = vsel %vm1801, %v5250, 0
      %v5398 = vsel %vm1801, %v5251, 0
      %v5401 = vsel %vm1801, %v5252, 0
      %v5404 = vsel %vm1801, %v5253, 0
      %v5407 = vsel %vm1801, %v5254, 0
      %5409 = vmatprep.subr.mxu0 0.0
      %5410 = vmatpush1.msra.mxu0 %v5255
      %5411 = vmatprep.subr.mxu0 0.0
      %5412 = vmatpush1.msra.mxu0 %v5256
      %5413 = vmatprep.subr.mxu0 0.0
      %5414 = vmatpush1.msra.mxu0 %v5257
      %5415 = vmatprep.subr.mxu0 0.0
      %5416 = vmatpush1.msra.mxu0 %v5258
      %5417 = vmatprep.subr.mxu0 0.0
      %5418 = vmatpush1.msra.mxu0 %v5259
      %5419 = vmatprep.subr.mxu0 0.0
      %5420 = vmatpush1.msra.mxu0 %v5260
      %5421 = vmatprep.subr.mxu0 0.0
      %5422 = vmatpush1.msra.mxu0 %v5261
      %5423 = vmatprep.subr.mxu0 0.0
      %5424 = vmatpush1.msra.mxu0 %v5262
      %5425 = vmatprep.subr.mxu0 0.0
      %5426 = vmatpush1.msra.mxu0 0.0
      %5427 = vmatprep.subr.mxu0 0.0
      %5428 = vmatpush1.msra.mxu0 0.0
      %5429 = vmatprep.subr.mxu0 0.0
      %5430 = vmatpush1.msra.mxu0 0.0
      %5431 = vmatprep.subr.mxu0 0.0
      %5432 = vmatpush1.msra.mxu0 0.0
      %5433 = vmatprep.subr.mxu0 0.0
      %5434 = vmatpush1.msra.mxu0 0.0
      %5435 = vmatprep.subr.mxu0 0.0
      %5436 = vmatpush1.msra.mxu0 0.0
      %5437 = vmatprep.subr.mxu0 0.0
      %5438 = vmatpush1.msra.mxu0 0.0
      %5439 = vmatprep.subr.mxu0 0.0
      %5440 = vmatpush1.msra.mxu0 0.0
      %5441 = vmatprep.subr.mxu0 0.0
      %5442 = vmatpush1.msra.mxu0 0.0
      %5443 = vmatprep.subr.mxu0 0.0
      %5444 = vmatpush1.msra.mxu0 0.0
      %5445 = vmatprep.subr.mxu0 0.0
      %5446 = vmatpush1.msra.mxu0 0.0
      %5447 = vmatprep.subr.mxu0 0.0
      %5448 = vmatpush1.msra.mxu0 0.0
      %5449 = vmatprep.subr.mxu0 0.0
      %5450 = vmatpush1.msra.mxu0 0.0
      %5451 = vmatprep.subr.mxu0 0.0
      %5452 = vmatpush1.msra.mxu0 0.0
      %5453 = vmatprep.subr.mxu0 0.0
      %5454 = vmatpush1.msra.mxu0 0.0
      %5455 = vmatprep.subr.mxu0 0.0
      %5456 = vmatpush1.msra.mxu0 0.0
      %5457 = vmatprep.subr.mxu0 0.0
      %5458 = vmatpush1.msra.mxu0 0.0
      %5459 = vmatprep.subr.mxu0 0.0
      %5460 = vmatpush1.msra.mxu0 0.0
      %5461 = vmatprep.subr.mxu0 0.0
      %5462 = vmatpush1.msra.mxu0 0.0
      %5463 = vmatprep.subr.mxu0 0.0
      %5464 = vmatpush1.msra.mxu0 0.0
      %5465 = vmatprep.subr.mxu0 0.0
      %5466 = vmatpush1.msra.mxu0 0.0
      %5467 = vmatprep.subr.mxu0 0.0
      %5468 = vmatpush1.msra.mxu0 0.0
      %5469 = vmatprep.subr.mxu0 0.0
      %5470 = vmatpush1.msra.mxu0 0.0
      %5471 = vmatprep.subr.mxu0 0.0
      %5472 = vmatpush1.msra.mxu0 0.0
      %5473 = vmatprep.mubr.f32.mxu0 0.0
      %5474 = vmatmul.mubr.f32.gmra.mrb[0].mxu0 %v5392
      %v5475 = vpop.f32.mrb[0].mxu0
      %v5476 = vadd.f32 %v5363, %v5475
      %v5477 = vpop.f32.mrb[0].mxu0
      %5478 = vmatprep.mubr.f32.mxu0 0.0
      %5479 = vmatmul.mubr.f32.gmra.mrb[0].mxu0 %v5395
      %v5480 = vpop.f32.mrb[0].mxu0
      %v5481 = vadd.f32 %v5368, %v5480
      %v5482 = vpop.f32.mrb[0].mxu0
      %5483 = vmatprep.mubr.f32.mxu0 0.0
      %5484 = vmatmul.mubr.f32.gmra.mrb[0].mxu0 %v5398
      %v5485 = vpop.f32.mrb[0].mxu0
      %v5486 = vadd.f32 %v5373, %v5485
      %v5487 = vpop.f32.mrb[0].mxu0
      %5488 = vmatprep.mubr.f32.mxu0 0.0
      %5489 = vmatmul.mubr.f32.gmra.mrb[0].mxu0 %v5401
      %v5490 = vpop.f32.mrb[0].mxu0
      %v5491 = vadd.f32 %v5378, %v5490
      %v5492 = vpop.f32.mrb[0].mxu0
      %5493 = vmatprep.mubr.f32.mxu0 0.0
      %5494 = vmatmul.mubr.f32.gmra.mrb[0].mxu0 %v5404
      %v5495 = vpop.f32.mrb[0].mxu0
      %v5496 = vadd.f32 %v5383, %v5495
      %v5497 = vpop.f32.mrb[0].mxu0
      %5498 = vmatprep.mubr.f32.mxu0 0.0
      %5499 = vmatmul.mubr.f32.gmra.mrb[0].mxu0 %v5407
      %v5500 = vpop.f32.mrb[0].mxu0
      %v5501 = vadd.f32 %v5388, %v5500
      %v5502 = vpop.f32.mrb[0].mxu0
      %5503 = vdwg.mxu0
      %v5504 = vld [vmem:[#allocation4 + $0x2] sm:$0xff]
      %v5505 = vld [vmem:[#allocation4 + $0xa] sm:$0xff]
      %v5506 = vld [vmem:[#allocation4 + $0x12] sm:$0xff]
      %v5507 = vld [vmem:[#allocation4 + $0x1a] sm:$0xff]
      %v5508 = vld [vmem:[#allocation4 + $0x22] sm:$0xff]
      %v5509 = vld [vmem:[#allocation4 + $0x2a] sm:$0xff]
      %s5510 = scalar_lea.vmem %s5, 128
      %v5511 = vld [vmem:[%s5510] sm:$0xff]
      %v5512 = vld [vmem:[%s5510 + $0x8] sm:$0xff]
      %v5513 = vld [vmem:[%s5510 + $0x10] sm:$0xff]
      %v5514 = vld [vmem:[%s5510 + $0x18] sm:$0xff]
      %v5515 = vld [vmem:[%s5510 + $0x20] sm:$0xff]
      %v5516 = vld [vmem:[%s5510 + $0x28] sm:$0xff]
      %v5517 = vld [vmem:[%s5510 + $0x30] sm:$0xff]
      %v5518 = vld [vmem:[%s5510 + $0x38] sm:$0xff]
      %v5520 = vsel %vm1801, %v5504, 0
      %v5523 = vsel %vm1801, %v5505, 0
      %v5526 = vsel %vm1801, %v5506, 0
      %v5529 = vsel %vm1801, %v5507, 0
      %v5532 = vsel %vm1801, %v5508, 0
      %v5535 = vsel %vm1801, %v5509, 0
      %5537 = vmatprep.subr.mxu0 0.0
      %5538 = vmatpush1.msra.mxu0 %v5511
      %5539 = vmatprep.subr.mxu0 0.0
      %5540 = vmatpush1.msra.mxu0 %v5512
      %5541 = vmatprep.subr.mxu0 0.0
      %5542 = vmatpush1.msra.mxu0 %v5513
      %5543 = vmatprep.subr.mxu0 0.0
      %5544 = vmatpush1.msra.mxu0 %v5514
      %5545 = vmatprep.subr.mxu0 0.0
      %5546 = vmatpush1.msra.mxu0 %v5515
      %5547 = vmatprep.subr.mxu0 0.0
      %5548 = vmatpush1.msra.mxu0 %v5516
      %5549 = vmatprep.subr.mxu0 0.0
      %5550 = vmatpush1.msra.mxu0 %v5517
      %5551 = vmatprep.subr.mxu0 0.0
      %5552 = vmatpush1.msra.mxu0 %v5518
      %5553 = vmatprep.subr.mxu0 0.0
      %5554 = vmatpush1.msra.mxu0 0.0
      %5555 = vmatprep.subr.mxu0 0.0
      %5556 = vmatpush1.msra.mxu0 0.0
      %5557 = vmatprep.subr.mxu0 0.0
      %5558 = vmatpush1.msra.mxu0 0.0
      %5559 = vmatprep.subr.mxu0 0.0
      %5560 = vmatpush1.msra.mxu0 0.0
      %5561 = vmatprep.subr.mxu0 0.0
      %5562 = vmatpush1.msra.mxu0 0.0
      %5563 = vmatprep.subr.mxu0 0.0
      %5564 = vmatpush1.msra.mxu0 0.0
      %5565 = vmatprep.subr.mxu0 0.0
      %5566 = vmatpush1.msra.mxu0 0.0
      %5567 = vmatprep.subr.mxu0 0.0
      %5568 = vmatpush1.msra.mxu0 0.0
      %5569 = vmatprep.subr.mxu0 0.0
      %5570 = vmatpush1.msra.mxu0 0.0
      %5571 = vmatprep.subr.mxu0 0.0
      %5572 = vmatpush1.msra.mxu0 0.0
      %5573 = vmatprep.subr.mxu0 0.0
      %5574 = vmatpush1.msra.mxu0 0.0
      %5575 = vmatprep.subr.mxu0 0.0
      %5576 = vmatpush1.msra.mxu0 0.0
      %5577 = vmatprep.subr.mxu0 0.0
      %5578 = vmatpush1.msra.mxu0 0.0
      %5579 = vmatprep.subr.mxu0 0.0
      %5580 = vmatpush1.msra.mxu0 0.0
      %5581 = vmatprep.subr.mxu0 0.0
      %5582 = vmatpush1.msra.mxu0 0.0
      %5583 = vmatprep.subr.mxu0 0.0
      %5584 = vmatpush1.msra.mxu0 0.0
      %5585 = vmatprep.subr.mxu0 0.0
      %5586 = vmatpush1.msra.mxu0 0.0
      %5587 = vmatprep.subr.mxu0 0.0
      %5588 = vmatpush1.msra.mxu0 0.0
      %5589 = vmatprep.subr.mxu0 0.0
      %5590 = vmatpush1.msra.mxu0 0.0
      %5591 = vmatprep.subr.mxu0 0.0
      %5592 = vmatpush1.msra.mxu0 0.0
      %5593 = vmatprep.subr.mxu0 0.0
      %5594 = vmatpush1.msra.mxu0 0.0
      %5595 = vmatprep.subr.mxu0 0.0
      %5596 = vmatpush1.msra.mxu0 0.0
      %5597 = vmatprep.subr.mxu0 0.0
      %5598 = vmatpush1.msra.mxu0 0.0
      %5599 = vmatprep.subr.mxu0 0.0
      %5600 = vmatpush1.msra.mxu0 0.0
      %5601 = vmatprep.mubr.f32.mxu0 0.0
      %5602 = vmatmul.mubr.f32.gmra.mrb[0].mxu0 %v5520
      %v5603 = vpop.f32.mrb[0].mxu0
      %v5604 = vadd.f32 0.0, %v5603
      %v5605 = vpop.f32.mrb[0].mxu0
      %5606 = vmatprep.mubr.f32.mxu0 0.0
      %5607 = vmatmul.mubr.f32.gmra.mrb[0].mxu0 %v5523
      %v5608 = vpop.f32.mrb[0].mxu0
      %v5609 = vadd.f32 0.0, %v5608
      %v5610 = vpop.f32.mrb[0].mxu0
      %5611 = vmatprep.mubr.f32.mxu0 0.0
      %5612 = vmatmul.mubr.f32.gmra.mrb[0].mxu0 %v5526
      %v5613 = vpop.f32.mrb[0].mxu0
      %v5614 = vadd.f32 0.0, %v5613
      %v5615 = vpop.f32.mrb[0].mxu0
      %5616 = vmatprep.mubr.f32.mxu0 0.0
      %5617 = vmatmul.mubr.f32.gmra.mrb[0].mxu0 %v5529
      %v5618 = vpop.f32.mrb[0].mxu0
      %v5619 = vadd.f32 0.0, %v5618
      %v5620 = vpop.f32.mrb[0].mxu0
      %5621 = vmatprep.mubr.f32.mxu0 0.0
      %5622 = vmatmul.mubr.f32.gmra.mrb[0].mxu0 %v5532
      %v5623 = vpop.f32.mrb[0].mxu0
      %v5624 = vadd.f32 0.0, %v5623
      %v5625 = vpop.f32.mrb[0].mxu0
      %5626 = vmatprep.mubr.f32.mxu0 0.0
      %5627 = vmatmul.mubr.f32.gmra.mrb[0].mxu0 %v5535
      %v5628 = vpop.f32.mrb[0].mxu0
      %v5629 = vadd.f32 0.0, %v5628
      %v5630 = vpop.f32.mrb[0].mxu0
      %5631 = vdwg.mxu0
      %v5632 = vadd.f32 %v5476, %v5604
      %v5633 = vadd.f32 %v5481, %v5609
      %v5634 = vadd.f32 %v5486, %v5614
      %v5635 = vadd.f32 %v5491, %v5619
      %v5636 = vadd.f32 %v5496, %v5624
      %v5637 = vadd.f32 %v5501, %v5629
      %v5638 = vld [vmem:[#allocation4 + $0x8] sm:$0xff]
      %v5639 = vld [vmem:[#allocation4 + $0x10] sm:$0xff]
      %v5640 = vld [vmem:[#allocation4 + $0x18] sm:$0xff]
      %v5641 = vld [vmem:[#allocation4 + $0x20] sm:$0xff]
      %v5642 = vld [vmem:[#allocation4 + $0x28] sm:$0xff]
      %v5643 = vld [vmem:[#allocation4 + $0x30] sm:$0xff]
      %s5644 = scalar_lea.vmem %s5, 192
      %v5645 = vld [vmem:[%s5644] sm:$0xff]
      %v5646 = vld [vmem:[%s5644 + $0x8] sm:$0xff]
      %v5647 = vld [vmem:[%s5644 + $0x10] sm:$0xff]
      %v5648 = vld [vmem:[%s5644 + $0x18] sm:$0xff]
      %v5649 = vld [vmem:[%s5644 + $0x20] sm:$0xff]
      %v5650 = vld [vmem:[%s5644 + $0x28] sm:$0xff]
      %v5651 = vld [vmem:[%s5644 + $0x30] sm:$0xff]
      %v5652 = vld [vmem:[%s5644 + $0x38] sm:$0xff]
      %v5654 = vsel %vm1801, %v5638, 0
      %v5657 = vsel %vm1801, %v5639, 0
      %v5660 = vsel %vm1801, %v5640, 0
      %v5663 = vsel %vm1801, %v5641, 0
      %v5666 = vsel %vm1801, %v5642, 0
      %v5669 = vsel %vm1801, %v5643, 0
      %5671 = vmatprep.subr.mxu0 0.0
      %5672 = vmatpush1.msra.mxu0 %v5645
      %5673 = vmatprep.subr.mxu0 0.0
      %5674 = vmatpush1.msra.mxu0 %v5646
      %5675 = vmatprep.subr.mxu0 0.0
      %5676 = vmatpush1.msra.mxu0 %v5647
      %5677 = vmatprep.subr.mxu0 0.0
      %5678 = vmatpush1.msra.mxu0 %v5648
      %5679 = vmatprep.subr.mxu0 0.0
      %5680 = vmatpush1.msra.mxu0 %v5649
      %5681 = vmatprep.subr.mxu0 0.0
      %5682 = vmatpush1.msra.mxu0 %v5650
      %5683 = vmatprep.subr.mxu0 0.0
      %5684 = vmatpush1.msra.mxu0 %v5651
      %5685 = vmatprep.subr.mxu0 0.0
      %5686 = vmatpush1.msra.mxu0 %v5652
      %5687 = vmatprep.subr.mxu0 0.0
      %5688 = vmatpush1.msra.mxu0 0.0
      %5689 = vmatprep.subr.mxu0 0.0
      %5690 = vmatpush1.msra.mxu0 0.0
      %5691 = vmatprep.subr.mxu0 0.0
      %5692 = vmatpush1.msra.mxu0 0.0
      %5693 = vmatprep.subr.mxu0 0.0
      %5694 = vmatpush1.msra.mxu0 0.0
      %5695 = vmatprep.subr.mxu0 0.0
      %5696 = vmatpush1.msra.mxu0 0.0
      %5697 = vmatprep.subr.mxu0 0.0
      %5698 = vmatpush1.msra.mxu0 0.0
      %5699 = vmatprep.subr.mxu0 0.0
      %5700 = vmatpush1.msra.mxu0 0.0
      %5701 = vmatprep.subr.mxu0 0.0
      %5702 = vmatpush1.msra.mxu0 0.0
      %5703 = vmatprep.subr.mxu0 0.0
      %5704 = vmatpush1.msra.mxu0 0.0
      %5705 = vmatprep.subr.mxu0 0.0
      %5706 = vmatpush1.msra.mxu0 0.0
      %5707 = vmatprep.subr.mxu0 0.0
      %5708 = vmatpush1.msra.mxu0 0.0
      %5709 = vmatprep.subr.mxu0 0.0
      %5710 = vmatpush1.msra.mxu0 0.0
      %5711 = vmatprep.subr.mxu0 0.0
      %5712 = vmatpush1.msra.mxu0 0.0
      %5713 = vmatprep.subr.mxu0 0.0
      %5714 = vmatpush1.msra.mxu0 0.0
      %5715 = vmatprep.subr.mxu0 0.0
      %5716 = vmatpush1.msra.mxu0 0.0
      %5717 = vmatprep.subr.mxu0 0.0
      %5718 = vmatpush1.msra.mxu0 0.0
      %5719 = vmatprep.subr.mxu0 0.0
      %5720 = vmatpush1.msra.mxu0 0.0
      %5721 = vmatprep.subr.mxu0 0.0
      %5722 = vmatpush1.msra.mxu0 0.0
      %5723 = vmatprep.subr.mxu0 0.0
      %5724 = vmatpush1.msra.mxu0 0.0
      %5725 = vmatprep.subr.mxu0 0.0
      %5726 = vmatpush1.msra.mxu0 0.0
      %5727 = vmatprep.subr.mxu0 0.0
      %5728 = vmatpush1.msra.mxu0 0.0
      %5729 = vmatprep.subr.mxu0 0.0
      %5730 = vmatpush1.msra.mxu0 0.0
      %5731 = vmatprep.subr.mxu0 0.0
      %5732 = vmatpush1.msra.mxu0 0.0
      %5733 = vmatprep.subr.mxu0 0.0
      %5734 = vmatpush1.msra.mxu0 0.0
      %5735 = vmatprep.mubr.f32.mxu0 0.0
      %5736 = vmatmul.mubr.f32.gmra.mrb[0].mxu0 %v5654
      %v5737 = vpop.f32.mrb[0].mxu0
      %v5738 = vadd.f32 0.0, %v5737
      %v5739 = vpop.f32.mrb[0].mxu0
      %5740 = vmatprep.mubr.f32.mxu0 0.0
      %5741 = vmatmul.mubr.f32.gmra.mrb[0].mxu0 %v5657
      %v5742 = vpop.f32.mrb[0].mxu0
      %v5743 = vadd.f32 0.0, %v5742
      %v5744 = vpop.f32.mrb[0].mxu0
      %5745 = vmatprep.mubr.f32.mxu0 0.0
      %5746 = vmatmul.mubr.f32.gmra.mrb[0].mxu0 %v5660
      %v5747 = vpop.f32.mrb[0].mxu0
      %v5748 = vadd.f32 0.0, %v5747
      %v5749 = vpop.f32.mrb[0].mxu0
      %5750 = vmatprep.mubr.f32.mxu0 0.0
      %5751 = vmatmul.mubr.f32.gmra.mrb[0].mxu0 %v5663
      %v5752 = vpop.f32.mrb[0].mxu0
      %v5753 = vadd.f32 0.0, %v5752
      %v5754 = vpop.f32.mrb[0].mxu0
      %5755 = vmatprep.mubr.f32.mxu0 0.0
      %5756 = vmatmul.mubr.f32.gmra.mrb[0].mxu0 %v5666
      %v5757 = vpop.f32.mrb[0].mxu0
      %v5758 = vadd.f32 0.0, %v5757
      %v5759 = vpop.f32.mrb[0].mxu0
      %5760 = vmatprep.mubr.f32.mxu0 0.0
      %5761 = vmatmul.mubr.f32.gmra.mrb[0].mxu0 %v5669
      %v5762 = vpop.f32.mrb[0].mxu0
      %v5763 = vadd.f32 0.0, %v5762
      %v5764 = vpop.f32.mrb[0].mxu0
      %5765 = vdwg.mxu0
      %v5766 = vadd.f32 %v5632, %v5738
      %v5767 = vadd.f32 %v5633, %v5743
      %v5768 = vadd.f32 %v5634, %v5748
      %v5769 = vadd.f32 %v5635, %v5753
      %v5770 = vadd.f32 %v5636, %v5758
      %v5771 = vadd.f32 %v5637, %v5763
      %v5772 = vld [vmem:[#allocation4 + $0x9] sm:$0xff]
      %v5773 = vld [vmem:[#allocation4 + $0x11] sm:$0xff]
      %v5774 = vld [vmem:[#allocation4 + $0x19] sm:$0xff]
      %v5775 = vld [vmem:[#allocation4 + $0x21] sm:$0xff]
      %v5776 = vld [vmem:[#allocation4 + $0x29] sm:$0xff]
      %v5777 = vld [vmem:[#allocation4 + $0x31] sm:$0xff]
      %s5778 = scalar_lea.vmem %s5, 256
      %v5779 = vld [vmem:[%s5778] sm:$0xff]
      %v5780 = vld [vmem:[%s5778 + $0x8] sm:$0xff]
      %v5781 = vld [vmem:[%s5778 + $0x10] sm:$0xff]
      %v5782 = vld [vmem:[%s5778 + $0x18] sm:$0xff]
      %v5783 = vld [vmem:[%s5778 + $0x20] sm:$0xff]
      %v5784 = vld [vmem:[%s5778 + $0x28] sm:$0xff]
      %v5785 = vld [vmem:[%s5778 + $0x30] sm:$0xff]
      %v5786 = vld [vmem:[%s5778 + $0x38] sm:$0xff]
      %v5788 = vsel %vm1801, %v5772, 0
      %v5791 = vsel %vm1801, %v5773, 0
      %v5794 = vsel %vm1801, %v5774, 0
      %v5797 = vsel %vm1801, %v5775, 0
      %v5800 = vsel %vm1801, %v5776, 0
      %v5803 = vsel %vm1801, %v5777, 0
      %5805 = vmatprep.subr.mxu0 0.0
      %5806 = vmatpush1.msra.mxu0 %v5779
      %5807 = vmatprep.subr.mxu0 0.0
      %5808 = vmatpush1.msra.mxu0 %v5780
      %5809 = vmatprep.subr.mxu0 0.0
      %5810 = vmatpush1.msra.mxu0 %v5781
      %5811 = vmatprep.subr.mxu0 0.0
      %5812 = vmatpush1.msra.mxu0 %v5782
      %5813 = vmatprep.subr.mxu0 0.0
      %5814 = vmatpush1.msra.mxu0 %v5783
      %5815 = vmatprep.subr.mxu0 0.0
      %5816 = vmatpush1.msra.mxu0 %v5784
      %5817 = vmatprep.subr.mxu0 0.0
      %5818 = vmatpush1.msra.mxu0 %v5785
      %5819 = vmatprep.subr.mxu0 0.0
      %5820 = vmatpush1.msra.mxu0 %v5786
      %5821 = vmatprep.subr.mxu0 0.0
      %5822 = vmatpush1.msra.mxu0 0.0
      %5823 = vmatprep.subr.mxu0 0.0
      %5824 = vmatpush1.msra.mxu0 0.0
      %5825 = vmatprep.subr.mxu0 0.0
      %5826 = vmatpush1.msra.mxu0 0.0
      %5827 = vmatprep.subr.mxu0 0.0
      %5828 = vmatpush1.msra.mxu0 0.0
      %5829 = vmatprep.subr.mxu0 0.0
      %5830 = vmatpush1.msra.mxu0 0.0
      %5831 = vmatprep.subr.mxu0 0.0
      %5832 = vmatpush1.msra.mxu0 0.0
      %5833 = vmatprep.subr.mxu0 0.0
      %5834 = vmatpush1.msra.mxu0 0.0
      %5835 = vmatprep.subr.mxu0 0.0
      %5836 = vmatpush1.msra.mxu0 0.0
      %5837 = vmatprep.subr.mxu0 0.0
      %5838 = vmatpush1.msra.mxu0 0.0
      %5839 = vmatprep.subr.mxu0 0.0
      %5840 = vmatpush1.msra.mxu0 0.0
      %5841 = vmatprep.subr.mxu0 0.0
      %5842 = vmatpush1.msra.mxu0 0.0
      %5843 = vmatprep.subr.mxu0 0.0
      %5844 = vmatpush1.msra.mxu0 0.0
      %5845 = vmatprep.subr.mxu0 0.0
      %5846 = vmatpush1.msra.mxu0 0.0
      %5847 = vmatprep.subr.mxu0 0.0
      %5848 = vmatpush1.msra.mxu0 0.0
      %5849 = vmatprep.subr.mxu0 0.0
      %5850 = vmatpush1.msra.mxu0 0.0
      %5851 = vmatprep.subr.mxu0 0.0
      %5852 = vmatpush1.msra.mxu0 0.0
      %5853 = vmatprep.subr.mxu0 0.0
      %5854 = vmatpush1.msra.mxu0 0.0
      %5855 = vmatprep.subr.mxu0 0.0
      %5856 = vmatpush1.msra.mxu0 0.0
      %5857 = vmatprep.subr.mxu0 0.0
      %5858 = vmatpush1.msra.mxu0 0.0
      %5859 = vmatprep.subr.mxu0 0.0
      %5860 = vmatpush1.msra.mxu0 0.0
      %5861 = vmatprep.subr.mxu0 0.0
      %5862 = vmatpush1.msra.mxu0 0.0
      %5863 = vmatprep.subr.mxu0 0.0
      %5864 = vmatpush1.msra.mxu0 0.0
      %5865 = vmatprep.subr.mxu0 0.0
      %5866 = vmatpush1.msra.mxu0 0.0
      %5867 = vmatprep.subr.mxu0 0.0
      %5868 = vmatpush1.msra.mxu0 0.0
      %5869 = vmatprep.mubr.f32.mxu0 0.0
      %5870 = vmatmul.mubr.f32.gmra.mrb[0].mxu0 %v5788
      %v5871 = vpop.f32.mrb[0].mxu0
      %v5872 = vadd.f32 0.0, %v5871
      %v5873 = vpop.f32.mrb[0].mxu0
      %5874 = vmatprep.mubr.f32.mxu0 0.0
      %5875 = vmatmul.mubr.f32.gmra.mrb[0].mxu0 %v5791
      %v5876 = vpop.f32.mrb[0].mxu0
      %v5877 = vadd.f32 0.0, %v5876
      %v5878 = vpop.f32.mrb[0].mxu0
      %5879 = vmatprep.mubr.f32.mxu0 0.0
      %5880 = vmatmul.mubr.f32.gmra.mrb[0].mxu0 %v5794
      %v5881 = vpop.f32.mrb[0].mxu0
      %v5882 = vadd.f32 0.0, %v5881
      %v5883 = vpop.f32.mrb[0].mxu0
      %5884 = vmatprep.mubr.f32.mxu0 0.0
      %5885 = vmatmul.mubr.f32.gmra.mrb[0].mxu0 %v5797
      %v5886 = vpop.f32.mrb[0].mxu0
      %v5887 = vadd.f32 0.0, %v5886
      %v5888 = vpop.f32.mrb[0].mxu0
      %5889 = vmatprep.mubr.f32.mxu0 0.0
      %5890 = vmatmul.mubr.f32.gmra.mrb[0].mxu0 %v5800
      %v5891 = vpop.f32.mrb[0].mxu0
      %v5892 = vadd.f32 0.0, %v5891
      %v5893 = vpop.f32.mrb[0].mxu0
      %5894 = vmatprep.mubr.f32.mxu0 0.0
      %5895 = vmatmul.mubr.f32.gmra.mrb[0].mxu0 %v5803
      %v5896 = vpop.f32.mrb[0].mxu0
      %v5897 = vadd.f32 0.0, %v5896
      %v5898 = vpop.f32.mrb[0].mxu0
      %5899 = vdwg.mxu0
      %v5900 = vadd.f32 %v5766, %v5872
      %v5901 = vadd.f32 %v5767, %v5877
      %v5902 = vadd.f32 %v5768, %v5882
      %v5903 = vadd.f32 %v5769, %v5887
      %v5904 = vadd.f32 %v5770, %v5892
      %v5905 = vadd.f32 %v5771, %v5897
      %v5906 = vld [vmem:[#allocation4 + $0xa] sm:$0xff]
      %v5907 = vld [vmem:[#allocation4 + $0x12] sm:$0xff]
      %v5908 = vld [vmem:[#allocation4 + $0x1a] sm:$0xff]
      %v5909 = vld [vmem:[#allocation4 + $0x22] sm:$0xff]
      %v5910 = vld [vmem:[#allocation4 + $0x2a] sm:$0xff]
      %v5911 = vld [vmem:[#allocation4 + $0x32] sm:$0xff]
      %s5912 = scalar_lea.vmem %s5, 320
      %v5913 = vld [vmem:[%s5912] sm:$0xff]
      %v5914 = vld [vmem:[%s5912 + $0x8] sm:$0xff]
      %v5915 = vld [vmem:[%s5912 + $0x10] sm:$0xff]
      %v5916 = vld [vmem:[%s5912 + $0x18] sm:$0xff]
      %v5917 = vld [vmem:[%s5912 + $0x20] sm:$0xff]
      %v5918 = vld [vmem:[%s5912 + $0x28] sm:$0xff]
      %v5919 = vld [vmem:[%s5912 + $0x30] sm:$0xff]
      %v5920 = vld [vmem:[%s5912 + $0x38] sm:$0xff]
      %v5922 = vsel %vm1801, %v5906, 0
      %v5925 = vsel %vm1801, %v5907, 0
      %v5928 = vsel %vm1801, %v5908, 0
      %v5931 = vsel %vm1801, %v5909, 0
      %v5934 = vsel %vm1801, %v5910, 0
      %v5937 = vsel %vm1801, %v5911, 0
      %5939 = vmatprep.subr.mxu0 0.0
      %5940 = vmatpush1.msra.mxu0 %v5913
      %5941 = vmatprep.subr.mxu0 0.0
      %5942 = vmatpush1.msra.mxu0 %v5914
      %5943 = vmatprep.subr.mxu0 0.0
      %5944 = vmatpush1.msra.mxu0 %v5915
      %5945 = vmatprep.subr.mxu0 0.0
      %5946 = vmatpush1.msra.mxu0 %v5916
      %5947 = vmatprep.subr.mxu0 0.0
      %5948 = vmatpush1.msra.mxu0 %v5917
      %5949 = vmatprep.subr.mxu0 0.0
      %5950 = vmatpush1.msra.mxu0 %v5918
      %5951 = vmatprep.subr.mxu0 0.0
      %5952 = vmatpush1.msra.mxu0 %v5919
      %5953 = vmatprep.subr.mxu0 0.0
      %5954 = vmatpush1.msra.mxu0 %v5920
      %5955 = vmatprep.subr.mxu0 0.0
      %5956 = vmatpush1.msra.mxu0 0.0
      %5957 = vmatprep.subr.mxu0 0.0
      %5958 = vmatpush1.msra.mxu0 0.0
      %5959 = vmatprep.subr.mxu0 0.0
      %5960 = vmatpush1.msra.mxu0 0.0
      %5961 = vmatprep.subr.mxu0 0.0
      %5962 = vmatpush1.msra.mxu0 0.0
      %5963 = vmatprep.subr.mxu0 0.0
      %5964 = vmatpush1.msra.mxu0 0.0
      %5965 = vmatprep.subr.mxu0 0.0
      %5966 = vmatpush1.msra.mxu0 0.0
      %5967 = vmatprep.subr.mxu0 0.0
      %5968 = vmatpush1.msra.mxu0 0.0
      %5969 = vmatprep.subr.mxu0 0.0
      %5970 = vmatpush1.msra.mxu0 0.0
      %5971 = vmatprep.subr.mxu0 0.0
      %5972 = vmatpush1.msra.mxu0 0.0
      %5973 = vmatprep.subr.mxu0 0.0
      %5974 = vmatpush1.msra.mxu0 0.0
      %5975 = vmatprep.subr.mxu0 0.0
      %5976 = vmatpush1.msra.mxu0 0.0
      %5977 = vmatprep.subr.mxu0 0.0
      %5978 = vmatpush1.msra.mxu0 0.0
      %5979 = vmatprep.subr.mxu0 0.0
      %5980 = vmatpush1.msra.mxu0 0.0
      %5981 = vmatprep.subr.mxu0 0.0
      %5982 = vmatpush1.msra.mxu0 0.0
      %5983 = vmatprep.subr.mxu0 0.0
      %5984 = vmatpush1.msra.mxu0 0.0
      %5985 = vmatprep.subr.mxu0 0.0
      %5986 = vmatpush1.msra.mxu0 0.0
      %5987 = vmatprep.subr.mxu0 0.0
      %5988 = vmatpush1.msra.mxu0 0.0
      %5989 = vmatprep.subr.mxu0 0.0
      %5990 = vmatpush1.msra.mxu0 0.0
      %5991 = vmatprep.subr.mxu0 0.0
      %5992 = vmatpush1.msra.mxu0 0.0
      %5993 = vmatprep.subr.mxu0 0.0
      %5994 = vmatpush1.msra.mxu0 0.0
      %5995 = vmatprep.subr.mxu0 0.0
      %5996 = vmatpush1.msra.mxu0 0.0
      %5997 = vmatprep.subr.mxu0 0.0
      %5998 = vmatpush1.msra.mxu0 0.0
      %5999 = vmatprep.subr.mxu0 0.0
      %6000 = vmatpush1.msra.mxu0 0.0
      %6001 = vmatprep.subr.mxu0 0.0
      %6002 = vmatpush1.msra.mxu0 0.0
      %6003 = vmatprep.mubr.f32.mxu0 0.0
      %6004 = vmatmul.mubr.f32.gmra.mrb[0].mxu0 %v5922
      %v6005 = vpop.f32.mrb[0].mxu0
      %v6006 = vadd.f32 0.0, %v6005
      %v6007 = vpop.f32.mrb[0].mxu0
      %6008 = vmatprep.mubr.f32.mxu0 0.0
      %6009 = vmatmul.mubr.f32.gmra.mrb[0].mxu0 %v5925
      %v6010 = vpop.f32.mrb[0].mxu0
      %v6011 = vadd.f32 0.0, %v6010
      %v6012 = vpop.f32.mrb[0].mxu0
      %6013 = vmatprep.mubr.f32.mxu0 0.0
      %6014 = vmatmul.mubr.f32.gmra.mrb[0].mxu0 %v5928
      %v6015 = vpop.f32.mrb[0].mxu0
      %v6016 = vadd.f32 0.0, %v6015
      %v6017 = vpop.f32.mrb[0].mxu0
      %6018 = vmatprep.mubr.f32.mxu0 0.0
      %6019 = vmatmul.mubr.f32.gmra.mrb[0].mxu0 %v5931
      %v6020 = vpop.f32.mrb[0].mxu0
      %v6021 = vadd.f32 0.0, %v6020
      %v6022 = vpop.f32.mrb[0].mxu0
      %6023 = vmatprep.mubr.f32.mxu0 0.0
      %6024 = vmatmul.mubr.f32.gmra.mrb[0].mxu0 %v5934
      %v6025 = vpop.f32.mrb[0].mxu0
      %v6026 = vadd.f32 0.0, %v6025
      %v6027 = vpop.f32.mrb[0].mxu0
      %6028 = vmatprep.mubr.f32.mxu0 0.0
      %6029 = vmatmul.mubr.f32.gmra.mrb[0].mxu0 %v5937
      %v6030 = vpop.f32.mrb[0].mxu0
      %v6031 = vadd.f32 0.0, %v6030
      %v6032 = vpop.f32.mrb[0].mxu0
      %6033 = vdwg.mxu0
      %v6034 = vadd.f32 %v5900, %v6006
      %v6035 = vadd.f32 %v5901, %v6011
      %v6036 = vadd.f32 %v5902, %v6016
      %v6037 = vadd.f32 %v5903, %v6021
      %v6038 = vadd.f32 %v5904, %v6026
      %v6039 = vadd.f32 %v5905, %v6031
      %v6040 = vld [vmem:[#allocation4 + $0x10] sm:$0xff]
      %v6041 = vld [vmem:[#allocation4 + $0x18] sm:$0xff]
      %v6042 = vld [vmem:[#allocation4 + $0x20] sm:$0xff]
      %v6043 = vld [vmem:[#allocation4 + $0x28] sm:$0xff]
      %v6044 = vld [vmem:[#allocation4 + $0x30] sm:$0xff]
      %v6045 = vld [vmem:[#allocation4 + $0x38] sm:$0xff]
      %s6046 = scalar_lea.vmem %s5, 384
      %v6047 = vld [vmem:[%s6046] sm:$0xff]
      %v6048 = vld [vmem:[%s6046 + $0x8] sm:$0xff]
      %v6049 = vld [vmem:[%s6046 + $0x10] sm:$0xff]
      %v6050 = vld [vmem:[%s6046 + $0x18] sm:$0xff]
      %v6051 = vld [vmem:[%s6046 + $0x20] sm:$0xff]
      %v6052 = vld [vmem:[%s6046 + $0x28] sm:$0xff]
      %v6053 = vld [vmem:[%s6046 + $0x30] sm:$0xff]
      %v6054 = vld [vmem:[%s6046 + $0x38] sm:$0xff]
      %v6056 = vsel %vm1801, %v6040, 0
      %v6059 = vsel %vm1801, %v6041, 0
      %v6062 = vsel %vm1801, %v6042, 0
      %v6065 = vsel %vm1801, %v6043, 0
      %v6068 = vsel %vm1801, %v6044, 0
      %v6071 = vsel %vm1801, %v6045, 0
      %6073 = vmatprep.subr.mxu0 0.0
      %6074 = vmatpush1.msra.mxu0 %v6047
      %6075 = vmatprep.subr.mxu0 0.0
      %6076 = vmatpush1.msra.mxu0 %v6048
      %6077 = vmatprep.subr.mxu0 0.0
      %6078 = vmatpush1.msra.mxu0 %v6049
      %6079 = vmatprep.subr.mxu0 0.0
      %6080 = vmatpush1.msra.mxu0 %v6050
      %6081 = vmatprep.subr.mxu0 0.0
      %6082 = vmatpush1.msra.mxu0 %v6051
      %6083 = vmatprep.subr.mxu0 0.0
      %6084 = vmatpush1.msra.mxu0 %v6052
      %6085 = vmatprep.subr.mxu0 0.0
      %6086 = vmatpush1.msra.mxu0 %v6053
      %6087 = vmatprep.subr.mxu0 0.0
      %6088 = vmatpush1.msra.mxu0 %v6054
      %6089 = vmatprep.subr.mxu0 0.0
      %6090 = vmatpush1.msra.mxu0 0.0
      %6091 = vmatprep.subr.mxu0 0.0
      %6092 = vmatpush1.msra.mxu0 0.0
      %6093 = vmatprep.subr.mxu0 0.0
      %6094 = vmatpush1.msra.mxu0 0.0
      %6095 = vmatprep.subr.mxu0 0.0
      %6096 = vmatpush1.msra.mxu0 0.0
      %6097 = vmatprep.subr.mxu0 0.0
      %6098 = vmatpush1.msra.mxu0 0.0
      %6099 = vmatprep.subr.mxu0 0.0
      %6100 = vmatpush1.msra.mxu0 0.0
      %6101 = vmatprep.subr.mxu0 0.0
      %6102 = vmatpush1.msra.mxu0 0.0
      %6103 = vmatprep.subr.mxu0 0.0
      %6104 = vmatpush1.msra.mxu0 0.0
      %6105 = vmatprep.subr.mxu0 0.0
      %6106 = vmatpush1.msra.mxu0 0.0
      %6107 = vmatprep.subr.mxu0 0.0
      %6108 = vmatpush1.msra.mxu0 0.0
      %6109 = vmatprep.subr.mxu0 0.0
      %6110 = vmatpush1.msra.mxu0 0.0
      %6111 = vmatprep.subr.mxu0 0.0
      %6112 = vmatpush1.msra.mxu0 0.0
      %6113 = vmatprep.subr.mxu0 0.0
      %6114 = vmatpush1.msra.mxu0 0.0
      %6115 = vmatprep.subr.mxu0 0.0
      %6116 = vmatpush1.msra.mxu0 0.0
      %6117 = vmatprep.subr.mxu0 0.0
      %6118 = vmatpush1.msra.mxu0 0.0
      %6119 = vmatprep.subr.mxu0 0.0
      %6120 = vmatpush1.msra.mxu0 0.0
      %6121 = vmatprep.subr.mxu0 0.0
      %6122 = vmatpush1.msra.mxu0 0.0
      %6123 = vmatprep.subr.mxu0 0.0
      %6124 = vmatpush1.msra.mxu0 0.0
      %6125 = vmatprep.subr.mxu0 0.0
      %6126 = vmatpush1.msra.mxu0 0.0
      %6127 = vmatprep.subr.mxu0 0.0
      %6128 = vmatpush1.msra.mxu0 0.0
      %6129 = vmatprep.subr.mxu0 0.0
      %6130 = vmatpush1.msra.mxu0 0.0
      %6131 = vmatprep.subr.mxu0 0.0
      %6132 = vmatpush1.msra.mxu0 0.0
      %6133 = vmatprep.subr.mxu0 0.0
      %6134 = vmatpush1.msra.mxu0 0.0
      %6135 = vmatprep.subr.mxu0 0.0
      %6136 = vmatpush1.msra.mxu0 0.0
      %6137 = vmatprep.mubr.f32.mxu0 0.0
      %6138 = vmatmul.mubr.f32.gmra.mrb[0].mxu0 %v6056
      %v6139 = vpop.f32.mrb[0].mxu0
      %v6140 = vadd.f32 0.0, %v6139
      %v6141 = vpop.f32.mrb[0].mxu0
      %6142 = vmatprep.mubr.f32.mxu0 0.0
      %6143 = vmatmul.mubr.f32.gmra.mrb[0].mxu0 %v6059
      %v6144 = vpop.f32.mrb[0].mxu0
      %v6145 = vadd.f32 0.0, %v6144
      %v6146 = vpop.f32.mrb[0].mxu0
      %6147 = vmatprep.mubr.f32.mxu0 0.0
      %6148 = vmatmul.mubr.f32.gmra.mrb[0].mxu0 %v6062
      %v6149 = vpop.f32.mrb[0].mxu0
      %v6150 = vadd.f32 0.0, %v6149
      %v6151 = vpop.f32.mrb[0].mxu0
      %6152 = vmatprep.mubr.f32.mxu0 0.0
      %6153 = vmatmul.mubr.f32.gmra.mrb[0].mxu0 %v6065
      %v6154 = vpop.f32.mrb[0].mxu0
      %v6155 = vadd.f32 0.0, %v6154
      %v6156 = vpop.f32.mrb[0].mxu0
      %6157 = vmatprep.mubr.f32.mxu0 0.0
      %6158 = vmatmul.mubr.f32.gmra.mrb[0].mxu0 %v6068
      %v6159 = vpop.f32.mrb[0].mxu0
      %v6160 = vadd.f32 0.0, %v6159
      %v6161 = vpop.f32.mrb[0].mxu0
      %6162 = vmatprep.mubr.f32.mxu0 0.0
      %6163 = vmatmul.mubr.f32.gmra.mrb[0].mxu0 %v6071
      %v6164 = vpop.f32.mrb[0].mxu0
      %v6165 = vadd.f32 0.0, %v6164
      %v6166 = vpop.f32.mrb[0].mxu0
      %6167 = vdwg.mxu0
      %v6168 = vadd.f32 %v6034, %v6140
      %v6169 = vadd.f32 %v6035, %v6145
      %v6170 = vadd.f32 %v6036, %v6150
      %v6171 = vadd.f32 %v6037, %v6155
      %v6172 = vadd.f32 %v6038, %v6160
      %v6173 = vadd.f32 %v6039, %v6165
      %v6174 = vld [vmem:[#allocation4 + $0x11] sm:$0xff]
      %v6175 = vld [vmem:[#allocation4 + $0x19] sm:$0xff]
      %v6176 = vld [vmem:[#allocation4 + $0x21] sm:$0xff]
      %v6177 = vld [vmem:[#allocation4 + $0x29] sm:$0xff]
      %v6178 = vld [vmem:[#allocation4 + $0x31] sm:$0xff]
      %v6179 = vld [vmem:[#allocation4 + $0x39] sm:$0xff]
      %s6180 = scalar_lea.vmem %s5, 448
      %v6181 = vld [vmem:[%s6180] sm:$0xff]
      %v6182 = vld [vmem:[%s6180 + $0x8] sm:$0xff]
      %v6183 = vld [vmem:[%s6180 + $0x10] sm:$0xff]
      %v6184 = vld [vmem:[%s6180 + $0x18] sm:$0xff]
      %v6185 = vld [vmem:[%s6180 + $0x20] sm:$0xff]
      %v6186 = vld [vmem:[%s6180 + $0x28] sm:$0xff]
      %v6187 = vld [vmem:[%s6180 + $0x30] sm:$0xff]
      %v6188 = vld [vmem:[%s6180 + $0x38] sm:$0xff]
      %v6190 = vsel %vm1801, %v6174, 0
      %v6193 = vsel %vm1801, %v6175, 0
      %v6196 = vsel %vm1801, %v6176, 0
      %v6199 = vsel %vm1801, %v6177, 0
      %v6202 = vsel %vm1801, %v6178, 0
      %v6205 = vsel %vm1801, %v6179, 0
      %6207 = vmatprep.subr.mxu0 0.0
      %6208 = vmatpush1.msra.mxu0 %v6181
      %6209 = vmatprep.subr.mxu0 0.0
      %6210 = vmatpush1.msra.mxu0 %v6182
      %6211 = vmatprep.subr.mxu0 0.0
      %6212 = vmatpush1.msra.mxu0 %v6183
      %6213 = vmatprep.subr.mxu0 0.0
      %6214 = vmatpush1.msra.mxu0 %v6184
      %6215 = vmatprep.subr.mxu0 0.0
      %6216 = vmatpush1.msra.mxu0 %v6185
      %6217 = vmatprep.subr.mxu0 0.0
      %6218 = vmatpush1.msra.mxu0 %v6186
      %6219 = vmatprep.subr.mxu0 0.0
      %6220 = vmatpush1.msra.mxu0 %v6187
      %6221 = vmatprep.subr.mxu0 0.0
      %6222 = vmatpush1.msra.mxu0 %v6188
      %6223 = vmatprep.subr.mxu0 0.0
      %6224 = vmatpush1.msra.mxu0 0.0
      %6225 = vmatprep.subr.mxu0 0.0
      %6226 = vmatpush1.msra.mxu0 0.0
      %6227 = vmatprep.subr.mxu0 0.0
      %6228 = vmatpush1.msra.mxu0 0.0
      %6229 = vmatprep.subr.mxu0 0.0
      %6230 = vmatpush1.msra.mxu0 0.0
      %6231 = vmatprep.subr.mxu0 0.0
      %6232 = vmatpush1.msra.mxu0 0.0
      %6233 = vmatprep.subr.mxu0 0.0
      %6234 = vmatpush1.msra.mxu0 0.0
      %6235 = vmatprep.subr.mxu0 0.0
      %6236 = vmatpush1.msra.mxu0 0.0
      %6237 = vmatprep.subr.mxu0 0.0
      %6238 = vmatpush1.msra.mxu0 0.0
      %6239 = vmatprep.subr.mxu0 0.0
      %6240 = vmatpush1.msra.mxu0 0.0
      %6241 = vmatprep.subr.mxu0 0.0
      %6242 = vmatpush1.msra.mxu0 0.0
      %6243 = vmatprep.subr.mxu0 0.0
      %6244 = vmatpush1.msra.mxu0 0.0
      %6245 = vmatprep.subr.mxu0 0.0
      %6246 = vmatpush1.msra.mxu0 0.0
      %6247 = vmatprep.subr.mxu0 0.0
      %6248 = vmatpush1.msra.mxu0 0.0
      %6249 = vmatprep.subr.mxu0 0.0
      %6250 = vmatpush1.msra.mxu0 0.0
      %6251 = vmatprep.subr.mxu0 0.0
      %6252 = vmatpush1.msra.mxu0 0.0
      %6253 = vmatprep.subr.mxu0 0.0
      %6254 = vmatpush1.msra.mxu0 0.0
      %6255 = vmatprep.subr.mxu0 0.0
      %6256 = vmatpush1.msra.mxu0 0.0
      %6257 = vmatprep.subr.mxu0 0.0
      %6258 = vmatpush1.msra.mxu0 0.0
      %6259 = vmatprep.subr.mxu0 0.0
      %6260 = vmatpush1.msra.mxu0 0.0
      %6261 = vmatprep.subr.mxu0 0.0
      %6262 = vmatpush1.msra.mxu0 0.0
      %6263 = vmatprep.subr.mxu0 0.0
      %6264 = vmatpush1.msra.mxu0 0.0
      %6265 = vmatprep.subr.mxu0 0.0
      %6266 = vmatpush1.msra.mxu0 0.0
      %6267 = vmatprep.subr.mxu0 0.0
      %6268 = vmatpush1.msra.mxu0 0.0
      %6269 = vmatprep.subr.mxu0 0.0
      %6270 = vmatpush1.msra.mxu0 0.0
      %6271 = vmatprep.mubr.f32.mxu0 0.0
      %6272 = vmatmul.mubr.f32.gmra.mrb[0].mxu0 %v6190
      %v6273 = vpop.f32.mrb[0].mxu0
      %v6274 = vadd.f32 0.0, %v6273
      %v6275 = vpop.f32.mrb[0].mxu0
      %6276 = vmatprep.mubr.f32.mxu0 0.0
      %6277 = vmatmul.mubr.f32.gmra.mrb[0].mxu0 %v6193
      %v6278 = vpop.f32.mrb[0].mxu0
      %v6279 = vadd.f32 0.0, %v6278
      %v6280 = vpop.f32.mrb[0].mxu0
      %6281 = vmatprep.mubr.f32.mxu0 0.0
      %6282 = vmatmul.mubr.f32.gmra.mrb[0].mxu0 %v6196
      %v6283 = vpop.f32.mrb[0].mxu0
      %v6284 = vadd.f32 0.0, %v6283
      %v6285 = vpop.f32.mrb[0].mxu0
      %6286 = vmatprep.mubr.f32.mxu0 0.0
      %6287 = vmatmul.mubr.f32.gmra.mrb[0].mxu0 %v6199
      %v6288 = vpop.f32.mrb[0].mxu0
      %v6289 = vadd.f32 0.0, %v6288
      %v6290 = vpop.f32.mrb[0].mxu0
      %6291 = vmatprep.mubr.f32.mxu0 0.0
      %6292 = vmatmul.mubr.f32.gmra.mrb[0].mxu0 %v6202
      %v6293 = vpop.f32.mrb[0].mxu0
      %v6294 = vadd.f32 0.0, %v6293
      %v6295 = vpop.f32.mrb[0].mxu0
      %6296 = vmatprep.mubr.f32.mxu0 0.0
      %6297 = vmatmul.mubr.f32.gmra.mrb[0].mxu0 %v6205
      %v6298 = vpop.f32.mrb[0].mxu0
      %v6299 = vadd.f32 0.0, %v6298
      %v6300 = vpop.f32.mrb[0].mxu0
      %6301 = vdwg.mxu0
      %v6302 = vadd.f32 %v6168, %v6274
      %v6303 = vadd.f32 %v6169, %v6279
      %v6304 = vadd.f32 %v6170, %v6284
      %v6305 = vadd.f32 %v6171, %v6289
      %v6306 = vadd.f32 %v6172, %v6294
      %v6307 = vadd.f32 %v6173, %v6299
      %v6308 = vld [vmem:[#allocation4 + $0x12] sm:$0xff]
      %v6309 = vld [vmem:[#allocation4 + $0x1a] sm:$0xff]
      %v6310 = vld [vmem:[#allocation4 + $0x22] sm:$0xff]
      %v6311 = vld [vmem:[#allocation4 + $0x2a] sm:$0xff]
      %v6312 = vld [vmem:[#allocation4 + $0x32] sm:$0xff]
      %v6313 = vld [vmem:[#allocation4 + $0x3a] sm:$0xff]
      %s6314 = scalar_lea.vmem %s5, 512
      %v6315 = vld [vmem:[%s6314] sm:$0xff]
      %v6316 = vld [vmem:[%s6314 + $0x8] sm:$0xff]
      %v6317 = vld [vmem:[%s6314 + $0x10] sm:$0xff]
      %v6318 = vld [vmem:[%s6314 + $0x18] sm:$0xff]
      %v6319 = vld [vmem:[%s6314 + $0x20] sm:$0xff]
      %v6320 = vld [vmem:[%s6314 + $0x28] sm:$0xff]
      %v6321 = vld [vmem:[%s6314 + $0x30] sm:$0xff]
      %v6322 = vld [vmem:[%s6314 + $0x38] sm:$0xff]
      %v6324 = vsel %vm1801, %v6308, 0
      %v6327 = vsel %vm1801, %v6309, 0
      %v6330 = vsel %vm1801, %v6310, 0
      %v6333 = vsel %vm1801, %v6311, 0
      %v6336 = vsel %vm1801, %v6312, 0
      %v6339 = vsel %vm1801, %v6313, 0
      %6341 = vmatprep.subr.mxu0 0.0
      %6342 = vmatpush1.msra.mxu0 %v6315
      %6343 = vmatprep.subr.mxu0 0.0
      %6344 = vmatpush1.msra.mxu0 %v6316
      %6345 = vmatprep.subr.mxu0 0.0
      %6346 = vmatpush1.msra.mxu0 %v6317
      %6347 = vmatprep.subr.mxu0 0.0
      %6348 = vmatpush1.msra.mxu0 %v6318
      %6349 = vmatprep.subr.mxu0 0.0
      %6350 = vmatpush1.msra.mxu0 %v6319
      %6351 = vmatprep.subr.mxu0 0.0
      %6352 = vmatpush1.msra.mxu0 %v6320
      %6353 = vmatprep.subr.mxu0 0.0
      %6354 = vmatpush1.msra.mxu0 %v6321
      %6355 = vmatprep.subr.mxu0 0.0
      %6356 = vmatpush1.msra.mxu0 %v6322
      %6357 = vmatprep.subr.mxu0 0.0
      %6358 = vmatpush1.msra.mxu0 0.0
      %6359 = vmatprep.subr.mxu0 0.0
      %6360 = vmatpush1.msra.mxu0 0.0
      %6361 = vmatprep.subr.mxu0 0.0
      %6362 = vmatpush1.msra.mxu0 0.0
      %6363 = vmatprep.subr.mxu0 0.0
      %6364 = vmatpush1.msra.mxu0 0.0
      %6365 = vmatprep.subr.mxu0 0.0
      %6366 = vmatpush1.msra.mxu0 0.0
      %6367 = vmatprep.subr.mxu0 0.0
      %6368 = vmatpush1.msra.mxu0 0.0
      %6369 = vmatprep.subr.mxu0 0.0
      %6370 = vmatpush1.msra.mxu0 0.0
      %6371 = vmatprep.subr.mxu0 0.0
      %6372 = vmatpush1.msra.mxu0 0.0
      %6373 = vmatprep.subr.mxu0 0.0
      %6374 = vmatpush1.msra.mxu0 0.0
      %6375 = vmatprep.subr.mxu0 0.0
      %6376 = vmatpush1.msra.mxu0 0.0
      %6377 = vmatprep.subr.mxu0 0.0
      %6378 = vmatpush1.msra.mxu0 0.0
      %6379 = vmatprep.subr.mxu0 0.0
      %6380 = vmatpush1.msra.mxu0 0.0
      %6381 = vmatprep.subr.mxu0 0.0
      %6382 = vmatpush1.msra.mxu0 0.0
      %6383 = vmatprep.subr.mxu0 0.0
      %6384 = vmatpush1.msra.mxu0 0.0
      %6385 = vmatprep.subr.mxu0 0.0
      %6386 = vmatpush1.msra.mxu0 0.0
      %6387 = vmatprep.subr.mxu0 0.0
      %6388 = vmatpush1.msra.mxu0 0.0
      %6389 = vmatprep.subr.mxu0 0.0
      %6390 = vmatpush1.msra.mxu0 0.0
      %6391 = vmatprep.subr.mxu0 0.0
      %6392 = vmatpush1.msra.mxu0 0.0
      %6393 = vmatprep.subr.mxu0 0.0
      %6394 = vmatpush1.msra.mxu0 0.0
      %6395 = vmatprep.subr.mxu0 0.0
      %6396 = vmatpush1.msra.mxu0 0.0
      %6397 = vmatprep.subr.mxu0 0.0
      %6398 = vmatpush1.msra.mxu0 0.0
      %6399 = vmatprep.subr.mxu0 0.0
      %6400 = vmatpush1.msra.mxu0 0.0
      %6401 = vmatprep.subr.mxu0 0.0
      %6402 = vmatpush1.msra.mxu0 0.0
      %6403 = vmatprep.subr.mxu0 0.0
      %6404 = vmatpush1.msra.mxu0 0.0
      %6405 = vmatprep.mubr.f32.mxu0 0.0
      %6406 = vmatmul.mubr.f32.gmra.mrb[0].mxu0 %v6324
      %v6407 = vpop.f32.mrb[0].mxu0
      %v6408 = vadd.f32 0.0, %v6407
      %v6409 = vpop.f32.mrb[0].mxu0
      %6410 = vmatprep.mubr.f32.mxu0 0.0
      %6411 = vmatmul.mubr.f32.gmra.mrb[0].mxu0 %v6327
      %v6412 = vpop.f32.mrb[0].mxu0
      %v6413 = vadd.f32 0.0, %v6412
      %v6414 = vpop.f32.mrb[0].mxu0
      %6415 = vmatprep.mubr.f32.mxu0 0.0
      %6416 = vmatmul.mubr.f32.gmra.mrb[0].mxu0 %v6330
      %v6417 = vpop.f32.mrb[0].mxu0
      %v6418 = vadd.f32 0.0, %v6417
      %v6419 = vpop.f32.mrb[0].mxu0
      %6420 = vmatprep.mubr.f32.mxu0 0.0
      %6421 = vmatmul.mubr.f32.gmra.mrb[0].mxu0 %v6333
      %v6422 = vpop.f32.mrb[0].mxu0
      %v6423 = vadd.f32 0.0, %v6422
      %v6424 = vpop.f32.mrb[0].mxu0
      %6425 = vmatprep.mubr.f32.mxu0 0.0
      %6426 = vmatmul.mubr.f32.gmra.mrb[0].mxu0 %v6336
      %v6427 = vpop.f32.mrb[0].mxu0
      %v6428 = vadd.f32 0.0, %v6427
      %v6429 = vpop.f32.mrb[0].mxu0
      %6430 = vmatprep.mubr.f32.mxu0 0.0
      %6431 = vmatmul.mubr.f32.gmra.mrb[0].mxu0 %v6339
      %v6432 = vpop.f32.mrb[0].mxu0
      %v6433 = vadd.f32 0.0, %v6432
      %v6434 = vpop.f32.mrb[0].mxu0
      %6435 = vdwg.mxu0
      %v6436 = vadd.f32 %v6302, %v6408
      %v6437 = vadd.f32 %v6303, %v6413
      %v6438 = vadd.f32 %v6304, %v6418
      %v6439 = vadd.f32 %v6305, %v6423
      %v6440 = vadd.f32 %v6306, %v6428
      %v6441 = vadd.f32 %v6307, %v6433
      %v6442 = vld [vmem:[%s6] sm:$0x1]
      %v6444 = vlaneseq
      %v6445 = vshrl.u32 %v6444, 7
      %v6446 = vsub.s32 0, %v6445
      %v6447 = vrot.slane %v6442, %v6446
      %v6449 = vadd.f32 %v6436, %v6447
      %v6450 = vadd.f32 %v6437, %v6447
      %v6451 = vadd.f32 %v6438, %v6447
      %v6452 = vadd.f32 %v6439, %v6447
      %v6453 = vadd.f32 %v6440, %v6447
      %v6454 = vadd.f32 %v6441, %v6447
      %v6455 = vmax.f32 %v6449, 0.0
      %v6456 = vmax.f32 %v6450, 0.0
      %v6457 = vmax.f32 %v6451, 0.0
      %v6458 = vmax.f32 %v6452, 0.0
      %v6459 = vmax.f32 %v6453, 0.0
      %v6460 = vmax.f32 %v6454, 0.0
      %6461 = vst.msk [vmem:[#allocation5] sm:$0xff] %vm1801, 0.0
      %6462 = vst.msk [vmem:[#allocation5 + $0x8] sm:$0xff] %vm1801, 0.0
      %6463 = vst.msk [vmem:[#allocation5 + $0x10] sm:$0xff] %vm1801, 0.0
      %6464 = vst.msk [vmem:[#allocation5 + $0x18] sm:$0xff] %vm1801, 0.0
      %6465 = vst.msk [vmem:[#allocation5 + $0x20] sm:$0xff] %vm1801, 0.0
      %6466 = vst.msk [vmem:[#allocation5 + $0x28] sm:$0xff] %vm1801, 0.0
      %6467 = vst.msk [vmem:[#allocation5 + $0x30] sm:$0xff] %vm1801, 0.0
      %6468 = vst.msk [vmem:[#allocation5 + $0x38] sm:$0xff] %vm1801, 0.0
      %6469 = vst.msk [vmem:[#allocation5 + $0x40] sm:$0xff] %vm1801, 0.0
      %6470 = vst.msk [vmem:[#allocation5 + $0x9] sm:$0x3f] %vm5177, %v6455
      %6471 = vst.msk [vmem:[#allocation5 + $0x11] sm:$0x3f] %vm5177, %v6456
      %6472 = vst.msk [vmem:[#allocation5 + $0x19] sm:$0x3f] %vm5177, %v6457
      %6473 = vst.msk [vmem:[#allocation5 + $0x21] sm:$0x3f] %vm5177, %v6458
      %6474 = vst.msk [vmem:[#allocation5 + $0x29] sm:$0x3f] %vm5177, %v6459
      %6475 = vst.msk [vmem:[#allocation5 + $0x31] sm:$0x3f] %vm5177, %v6460
      %v6476 = vld [vmem:[#allocation5] sm:$0xff]
      %v6477 = vld [vmem:[#allocation5 + $0x8] sm:$0xff]
      %v6478 = vld [vmem:[#allocation5 + $0x10] sm:$0xff]
      %v6479 = vld [vmem:[#allocation5 + $0x18] sm:$0xff]
      %v6480 = vld [vmem:[#allocation5 + $0x20] sm:$0xff]
      %v6481 = vld [vmem:[#allocation5 + $0x28] sm:$0xff]
      %v6482 = vld [vmem:[%s7] sm:$0xff]
      %v6483 = vld [vmem:[%s7 + $0x8] sm:$0xff]
      %v6484 = vld [vmem:[%s7 + $0x10] sm:$0xff]
      %v6485 = vld [vmem:[%s7 + $0x18] sm:$0xff]
      %v6486 = vld [vmem:[%s7 + $0x20] sm:$0xff]
      %v6487 = vld [vmem:[%s7 + $0x28] sm:$0xff]
      %v6488 = vld [vmem:[%s7 + $0x30] sm:$0xff]
      %v6489 = vld [vmem:[%s7 + $0x38] sm:$0xff]
      %v6490 = vld [vmem:[#allocation5 + $0x1] sm:$0xff]
      %v6491 = vld [vmem:[#allocation5 + $0x9] sm:$0xff]
      %v6492 = vld [vmem:[#allocation5 + $0x11] sm:$0xff]
      %v6493 = vld [vmem:[#allocation5 + $0x19] sm:$0xff]
      %v6494 = vld [vmem:[#allocation5 + $0x21] sm:$0xff]
      %v6495 = vld [vmem:[#allocation5 + $0x29] sm:$0xff]
      %s6496 = scalar_lea.vmem %s7, 64
      %v6497 = vld [vmem:[%s6496] sm:$0xff]
      %v6498 = vld [vmem:[%s6496 + $0x8] sm:$0xff]
      %v6499 = vld [vmem:[%s6496 + $0x10] sm:$0xff]
      %v6500 = vld [vmem:[%s6496 + $0x18] sm:$0xff]
      %v6501 = vld [vmem:[%s6496 + $0x20] sm:$0xff]
      %v6502 = vld [vmem:[%s6496 + $0x28] sm:$0xff]
      %v6503 = vld [vmem:[%s6496 + $0x30] sm:$0xff]
      %v6504 = vld [vmem:[%s6496 + $0x38] sm:$0xff]
      %v6506 = vsel %vm1801, %v6490, 0
      %v6509 = vsel %vm1801, %v6491, 0
      %v6512 = vsel %vm1801, %v6492, 0
      %v6515 = vsel %vm1801, %v6493, 0
      %v6518 = vsel %vm1801, %v6494, 0
      %v6521 = vsel %vm1801, %v6495, 0
      %6523 = vmatprep.subr.mxu0 0.0
      %6524 = vmatpush1.msra.mxu0 %v6497
      %6525 = vmatprep.subr.mxu0 0.0
      %6526 = vmatpush1.msra.mxu0 %v6498
      %6527 = vmatprep.subr.mxu0 0.0
      %6528 = vmatpush1.msra.mxu0 %v6499
      %6529 = vmatprep.subr.mxu0 0.0
      %6530 = vmatpush1.msra.mxu0 %v6500
      %6531 = vmatprep.subr.mxu0 0.0
      %6532 = vmatpush1.msra.mxu0 %v6501
      %6533 = vmatprep.subr.mxu0 0.0
      %6534 = vmatpush1.msra.mxu0 %v6502
      %6535 = vmatprep.subr.mxu0 0.0
      %6536 = vmatpush1.msra.mxu0 %v6503
      %6537 = vmatprep.subr.mxu0 0.0
      %6538 = vmatpush1.msra.mxu0 %v6504
      %6539 = vmatprep.subr.mxu0 0.0
      %6540 = vmatpush1.msra.mxu0 0.0
      %6541 = vmatprep.subr.mxu0 0.0
      %6542 = vmatpush1.msra.mxu0 0.0
      %6543 = vmatprep.subr.mxu0 0.0
      %6544 = vmatpush1.msra.mxu0 0.0
      %6545 = vmatprep.subr.mxu0 0.0
      %6546 = vmatpush1.msra.mxu0 0.0
      %6547 = vmatprep.subr.mxu0 0.0
      %6548 = vmatpush1.msra.mxu0 0.0
      %6549 = vmatprep.subr.mxu0 0.0
      %6550 = vmatpush1.msra.mxu0 0.0
      %6551 = vmatprep.subr.mxu0 0.0
      %6552 = vmatpush1.msra.mxu0 0.0
      %6553 = vmatprep.subr.mxu0 0.0
      %6554 = vmatpush1.msra.mxu0 0.0
      %6555 = vmatprep.subr.mxu0 0.0
      %6556 = vmatpush1.msra.mxu0 0.0
      %6557 = vmatprep.subr.mxu0 0.0
      %6558 = vmatpush1.msra.mxu0 0.0
      %6559 = vmatprep.subr.mxu0 0.0
      %6560 = vmatpush1.msra.mxu0 0.0
      %6561 = vmatprep.subr.mxu0 0.0
      %6562 = vmatpush1.msra.mxu0 0.0
      %6563 = vmatprep.subr.mxu0 0.0
      %6564 = vmatpush1.msra.mxu0 0.0
      %6565 = vmatprep.subr.mxu0 0.0
      %6566 = vmatpush1.msra.mxu0 0.0
      %6567 = vmatprep.subr.mxu0 0.0
      %6568 = vmatpush1.msra.mxu0 0.0
      %6569 = vmatprep.subr.mxu0 0.0
      %6570 = vmatpush1.msra.mxu0 0.0
      %6571 = vmatprep.subr.mxu0 0.0
      %6572 = vmatpush1.msra.mxu0 0.0
      %6573 = vmatprep.subr.mxu0 0.0
      %6574 = vmatpush1.msra.mxu0 0.0
      %6575 = vmatprep.subr.mxu0 0.0
      %6576 = vmatpush1.msra.mxu0 0.0
      %6577 = vmatprep.subr.mxu0 0.0
      %6578 = vmatpush1.msra.mxu0 0.0
      %6579 = vmatprep.subr.mxu0 0.0
      %6580 = vmatpush1.msra.mxu0 0.0
      %6581 = vmatprep.subr.mxu0 0.0
      %6582 = vmatpush1.msra.mxu0 0.0
      %6583 = vmatprep.subr.mxu0 0.0
      %6584 = vmatpush1.msra.mxu0 0.0
      %6585 = vmatprep.subr.mxu0 0.0
      %6586 = vmatpush1.msra.mxu0 0.0
      %6587 = vmatprep.mubr.f32.mxu0 0.0
      %6588 = vmatmul.mubr.f32.gmra.mrb[0].mxu0 %v6506
      %v6589 = vpop.f32.mrb[0].mxu0
      %v6590 = vadd.f32 0.0, %v6589
      %v6591 = vpop.f32.mrb[0].mxu0
      %6592 = vmatprep.mubr.f32.mxu0 0.0
      %6593 = vmatmul.mubr.f32.gmra.mrb[0].mxu0 %v6509
      %v6594 = vpop.f32.mrb[0].mxu0
      %v6595 = vadd.f32 0.0, %v6594
      %v6596 = vpop.f32.mrb[0].mxu0
      %6597 = vmatprep.mubr.f32.mxu0 0.0
      %6598 = vmatmul.mubr.f32.gmra.mrb[0].mxu0 %v6512
      %v6599 = vpop.f32.mrb[0].mxu0
      %v6600 = vadd.f32 0.0, %v6599
      %v6601 = vpop.f32.mrb[0].mxu0
      %6602 = vmatprep.mubr.f32.mxu0 0.0
      %6603 = vmatmul.mubr.f32.gmra.mrb[0].mxu0 %v6515
      %v6604 = vpop.f32.mrb[0].mxu0
      %v6605 = vadd.f32 0.0, %v6604
      %v6606 = vpop.f32.mrb[0].mxu0
      %6607 = vmatprep.mubr.f32.mxu0 0.0
      %6608 = vmatmul.mubr.f32.gmra.mrb[0].mxu0 %v6518
      %v6609 = vpop.f32.mrb[0].mxu0
      %v6610 = vadd.f32 0.0, %v6609
      %v6611 = vpop.f32.mrb[0].mxu0
      %6612 = vmatprep.mubr.f32.mxu0 0.0
      %6613 = vmatmul.mubr.f32.gmra.mrb[0].mxu0 %v6521
      %v6614 = vpop.f32.mrb[0].mxu0
      %v6615 = vadd.f32 0.0, %v6614
      %v6616 = vpop.f32.mrb[0].mxu0
      %6617 = vdwg.mxu0
      %v6619 = vsel %vm1801, %v6476, 0
      %v6622 = vsel %vm1801, %v6477, 0
      %v6625 = vsel %vm1801, %v6478, 0
      %v6628 = vsel %vm1801, %v6479, 0
      %v6631 = vsel %vm1801, %v6480, 0
      %v6634 = vsel %vm1801, %v6481, 0
      %6636 = vmatprep.subr.mxu0 0.0
      %6637 = vmatpush1.msra.mxu0 %v6482
      %6638 = vmatprep.subr.mxu0 0.0
      %6639 = vmatpush1.msra.mxu0 %v6483
      %6640 = vmatprep.subr.mxu0 0.0
      %6641 = vmatpush1.msra.mxu0 %v6484
      %6642 = vmatprep.subr.mxu0 0.0
      %6643 = vmatpush1.msra.mxu0 %v6485
      %6644 = vmatprep.subr.mxu0 0.0
      %6645 = vmatpush1.msra.mxu0 %v6486
      %6646 = vmatprep.subr.mxu0 0.0
      %6647 = vmatpush1.msra.mxu0 %v6487
      %6648 = vmatprep.subr.mxu0 0.0
      %6649 = vmatpush1.msra.mxu0 %v6488
      %6650 = vmatprep.subr.mxu0 0.0
      %6651 = vmatpush1.msra.mxu0 %v6489
      %6652 = vmatprep.subr.mxu0 0.0
      %6653 = vmatpush1.msra.mxu0 0.0
      %6654 = vmatprep.subr.mxu0 0.0
      %6655 = vmatpush1.msra.mxu0 0.0
      %6656 = vmatprep.subr.mxu0 0.0
      %6657 = vmatpush1.msra.mxu0 0.0
      %6658 = vmatprep.subr.mxu0 0.0
      %6659 = vmatpush1.msra.mxu0 0.0
      %6660 = vmatprep.subr.mxu0 0.0
      %6661 = vmatpush1.msra.mxu0 0.0
      %6662 = vmatprep.subr.mxu0 0.0
      %6663 = vmatpush1.msra.mxu0 0.0
      %6664 = vmatprep.subr.mxu0 0.0
      %6665 = vmatpush1.msra.mxu0 0.0
      %6666 = vmatprep.subr.mxu0 0.0
      %6667 = vmatpush1.msra.mxu0 0.0
      %6668 = vmatprep.subr.mxu0 0.0
      %6669 = vmatpush1.msra.mxu0 0.0
      %6670 = vmatprep.subr.mxu0 0.0
      %6671 = vmatpush1.msra.mxu0 0.0
      %6672 = vmatprep.subr.mxu0 0.0
      %6673 = vmatpush1.msra.mxu0 0.0
      %6674 = vmatprep.subr.mxu0 0.0
      %6675 = vmatpush1.msra.mxu0 0.0
      %6676 = vmatprep.subr.mxu0 0.0
      %6677 = vmatpush1.msra.mxu0 0.0
      %6678 = vmatprep.subr.mxu0 0.0
      %6679 = vmatpush1.msra.mxu0 0.0
      %6680 = vmatprep.subr.mxu0 0.0
      %6681 = vmatpush1.msra.mxu0 0.0
      %6682 = vmatprep.subr.mxu0 0.0
      %6683 = vmatpush1.msra.mxu0 0.0
      %6684 = vmatprep.subr.mxu0 0.0
      %6685 = vmatpush1.msra.mxu0 0.0
      %6686 = vmatprep.subr.mxu0 0.0
      %6687 = vmatpush1.msra.mxu0 0.0
      %6688 = vmatprep.subr.mxu0 0.0
      %6689 = vmatpush1.msra.mxu0 0.0
      %6690 = vmatprep.subr.mxu0 0.0
      %6691 = vmatpush1.msra.mxu0 0.0
      %6692 = vmatprep.subr.mxu0 0.0
      %6693 = vmatpush1.msra.mxu0 0.0
      %6694 = vmatprep.subr.mxu0 0.0
      %6695 = vmatpush1.msra.mxu0 0.0
      %6696 = vmatprep.subr.mxu0 0.0
      %6697 = vmatpush1.msra.mxu0 0.0
      %6698 = vmatprep.subr.mxu0 0.0
      %6699 = vmatpush1.msra.mxu0 0.0
      %6700 = vmatprep.mubr.f32.mxu0 0.0
      %6701 = vmatmul.mubr.f32.gmra.mrb[0].mxu0 %v6619
      %v6702 = vpop.f32.mrb[0].mxu0
      %v6703 = vadd.f32 %v6590, %v6702
      %v6704 = vpop.f32.mrb[0].mxu0
      %6705 = vmatprep.mubr.f32.mxu0 0.0
      %6706 = vmatmul.mubr.f32.gmra.mrb[0].mxu0 %v6622
      %v6707 = vpop.f32.mrb[0].mxu0
      %v6708 = vadd.f32 %v6595, %v6707
      %v6709 = vpop.f32.mrb[0].mxu0
      %6710 = vmatprep.mubr.f32.mxu0 0.0
      %6711 = vmatmul.mubr.f32.gmra.mrb[0].mxu0 %v6625
      %v6712 = vpop.f32.mrb[0].mxu0
      %v6713 = vadd.f32 %v6600, %v6712
      %v6714 = vpop.f32.mrb[0].mxu0
      %6715 = vmatprep.mubr.f32.mxu0 0.0
      %6716 = vmatmul.mubr.f32.gmra.mrb[0].mxu0 %v6628
      %v6717 = vpop.f32.mrb[0].mxu0
      %v6718 = vadd.f32 %v6605, %v6717
      %v6719 = vpop.f32.mrb[0].mxu0
      %6720 = vmatprep.mubr.f32.mxu0 0.0
      %6721 = vmatmul.mubr.f32.gmra.mrb[0].mxu0 %v6631
      %v6722 = vpop.f32.mrb[0].mxu0
      %v6723 = vadd.f32 %v6610, %v6722
      %v6724 = vpop.f32.mrb[0].mxu0
      %6725 = vmatprep.mubr.f32.mxu0 0.0
      %6726 = vmatmul.mubr.f32.gmra.mrb[0].mxu0 %v6634
      %v6727 = vpop.f32.mrb[0].mxu0
      %v6728 = vadd.f32 %v6615, %v6727
      %v6729 = vpop.f32.mrb[0].mxu0
      %6730 = vdwg.mxu0
      %v6731 = vld [vmem:[#allocation5 + $0x2] sm:$0xff]
      %v6732 = vld [vmem:[#allocation5 + $0xa] sm:$0xff]
      %v6733 = vld [vmem:[#allocation5 + $0x12] sm:$0xff]
      %v6734 = vld [vmem:[#allocation5 + $0x1a] sm:$0xff]
      %v6735 = vld [vmem:[#allocation5 + $0x22] sm:$0xff]
      %v6736 = vld [vmem:[#allocation5 + $0x2a] sm:$0xff]
      %s6737 = scalar_lea.vmem %s7, 128
      %v6738 = vld [vmem:[%s6737] sm:$0xff]
      %v6739 = vld [vmem:[%s6737 + $0x8] sm:$0xff]
      %v6740 = vld [vmem:[%s6737 + $0x10] sm:$0xff]
      %v6741 = vld [vmem:[%s6737 + $0x18] sm:$0xff]
      %v6742 = vld [vmem:[%s6737 + $0x20] sm:$0xff]
      %v6743 = vld [vmem:[%s6737 + $0x28] sm:$0xff]
      %v6744 = vld [vmem:[%s6737 + $0x30] sm:$0xff]
      %v6745 = vld [vmem:[%s6737 + $0x38] sm:$0xff]
      %v6747 = vsel %vm1801, %v6731, 0
      %v6750 = vsel %vm1801, %v6732, 0
      %v6753 = vsel %vm1801, %v6733, 0
      %v6756 = vsel %vm1801, %v6734, 0
      %v6759 = vsel %vm1801, %v6735, 0
      %v6762 = vsel %vm1801, %v6736, 0
      %6764 = vmatprep.subr.mxu0 0.0
      %6765 = vmatpush1.msra.mxu0 %v6738
      %6766 = vmatprep.subr.mxu0 0.0
      %6767 = vmatpush1.msra.mxu0 %v6739
      %6768 = vmatprep.subr.mxu0 0.0
      %6769 = vmatpush1.msra.mxu0 %v6740
      %6770 = vmatprep.subr.mxu0 0.0
      %6771 = vmatpush1.msra.mxu0 %v6741
      %6772 = vmatprep.subr.mxu0 0.0
      %6773 = vmatpush1.msra.mxu0 %v6742
      %6774 = vmatprep.subr.mxu0 0.0
      %6775 = vmatpush1.msra.mxu0 %v6743
      %6776 = vmatprep.subr.mxu0 0.0
      %6777 = vmatpush1.msra.mxu0 %v6744
      %6778 = vmatprep.subr.mxu0 0.0
      %6779 = vmatpush1.msra.mxu0 %v6745
      %6780 = vmatprep.subr.mxu0 0.0
      %6781 = vmatpush1.msra.mxu0 0.0
      %6782 = vmatprep.subr.mxu0 0.0
      %6783 = vmatpush1.msra.mxu0 0.0
      %6784 = vmatprep.subr.mxu0 0.0
      %6785 = vmatpush1.msra.mxu0 0.0
      %6786 = vmatprep.subr.mxu0 0.0
      %6787 = vmatpush1.msra.mxu0 0.0
      %6788 = vmatprep.subr.mxu0 0.0
      %6789 = vmatpush1.msra.mxu0 0.0
      %6790 = vmatprep.subr.mxu0 0.0
      %6791 = vmatpush1.msra.mxu0 0.0
      %6792 = vmatprep.subr.mxu0 0.0
      %6793 = vmatpush1.msra.mxu0 0.0
      %6794 = vmatprep.subr.mxu0 0.0
      %6795 = vmatpush1.msra.mxu0 0.0
      %6796 = vmatprep.subr.mxu0 0.0
      %6797 = vmatpush1.msra.mxu0 0.0
      %6798 = vmatprep.subr.mxu0 0.0
      %6799 = vmatpush1.msra.mxu0 0.0
      %6800 = vmatprep.subr.mxu0 0.0
      %6801 = vmatpush1.msra.mxu0 0.0
      %6802 = vmatprep.subr.mxu0 0.0
      %6803 = vmatpush1.msra.mxu0 0.0
      %6804 = vmatprep.subr.mxu0 0.0
      %6805 = vmatpush1.msra.mxu0 0.0
      %6806 = vmatprep.subr.mxu0 0.0
      %6807 = vmatpush1.msra.mxu0 0.0
      %6808 = vmatprep.subr.mxu0 0.0
      %6809 = vmatpush1.msra.mxu0 0.0
      %6810 = vmatprep.subr.mxu0 0.0
      %6811 = vmatpush1.msra.mxu0 0.0
      %6812 = vmatprep.subr.mxu0 0.0
      %6813 = vmatpush1.msra.mxu0 0.0
      %6814 = vmatprep.subr.mxu0 0.0
      %6815 = vmatpush1.msra.mxu0 0.0
      %6816 = vmatprep.subr.mxu0 0.0
      %6817 = vmatpush1.msra.mxu0 0.0
      %6818 = vmatprep.subr.mxu0 0.0
      %6819 = vmatpush1.msra.mxu0 0.0
      %6820 = vmatprep.subr.mxu0 0.0
      %6821 = vmatpush1.msra.mxu0 0.0
      %6822 = vmatprep.subr.mxu0 0.0
      %6823 = vmatpush1.msra.mxu0 0.0
      %6824 = vmatprep.subr.mxu0 0.0
      %6825 = vmatpush1.msra.mxu0 0.0
      %6826 = vmatprep.subr.mxu0 0.0
      %6827 = vmatpush1.msra.mxu0 0.0
      %6828 = vmatprep.mubr.f32.mxu0 0.0
      %6829 = vmatmul.mubr.f32.gmra.mrb[0].mxu0 %v6747
      %v6830 = vpop.f32.mrb[0].mxu0
      %v6831 = vadd.f32 0.0, %v6830
      %v6832 = vpop.f32.mrb[0].mxu0
      %6833 = vmatprep.mubr.f32.mxu0 0.0
      %6834 = vmatmul.mubr.f32.gmra.mrb[0].mxu0 %v6750
      %v6835 = vpop.f32.mrb[0].mxu0
      %v6836 = vadd.f32 0.0, %v6835
      %v6837 = vpop.f32.mrb[0].mxu0
      %6838 = vmatprep.mubr.f32.mxu0 0.0
      %6839 = vmatmul.mubr.f32.gmra.mrb[0].mxu0 %v6753
      %v6840 = vpop.f32.mrb[0].mxu0
      %v6841 = vadd.f32 0.0, %v6840
      %v6842 = vpop.f32.mrb[0].mxu0
      %6843 = vmatprep.mubr.f32.mxu0 0.0
      %6844 = vmatmul.mubr.f32.gmra.mrb[0].mxu0 %v6756
      %v6845 = vpop.f32.mrb[0].mxu0
      %v6846 = vadd.f32 0.0, %v6845
      %v6847 = vpop.f32.mrb[0].mxu0
      %6848 = vmatprep.mubr.f32.mxu0 0.0
      %6849 = vmatmul.mubr.f32.gmra.mrb[0].mxu0 %v6759
      %v6850 = vpop.f32.mrb[0].mxu0
      %v6851 = vadd.f32 0.0, %v6850
      %v6852 = vpop.f32.mrb[0].mxu0
      %6853 = vmatprep.mubr.f32.mxu0 0.0
      %6854 = vmatmul.mubr.f32.gmra.mrb[0].mxu0 %v6762
      %v6855 = vpop.f32.mrb[0].mxu0
      %v6856 = vadd.f32 0.0, %v6855
      %v6857 = vpop.f32.mrb[0].mxu0
      %6858 = vdwg.mxu0
      %v6859 = vadd.f32 %v6703, %v6831
      %v6860 = vadd.f32 %v6708, %v6836
      %v6861 = vadd.f32 %v6713, %v6841
      %v6862 = vadd.f32 %v6718, %v6846
      %v6863 = vadd.f32 %v6723, %v6851
      %v6864 = vadd.f32 %v6728, %v6856
      %v6865 = vld [vmem:[#allocation5 + $0x8] sm:$0xff]
      %v6866 = vld [vmem:[#allocation5 + $0x10] sm:$0xff]
      %v6867 = vld [vmem:[#allocation5 + $0x18] sm:$0xff]
      %v6868 = vld [vmem:[#allocation5 + $0x20] sm:$0xff]
      %v6869 = vld [vmem:[#allocation5 + $0x28] sm:$0xff]
      %v6870 = vld [vmem:[#allocation5 + $0x30] sm:$0xff]
      %s6871 = scalar_lea.vmem %s7, 192
      %v6872 = vld [vmem:[%s6871] sm:$0xff]
      %v6873 = vld [vmem:[%s6871 + $0x8] sm:$0xff]
      %v6874 = vld [vmem:[%s6871 + $0x10] sm:$0xff]
      %v6875 = vld [vmem:[%s6871 + $0x18] sm:$0xff]
      %v6876 = vld [vmem:[%s6871 + $0x20] sm:$0xff]
      %v6877 = vld [vmem:[%s6871 + $0x28] sm:$0xff]
      %v6878 = vld [vmem:[%s6871 + $0x30] sm:$0xff]
      %v6879 = vld [vmem:[%s6871 + $0x38] sm:$0xff]
      %v6881 = vsel %vm1801, %v6865, 0
      %v6884 = vsel %vm1801, %v6866, 0
      %v6887 = vsel %vm1801, %v6867, 0
      %v6890 = vsel %vm1801, %v6868, 0
      %v6893 = vsel %vm1801, %v6869, 0
      %v6896 = vsel %vm1801, %v6870, 0
      %6898 = vmatprep.subr.mxu0 0.0
      %6899 = vmatpush1.msra.mxu0 %v6872
      %6900 = vmatprep.subr.mxu0 0.0
      %6901 = vmatpush1.msra.mxu0 %v6873
      %6902 = vmatprep.subr.mxu0 0.0
      %6903 = vmatpush1.msra.mxu0 %v6874
      %6904 = vmatprep.subr.mxu0 0.0
      %6905 = vmatpush1.msra.mxu0 %v6875
      %6906 = vmatprep.subr.mxu0 0.0
      %6907 = vmatpush1.msra.mxu0 %v6876
      %6908 = vmatprep.subr.mxu0 0.0
      %6909 = vmatpush1.msra.mxu0 %v6877
      %6910 = vmatprep.subr.mxu0 0.0
      %6911 = vmatpush1.msra.mxu0 %v6878
      %6912 = vmatprep.subr.mxu0 0.0
      %6913 = vmatpush1.msra.mxu0 %v6879
      %6914 = vmatprep.subr.mxu0 0.0
      %6915 = vmatpush1.msra.mxu0 0.0
      %6916 = vmatprep.subr.mxu0 0.0
      %6917 = vmatpush1.msra.mxu0 0.0
      %6918 = vmatprep.subr.mxu0 0.0
      %6919 = vmatpush1.msra.mxu0 0.0
      %6920 = vmatprep.subr.mxu0 0.0
      %6921 = vmatpush1.msra.mxu0 0.0
      %6922 = vmatprep.subr.mxu0 0.0
      %6923 = vmatpush1.msra.mxu0 0.0
      %6924 = vmatprep.subr.mxu0 0.0
      %6925 = vmatpush1.msra.mxu0 0.0
      %6926 = vmatprep.subr.mxu0 0.0
      %6927 = vmatpush1.msra.mxu0 0.0
      %6928 = vmatprep.subr.mxu0 0.0
      %6929 = vmatpush1.msra.mxu0 0.0
      %6930 = vmatprep.subr.mxu0 0.0
      %6931 = vmatpush1.msra.mxu0 0.0
      %6932 = vmatprep.subr.mxu0 0.0
      %6933 = vmatpush1.msra.mxu0 0.0
      %6934 = vmatprep.subr.mxu0 0.0
      %6935 = vmatpush1.msra.mxu0 0.0
      %6936 = vmatprep.subr.mxu0 0.0
      %6937 = vmatpush1.msra.mxu0 0.0
      %6938 = vmatprep.subr.mxu0 0.0
      %6939 = vmatpush1.msra.mxu0 0.0
      %6940 = vmatprep.subr.mxu0 0.0
      %6941 = vmatpush1.msra.mxu0 0.0
      %6942 = vmatprep.subr.mxu0 0.0
      %6943 = vmatpush1.msra.mxu0 0.0
      %6944 = vmatprep.subr.mxu0 0.0
      %6945 = vmatpush1.msra.mxu0 0.0
      %6946 = vmatprep.subr.mxu0 0.0
      %6947 = vmatpush1.msra.mxu0 0.0
      %6948 = vmatprep.subr.mxu0 0.0
      %6949 = vmatpush1.msra.mxu0 0.0
      %6950 = vmatprep.subr.mxu0 0.0
      %6951 = vmatpush1.msra.mxu0 0.0
      %6952 = vmatprep.subr.mxu0 0.0
      %6953 = vmatpush1.msra.mxu0 0.0
      %6954 = vmatprep.subr.mxu0 0.0
      %6955 = vmatpush1.msra.mxu0 0.0
      %6956 = vmatprep.subr.mxu0 0.0
      %6957 = vmatpush1.msra.mxu0 0.0
      %6958 = vmatprep.subr.mxu0 0.0
      %6959 = vmatpush1.msra.mxu0 0.0
      %6960 = vmatprep.subr.mxu0 0.0
      %6961 = vmatpush1.msra.mxu0 0.0
      %6962 = vmatprep.mubr.f32.mxu0 0.0
      %6963 = vmatmul.mubr.f32.gmra.mrb[0].mxu0 %v6881
      %v6964 = vpop.f32.mrb[0].mxu0
      %v6965 = vadd.f32 0.0, %v6964
      %v6966 = vpop.f32.mrb[0].mxu0
      %6967 = vmatprep.mubr.f32.mxu0 0.0
      %6968 = vmatmul.mubr.f32.gmra.mrb[0].mxu0 %v6884
      %v6969 = vpop.f32.mrb[0].mxu0
      %v6970 = vadd.f32 0.0, %v6969
      %v6971 = vpop.f32.mrb[0].mxu0
      %6972 = vmatprep.mubr.f32.mxu0 0.0
      %6973 = vmatmul.mubr.f32.gmra.mrb[0].mxu0 %v6887
      %v6974 = vpop.f32.mrb[0].mxu0
      %v6975 = vadd.f32 0.0, %v6974
      %v6976 = vpop.f32.mrb[0].mxu0
      %6977 = vmatprep.mubr.f32.mxu0 0.0
      %6978 = vmatmul.mubr.f32.gmra.mrb[0].mxu0 %v6890
      %v6979 = vpop.f32.mrb[0].mxu0
      %v6980 = vadd.f32 0.0, %v6979
      %v6981 = vpop.f32.mrb[0].mxu0
      %6982 = vmatprep.mubr.f32.mxu0 0.0
      %6983 = vmatmul.mubr.f32.gmra.mrb[0].mxu0 %v6893
      %v6984 = vpop.f32.mrb[0].mxu0
      %v6985 = vadd.f32 0.0, %v6984
      %v6986 = vpop.f32.mrb[0].mxu0
      %6987 = vmatprep.mubr.f32.mxu0 0.0
      %6988 = vmatmul.mubr.f32.gmra.mrb[0].mxu0 %v6896
      %v6989 = vpop.f32.mrb[0].mxu0
      %v6990 = vadd.f32 0.0, %v6989
      %v6991 = vpop.f32.mrb[0].mxu0
      %6992 = vdwg.mxu0
      %v6993 = vadd.f32 %v6859, %v6965
      %v6994 = vadd.f32 %v6860, %v6970
      %v6995 = vadd.f32 %v6861, %v6975
      %v6996 = vadd.f32 %v6862, %v6980
      %v6997 = vadd.f32 %v6863, %v6985
      %v6998 = vadd.f32 %v6864, %v6990
      %v6999 = vld [vmem:[#allocation5 + $0x9] sm:$0xff]
      %v7000 = vld [vmem:[#allocation5 + $0x11] sm:$0xff]
      %v7001 = vld [vmem:[#allocation5 + $0x19] sm:$0xff]
      %v7002 = vld [vmem:[#allocation5 + $0x21] sm:$0xff]
      %v7003 = vld [vmem:[#allocation5 + $0x29] sm:$0xff]
      %v7004 = vld [vmem:[#allocation5 + $0x31] sm:$0xff]
      %s7005 = scalar_lea.vmem %s7, 256
      %v7006 = vld [vmem:[%s7005] sm:$0xff]
      %v7007 = vld [vmem:[%s7005 + $0x8] sm:$0xff]
      %v7008 = vld [vmem:[%s7005 + $0x10] sm:$0xff]
      %v7009 = vld [vmem:[%s7005 + $0x18] sm:$0xff]
      %v7010 = vld [vmem:[%s7005 + $0x20] sm:$0xff]
      %v7011 = vld [vmem:[%s7005 + $0x28] sm:$0xff]
      %v7012 = vld [vmem:[%s7005 + $0x30] sm:$0xff]
      %v7013 = vld [vmem:[%s7005 + $0x38] sm:$0xff]
      %v7015 = vsel %vm1801, %v6999, 0
      %v7018 = vsel %vm1801, %v7000, 0
      %v7021 = vsel %vm1801, %v7001, 0
      %v7024 = vsel %vm1801, %v7002, 0
      %v7027 = vsel %vm1801, %v7003, 0
      %v7030 = vsel %vm1801, %v7004, 0
      %7032 = vmatprep.subr.mxu0 0.0
      %7033 = vmatpush1.msra.mxu0 %v7006
      %7034 = vmatprep.subr.mxu0 0.0
      %7035 = vmatpush1.msra.mxu0 %v7007
      %7036 = vmatprep.subr.mxu0 0.0
      %7037 = vmatpush1.msra.mxu0 %v7008
      %7038 = vmatprep.subr.mxu0 0.0
      %7039 = vmatpush1.msra.mxu0 %v7009
      %7040 = vmatprep.subr.mxu0 0.0
      %7041 = vmatpush1.msra.mxu0 %v7010
      %7042 = vmatprep.subr.mxu0 0.0
      %7043 = vmatpush1.msra.mxu0 %v7011
      %7044 = vmatprep.subr.mxu0 0.0
      %7045 = vmatpush1.msra.mxu0 %v7012
      %7046 = vmatprep.subr.mxu0 0.0
      %7047 = vmatpush1.msra.mxu0 %v7013
      %7048 = vmatprep.subr.mxu0 0.0
      %7049 = vmatpush1.msra.mxu0 0.0
      %7050 = vmatprep.subr.mxu0 0.0
      %7051 = vmatpush1.msra.mxu0 0.0
      %7052 = vmatprep.subr.mxu0 0.0
      %7053 = vmatpush1.msra.mxu0 0.0
      %7054 = vmatprep.subr.mxu0 0.0
      %7055 = vmatpush1.msra.mxu0 0.0
      %7056 = vmatprep.subr.mxu0 0.0
      %7057 = vmatpush1.msra.mxu0 0.0
      %7058 = vmatprep.subr.mxu0 0.0
      %7059 = vmatpush1.msra.mxu0 0.0
      %7060 = vmatprep.subr.mxu0 0.0
      %7061 = vmatpush1.msra.mxu0 0.0
      %7062 = vmatprep.subr.mxu0 0.0
      %7063 = vmatpush1.msra.mxu0 0.0
      %7064 = vmatprep.subr.mxu0 0.0
      %7065 = vmatpush1.msra.mxu0 0.0
      %7066 = vmatprep.subr.mxu0 0.0
      %7067 = vmatpush1.msra.mxu0 0.0
      %7068 = vmatprep.subr.mxu0 0.0
      %7069 = vmatpush1.msra.mxu0 0.0
      %7070 = vmatprep.subr.mxu0 0.0
      %7071 = vmatpush1.msra.mxu0 0.0
      %7072 = vmatprep.subr.mxu0 0.0
      %7073 = vmatpush1.msra.mxu0 0.0
      %7074 = vmatprep.subr.mxu0 0.0
      %7075 = vmatpush1.msra.mxu0 0.0
      %7076 = vmatprep.subr.mxu0 0.0
      %7077 = vmatpush1.msra.mxu0 0.0
      %7078 = vmatprep.subr.mxu0 0.0
      %7079 = vmatpush1.msra.mxu0 0.0
      %7080 = vmatprep.subr.mxu0 0.0
      %7081 = vmatpush1.msra.mxu0 0.0
      %7082 = vmatprep.subr.mxu0 0.0
      %7083 = vmatpush1.msra.mxu0 0.0
      %7084 = vmatprep.subr.mxu0 0.0
      %7085 = vmatpush1.msra.mxu0 0.0
      %7086 = vmatprep.subr.mxu0 0.0
      %7087 = vmatpush1.msra.mxu0 0.0
      %7088 = vmatprep.subr.mxu0 0.0
      %7089 = vmatpush1.msra.mxu0 0.0
      %7090 = vmatprep.subr.mxu0 0.0
      %7091 = vmatpush1.msra.mxu0 0.0
      %7092 = vmatprep.subr.mxu0 0.0
      %7093 = vmatpush1.msra.mxu0 0.0
      %7094 = vmatprep.subr.mxu0 0.0
      %7095 = vmatpush1.msra.mxu0 0.0
      %7096 = vmatprep.mubr.f32.mxu0 0.0
      %7097 = vmatmul.mubr.f32.gmra.mrb[0].mxu0 %v7015
      %v7098 = vpop.f32.mrb[0].mxu0
      %v7099 = vadd.f32 0.0, %v7098
      %v7100 = vpop.f32.mrb[0].mxu0
      %7101 = vmatprep.mubr.f32.mxu0 0.0
      %7102 = vmatmul.mubr.f32.gmra.mrb[0].mxu0 %v7018
      %v7103 = vpop.f32.mrb[0].mxu0
      %v7104 = vadd.f32 0.0, %v7103
      %v7105 = vpop.f32.mrb[0].mxu0
      %7106 = vmatprep.mubr.f32.mxu0 0.0
      %7107 = vmatmul.mubr.f32.gmra.mrb[0].mxu0 %v7021
      %v7108 = vpop.f32.mrb[0].mxu0
      %v7109 = vadd.f32 0.0, %v7108
      %v7110 = vpop.f32.mrb[0].mxu0
      %7111 = vmatprep.mubr.f32.mxu0 0.0
      %7112 = vmatmul.mubr.f32.gmra.mrb[0].mxu0 %v7024
      %v7113 = vpop.f32.mrb[0].mxu0
      %v7114 = vadd.f32 0.0, %v7113
      %v7115 = vpop.f32.mrb[0].mxu0
      %7116 = vmatprep.mubr.f32.mxu0 0.0
      %7117 = vmatmul.mubr.f32.gmra.mrb[0].mxu0 %v7027
      %v7118 = vpop.f32.mrb[0].mxu0
      %v7119 = vadd.f32 0.0, %v7118
      %v7120 = vpop.f32.mrb[0].mxu0
      %7121 = vmatprep.mubr.f32.mxu0 0.0
      %7122 = vmatmul.mubr.f32.gmra.mrb[0].mxu0 %v7030
      %v7123 = vpop.f32.mrb[0].mxu0
      %v7124 = vadd.f32 0.0, %v7123
      %v7125 = vpop.f32.mrb[0].mxu0
      %7126 = vdwg.mxu0
      %v7127 = vadd.f32 %v6993, %v7099
      %v7128 = vadd.f32 %v6994, %v7104
      %v7129 = vadd.f32 %v6995, %v7109
      %v7130 = vadd.f32 %v6996, %v7114
      %v7131 = vadd.f32 %v6997, %v7119
      %v7132 = vadd.f32 %v6998, %v7124
      %v7133 = vld [vmem:[#allocation5 + $0xa] sm:$0xff]
      %v7134 = vld [vmem:[#allocation5 + $0x12] sm:$0xff]
      %v7135 = vld [vmem:[#allocation5 + $0x1a] sm:$0xff]
      %v7136 = vld [vmem:[#allocation5 + $0x22] sm:$0xff]
      %v7137 = vld [vmem:[#allocation5 + $0x2a] sm:$0xff]
      %v7138 = vld [vmem:[#allocation5 + $0x32] sm:$0xff]
      %s7139 = scalar_lea.vmem %s7, 320
      %v7140 = vld [vmem:[%s7139] sm:$0xff]
      %v7141 = vld [vmem:[%s7139 + $0x8] sm:$0xff]
      %v7142 = vld [vmem:[%s7139 + $0x10] sm:$0xff]
      %v7143 = vld [vmem:[%s7139 + $0x18] sm:$0xff]
      %v7144 = vld [vmem:[%s7139 + $0x20] sm:$0xff]
      %v7145 = vld [vmem:[%s7139 + $0x28] sm:$0xff]
      %v7146 = vld [vmem:[%s7139 + $0x30] sm:$0xff]
      %v7147 = vld [vmem:[%s7139 + $0x38] sm:$0xff]
      %v7149 = vsel %vm1801, %v7133, 0
      %v7152 = vsel %vm1801, %v7134, 0
      %v7155 = vsel %vm1801, %v7135, 0
      %v7158 = vsel %vm1801, %v7136, 0
      %v7161 = vsel %vm1801, %v7137, 0
      %v7164 = vsel %vm1801, %v7138, 0
      %7166 = vmatprep.subr.mxu0 0.0
      %7167 = vmatpush1.msra.mxu0 %v7140
      %7168 = vmatprep.subr.mxu0 0.0
      %7169 = vmatpush1.msra.mxu0 %v7141
      %7170 = vmatprep.subr.mxu0 0.0
      %7171 = vmatpush1.msra.mxu0 %v7142
      %7172 = vmatprep.subr.mxu0 0.0
      %7173 = vmatpush1.msra.mxu0 %v7143
      %7174 = vmatprep.subr.mxu0 0.0
      %7175 = vmatpush1.msra.mxu0 %v7144
      %7176 = vmatprep.subr.mxu0 0.0
      %7177 = vmatpush1.msra.mxu0 %v7145
      %7178 = vmatprep.subr.mxu0 0.0
      %7179 = vmatpush1.msra.mxu0 %v7146
      %7180 = vmatprep.subr.mxu0 0.0
      %7181 = vmatpush1.msra.mxu0 %v7147
      %7182 = vmatprep.subr.mxu0 0.0
      %7183 = vmatpush1.msra.mxu0 0.0
      %7184 = vmatprep.subr.mxu0 0.0
      %7185 = vmatpush1.msra.mxu0 0.0
      %7186 = vmatprep.subr.mxu0 0.0
      %7187 = vmatpush1.msra.mxu0 0.0
      %7188 = vmatprep.subr.mxu0 0.0
      %7189 = vmatpush1.msra.mxu0 0.0
      %7190 = vmatprep.subr.mxu0 0.0
      %7191 = vmatpush1.msra.mxu0 0.0
      %7192 = vmatprep.subr.mxu0 0.0
      %7193 = vmatpush1.msra.mxu0 0.0
      %7194 = vmatprep.subr.mxu0 0.0
      %7195 = vmatpush1.msra.mxu0 0.0
      %7196 = vmatprep.subr.mxu0 0.0
      %7197 = vmatpush1.msra.mxu0 0.0
      %7198 = vmatprep.subr.mxu0 0.0
      %7199 = vmatpush1.msra.mxu0 0.0
      %7200 = vmatprep.subr.mxu0 0.0
      %7201 = vmatpush1.msra.mxu0 0.0
      %7202 = vmatprep.subr.mxu0 0.0
      %7203 = vmatpush1.msra.mxu0 0.0
      %7204 = vmatprep.subr.mxu0 0.0
      %7205 = vmatpush1.msra.mxu0 0.0
      %7206 = vmatprep.subr.mxu0 0.0
      %7207 = vmatpush1.msra.mxu0 0.0
      %7208 = vmatprep.subr.mxu0 0.0
      %7209 = vmatpush1.msra.mxu0 0.0
      %7210 = vmatprep.subr.mxu0 0.0
      %7211 = vmatpush1.msra.mxu0 0.0
      %7212 = vmatprep.subr.mxu0 0.0
      %7213 = vmatpush1.msra.mxu0 0.0
      %7214 = vmatprep.subr.mxu0 0.0
      %7215 = vmatpush1.msra.mxu0 0.0
      %7216 = vmatprep.subr.mxu0 0.0
      %7217 = vmatpush1.msra.mxu0 0.0
      %7218 = vmatprep.subr.mxu0 0.0
      %7219 = vmatpush1.msra.mxu0 0.0
      %7220 = vmatprep.subr.mxu0 0.0
      %7221 = vmatpush1.msra.mxu0 0.0
      %7222 = vmatprep.subr.mxu0 0.0
      %7223 = vmatpush1.msra.mxu0 0.0
      %7224 = vmatprep.subr.mxu0 0.0
      %7225 = vmatpush1.msra.mxu0 0.0
      %7226 = vmatprep.subr.mxu0 0.0
      %7227 = vmatpush1.msra.mxu0 0.0
      %7228 = vmatprep.subr.mxu0 0.0
      %7229 = vmatpush1.msra.mxu0 0.0
      %7230 = vmatprep.mubr.f32.mxu0 0.0
      %7231 = vmatmul.mubr.f32.gmra.mrb[0].mxu0 %v7149
      %v7232 = vpop.f32.mrb[0].mxu0
      %v7233 = vadd.f32 0.0, %v7232
      %v7234 = vpop.f32.mrb[0].mxu0
      %7235 = vmatprep.mubr.f32.mxu0 0.0
      %7236 = vmatmul.mubr.f32.gmra.mrb[0].mxu0 %v7152
      %v7237 = vpop.f32.mrb[0].mxu0
      %v7238 = vadd.f32 0.0, %v7237
      %v7239 = vpop.f32.mrb[0].mxu0
      %7240 = vmatprep.mubr.f32.mxu0 0.0
      %7241 = vmatmul.mubr.f32.gmra.mrb[0].mxu0 %v7155
      %v7242 = vpop.f32.mrb[0].mxu0
      %v7243 = vadd.f32 0.0, %v7242
      %v7244 = vpop.f32.mrb[0].mxu0
      %7245 = vmatprep.mubr.f32.mxu0 0.0
      %7246 = vmatmul.mubr.f32.gmra.mrb[0].mxu0 %v7158
      %v7247 = vpop.f32.mrb[0].mxu0
      %v7248 = vadd.f32 0.0, %v7247
      %v7249 = vpop.f32.mrb[0].mxu0
      %7250 = vmatprep.mubr.f32.mxu0 0.0
      %7251 = vmatmul.mubr.f32.gmra.mrb[0].mxu0 %v7161
      %v7252 = vpop.f32.mrb[0].mxu0
      %v7253 = vadd.f32 0.0, %v7252
      %v7254 = vpop.f32.mrb[0].mxu0
      %7255 = vmatprep.mubr.f32.mxu0 0.0
      %7256 = vmatmul.mubr.f32.gmra.mrb[0].mxu0 %v7164
      %v7257 = vpop.f32.mrb[0].mxu0
      %v7258 = vadd.f32 0.0, %v7257
      %v7259 = vpop.f32.mrb[0].mxu0
      %7260 = vdwg.mxu0
      %v7261 = vadd.f32 %v7127, %v7233
      %v7262 = vadd.f32 %v7128, %v7238
      %v7263 = vadd.f32 %v7129, %v7243
      %v7264 = vadd.f32 %v7130, %v7248
      %v7265 = vadd.f32 %v7131, %v7253
      %v7266 = vadd.f32 %v7132, %v7258
      %v7267 = vld [vmem:[#allocation5 + $0x10] sm:$0xff]
      %v7268 = vld [vmem:[#allocation5 + $0x18] sm:$0xff]
      %v7269 = vld [vmem:[#allocation5 + $0x20] sm:$0xff]
      %v7270 = vld [vmem:[#allocation5 + $0x28] sm:$0xff]
      %v7271 = vld [vmem:[#allocation5 + $0x30] sm:$0xff]
      %v7272 = vld [vmem:[#allocation5 + $0x38] sm:$0xff]
      %s7273 = scalar_lea.vmem %s7, 384
      %v7274 = vld [vmem:[%s7273] sm:$0xff]
      %v7275 = vld [vmem:[%s7273 + $0x8] sm:$0xff]
      %v7276 = vld [vmem:[%s7273 + $0x10] sm:$0xff]
      %v7277 = vld [vmem:[%s7273 + $0x18] sm:$0xff]
      %v7278 = vld [vmem:[%s7273 + $0x20] sm:$0xff]
      %v7279 = vld [vmem:[%s7273 + $0x28] sm:$0xff]
      %v7280 = vld [vmem:[%s7273 + $0x30] sm:$0xff]
      %v7281 = vld [vmem:[%s7273 + $0x38] sm:$0xff]
      %v7283 = vsel %vm1801, %v7267, 0
      %v7286 = vsel %vm1801, %v7268, 0
      %v7289 = vsel %vm1801, %v7269, 0
      %v7292 = vsel %vm1801, %v7270, 0
      %v7295 = vsel %vm1801, %v7271, 0
      %v7298 = vsel %vm1801, %v7272, 0
      %7300 = vmatprep.subr.mxu0 0.0
      %7301 = vmatpush1.msra.mxu0 %v7274
      %7302 = vmatprep.subr.mxu0 0.0
      %7303 = vmatpush1.msra.mxu0 %v7275
      %7304 = vmatprep.subr.mxu0 0.0
      %7305 = vmatpush1.msra.mxu0 %v7276
      %7306 = vmatprep.subr.mxu0 0.0
      %7307 = vmatpush1.msra.mxu0 %v7277
      %7308 = vmatprep.subr.mxu0 0.0
      %7309 = vmatpush1.msra.mxu0 %v7278
      %7310 = vmatprep.subr.mxu0 0.0
      %7311 = vmatpush1.msra.mxu0 %v7279
      %7312 = vmatprep.subr.mxu0 0.0
      %7313 = vmatpush1.msra.mxu0 %v7280
      %7314 = vmatprep.subr.mxu0 0.0
      %7315 = vmatpush1.msra.mxu0 %v7281
      %7316 = vmatprep.subr.mxu0 0.0
      %7317 = vmatpush1.msra.mxu0 0.0
      %7318 = vmatprep.subr.mxu0 0.0
      %7319 = vmatpush1.msra.mxu0 0.0
      %7320 = vmatprep.subr.mxu0 0.0
      %7321 = vmatpush1.msra.mxu0 0.0
      %7322 = vmatprep.subr.mxu0 0.0
      %7323 = vmatpush1.msra.mxu0 0.0
      %7324 = vmatprep.subr.mxu0 0.0
      %7325 = vmatpush1.msra.mxu0 0.0
      %7326 = vmatprep.subr.mxu0 0.0
      %7327 = vmatpush1.msra.mxu0 0.0
      %7328 = vmatprep.subr.mxu0 0.0
      %7329 = vmatpush1.msra.mxu0 0.0
      %7330 = vmatprep.subr.mxu0 0.0
      %7331 = vmatpush1.msra.mxu0 0.0
      %7332 = vmatprep.subr.mxu0 0.0
      %7333 = vmatpush1.msra.mxu0 0.0
      %7334 = vmatprep.subr.mxu0 0.0
      %7335 = vmatpush1.msra.mxu0 0.0
      %7336 = vmatprep.subr.mxu0 0.0
      %7337 = vmatpush1.msra.mxu0 0.0
      %7338 = vmatprep.subr.mxu0 0.0
      %7339 = vmatpush1.msra.mxu0 0.0
      %7340 = vmatprep.subr.mxu0 0.0
      %7341 = vmatpush1.msra.mxu0 0.0
      %7342 = vmatprep.subr.mxu0 0.0
      %7343 = vmatpush1.msra.mxu0 0.0
      %7344 = vmatprep.subr.mxu0 0.0
      %7345 = vmatpush1.msra.mxu0 0.0
      %7346 = vmatprep.subr.mxu0 0.0
      %7347 = vmatpush1.msra.mxu0 0.0
      %7348 = vmatprep.subr.mxu0 0.0
      %7349 = vmatpush1.msra.mxu0 0.0
      %7350 = vmatprep.subr.mxu0 0.0
      %7351 = vmatpush1.msra.mxu0 0.0
      %7352 = vmatprep.subr.mxu0 0.0
      %7353 = vmatpush1.msra.mxu0 0.0
      %7354 = vmatprep.subr.mxu0 0.0
      %7355 = vmatpush1.msra.mxu0 0.0
      %7356 = vmatprep.subr.mxu0 0.0
      %7357 = vmatpush1.msra.mxu0 0.0
      %7358 = vmatprep.subr.mxu0 0.0
      %7359 = vmatpush1.msra.mxu0 0.0
      %7360 = vmatprep.subr.mxu0 0.0
      %7361 = vmatpush1.msra.mxu0 0.0
      %7362 = vmatprep.subr.mxu0 0.0
      %7363 = vmatpush1.msra.mxu0 0.0
      %7364 = vmatprep.mubr.f32.mxu0 0.0
      %7365 = vmatmul.mubr.f32.gmra.mrb[0].mxu0 %v7283
      %v7366 = vpop.f32.mrb[0].mxu0
      %v7367 = vadd.f32 0.0, %v7366
      %v7368 = vpop.f32.mrb[0].mxu0
      %7369 = vmatprep.mubr.f32.mxu0 0.0
      %7370 = vmatmul.mubr.f32.gmra.mrb[0].mxu0 %v7286
      %v7371 = vpop.f32.mrb[0].mxu0
      %v7372 = vadd.f32 0.0, %v7371
      %v7373 = vpop.f32.mrb[0].mxu0
      %7374 = vmatprep.mubr.f32.mxu0 0.0
      %7375 = vmatmul.mubr.f32.gmra.mrb[0].mxu0 %v7289
      %v7376 = vpop.f32.mrb[0].mxu0
      %v7377 = vadd.f32 0.0, %v7376
      %v7378 = vpop.f32.mrb[0].mxu0
      %7379 = vmatprep.mubr.f32.mxu0 0.0
      %7380 = vmatmul.mubr.f32.gmra.mrb[0].mxu0 %v7292
      %v7381 = vpop.f32.mrb[0].mxu0
      %v7382 = vadd.f32 0.0, %v7381
      %v7383 = vpop.f32.mrb[0].mxu0
      %7384 = vmatprep.mubr.f32.mxu0 0.0
      %7385 = vmatmul.mubr.f32.gmra.mrb[0].mxu0 %v7295
      %v7386 = vpop.f32.mrb[0].mxu0
      %v7387 = vadd.f32 0.0, %v7386
      %v7388 = vpop.f32.mrb[0].mxu0
      %7389 = vmatprep.mubr.f32.mxu0 0.0
      %7390 = vmatmul.mubr.f32.gmra.mrb[0].mxu0 %v7298
      %v7391 = vpop.f32.mrb[0].mxu0
      %v7392 = vadd.f32 0.0, %v7391
      %v7393 = vpop.f32.mrb[0].mxu0
      %7394 = vdwg.mxu0
      %v7395 = vadd.f32 %v7261, %v7367
      %v7396 = vadd.f32 %v7262, %v7372
      %v7397 = vadd.f32 %v7263, %v7377
      %v7398 = vadd.f32 %v7264, %v7382
      %v7399 = vadd.f32 %v7265, %v7387
      %v7400 = vadd.f32 %v7266, %v7392
      %v7401 = vld [vmem:[#allocation5 + $0x11] sm:$0xff]
      %v7402 = vld [vmem:[#allocation5 + $0x19] sm:$0xff]
      %v7403 = vld [vmem:[#allocation5 + $0x21] sm:$0xff]
      %v7404 = vld [vmem:[#allocation5 + $0x29] sm:$0xff]
      %v7405 = vld [vmem:[#allocation5 + $0x31] sm:$0xff]
      %v7406 = vld [vmem:[#allocation5 + $0x39] sm:$0xff]
      %s7407 = scalar_lea.vmem %s7, 448
      %v7408 = vld [vmem:[%s7407] sm:$0xff]
      %v7409 = vld [vmem:[%s7407 + $0x8] sm:$0xff]
      %v7410 = vld [vmem:[%s7407 + $0x10] sm:$0xff]
      %v7411 = vld [vmem:[%s7407 + $0x18] sm:$0xff]
      %v7412 = vld [vmem:[%s7407 + $0x20] sm:$0xff]
      %v7413 = vld [vmem:[%s7407 + $0x28] sm:$0xff]
      %v7414 = vld [vmem:[%s7407 + $0x30] sm:$0xff]
      %v7415 = vld [vmem:[%s7407 + $0x38] sm:$0xff]
      %v7417 = vsel %vm1801, %v7401, 0
      %v7420 = vsel %vm1801, %v7402, 0
      %v7423 = vsel %vm1801, %v7403, 0
      %v7426 = vsel %vm1801, %v7404, 0
      %v7429 = vsel %vm1801, %v7405, 0
      %v7432 = vsel %vm1801, %v7406, 0
      %7434 = vmatprep.subr.mxu0 0.0
      %7435 = vmatpush1.msra.mxu0 %v7408
      %7436 = vmatprep.subr.mxu0 0.0
      %7437 = vmatpush1.msra.mxu0 %v7409
      %7438 = vmatprep.subr.mxu0 0.0
      %7439 = vmatpush1.msra.mxu0 %v7410
      %7440 = vmatprep.subr.mxu0 0.0
      %7441 = vmatpush1.msra.mxu0 %v7411
      %7442 = vmatprep.subr.mxu0 0.0
      %7443 = vmatpush1.msra.mxu0 %v7412
      %7444 = vmatprep.subr.mxu0 0.0
      %7445 = vmatpush1.msra.mxu0 %v7413
      %7446 = vmatprep.subr.mxu0 0.0
      %7447 = vmatpush1.msra.mxu0 %v7414
      %7448 = vmatprep.subr.mxu0 0.0
      %7449 = vmatpush1.msra.mxu0 %v7415
      %7450 = vmatprep.subr.mxu0 0.0
      %7451 = vmatpush1.msra.mxu0 0.0
      %7452 = vmatprep.subr.mxu0 0.0
      %7453 = vmatpush1.msra.mxu0 0.0
      %7454 = vmatprep.subr.mxu0 0.0
      %7455 = vmatpush1.msra.mxu0 0.0
      %7456 = vmatprep.subr.mxu0 0.0
      %7457 = vmatpush1.msra.mxu0 0.0
      %7458 = vmatprep.subr.mxu0 0.0
      %7459 = vmatpush1.msra.mxu0 0.0
      %7460 = vmatprep.subr.mxu0 0.0
      %7461 = vmatpush1.msra.mxu0 0.0
      %7462 = vmatprep.subr.mxu0 0.0
      %7463 = vmatpush1.msra.mxu0 0.0
      %7464 = vmatprep.subr.mxu0 0.0
      %7465 = vmatpush1.msra.mxu0 0.0
      %7466 = vmatprep.subr.mxu0 0.0
      %7467 = vmatpush1.msra.mxu0 0.0
      %7468 = vmatprep.subr.mxu0 0.0
      %7469 = vmatpush1.msra.mxu0 0.0
      %7470 = vmatprep.subr.mxu0 0.0
      %7471 = vmatpush1.msra.mxu0 0.0
      %7472 = vmatprep.subr.mxu0 0.0
      %7473 = vmatpush1.msra.mxu0 0.0
      %7474 = vmatprep.subr.mxu0 0.0
      %7475 = vmatpush1.msra.mxu0 0.0
      %7476 = vmatprep.subr.mxu0 0.0
      %7477 = vmatpush1.msra.mxu0 0.0
      %7478 = vmatprep.subr.mxu0 0.0
      %7479 = vmatpush1.msra.mxu0 0.0
      %7480 = vmatprep.subr.mxu0 0.0
      %7481 = vmatpush1.msra.mxu0 0.0
      %7482 = vmatprep.subr.mxu0 0.0
      %7483 = vmatpush1.msra.mxu0 0.0
      %7484 = vmatprep.subr.mxu0 0.0
      %7485 = vmatpush1.msra.mxu0 0.0
      %7486 = vmatprep.subr.mxu0 0.0
      %7487 = vmatpush1.msra.mxu0 0.0
      %7488 = vmatprep.subr.mxu0 0.0
      %7489 = vmatpush1.msra.mxu0 0.0
      %7490 = vmatprep.subr.mxu0 0.0
      %7491 = vmatpush1.msra.mxu0 0.0
      %7492 = vmatprep.subr.mxu0 0.0
      %7493 = vmatpush1.msra.mxu0 0.0
      %7494 = vmatprep.subr.mxu0 0.0
      %7495 = vmatpush1.msra.mxu0 0.0
      %7496 = vmatprep.subr.mxu0 0.0
      %7497 = vmatpush1.msra.mxu0 0.0
      %7498 = vmatprep.mubr.f32.mxu0 0.0
      %7499 = vmatmul.mubr.f32.gmra.mrb[0].mxu0 %v7417
      %v7500 = vpop.f32.mrb[0].mxu0
      %v7501 = vadd.f32 0.0, %v7500
      %v7502 = vpop.f32.mrb[0].mxu0
      %7503 = vmatprep.mubr.f32.mxu0 0.0
      %7504 = vmatmul.mubr.f32.gmra.mrb[0].mxu0 %v7420
      %v7505 = vpop.f32.mrb[0].mxu0
      %v7506 = vadd.f32 0.0, %v7505
      %v7507 = vpop.f32.mrb[0].mxu0
      %7508 = vmatprep.mubr.f32.mxu0 0.0
      %7509 = vmatmul.mubr.f32.gmra.mrb[0].mxu0 %v7423
      %v7510 = vpop.f32.mrb[0].mxu0
      %v7511 = vadd.f32 0.0, %v7510
      %v7512 = vpop.f32.mrb[0].mxu0
      %7513 = vmatprep.mubr.f32.mxu0 0.0
      %7514 = vmatmul.mubr.f32.gmra.mrb[0].mxu0 %v7426
      %v7515 = vpop.f32.mrb[0].mxu0
      %v7516 = vadd.f32 0.0, %v7515
      %v7517 = vpop.f32.mrb[0].mxu0
      %7518 = vmatprep.mubr.f32.mxu0 0.0
      %7519 = vmatmul.mubr.f32.gmra.mrb[0].mxu0 %v7429
      %v7520 = vpop.f32.mrb[0].mxu0
      %v7521 = vadd.f32 0.0, %v7520
      %v7522 = vpop.f32.mrb[0].mxu0
      %7523 = vmatprep.mubr.f32.mxu0 0.0
      %7524 = vmatmul.mubr.f32.gmra.mrb[0].mxu0 %v7432
      %v7525 = vpop.f32.mrb[0].mxu0
      %v7526 = vadd.f32 0.0, %v7525
      %v7527 = vpop.f32.mrb[0].mxu0
      %7528 = vdwg.mxu0
      %v7529 = vadd.f32 %v7395, %v7501
      %v7530 = vadd.f32 %v7396, %v7506
      %v7531 = vadd.f32 %v7397, %v7511
      %v7532 = vadd.f32 %v7398, %v7516
      %v7533 = vadd.f32 %v7399, %v7521
      %v7534 = vadd.f32 %v7400, %v7526
      %v7535 = vld [vmem:[#allocation5 + $0x12] sm:$0xff]
      %v7536 = vld [vmem:[#allocation5 + $0x1a] sm:$0xff]
      %v7537 = vld [vmem:[#allocation5 + $0x22] sm:$0xff]
      %v7538 = vld [vmem:[#allocation5 + $0x2a] sm:$0xff]
      %v7539 = vld [vmem:[#allocation5 + $0x32] sm:$0xff]
      %v7540 = vld [vmem:[#allocation5 + $0x3a] sm:$0xff]
      %s7541 = scalar_lea.vmem %s7, 512
      %v7542 = vld [vmem:[%s7541] sm:$0xff]
      %v7543 = vld [vmem:[%s7541 + $0x8] sm:$0xff]
      %v7544 = vld [vmem:[%s7541 + $0x10] sm:$0xff]
      %v7545 = vld [vmem:[%s7541 + $0x18] sm:$0xff]
      %v7546 = vld [vmem:[%s7541 + $0x20] sm:$0xff]
      %v7547 = vld [vmem:[%s7541 + $0x28] sm:$0xff]
      %v7548 = vld [vmem:[%s7541 + $0x30] sm:$0xff]
      %v7549 = vld [vmem:[%s7541 + $0x38] sm:$0xff]
      %v7551 = vsel %vm1801, %v7535, 0
      %v7554 = vsel %vm1801, %v7536, 0
      %v7557 = vsel %vm1801, %v7537, 0
      %v7560 = vsel %vm1801, %v7538, 0
      %v7563 = vsel %vm1801, %v7539, 0
      %v7566 = vsel %vm1801, %v7540, 0
      %7568 = vmatprep.subr.mxu0 0.0
      %7569 = vmatpush1.msra.mxu0 %v7542
      %7570 = vmatprep.subr.mxu0 0.0
      %7571 = vmatpush1.msra.mxu0 %v7543
      %7572 = vmatprep.subr.mxu0 0.0
      %7573 = vmatpush1.msra.mxu0 %v7544
      %7574 = vmatprep.subr.mxu0 0.0
      %7575 = vmatpush1.msra.mxu0 %v7545
      %7576 = vmatprep.subr.mxu0 0.0
      %7577 = vmatpush1.msra.mxu0 %v7546
      %7578 = vmatprep.subr.mxu0 0.0
      %7579 = vmatpush1.msra.mxu0 %v7547
      %7580 = vmatprep.subr.mxu0 0.0
      %7581 = vmatpush1.msra.mxu0 %v7548
      %7582 = vmatprep.subr.mxu0 0.0
      %7583 = vmatpush1.msra.mxu0 %v7549
      %7584 = vmatprep.subr.mxu0 0.0
      %7585 = vmatpush1.msra.mxu0 0.0
      %7586 = vmatprep.subr.mxu0 0.0
      %7587 = vmatpush1.msra.mxu0 0.0
      %7588 = vmatprep.subr.mxu0 0.0
      %7589 = vmatpush1.msra.mxu0 0.0
      %7590 = vmatprep.subr.mxu0 0.0
      %7591 = vmatpush1.msra.mxu0 0.0
      %7592 = vmatprep.subr.mxu0 0.0
      %7593 = vmatpush1.msra.mxu0 0.0
      %7594 = vmatprep.subr.mxu0 0.0
      %7595 = vmatpush1.msra.mxu0 0.0
      %7596 = vmatprep.subr.mxu0 0.0
      %7597 = vmatpush1.msra.mxu0 0.0
      %7598 = vmatprep.subr.mxu0 0.0
      %7599 = vmatpush1.msra.mxu0 0.0
      %7600 = vmatprep.subr.mxu0 0.0
      %7601 = vmatpush1.msra.mxu0 0.0
      %7602 = vmatprep.subr.mxu0 0.0
      %7603 = vmatpush1.msra.mxu0 0.0
      %7604 = vmatprep.subr.mxu0 0.0
      %7605 = vmatpush1.msra.mxu0 0.0
      %7606 = vmatprep.subr.mxu0 0.0
      %7607 = vmatpush1.msra.mxu0 0.0
      %7608 = vmatprep.subr.mxu0 0.0
      %7609 = vmatpush1.msra.mxu0 0.0
      %7610 = vmatprep.subr.mxu0 0.0
      %7611 = vmatpush1.msra.mxu0 0.0
      %7612 = vmatprep.subr.mxu0 0.0
      %7613 = vmatpush1.msra.mxu0 0.0
      %7614 = vmatprep.subr.mxu0 0.0
      %7615 = vmatpush1.msra.mxu0 0.0
      %7616 = vmatprep.subr.mxu0 0.0
      %7617 = vmatpush1.msra.mxu0 0.0
      %7618 = vmatprep.subr.mxu0 0.0
      %7619 = vmatpush1.msra.mxu0 0.0
      %7620 = vmatprep.subr.mxu0 0.0
      %7621 = vmatpush1.msra.mxu0 0.0
      %7622 = vmatprep.subr.mxu0 0.0
      %7623 = vmatpush1.msra.mxu0 0.0
      %7624 = vmatprep.subr.mxu0 0.0
      %7625 = vmatpush1.msra.mxu0 0.0
      %7626 = vmatprep.subr.mxu0 0.0
      %7627 = vmatpush1.msra.mxu0 0.0
      %7628 = vmatprep.subr.mxu0 0.0
      %7629 = vmatpush1.msra.mxu0 0.0
      %7630 = vmatprep.subr.mxu0 0.0
      %7631 = vmatpush1.msra.mxu0 0.0
      %7632 = vmatprep.mubr.f32.mxu0 0.0
      %7633 = vmatmul.mubr.f32.gmra.mrb[0].mxu0 %v7551
      %v7634 = vpop.f32.mrb[0].mxu0
      %v7635 = vadd.f32 0.0, %v7634
      %v7636 = vpop.f32.mrb[0].mxu0
      %7637 = vmatprep.mubr.f32.mxu0 0.0
      %7638 = vmatmul.mubr.f32.gmra.mrb[0].mxu0 %v7554
      %v7639 = vpop.f32.mrb[0].mxu0
      %v7640 = vadd.f32 0.0, %v7639
      %v7641 = vpop.f32.mrb[0].mxu0
      %7642 = vmatprep.mubr.f32.mxu0 0.0
      %7643 = vmatmul.mubr.f32.gmra.mrb[0].mxu0 %v7557
      %v7644 = vpop.f32.mrb[0].mxu0
      %v7645 = vadd.f32 0.0, %v7644
      %v7646 = vpop.f32.mrb[0].mxu0
      %7647 = vmatprep.mubr.f32.mxu0 0.0
      %7648 = vmatmul.mubr.f32.gmra.mrb[0].mxu0 %v7560
      %v7649 = vpop.f32.mrb[0].mxu0
      %v7650 = vadd.f32 0.0, %v7649
      %v7651 = vpop.f32.mrb[0].mxu0
      %7652 = vmatprep.mubr.f32.mxu0 0.0
      %7653 = vmatmul.mubr.f32.gmra.mrb[0].mxu0 %v7563
      %v7654 = vpop.f32.mrb[0].mxu0
      %v7655 = vadd.f32 0.0, %v7654
      %v7656 = vpop.f32.mrb[0].mxu0
      %7657 = vmatprep.mubr.f32.mxu0 0.0
      %7658 = vmatmul.mubr.f32.gmra.mrb[0].mxu0 %v7566
      %v7659 = vpop.f32.mrb[0].mxu0
      %v7660 = vadd.f32 0.0, %v7659
      %v7661 = vpop.f32.mrb[0].mxu0
      %7662 = vdwg.mxu0
      %v7663 = vadd.f32 %v7529, %v7635
      %v7664 = vadd.f32 %v7530, %v7640
      %v7665 = vadd.f32 %v7531, %v7645
      %v7666 = vadd.f32 %v7532, %v7650
      %v7667 = vadd.f32 %v7533, %v7655
      %v7668 = vadd.f32 %v7534, %v7660
      %v7669 = vld [vmem:[%s8] sm:$0x1]
      %v7671 = vlaneseq
      %v7672 = vshrl.u32 %v7671, 7
      %v7673 = vsub.s32 0, %v7672
      %v7674 = vrot.slane %v7669, %v7673
      %v7676 = vadd.f32 %v7663, %v7674
      %v7677 = vadd.f32 %v7664, %v7674
      %v7678 = vadd.f32 %v7665, %v7674
      %v7679 = vadd.f32 %v7666, %v7674
      %v7680 = vadd.f32 %v7667, %v7674
      %v7681 = vadd.f32 %v7668, %v7674
      %v7682 = vmax.f32 %v7676, 0.0
      %v7683 = vmax.f32 %v7677, 0.0
      %v7684 = vmax.f32 %v7678, 0.0
      %v7685 = vmax.f32 %v7679, 0.0
      %v7686 = vmax.f32 %v7680, 0.0
      %v7687 = vmax.f32 %v7681, 0.0
      %7688 = vst.msk [vmem:[%s332] sm:$0xff] %vm1801, %v7682
      %7689 = vst.msk [vmem:[%s332 + $0x8] sm:$0xff] %vm1801, %v7683
      %7690 = vst.msk [vmem:[%s332 + $0x10] sm:$0xff] %vm1801, %v7684
      %7691 = vst.msk [vmem:[%s332 + $0x18] sm:$0xff] %vm1801, %v7685
      %7692 = vst.msk [vmem:[%s332 + $0x20] sm:$0xff] %vm1801, %v7686
      %7693 = vst.msk [vmem:[%s332 + $0x28] sm:$0xff] %vm1801, %v7687
      %p7694 = scmp.lt.s32.totalorder %s20, 1
      %s7695 = scalar_select %p7694, %s20, 1
      %s7696 = smul.addr %s7695, 6
      %s7697 = smul.addr %s7696, 8
      %s7698 = scalar_lea.vmem %s9, %s7697
      // Predicated region
      $region57: #{cnn_encoder.1} parent=55 // pred_check
        %p7699 = pneg %p232
      $region58: #{cnn_encoder.1} parent=55 // pred_check_branch
        %7701 = sbr.rel (%p7699) target = $region60
      $region59: #{cnn_encoder.1} parent=55 // pred_region
        _
      $region60: #{cnn_encoder.1} parent=55 // pred_fallthru
        _
    $region56: #{cnn_encoder.1} parent=5 // pred_fallthru
      _
    %p7702 = scmp.le.s32.totalorder 2, %s15
    // Predicated region
    $region61: #{cnn_encoder.1} parent=5 // pred_check
      %p7703 = pneg %p7702
    $region62: #{cnn_encoder.1} parent=5 // pred_check_branch
      %7705 = sbr.rel (%p7703) target = $region64
    $region63: #{cnn_encoder.1} parent=5 // pred_region
      %s7706 = ssub.s32 %s15, 2
      // Predicated region
      $region65: #{cnn_encoder.1} parent=63 // pred_check
        %p7707 = pneg %p238
      $region66: #{cnn_encoder.1} parent=63 // pred_check_branch
        %7709 = sbr.rel (%p7707) target = $region68
      $region67: #{cnn_encoder.1} parent=63 // pred_region
        %p7710 = scmp.lt.s32.totalorder %s21, 1
        %s7711 = scalar_select %p7710, %s21, 1
        %s7712 = smul.addr %s7711, 6
        %s7713 = smul.addr %s7712, 8
        %s7714 = scalar_lea.vmem %s9, %s7713
      $region68: #{cnn_encoder.1} parent=63 // pred_fallthru
        _
    $region64: #{cnn_encoder.1} parent=5 // pred_fallthru
      _
  $region6: #{cnn_encoder.1} parent=0 // loop_footer
    %s19 = sadd.s32 1, %s15
  $region7: #{cnn_encoder.1} parent=0 // loop_footer_branch
    %14 = sbr.rel target = $region3
  $region8: #{cnn_encoder.1} parent=0 // loop_exit
    _

</llo_original>
